<compile_context>
chip_gen: v7x
topology: tpu7x:2x2x1
jax: 0.10.0
libtpu: 0.0.40
codegen_flags: <defaults>
</compile_context>

<pallas_src>
import functools

import jax
import jax.numpy as jnp
from jax.experimental import pallas as pl
from jax.experimental.pallas import tpu as pltpu

VMEM_SPEC = pl.BlockSpec(memory_space=pltpu.MemorySpace.VMEM)


def _gate_stride(hidden):
    # Each fused-GRU gate occupies its own 128-lane-aligned block.
    return ((hidden + 127) // 128) * 128


# --------------------------------------------------------------------------
# The single fused Pallas kernel (grid=(), every operand fully VMEM-resident)
# --------------------------------------------------------------------------
def _attentive_fp_kernel(
    # graph glue (dense one-hot masks, built once in the wrapper)
    x_ref, ea_ref, src_gather_ref, src_scatter_ref, dst_scatter_ref, gmask_ref,
    # atom embedding
    lin1_w_ref, lin1_b_ref,
    g_w1x_ref, g_w1e_ref, g_w2_ref, g_attl_ref, g_attr_ref, g_bias_ref,
    g0_wi_ref, g0_wh_ref, g0_bi_ref, g0_bh_ref,
    # (num_layers - 1) GATConv+GRU layers, weights stacked on a leading axis
    al_w_ref, al_asrc_ref, al_adst_ref, al_bias_ref,
    al_wi_ref, al_wh_ref, al_bi_ref, al_bh_ref,
    # molecule readout (bipartite GATConv + GRU)
    m_w_ref, m_asrc_ref, m_adst_ref, m_bias_ref,
    m_wi_ref, m_wh_ref, m_bi_ref, m_bh_ref,
    # predictor
    lin2_w_ref, lin2_b_ref,
    # output
    o_ref,
    *, hidden, num_extra_layers, num_timesteps,
):
    h_dim = hidden
    f32 = jnp.float32

    def dot(a, b):
        return jnp.dot(a, b, preferred_element_type=f32)

    def leaky(v):                      # negative_slope = 0.01 everywhere in AttentiveFP
        return jnp.where(v >= 0.0, v, 0.01 * v)

    def elu(v):                        # alpha = 1.0; exp only sees the non-positive branch
        return jnp.where(v > 0.0, v, jnp.exp(jnp.minimum(v, 0.0)) - 1.0)

    def sigmoid(v):
        return 1.0 / (1.0 + jnp.exp(-v))

    def col_to_row(col):
        # [n,1] -> [1,n] without relayout/transpose ops: identity-masked sublane reduce.
        n = col.shape[0]
        r = jax.lax.broadcasted_iota(jnp.int32, (n, n), 0)
        c = jax.lax.broadcasted_iota(jnp.int32, (n, n), 1)
        return jnp.sum(jnp.where(r == c, col, 0.0), axis=0, keepdims=True)

    def seg_softmax_agg(logit_row, mask_te, msgs_eh, bias_row):
        # Per-target softmax over incoming edges + weighted aggregation
        # (== torch_geometric.utils.softmax followed by scatter-add):
        #   alpha[t,e] = softmax_e( leaky_relu(logit[e]) | target(e)==t )
        #   out[t]     = elu( sum_e alpha[t,e] * msgs[e] + bias )
        a = leaky(logit_row)                                  # [1, E']
        dense = jnp.where(mask_te > 0.0, a, -1e30)            # [T, E']
        m = jnp.max(dense, axis=-1, keepdims=True)            # [T, 1]
        p = jnp.exp(dense - m) * mask_te
        denom = jnp.sum(p, axis=-1, keepdims=True) + 1e-16    # PyG softmax epsilon
        alpha = p * pl.reciprocal(denom, approx=True)         # EUP reciprocal, not VALU divide
        agg = dot(alpha, msgs_eh)                             # [T, H]
        return elu(agg + bias_row)

    def gru_relu(inp, hid, wi, wh, bi, bh):
        # torch.nn.GRUCell with fused [r|z|n] weights (each gate in a 128-lane block),
        # followed by the .relu_() that AttentiveFP applies to the GRU output.
        gs = wi.shape[-1] // 3
        gi = dot(inp, wi) + bi                                # [., 3*gs]
        gh = dot(hid, wh) + bh
        r = sigmoid(gi[:, 0:h_dim] + gh[:, 0:h_dim])
        z = sigmoid(gi[:, gs:gs + h_dim] + gh[:, gs:gs + h_dim])
        n = jnp.tanh(gi[:, 2 * gs:2 * gs + h_dim] + r * gh[:, 2 * gs:2 * gs + h_dim])
        return jnp.maximum((1.0 - z) * n + z * hid, 0.0)

    src_gather = src_gather_ref[...]     # [E, N]: src_gather @ node_feats == feats[src]
    src_scatter = src_scatter_ref[...]   # [N, E]: one-hot of src along sublanes
    dst_scatter = dst_scatter_ref[...]   # [N, E]: one-hot of dst; also the softmax target mask
    gmask = gmask_ref[...]               # [B, N]: graph membership (pooling + mol softmax mask)

    # ---------------- Atom embedding ----------------
    x_h = leaky(dot(x_ref[...], lin1_w_ref[...]) + lin1_b_ref[...])              # [N, H]

    # GATEConv (edge-feature attention) + GRU
    x_src = dot(src_gather, x_h)                                                 # [E, H] = x_h[src]
    t_e = leaky(dot(x_src, g_w1x_ref[...]) + dot(ea_ref[...], g_w1e_ref[...]))   # lin1([x_j | e_ij])
    a_j = col_to_row(jnp.sum(t_e * g_attl_ref[...], axis=-1, keepdims=True))     # [1, E]
    a_i_nodes = jnp.sum(x_h * g_attr_ref[...], axis=-1, keepdims=True)           # [N, 1]
    a_i = jnp.sum(dst_scatter * a_i_nodes, axis=0, keepdims=True)                # [1, E] = a_i[dst]
    msg_e = dot(src_gather, dot(x_h, g_w2_ref[...]))                             # [E, H] = lin2(x)[src]
    h = seg_softmax_agg(a_j + a_i, dst_scatter, msg_e, g_bias_ref[...])          # [N, H]
    x_h = gru_relu(h, x_h, g0_wi_ref[...], g0_wh_ref[...], g0_bi_ref[...], g0_bh_ref[...])

    # (num_layers - 1) x [GATConv(neg_slope=0.01, no self loops) + GRUCell]
    for l in range(num_extra_layers):
        xp = dot(x_h, al_w_ref[l])                                               # [N, H]
        a_s_nodes = jnp.sum(xp * al_asrc_ref[l], axis=-1, keepdims=True)         # [N, 1]
        a_d_nodes = jnp.sum(xp * al_adst_ref[l], axis=-1, keepdims=True)         # [N, 1]
        a_s = jnp.sum(src_scatter * a_s_nodes, axis=0, keepdims=True)            # [1, E] = a_s[src]
        a_d = jnp.sum(dst_scatter * a_d_nodes, axis=0, keepdims=True)            # [1, E] = a_d[dst]
        xp_src = dot(src_gather, xp)                                             # [E, H] = xp[src]
        h = seg_softmax_agg(a_s + a_d, dst_scatter, xp_src, al_bias_ref[l])      # [N, H]
        x_h = gru_relu(h, x_h, al_wi_ref[l], al_wh_ref[l], al_bi_ref[l], al_bh_ref[l])

    # ---------------- Molecule embedding ----------------
    out = jnp.maximum(dot(gmask, x_h), 0.0)                                      # global_add_pool().relu_()

    m_w = m_w_ref[...]
    m_adst = m_adst_ref[...]
    m_bias = m_bias_ref[...]
    m_wi, m_wh, m_bi, m_bh = m_wi_ref[...], m_wh_ref[...], m_bi_ref[...], m_bh_ref[...]
    xs = dot(x_h, m_w)                                                           # [N, H] (loop invariant)
    a_s = col_to_row(jnp.sum(xs * m_asrc_ref[...], axis=-1, keepdims=True))      # [1, N] (loop invariant)

    def timestep(_, carry):
        xd = dot(carry, m_w)                                                     # [B, H]
        a_d_g = jnp.sum(xd * m_adst, axis=-1, keepdims=True)                     # [B, 1]
        a_d = jnp.sum(gmask * a_d_g, axis=0, keepdims=True)                      # [1, N] = a_d[batch]
        h_mol = seg_softmax_agg(a_s + a_d, gmask, xs, m_bias)                    # [B, H]
        return gru_relu(h_mol, carry, m_wi, m_wh, m_bi, m_bh)

    out = jax.lax.fori_loop(0, num_timesteps, timestep, out, unroll=True)

    # ---------------- Predictor ----------------
    o_ref[...] = dot(out, lin2_w_ref[...]) + lin2_b_ref[...]                     # [B, out_channels]


# --------------------------------------------------------------------------
# Wrapper: builds the one-hot glue masks once and launches the single kernel
# --------------------------------------------------------------------------
def attentive_fp_forward(packed, x, edge_index, edge_attr, batch,
                         *, num_graphs, num_timesteps, num_extra_layers):
    """AttentionConvNet.forward(data) == self.conv1(x, edge_index, edge_attr, batch)."""
    src, dst = edge_index[0], edge_index[1]
    n_nodes = x.shape[0]
    hidden = packed["lin1_w"].shape[1]
    out_ch = packed["lin2_w"].shape[1]

    node_ids = jnp.arange(n_nodes, dtype=src.dtype)
    src_gather = (src[:, None] == node_ids[None, :]).astype(jnp.float32)         # [E, N]
    src_scatter = src_gather.T                                                   # [N, E]
    dst_scatter = (dst[None, :] == node_ids[:, None]).astype(jnp.float32)        # [N, E]
    gmask = (batch[None, :] ==
             jnp.arange(num_graphs, dtype=batch.dtype)[:, None]).astype(jnp.float32)  # [B, N]

    kernel = functools.partial(
        _attentive_fp_kernel,
        hidden=hidden,
        num_extra_layers=num_extra_layers,
        num_timesteps=num_timesteps,
    )
    operands = (
        x, edge_attr, src_gather, src_scatter, dst_scatter, gmask,
        packed["lin1_w"], packed["lin1_b"],
        packed["gate_lin1_w_x"], packed["gate_lin1_w_e"], packed["gate_lin2_w"],
        packed["gate_att_l"], packed["gate_att_r"], packed["gate_bias"],
        packed["gru0_wi"], packed["gru0_wh"], packed["gru0_bi"], packed["gru0_bh"],
        packed["al_w"], packed["al_att_src"], packed["al_att_dst"], packed["al_bias"],
        packed["al_wi"], packed["al_wh"], packed["al_bi"], packed["al_bh"],
        packed["mol_w"], packed["mol_att_src"], packed["mol_att_dst"], packed["mol_bias"],
        packed["mol_wi"], packed["mol_wh"], packed["mol_bi"], packed["mol_bh"],
        packed["lin2_w"], packed["lin2_b"],
    )
    return pl.pallas_call(
        kernel,
        out_shape=jax.ShapeDtypeStruct((num_graphs, out_ch), jnp.float32),
        in_specs=[VMEM_SPEC] * len(operands),
        out_specs=VMEM_SPEC,
    )(*operands)


# --------------------------------------------------------------------------
# Deterministic parameter init (shapes follow torch_geometric AttentiveFP)
# --------------------------------------------------------------------------
def _init_gru(key, hdim):
    keys = jax.random.split(key, 12)
    s = 1.0 / float(hdim) ** 0.5
    p = {}
    for i, nm in enumerate(["wir", "wiz", "win", "whr", "whz", "whn"]):
        p[nm] = jax.random.uniform(keys[i], (hdim, hdim), jnp.float32, -s, s)
    for i, nm in enumerate(["bir", "biz", "bin", "bhr", "bhz", "bhn"]):
        p[nm] = jax.random.uniform(keys[6 + i], (1, hdim), jnp.float32, -s, s)
    return p


def init_params(key, in_ch, hidden, out_ch, edge_dim, num_layers):
    keys = iter(jax.random.split(key, 256))
    nxt = lambda: next(keys)

    def lin_w(fi, fo):
        s = 1.0 / float(fi) ** 0.5
        return jax.random.uniform(nxt(), (fi, fo), jnp.float32, -s, s)

    def lin_b(fi, fo):
        s = 1.0 / float(fi) ** 0.5
        return jax.random.uniform(nxt(), (1, fo), jnp.float32, -s, s)

    p = {}
    p["lin1_w"], p["lin1_b"] = lin_w(in_ch, hidden), lin_b(in_ch, hidden)
    # GATEConv(hidden, hidden, edge_dim): lin1/lin2 bias-free, att_l/att_r, bias
    p["gate_lin1_w"] = lin_w(hidden + edge_dim, hidden)
    p["gate_lin2_w"] = lin_w(hidden, hidden)
    p["gate_att_l"] = lin_w(hidden, 1)
    p["gate_att_r"] = lin_w(hidden, 1)
    p["gate_bias"] = lin_b(hidden, hidden)
    p["gru0"] = _init_gru(nxt(), hidden)
    layers = []
    for _ in range(num_layers - 1):            # GATConv(hidden, hidden, neg_slope=0.01) + GRUCell
        layers.append({
            "w": lin_w(hidden, hidden),
            "att_src": lin_w(hidden, 1),
            "att_dst": lin_w(hidden, 1),
            "bias": lin_b(hidden, hidden),
            "gru": _init_gru(nxt(), hidden),
        })
    p["atom_layers"] = layers
    p["mol"] = {                               # mol_conv (bipartite GATConv) + mol_gru
        "w": lin_w(hidden, hidden),
        "att_src": lin_w(hidden, 1),
        "att_dst": lin_w(hidden, 1),
        "bias": lin_b(hidden, hidden),
        "gru": _init_gru(nxt(), hidden),
    }
    p["lin2_w"], p["lin2_b"] = lin_w(hidden, out_ch), lin_b(hidden, out_ch)
    return p


# --------------------------------------------------------------------------
# One-time repacking of torch-shaped params into the fused / lane-dense layout
# --------------------------------------------------------------------------
def _pack_gru(g):
    h = g["wir"].shape[0]
    gs = _gate_stride(h)

    def pack(names, rows):
        buf = jnp.zeros((rows, 3 * gs), jnp.float32)
        for k, nm in enumerate(names):
            buf = buf.at[:, k * gs:k * gs + h].set(g[nm])
        return buf

    return (pack(("wir", "wiz", "win"), h), pack(("whr", "whz", "whn"), h),
            pack(("bir", "biz", "bin"), 1), pack(("bhr", "bhz", "bhn"), 1))


def pack_params(p):
    h = p["lin1_w"].shape[1]
    gs = _gate_stride(h)
    packed = {
        "lin1_w": p["lin1_w"], "lin1_b": p["lin1_b"],
        # split the GATEConv lin1 so the in-kernel concat becomes two matmuls
        "gate_lin1_w_x": p["gate_lin1_w"][:h, :],
        "gate_lin1_w_e": p["gate_lin1_w"][h:, :],
        "gate_lin2_w": p["gate_lin2_w"],
        "gate_att_l": p["gate_att_l"].T,       # [1, H] rows -> VPU lane reductions
        "gate_att_r": p["gate_att_r"].T,
        "gate_bias": p["gate_bias"],
        "lin2_w": p["lin2_w"], "lin2_b": p["lin2_b"],
    }
    packed["gru0_wi"], packed["gru0_wh"], packed["gru0_bi"], packed["gru0_bh"] = _pack_gru(p["gru0"])

    layers = p["atom_layers"]
    if layers:
        packed["al_w"] = jnp.stack([lp["w"] for lp in layers])
        packed["al_att_src"] = jnp.stack([lp["att_src"].T for lp in layers])
        packed["al_att_dst"] = jnp.stack([lp["att_dst"].T for lp in layers])
        packed["al_bias"] = jnp.stack([lp["bias"] for lp in layers])
        grus = [_pack_gru(lp["gru"]) for lp in layers]
        for i, nm in enumerate(("al_wi", "al_wh", "al_bi", "al_bh")):
            packed[nm] = jnp.stack([g[i] for g in grus])
    else:  # num_layers == 1: dummies (never read; kernel layer loop has zero trips)
        packed["al_w"] = jnp.zeros((1, h, h), jnp.float32)
        packed["al_att_src"] = jnp.zeros((1, 1, h), jnp.float32)
        packed["al_att_dst"] = jnp.zeros((1, 1, h), jnp.float32)
        packed["al_bias"] = jnp.zeros((1, 1, h), jnp.float32)
        packed["al_wi"] = jnp.zeros((1, h, 3 * gs), jnp.float32)
        packed["al_wh"] = jnp.zeros((1, h, 3 * gs), jnp.float32)
        packed["al_bi"] = jnp.zeros((1, 1, 3 * gs), jnp.float32)
        packed["al_bh"] = jnp.zeros((1, 1, 3 * gs), jnp.float32)

    mol = p["mol"]
    packed["mol_w"] = mol["w"]
    packed["mol_att_src"] = mol["att_src"].T
    packed["mol_att_dst"] = mol["att_dst"].T
    packed["mol_bias"] = mol["bias"]
    packed["mol_wi"], packed["mol_wh"], packed["mol_bi"], packed["mol_bh"] = _pack_gru(mol["gru"])
    return packed


# --------------------------------------------------------------------------
# Pure-JAX reference of the same forward (for a loose numerical self-check)
# --------------------------------------------------------------------------
def _reference_forward(p, x, edge_index, edge_attr, batch, *, num_graphs, num_timesteps):
    hp = jax.lax.Precision.HIGHEST
    dot = lambda a, b: jnp.dot(a, b, precision=hp)
    leaky = lambda v: jnp.where(v >= 0, v, 0.01 * v)
    elu = lambda v: jnp.where(v > 0, v, jnp.exp(jnp.minimum(v, 0.0)) - 1.0)
    sigmoid = lambda v: 1.0 / (1.0 + jnp.exp(-v))

    def gru(g, inp, hid):
        r = sigmoid(dot(inp, g["wir"]) + g["bir"] + dot(hid, g["whr"]) + g["bhr"])
        z = sigmoid(dot(inp, g["wiz"]) + g["biz"] + dot(hid, g["whz"]) + g["bhz"])
        n = jnp.tanh(dot(inp, g["win"]) + g["bin"] + r * (dot(hid, g["whn"]) + g["bhn"]))
        return jnp.maximum((1 - z) * n + z * hid, 0.0)

    def seg_softmax_agg(logit, mask, msgs, bias):
        a = leaky(logit)
        dense = jnp.where(mask > 0, a, -1e30)
        m = jnp.max(dense, axis=-1, keepdims=True)
        pe = jnp.exp(dense - m) * mask
        alpha = pe / (jnp.sum(pe, axis=-1, keepdims=True) + 1e-16)
        return elu(dot(alpha, msgs) + bias)

    src, dst = edge_index[0], edge_index[1]
    n_nodes = x.shape[0]
    tmask = (dst[None, :] == jnp.arange(n_nodes)[:, None]).astype(jnp.float32)
    gmask = (batch[None, :] == jnp.arange(num_graphs)[:, None]).astype(jnp.float32)

    x_h = leaky(dot(x, p["lin1_w"]) + p["lin1_b"])
    cat = jnp.concatenate([x_h[src], edge_attr], axis=-1)
    t = leaky(dot(cat, p["gate_lin1_w"]))
    logit = (dot(t, p["gate_att_l"]) + dot(x_h[dst], p["gate_att_r"])).reshape(1, -1)
    msg = dot(x_h, p["gate_lin2_w"])[src]
    x_h = gru(p["gru0"], seg_softmax_agg(logit, tmask, msg, p["gate_bias"]), x_h)

    for lp in p["atom_layers"]:
        xp = dot(x_h, lp["w"])
        a_s = dot(xp, lp["att_src"])[:, 0]
        a_d = dot(xp, lp["att_dst"])[:, 0]
        logit = (a_s[src] + a_d[dst]).reshape(1, -1)
        x_h = gru(lp["gru"], seg_softmax_agg(logit, tmask, xp[src], lp["bias"]), x_h)

    out = jnp.maximum(dot(gmask, x_h), 0.0)
    mol = p["mol"]
    xs = dot(x_h, mol["w"])
    a_s = dot(xs, mol["att_src"])[:, 0]
    for _ in range(num_timesteps):
        xd = dot(out, mol["w"])
        a_d = dot(xd, mol["att_dst"])[:, 0]
        logit = (a_s + a_d[batch]).reshape(1, -1)
        out = gru(mol["gru"], seg_softmax_agg(logit, gmask, xs, mol["bias"]), out)

    return dot(out, p["lin2_w"]) + p["lin2_b"]


# --------------------------------------------------------------------------
if __name__ == "__main__":
    # Small-but-consistent hyperparameters (what the optuna trial would suggest)
    IN_FEATURES = 24      # data1.x feature dim
    HIDDEN = 16           # trial 'out_features'
    EDGE_DIM = 10         # fixed in the module
    NUM_LAYERS = 3        # trial 'num_layers'
    NUM_TIMESTEPS = 4     # trial 'num_timesteps'
    OUT_CHANNELS = 1

    N_NODES, N_EDGES, N_GRAPHS = 12, 20, 2

    root = jax.random.PRNGKey(0)
    kx, ke, ks0, kd0, ks1, kd1, kp = jax.random.split(root, 7)

    x = jax.random.normal(kx, (N_NODES, IN_FEATURES), jnp.float32)
    edge_attr = jax.random.normal(ke, (N_EDGES, EDGE_DIM), jnp.float32)
    # edges confined to their graph: graph 0 = nodes 0..5, graph 1 = nodes 6..11
    src = jnp.concatenate([jax.random.randint(ks0, (N_EDGES // 2,), 0, 6),
                           jax.random.randint(ks1, (N_EDGES // 2,), 6, 12)]).astype(jnp.int32)
    dst = jnp.concatenate([jax.random.randint(kd0, (N_EDGES // 2,), 0, 6),
                           jax.random.randint(kd1, (N_EDGES // 2,), 6, 12)]).astype(jnp.int32)
    edge_index = jnp.stack([src, dst], axis=0)
    batch = jnp.array([0] * 6 + [1] * 6, jnp.int32)

    params = init_params(kp, IN_FEATURES, HIDDEN, OUT_CHANNELS, EDGE_DIM, NUM_LAYERS)
    packed = pack_params(params)          # one-time repack into fused/lane-dense layout

    fwd = jax.jit(functools.partial(attentive_fp_forward,
                                    num_graphs=N_GRAPHS,
                                    num_timesteps=NUM_TIMESTEPS,
                                    num_extra_layers=NUM_LAYERS - 1))
    out = jax.block_until_ready(fwd(packed, x, edge_index, edge_attr, batch))

    assert out.shape == (N_GRAPHS, OUT_CHANNELS), out.shape
    assert bool(jnp.all(jnp.isfinite(out)))

    ref = _reference_forward(params, x, edge_index, edge_attr, batch,
                             num_graphs=N_GRAPHS, num_timesteps=NUM_TIMESTEPS)
    # approx reciprocal (EUP) introduces ~2^-12 relative error -> loose tolerance
    assert bool(jnp.allclose(out, ref, rtol=1e-2, atol=1e-3)), (out, ref)

    print("KERNEL_OK")
</pallas_src>

<mosaic_0001>
module attributes {stable_mosaic.version = 11 : i64} {
  func.func @_attentive_fp_kernel(%arg0: memref<12x24xf32, #tpu.memory_space<vmem>>, %arg1: memref<20x10xf32, #tpu.memory_space<vmem>>, %arg2: memref<20x12xf32, #tpu.memory_space<vmem>>, %arg3: memref<12x20xf32, #tpu.memory_space<vmem>>, %arg4: memref<12x20xf32, #tpu.memory_space<vmem>>, %arg5: memref<2x12xf32, #tpu.memory_space<vmem>>, %arg6: memref<24x16xf32, #tpu.memory_space<vmem>>, %arg7: memref<1x16xf32, #tpu.memory_space<vmem>>, %arg8: memref<16x16xf32, #tpu.memory_space<vmem>>, %arg9: memref<10x16xf32, #tpu.memory_space<vmem>>, %arg10: memref<16x16xf32, #tpu.memory_space<vmem>>, %arg11: memref<1x16xf32, #tpu.memory_space<vmem>>, %arg12: memref<1x16xf32, #tpu.memory_space<vmem>>, %arg13: memref<1x16xf32, #tpu.memory_space<vmem>>, %arg14: memref<16x384xf32, #tpu.memory_space<vmem>>, %arg15: memref<16x384xf32, #tpu.memory_space<vmem>>, %arg16: memref<1x384xf32, #tpu.memory_space<vmem>>, %arg17: memref<1x384xf32, #tpu.memory_space<vmem>>, %arg18: memref<2x16x16xf32, #tpu.memory_space<vmem>>, %arg19: memref<2x1x16xf32, #tpu.memory_space<vmem>>, %arg20: memref<2x1x16xf32, #tpu.memory_space<vmem>>, %arg21: memref<2x1x16xf32, #tpu.memory_space<vmem>>, %arg22: memref<2x16x384xf32, #tpu.memory_space<vmem>>, %arg23: memref<2x16x384xf32, #tpu.memory_space<vmem>>, %arg24: memref<2x1x384xf32, #tpu.memory_space<vmem>>, %arg25: memref<2x1x384xf32, #tpu.memory_space<vmem>>, %arg26: memref<16x16xf32, #tpu.memory_space<vmem>>, %arg27: memref<1x16xf32, #tpu.memory_space<vmem>>, %arg28: memref<1x16xf32, #tpu.memory_space<vmem>>, %arg29: memref<1x16xf32, #tpu.memory_space<vmem>>, %arg30: memref<16x384xf32, #tpu.memory_space<vmem>>, %arg31: memref<16x384xf32, #tpu.memory_space<vmem>>, %arg32: memref<1x384xf32, #tpu.memory_space<vmem>>, %arg33: memref<1x384xf32, #tpu.memory_space<vmem>>, %arg34: memref<16x1xf32, #tpu.memory_space<vmem>>, %arg35: memref<1x1xf32, #tpu.memory_space<vmem>>, %arg36: memref<2x1xf32, #tpu.memory_space<vmem>>) attributes {dimension_semantics = [], scalar_prefetch = 0 : i64, scratch_operands = 0 : i64, tpu.core_type = #tpu.core_type<tc>} {
    %c0 = arith.constant 0 : index
    %c0_0 = arith.constant 0 : index
    %0 = vector.load %arg2[%c0, %c0_0] : memref<20x12xf32, #tpu.memory_space<vmem>>, vector<20x12xf32>
    %c0_1 = arith.constant 0 : index
    %c0_2 = arith.constant 0 : index
    %1 = vector.load %arg3[%c0_1, %c0_2] : memref<12x20xf32, #tpu.memory_space<vmem>>, vector<12x20xf32>
    %c0_3 = arith.constant 0 : index
    %c0_4 = arith.constant 0 : index
    %2 = vector.load %arg4[%c0_3, %c0_4] : memref<12x20xf32, #tpu.memory_space<vmem>>, vector<12x20xf32>
    %c0_5 = arith.constant 0 : index
    %c0_6 = arith.constant 0 : index
    %3 = vector.load %arg5[%c0_5, %c0_6] : memref<2x12xf32, #tpu.memory_space<vmem>>, vector<2x12xf32>
    %c0_7 = arith.constant 0 : index
    %c0_8 = arith.constant 0 : index
    %4 = vector.load %arg0[%c0_7, %c0_8] : memref<12x24xf32, #tpu.memory_space<vmem>>, vector<12x24xf32>
    %c0_9 = arith.constant 0 : index
    %c0_10 = arith.constant 0 : index
    %5 = vector.load %arg6[%c0_9, %c0_10] : memref<24x16xf32, #tpu.memory_space<vmem>>, vector<24x16xf32>
    %cst = arith.constant dense<0.000000e+00> : vector<12x16xf32>
    %6 = tpu.matmul %4, %5, %cst {dimension_numbers = #tpu.dot_dimension_numbers<[1], [0], [0], [1], [0, 0, 1, 1], [], []>} : vector<12x24xf32>, vector<24x16xf32>, vector<12x16xf32> -> vector<12x16xf32>
    %c0_11 = arith.constant 0 : index
    %c0_12 = arith.constant 0 : index
    %7 = vector.load %arg7[%c0_11, %c0_12] : memref<1x16xf32, #tpu.memory_space<vmem>>, vector<1x16xf32>
    %8 = vector.broadcast %7 : vector<1x16xf32> to vector<12x16xf32>
    %9 = arith.addf %6, %8 : vector<12x16xf32>
    %cst_13 = arith.constant 0.000000e+00 : f32
    %10 = vector.broadcast %cst_13 : f32 to vector<12x16xf32>
    %11 = arith.cmpf oge, %9, %10 : vector<12x16xf32>
    %cst_14 = arith.constant 0.00999999977 : f32
    %12 = vector.broadcast %cst_14 : f32 to vector<12x16xf32>
    %13 = arith.mulf %12, %9 : vector<12x16xf32>
    %14 = arith.select %11, %9, %13 : vector<12x16xi1>, vector<12x16xf32>
    %cst_15 = arith.constant dense<0.000000e+00> : vector<20x16xf32>
    %15 = tpu.matmul %0, %14, %cst_15 {dimension_numbers = #tpu.dot_dimension_numbers<[1], [0], [0], [1], [0, 0, 1, 1], [], []>} : vector<20x12xf32>, vector<12x16xf32>, vector<20x16xf32> -> vector<20x16xf32>
    %c0_16 = arith.constant 0 : index
    %c0_17 = arith.constant 0 : index
    %16 = vector.load %arg8[%c0_16, %c0_17] : memref<16x16xf32, #tpu.memory_space<vmem>>, vector<16x16xf32>
    %cst_18 = arith.constant dense<0.000000e+00> : vector<20x16xf32>
    %17 = tpu.matmul %15, %16, %cst_18 {dimension_numbers = #tpu.dot_dimension_numbers<[1], [0], [0], [1], [0, 0, 1, 1], [], []>} : vector<20x16xf32>, vector<16x16xf32>, vector<20x16xf32> -> vector<20x16xf32>
    %c0_19 = arith.constant 0 : index
    %c0_20 = arith.constant 0 : index
    %18 = vector.load %arg1[%c0_19, %c0_20] : memref<20x10xf32, #tpu.memory_space<vmem>>, vector<20x10xf32>
    %c0_21 = arith.constant 0 : index
    %c0_22 = arith.constant 0 : index
    %19 = vector.load %arg9[%c0_21, %c0_22] : memref<10x16xf32, #tpu.memory_space<vmem>>, vector<10x16xf32>
    %cst_23 = arith.constant dense<0.000000e+00> : vector<20x16xf32>
    %20 = tpu.matmul %18, %19, %cst_23 {dimension_numbers = #tpu.dot_dimension_numbers<[1], [0], [0], [1], [0, 0, 1, 1], [], []>} : vector<20x10xf32>, vector<10x16xf32>, vector<20x16xf32> -> vector<20x16xf32>
    %21 = arith.addf %17, %20 : vector<20x16xf32>
    %cst_24 = arith.constant 0.000000e+00 : f32
    %22 = vector.broadcast %cst_24 : f32 to vector<20x16xf32>
    %23 = arith.cmpf oge, %21, %22 : vector<20x16xf32>
    %cst_25 = arith.constant 0.00999999977 : f32
    %24 = vector.broadcast %cst_25 : f32 to vector<20x16xf32>
    %25 = arith.mulf %24, %21 : vector<20x16xf32>
    %26 = arith.select %23, %21, %25 : vector<20x16xi1>, vector<20x16xf32>
    %c0_26 = arith.constant 0 : index
    %c0_27 = arith.constant 0 : index
    %27 = vector.load %arg11[%c0_26, %c0_27] : memref<1x16xf32, #tpu.memory_space<vmem>>, vector<1x16xf32>
    %28 = vector.broadcast %27 : vector<1x16xf32> to vector<20x16xf32>
    %29 = arith.mulf %26, %28 : vector<20x16xf32>
    %cst_28 = arith.constant dense<0.000000e+00> : vector<20xf32>
    %30 = vector.multi_reduction <add>, %29, %cst_28 [1] : vector<20x16xf32> to vector<20xf32>
    %31 = vector.shape_cast %30 : vector<20xf32> to vector<20x1xf32>
    %32 = tpu.iota {dimensions = array<i32: 0>} : vector<20x20xi32>
    %33 = tpu.iota {dimensions = array<i32: 1>} : vector<20x20xi32>
    %34 = arith.cmpi eq, %32, %33 : vector<20x20xi32>
    %cst_29 = arith.constant 0.000000e+00 : f32
    %35 = vector.shape_cast %31 : vector<20x1xf32> to vector<20x1xf32>
    %36 = vector.broadcast %35 : vector<20x1xf32> to vector<20x20xf32>
    %37 = vector.broadcast %cst_29 : f32 to vector<20x20xf32>
    %38 = arith.select %34, %36, %37 : vector<20x20xi1>, vector<20x20xf32>
    %cst_30 = arith.constant dense<0.000000e+00> : vector<20xf32>
    %39 = vector.multi_reduction <add>, %38, %cst_30 [0] : vector<20x20xf32> to vector<20xf32>
    %40 = vector.shape_cast %39 : vector<20xf32> to vector<1x20xf32>
    %c0_31 = arith.constant 0 : index
    %c0_32 = arith.constant 0 : index
    %41 = vector.load %arg12[%c0_31, %c0_32] : memref<1x16xf32, #tpu.memory_space<vmem>>, vector<1x16xf32>
    %42 = vector.broadcast %41 : vector<1x16xf32> to vector<12x16xf32>
    %43 = arith.mulf %14, %42 : vector<12x16xf32>
    %cst_33 = arith.constant dense<0.000000e+00> : vector<12xf32>
    %44 = vector.multi_reduction <add>, %43, %cst_33 [1] : vector<12x16xf32> to vector<12xf32>
    %45 = vector.shape_cast %44 : vector<12xf32> to vector<12x1xf32>
    %46 = vector.broadcast %45 : vector<12x1xf32> to vector<12x20xf32>
    %47 = arith.mulf %2, %46 : vector<12x20xf32>
    %cst_34 = arith.constant dense<0.000000e+00> : vector<20xf32>
    %48 = vector.multi_reduction <add>, %47, %cst_34 [0] : vector<12x20xf32> to vector<20xf32>
    %49 = vector.shape_cast %48 : vector<20xf32> to vector<1x20xf32>
    %c0_35 = arith.constant 0 : index
    %c0_36 = arith.constant 0 : index
    %50 = vector.load %arg10[%c0_35, %c0_36] : memref<16x16xf32, #tpu.memory_space<vmem>>, vector<16x16xf32>
    %cst_37 = arith.constant dense<0.000000e+00> : vector<12x16xf32>
    %51 = tpu.matmul %14, %50, %cst_37 {dimension_numbers = #tpu.dot_dimension_numbers<[1], [0], [0], [1], [0, 0, 1, 1], [], []>} : vector<12x16xf32>, vector<16x16xf32>, vector<12x16xf32> -> vector<12x16xf32>
    %cst_38 = arith.constant dense<0.000000e+00> : vector<20x16xf32>
    %52 = tpu.matmul %0, %51, %cst_38 {dimension_numbers = #tpu.dot_dimension_numbers<[1], [0], [0], [1], [0, 0, 1, 1], [], []>} : vector<20x12xf32>, vector<12x16xf32>, vector<20x16xf32> -> vector<20x16xf32>
    %53 = arith.addf %40, %49 : vector<1x20xf32>
    %c0_39 = arith.constant 0 : index
    %c0_40 = arith.constant 0 : index
    %54 = vector.load %arg13[%c0_39, %c0_40] : memref<1x16xf32, #tpu.memory_space<vmem>>, vector<1x16xf32>
    %cst_41 = arith.constant 0.000000e+00 : f32
    %55 = vector.broadcast %cst_41 : f32 to vector<1x20xf32>
    %56 = arith.cmpf oge, %53, %55 : vector<1x20xf32>
    %cst_42 = arith.constant 0.00999999977 : f32
    %57 = vector.broadcast %cst_42 : f32 to vector<1x20xf32>
    %58 = arith.mulf %57, %53 : vector<1x20xf32>
    %59 = arith.select %56, %53, %58 : vector<1x20xi1>, vector<1x20xf32>
    %cst_43 = arith.constant 0.000000e+00 : f32
    %60 = vector.broadcast %cst_43 : f32 to vector<12x20xf32>
    %61 = arith.cmpf ogt, %2, %60 : vector<12x20xf32>
    %cst_44 = arith.constant -1.000000e+30 : f32
    %62 = vector.shape_cast %59 : vector<1x20xf32> to vector<1x20xf32>
    %63 = vector.broadcast %62 : vector<1x20xf32> to vector<12x20xf32>
    %64 = vector.broadcast %cst_44 : f32 to vector<12x20xf32>
    %65 = arith.select %61, %63, %64 : vector<12x20xi1>, vector<12x20xf32>
    %cst_45 = arith.constant dense<0xFF800000> : vector<12xf32>
    %66 = vector.multi_reduction <maximumf>, %65, %cst_45 [1] : vector<12x20xf32> to vector<12xf32>
    %67 = vector.shape_cast %66 : vector<12xf32> to vector<12x1xf32>
    %68 = vector.broadcast %67 : vector<12x1xf32> to vector<12x20xf32>
    %69 = arith.subf %65, %68 : vector<12x20xf32>
    %70 = math.exp %69 : vector<12x20xf32>
    %71 = arith.mulf %70, %2 : vector<12x20xf32>
    %cst_46 = arith.constant dense<0.000000e+00> : vector<12xf32>
    %72 = vector.multi_reduction <add>, %71, %cst_46 [1] : vector<12x20xf32> to vector<12xf32>
    %73 = vector.shape_cast %72 : vector<12xf32> to vector<12x1xf32>
    %cst_47 = arith.constant 1.000000e-16 : f32
    %74 = vector.broadcast %cst_47 : f32 to vector<12x1xf32>
    %75 = arith.addf %73, %74 : vector<12x1xf32>
    %76 = tpu.reciprocal %75 {approx = true} : vector<12x1xf32> -> vector<12x1xf32>
    %77 = vector.broadcast %76 : vector<12x1xf32> to vector<12x20xf32>
    %78 = arith.mulf %71, %77 : vector<12x20xf32>
    %cst_48 = arith.constant dense<0.000000e+00> : vector<12x16xf32>
    %79 = tpu.matmul %78, %52, %cst_48 {dimension_numbers = #tpu.dot_dimension_numbers<[1], [0], [0], [1], [0, 0, 1, 1], [], []>} : vector<12x20xf32>, vector<20x16xf32>, vector<12x16xf32> -> vector<12x16xf32>
    %80 = vector.broadcast %54 : vector<1x16xf32> to vector<12x16xf32>
    %81 = arith.addf %79, %80 : vector<12x16xf32>
    %cst_49 = arith.constant 0.000000e+00 : f32
    %82 = vector.broadcast %cst_49 : f32 to vector<12x16xf32>
    %83 = arith.cmpf ogt, %81, %82 : vector<12x16xf32>
    %cst_50 = arith.constant 0.000000e+00 : f32
    %84 = vector.broadcast %cst_50 : f32 to vector<12x16xf32>
    %85 = arith.minimumf %81, %84 : vector<12x16xf32>
    %86 = math.exp %85 : vector<12x16xf32>
    %cst_51 = arith.constant 1.000000e+00 : f32
    %87 = vector.broadcast %cst_51 : f32 to vector<12x16xf32>
    %88 = arith.subf %86, %87 : vector<12x16xf32>
    %89 = arith.select %83, %81, %88 : vector<12x16xi1>, vector<12x16xf32>
    %c0_52 = arith.constant 0 : index
    %c0_53 = arith.constant 0 : index
    %90 = vector.load %arg14[%c0_52, %c0_53] : memref<16x384xf32, #tpu.memory_space<vmem>>, vector<16x384xf32>
    %c0_54 = arith.constant 0 : index
    %c0_55 = arith.constant 0 : index
    %91 = vector.load %arg15[%c0_54, %c0_55] : memref<16x384xf32, #tpu.memory_space<vmem>>, vector<16x384xf32>
    %c0_56 = arith.constant 0 : index
    %c0_57 = arith.constant 0 : index
    %92 = vector.load %arg16[%c0_56, %c0_57] : memref<1x384xf32, #tpu.memory_space<vmem>>, vector<1x384xf32>
    %c0_58 = arith.constant 0 : index
    %c0_59 = arith.constant 0 : index
    %93 = vector.load %arg17[%c0_58, %c0_59] : memref<1x384xf32, #tpu.memory_space<vmem>>, vector<1x384xf32>
    %cst_60 = arith.constant dense<0.000000e+00> : vector<12x384xf32>
    %94 = tpu.matmul %89, %90, %cst_60 {dimension_numbers = #tpu.dot_dimension_numbers<[1], [0], [0], [1], [0, 0, 1, 1], [], []>} : vector<12x16xf32>, vector<16x384xf32>, vector<12x384xf32> -> vector<12x384xf32>
    %95 = vector.broadcast %92 : vector<1x384xf32> to vector<12x384xf32>
    %96 = arith.addf %94, %95 : vector<12x384xf32>
    %cst_61 = arith.constant dense<0.000000e+00> : vector<12x384xf32>
    %97 = tpu.matmul %14, %91, %cst_61 {dimension_numbers = #tpu.dot_dimension_numbers<[1], [0], [0], [1], [0, 0, 1, 1], [], []>} : vector<12x16xf32>, vector<16x384xf32>, vector<12x384xf32> -> vector<12x384xf32>
    %98 = vector.broadcast %93 : vector<1x384xf32> to vector<12x384xf32>
    %99 = arith.addf %97, %98 : vector<12x384xf32>
    %100 = vector.extract_strided_slice %96 {offsets = [0, 0], sizes = [12, 16], strides = [1, 1]} : vector<12x384xf32> to vector<12x16xf32>
    %101 = vector.extract_strided_slice %99 {offsets = [0, 0], sizes = [12, 16], strides = [1, 1]} : vector<12x384xf32> to vector<12x16xf32>
    %102 = arith.addf %100, %101 : vector<12x16xf32>
    %cst_62 = arith.constant 0.000000e+00 : f32
    %103 = vector.broadcast %cst_62 : f32 to vector<12x16xf32>
    %104 = arith.subf %103, %102 : vector<12x16xf32>
    %105 = math.exp %104 : vector<12x16xf32>
    %cst_63 = arith.constant 1.000000e+00 : f32
    %106 = vector.broadcast %cst_63 : f32 to vector<12x16xf32>
    %107 = arith.addf %106, %105 : vector<12x16xf32>
    %cst_64 = arith.constant 1.000000e+00 : f32
    %108 = vector.broadcast %cst_64 : f32 to vector<12x16xf32>
    %109 = arith.divf %108, %107 : vector<12x16xf32>
    %110 = vector.extract_strided_slice %96 {offsets = [0, 128], sizes = [12, 16], strides = [1, 1]} : vector<12x384xf32> to vector<12x16xf32>
    %111 = vector.extract_strided_slice %99 {offsets = [0, 128], sizes = [12, 16], strides = [1, 1]} : vector<12x384xf32> to vector<12x16xf32>
    %112 = arith.addf %110, %111 : vector<12x16xf32>
    %cst_65 = arith.constant 0.000000e+00 : f32
    %113 = vector.broadcast %cst_65 : f32 to vector<12x16xf32>
    %114 = arith.subf %113, %112 : vector<12x16xf32>
    %115 = math.exp %114 : vector<12x16xf32>
    %cst_66 = arith.constant 1.000000e+00 : f32
    %116 = vector.broadcast %cst_66 : f32 to vector<12x16xf32>
    %117 = arith.addf %116, %115 : vector<12x16xf32>
    %cst_67 = arith.constant 1.000000e+00 : f32
    %118 = vector.broadcast %cst_67 : f32 to vector<12x16xf32>
    %119 = arith.divf %118, %117 : vector<12x16xf32>
    %120 = vector.extract_strided_slice %96 {offsets = [0, 256], sizes = [12, 16], strides = [1, 1]} : vector<12x384xf32> to vector<12x16xf32>
    %121 = vector.extract_strided_slice %99 {offsets = [0, 256], sizes = [12, 16], strides = [1, 1]} : vector<12x384xf32> to vector<12x16xf32>
    %122 = arith.mulf %109, %121 : vector<12x16xf32>
    %123 = arith.addf %120, %122 : vector<12x16xf32>
    %124 = math.tanh %123 : vector<12x16xf32>
    %cst_68 = arith.constant 1.000000e+00 : f32
    %125 = vector.broadcast %cst_68 : f32 to vector<12x16xf32>
    %126 = arith.subf %125, %119 : vector<12x16xf32>
    %127 = arith.mulf %126, %124 : vector<12x16xf32>
    %128 = arith.mulf %119, %14 : vector<12x16xf32>
    %129 = arith.addf %127, %128 : vector<12x16xf32>
    %cst_69 = arith.constant 0.000000e+00 : f32
    %130 = vector.broadcast %cst_69 : f32 to vector<12x16xf32>
    %131 = arith.maximumf %129, %130 : vector<12x16xf32>
    %c0_70 = arith.constant 0 : index
    %c0_71 = arith.constant 0 : index
    %c0_72 = arith.constant 0 : index
    %132 = vector.load %arg18[%c0_70, %c0_71, %c0_72] : memref<2x16x16xf32, #tpu.memory_space<vmem>>, vector<1x16x16xf32>
    %133 = vector.shape_cast %132 : vector<1x16x16xf32> to vector<16x16xf32>
    %cst_73 = arith.constant dense<0.000000e+00> : vector<12x16xf32>
    %134 = tpu.matmul %131, %133, %cst_73 {dimension_numbers = #tpu.dot_dimension_numbers<[1], [0], [0], [1], [0, 0, 1, 1], [], []>} : vector<12x16xf32>, vector<16x16xf32>, vector<12x16xf32> -> vector<12x16xf32>
    %c0_74 = arith.constant 0 : index
    %c0_75 = arith.constant 0 : index
    %c0_76 = arith.constant 0 : index
    %135 = vector.load %arg19[%c0_74, %c0_75, %c0_76] : memref<2x1x16xf32, #tpu.memory_space<vmem>>, vector<1x1x16xf32>
    %136 = vector.shape_cast %135 : vector<1x1x16xf32> to vector<1x16xf32>
    %137 = vector.broadcast %136 : vector<1x16xf32> to vector<12x16xf32>
    %138 = arith.mulf %134, %137 : vector<12x16xf32>
    %cst_77 = arith.constant dense<0.000000e+00> : vector<12xf32>
    %139 = vector.multi_reduction <add>, %138, %cst_77 [1] : vector<12x16xf32> to vector<12xf32>
    %140 = vector.shape_cast %139 : vector<12xf32> to vector<12x1xf32>
    %c0_78 = arith.constant 0 : index
    %c0_79 = arith.constant 0 : index
    %c0_80 = arith.constant 0 : index
    %141 = vector.load %arg20[%c0_78, %c0_79, %c0_80] : memref<2x1x16xf32, #tpu.memory_space<vmem>>, vector<1x1x16xf32>
    %142 = vector.shape_cast %141 : vector<1x1x16xf32> to vector<1x16xf32>
    %143 = vector.broadcast %142 : vector<1x16xf32> to vector<12x16xf32>
    %144 = arith.mulf %134, %143 : vector<12x16xf32>
    %cst_81 = arith.constant dense<0.000000e+00> : vector<12xf32>
    %145 = vector.multi_reduction <add>, %144, %cst_81 [1] : vector<12x16xf32> to vector<12xf32>
    %146 = vector.shape_cast %145 : vector<12xf32> to vector<12x1xf32>
    %147 = vector.broadcast %140 : vector<12x1xf32> to vector<12x20xf32>
    %148 = arith.mulf %1, %147 : vector<12x20xf32>
    %cst_82 = arith.constant dense<0.000000e+00> : vector<20xf32>
    %149 = vector.multi_reduction <add>, %148, %cst_82 [0] : vector<12x20xf32> to vector<20xf32>
    %150 = vector.shape_cast %149 : vector<20xf32> to vector<1x20xf32>
    %151 = vector.broadcast %146 : vector<12x1xf32> to vector<12x20xf32>
    %152 = arith.mulf %2, %151 : vector<12x20xf32>
    %cst_83 = arith.constant dense<0.000000e+00> : vector<20xf32>
    %153 = vector.multi_reduction <add>, %152, %cst_83 [0] : vector<12x20xf32> to vector<20xf32>
    %154 = vector.shape_cast %153 : vector<20xf32> to vector<1x20xf32>
    %cst_84 = arith.constant dense<0.000000e+00> : vector<20x16xf32>
    %155 = tpu.matmul %0, %134, %cst_84 {dimension_numbers = #tpu.dot_dimension_numbers<[1], [0], [0], [1], [0, 0, 1, 1], [], []>} : vector<20x12xf32>, vector<12x16xf32>, vector<20x16xf32> -> vector<20x16xf32>
    %156 = arith.addf %150, %154 : vector<1x20xf32>
    %c0_85 = arith.constant 0 : index
    %c0_86 = arith.constant 0 : index
    %c0_87 = arith.constant 0 : index
    %157 = vector.load %arg21[%c0_85, %c0_86, %c0_87] : memref<2x1x16xf32, #tpu.memory_space<vmem>>, vector<1x1x16xf32>
    %158 = vector.shape_cast %157 : vector<1x1x16xf32> to vector<1x16xf32>
    %cst_88 = arith.constant 0.000000e+00 : f32
    %159 = vector.broadcast %cst_88 : f32 to vector<1x20xf32>
    %160 = arith.cmpf oge, %156, %159 : vector<1x20xf32>
    %cst_89 = arith.constant 0.00999999977 : f32
    %161 = vector.broadcast %cst_89 : f32 to vector<1x20xf32>
    %162 = arith.mulf %161, %156 : vector<1x20xf32>
    %163 = arith.select %160, %156, %162 : vector<1x20xi1>, vector<1x20xf32>
    %cst_90 = arith.constant 0.000000e+00 : f32
    %164 = vector.broadcast %cst_90 : f32 to vector<12x20xf32>
    %165 = arith.cmpf ogt, %2, %164 : vector<12x20xf32>
    %cst_91 = arith.constant -1.000000e+30 : f32
    %166 = vector.shape_cast %163 : vector<1x20xf32> to vector<1x20xf32>
    %167 = vector.broadcast %166 : vector<1x20xf32> to vector<12x20xf32>
    %168 = vector.broadcast %cst_91 : f32 to vector<12x20xf32>
    %169 = arith.select %165, %167, %168 : vector<12x20xi1>, vector<12x20xf32>
    %cst_92 = arith.constant dense<0xFF800000> : vector<12xf32>
    %170 = vector.multi_reduction <maximumf>, %169, %cst_92 [1] : vector<12x20xf32> to vector<12xf32>
    %171 = vector.shape_cast %170 : vector<12xf32> to vector<12x1xf32>
    %172 = vector.broadcast %171 : vector<12x1xf32> to vector<12x20xf32>
    %173 = arith.subf %169, %172 : vector<12x20xf32>
    %174 = math.exp %173 : vector<12x20xf32>
    %175 = arith.mulf %174, %2 : vector<12x20xf32>
    %cst_93 = arith.constant dense<0.000000e+00> : vector<12xf32>
    %176 = vector.multi_reduction <add>, %175, %cst_93 [1] : vector<12x20xf32> to vector<12xf32>
    %177 = vector.shape_cast %176 : vector<12xf32> to vector<12x1xf32>
    %cst_94 = arith.constant 1.000000e-16 : f32
    %178 = vector.broadcast %cst_94 : f32 to vector<12x1xf32>
    %179 = arith.addf %177, %178 : vector<12x1xf32>
    %180 = tpu.reciprocal %179 {approx = true} : vector<12x1xf32> -> vector<12x1xf32>
    %181 = vector.broadcast %180 : vector<12x1xf32> to vector<12x20xf32>
    %182 = arith.mulf %175, %181 : vector<12x20xf32>
    %cst_95 = arith.constant dense<0.000000e+00> : vector<12x16xf32>
    %183 = tpu.matmul %182, %155, %cst_95 {dimension_numbers = #tpu.dot_dimension_numbers<[1], [0], [0], [1], [0, 0, 1, 1], [], []>} : vector<12x20xf32>, vector<20x16xf32>, vector<12x16xf32> -> vector<12x16xf32>
    %184 = vector.broadcast %158 : vector<1x16xf32> to vector<12x16xf32>
    %185 = arith.addf %183, %184 : vector<12x16xf32>
    %cst_96 = arith.constant 0.000000e+00 : f32
    %186 = vector.broadcast %cst_96 : f32 to vector<12x16xf32>
    %187 = arith.cmpf ogt, %185, %186 : vector<12x16xf32>
    %cst_97 = arith.constant 0.000000e+00 : f32
    %188 = vector.broadcast %cst_97 : f32 to vector<12x16xf32>
    %189 = arith.minimumf %185, %188 : vector<12x16xf32>
    %190 = math.exp %189 : vector<12x16xf32>
    %cst_98 = arith.constant 1.000000e+00 : f32
    %191 = vector.broadcast %cst_98 : f32 to vector<12x16xf32>
    %192 = arith.subf %190, %191 : vector<12x16xf32>
    %193 = arith.select %187, %185, %192 : vector<12x16xi1>, vector<12x16xf32>
    %c0_99 = arith.constant 0 : index
    %c0_100 = arith.constant 0 : index
    %c0_101 = arith.constant 0 : index
    %194 = vector.load %arg22[%c0_99, %c0_100, %c0_101] : memref<2x16x384xf32, #tpu.memory_space<vmem>>, vector<1x16x384xf32>
    %195 = vector.shape_cast %194 : vector<1x16x384xf32> to vector<16x384xf32>
    %c0_102 = arith.constant 0 : index
    %c0_103 = arith.constant 0 : index
    %c0_104 = arith.constant 0 : index
    %196 = vector.load %arg23[%c0_102, %c0_103, %c0_104] : memref<2x16x384xf32, #tpu.memory_space<vmem>>, vector<1x16x384xf32>
    %197 = vector.shape_cast %196 : vector<1x16x384xf32> to vector<16x384xf32>
    %c0_105 = arith.constant 0 : index
    %c0_106 = arith.constant 0 : index
    %c0_107 = arith.constant 0 : index
    %198 = vector.load %arg24[%c0_105, %c0_106, %c0_107] : memref<2x1x384xf32, #tpu.memory_space<vmem>>, vector<1x1x384xf32>
    %199 = vector.shape_cast %198 : vector<1x1x384xf32> to vector<1x384xf32>
    %c0_108 = arith.constant 0 : index
    %c0_109 = arith.constant 0 : index
    %c0_110 = arith.constant 0 : index
    %200 = vector.load %arg25[%c0_108, %c0_109, %c0_110] : memref<2x1x384xf32, #tpu.memory_space<vmem>>, vector<1x1x384xf32>
    %201 = vector.shape_cast %200 : vector<1x1x384xf32> to vector<1x384xf32>
    %cst_111 = arith.constant dense<0.000000e+00> : vector<12x384xf32>
    %202 = tpu.matmul %193, %195, %cst_111 {dimension_numbers = #tpu.dot_dimension_numbers<[1], [0], [0], [1], [0, 0, 1, 1], [], []>} : vector<12x16xf32>, vector<16x384xf32>, vector<12x384xf32> -> vector<12x384xf32>
    %203 = vector.broadcast %199 : vector<1x384xf32> to vector<12x384xf32>
    %204 = arith.addf %202, %203 : vector<12x384xf32>
    %cst_112 = arith.constant dense<0.000000e+00> : vector<12x384xf32>
    %205 = tpu.matmul %131, %197, %cst_112 {dimension_numbers = #tpu.dot_dimension_numbers<[1], [0], [0], [1], [0, 0, 1, 1], [], []>} : vector<12x16xf32>, vector<16x384xf32>, vector<12x384xf32> -> vector<12x384xf32>
    %206 = vector.broadcast %201 : vector<1x384xf32> to vector<12x384xf32>
    %207 = arith.addf %205, %206 : vector<12x384xf32>
    %208 = vector.extract_strided_slice %204 {offsets = [0, 0], sizes = [12, 16], strides = [1, 1]} : vector<12x384xf32> to vector<12x16xf32>
    %209 = vector.extract_strided_slice %207 {offsets = [0, 0], sizes = [12, 16], strides = [1, 1]} : vector<12x384xf32> to vector<12x16xf32>
    %210 = arith.addf %208, %209 : vector<12x16xf32>
    %cst_113 = arith.constant 0.000000e+00 : f32
    %211 = vector.broadcast %cst_113 : f32 to vector<12x16xf32>
    %212 = arith.subf %211, %210 : vector<12x16xf32>
    %213 = math.exp %212 : vector<12x16xf32>
    %cst_114 = arith.constant 1.000000e+00 : f32
    %214 = vector.broadcast %cst_114 : f32 to vector<12x16xf32>
    %215 = arith.addf %214, %213 : vector<12x16xf32>
    %cst_115 = arith.constant 1.000000e+00 : f32
    %216 = vector.broadcast %cst_115 : f32 to vector<12x16xf32>
    %217 = arith.divf %216, %215 : vector<12x16xf32>
    %218 = vector.extract_strided_slice %204 {offsets = [0, 128], sizes = [12, 16], strides = [1, 1]} : vector<12x384xf32> to vector<12x16xf32>
    %219 = vector.extract_strided_slice %207 {offsets = [0, 128], sizes = [12, 16], strides = [1, 1]} : vector<12x384xf32> to vector<12x16xf32>
    %220 = arith.addf %218, %219 : vector<12x16xf32>
    %cst_116 = arith.constant 0.000000e+00 : f32
    %221 = vector.broadcast %cst_116 : f32 to vector<12x16xf32>
    %222 = arith.subf %221, %220 : vector<12x16xf32>
    %223 = math.exp %222 : vector<12x16xf32>
    %cst_117 = arith.constant 1.000000e+00 : f32
    %224 = vector.broadcast %cst_117 : f32 to vector<12x16xf32>
    %225 = arith.addf %224, %223 : vector<12x16xf32>
    %cst_118 = arith.constant 1.000000e+00 : f32
    %226 = vector.broadcast %cst_118 : f32 to vector<12x16xf32>
    %227 = arith.divf %226, %225 : vector<12x16xf32>
    %228 = vector.extract_strided_slice %204 {offsets = [0, 256], sizes = [12, 16], strides = [1, 1]} : vector<12x384xf32> to vector<12x16xf32>
    %229 = vector.extract_strided_slice %207 {offsets = [0, 256], sizes = [12, 16], strides = [1, 1]} : vector<12x384xf32> to vector<12x16xf32>
    %230 = arith.mulf %217, %229 : vector<12x16xf32>
    %231 = arith.addf %228, %230 : vector<12x16xf32>
    %232 = math.tanh %231 : vector<12x16xf32>
    %cst_119 = arith.constant 1.000000e+00 : f32
    %233 = vector.broadcast %cst_119 : f32 to vector<12x16xf32>
    %234 = arith.subf %233, %227 : vector<12x16xf32>
    %235 = arith.mulf %234, %232 : vector<12x16xf32>
    %236 = arith.mulf %227, %131 : vector<12x16xf32>
    %237 = arith.addf %235, %236 : vector<12x16xf32>
    %cst_120 = arith.constant 0.000000e+00 : f32
    %238 = vector.broadcast %cst_120 : f32 to vector<12x16xf32>
    %239 = arith.maximumf %237, %238 : vector<12x16xf32>
    %c1 = arith.constant 1 : index
    %c0_121 = arith.constant 0 : index
    %c0_122 = arith.constant 0 : index
    %240 = vector.load %arg18[%c1, %c0_121, %c0_122] : memref<2x16x16xf32, #tpu.memory_space<vmem>>, vector<1x16x16xf32>
    %241 = vector.shape_cast %240 : vector<1x16x16xf32> to vector<16x16xf32>
    %cst_123 = arith.constant dense<0.000000e+00> : vector<12x16xf32>
    %242 = tpu.matmul %239, %241, %cst_123 {dimension_numbers = #tpu.dot_dimension_numbers<[1], [0], [0], [1], [0, 0, 1, 1], [], []>} : vector<12x16xf32>, vector<16x16xf32>, vector<12x16xf32> -> vector<12x16xf32>
    %c1_124 = arith.constant 1 : index
    %c0_125 = arith.constant 0 : index
    %c0_126 = arith.constant 0 : index
    %243 = vector.load %arg19[%c1_124, %c0_125, %c0_126] : memref<2x1x16xf32, #tpu.memory_space<vmem>>, vector<1x1x16xf32>
    %244 = vector.shape_cast %243 : vector<1x1x16xf32> to vector<1x16xf32>
    %245 = vector.broadcast %244 : vector<1x16xf32> to vector<12x16xf32>
    %246 = arith.mulf %242, %245 : vector<12x16xf32>
    %cst_127 = arith.constant dense<0.000000e+00> : vector<12xf32>
    %247 = vector.multi_reduction <add>, %246, %cst_127 [1] : vector<12x16xf32> to vector<12xf32>
    %248 = vector.shape_cast %247 : vector<12xf32> to vector<12x1xf32>
    %c1_128 = arith.constant 1 : index
    %c0_129 = arith.constant 0 : index
    %c0_130 = arith.constant 0 : index
    %249 = vector.load %arg20[%c1_128, %c0_129, %c0_130] : memref<2x1x16xf32, #tpu.memory_space<vmem>>, vector<1x1x16xf32>
    %250 = vector.shape_cast %249 : vector<1x1x16xf32> to vector<1x16xf32>
    %251 = vector.broadcast %250 : vector<1x16xf32> to vector<12x16xf32>
    %252 = arith.mulf %242, %251 : vector<12x16xf32>
    %cst_131 = arith.constant dense<0.000000e+00> : vector<12xf32>
    %253 = vector.multi_reduction <add>, %252, %cst_131 [1] : vector<12x16xf32> to vector<12xf32>
    %254 = vector.shape_cast %253 : vector<12xf32> to vector<12x1xf32>
    %255 = vector.broadcast %248 : vector<12x1xf32> to vector<12x20xf32>
    %256 = arith.mulf %1, %255 : vector<12x20xf32>
    %cst_132 = arith.constant dense<0.000000e+00> : vector<20xf32>
    %257 = vector.multi_reduction <add>, %256, %cst_132 [0] : vector<12x20xf32> to vector<20xf32>
    %258 = vector.shape_cast %257 : vector<20xf32> to vector<1x20xf32>
    %259 = vector.broadcast %254 : vector<12x1xf32> to vector<12x20xf32>
    %260 = arith.mulf %2, %259 : vector<12x20xf32>
    %cst_133 = arith.constant dense<0.000000e+00> : vector<20xf32>
    %261 = vector.multi_reduction <add>, %260, %cst_133 [0] : vector<12x20xf32> to vector<20xf32>
    %262 = vector.shape_cast %261 : vector<20xf32> to vector<1x20xf32>
    %cst_134 = arith.constant dense<0.000000e+00> : vector<20x16xf32>
    %263 = tpu.matmul %0, %242, %cst_134 {dimension_numbers = #tpu.dot_dimension_numbers<[1], [0], [0], [1], [0, 0, 1, 1], [], []>} : vector<20x12xf32>, vector<12x16xf32>, vector<20x16xf32> -> vector<20x16xf32>
    %264 = arith.addf %258, %262 : vector<1x20xf32>
    %c1_135 = arith.constant 1 : index
    %c0_136 = arith.constant 0 : index
    %c0_137 = arith.constant 0 : index
    %265 = vector.load %arg21[%c1_135, %c0_136, %c0_137] : memref<2x1x16xf32, #tpu.memory_space<vmem>>, vector<1x1x16xf32>
    %266 = vector.shape_cast %265 : vector<1x1x16xf32> to vector<1x16xf32>
    %cst_138 = arith.constant 0.000000e+00 : f32
    %267 = vector.broadcast %cst_138 : f32 to vector<1x20xf32>
    %268 = arith.cmpf oge, %264, %267 : vector<1x20xf32>
    %cst_139 = arith.constant 0.00999999977 : f32
    %269 = vector.broadcast %cst_139 : f32 to vector<1x20xf32>
    %270 = arith.mulf %269, %264 : vector<1x20xf32>
    %271 = arith.select %268, %264, %270 : vector<1x20xi1>, vector<1x20xf32>
    %cst_140 = arith.constant 0.000000e+00 : f32
    %272 = vector.broadcast %cst_140 : f32 to vector<12x20xf32>
    %273 = arith.cmpf ogt, %2, %272 : vector<12x20xf32>
    %cst_141 = arith.constant -1.000000e+30 : f32
    %274 = vector.shape_cast %271 : vector<1x20xf32> to vector<1x20xf32>
    %275 = vector.broadcast %274 : vector<1x20xf32> to vector<12x20xf32>
    %276 = vector.broadcast %cst_141 : f32 to vector<12x20xf32>
    %277 = arith.select %273, %275, %276 : vector<12x20xi1>, vector<12x20xf32>
    %cst_142 = arith.constant dense<0xFF800000> : vector<12xf32>
    %278 = vector.multi_reduction <maximumf>, %277, %cst_142 [1] : vector<12x20xf32> to vector<12xf32>
    %279 = vector.shape_cast %278 : vector<12xf32> to vector<12x1xf32>
    %280 = vector.broadcast %279 : vector<12x1xf32> to vector<12x20xf32>
    %281 = arith.subf %277, %280 : vector<12x20xf32>
    %282 = math.exp %281 : vector<12x20xf32>
    %283 = arith.mulf %282, %2 : vector<12x20xf32>
    %cst_143 = arith.constant dense<0.000000e+00> : vector<12xf32>
    %284 = vector.multi_reduction <add>, %283, %cst_143 [1] : vector<12x20xf32> to vector<12xf32>
    %285 = vector.shape_cast %284 : vector<12xf32> to vector<12x1xf32>
    %cst_144 = arith.constant 1.000000e-16 : f32
    %286 = vector.broadcast %cst_144 : f32 to vector<12x1xf32>
    %287 = arith.addf %285, %286 : vector<12x1xf32>
    %288 = tpu.reciprocal %287 {approx = true} : vector<12x1xf32> -> vector<12x1xf32>
    %289 = vector.broadcast %288 : vector<12x1xf32> to vector<12x20xf32>
    %290 = arith.mulf %283, %289 : vector<12x20xf32>
    %cst_145 = arith.constant dense<0.000000e+00> : vector<12x16xf32>
    %291 = tpu.matmul %290, %263, %cst_145 {dimension_numbers = #tpu.dot_dimension_numbers<[1], [0], [0], [1], [0, 0, 1, 1], [], []>} : vector<12x20xf32>, vector<20x16xf32>, vector<12x16xf32> -> vector<12x16xf32>
    %292 = vector.broadcast %266 : vector<1x16xf32> to vector<12x16xf32>
    %293 = arith.addf %291, %292 : vector<12x16xf32>
    %cst_146 = arith.constant 0.000000e+00 : f32
    %294 = vector.broadcast %cst_146 : f32 to vector<12x16xf32>
    %295 = arith.cmpf ogt, %293, %294 : vector<12x16xf32>
    %cst_147 = arith.constant 0.000000e+00 : f32
    %296 = vector.broadcast %cst_147 : f32 to vector<12x16xf32>
    %297 = arith.minimumf %293, %296 : vector<12x16xf32>
    %298 = math.exp %297 : vector<12x16xf32>
    %cst_148 = arith.constant 1.000000e+00 : f32
    %299 = vector.broadcast %cst_148 : f32 to vector<12x16xf32>
    %300 = arith.subf %298, %299 : vector<12x16xf32>
    %301 = arith.select %295, %293, %300 : vector<12x16xi1>, vector<12x16xf32>
    %c1_149 = arith.constant 1 : index
    %c0_150 = arith.constant 0 : index
    %c0_151 = arith.constant 0 : index
    %302 = vector.load %arg22[%c1_149, %c0_150, %c0_151] : memref<2x16x384xf32, #tpu.memory_space<vmem>>, vector<1x16x384xf32>
    %303 = vector.shape_cast %302 : vector<1x16x384xf32> to vector<16x384xf32>
    %c1_152 = arith.constant 1 : index
    %c0_153 = arith.constant 0 : index
    %c0_154 = arith.constant 0 : index
    %304 = vector.load %arg23[%c1_152, %c0_153, %c0_154] : memref<2x16x384xf32, #tpu.memory_space<vmem>>, vector<1x16x384xf32>
    %305 = vector.shape_cast %304 : vector<1x16x384xf32> to vector<16x384xf32>
    %c1_155 = arith.constant 1 : index
    %c0_156 = arith.constant 0 : index
    %c0_157 = arith.constant 0 : index
    %306 = vector.load %arg24[%c1_155, %c0_156, %c0_157] : memref<2x1x384xf32, #tpu.memory_space<vmem>>, vector<1x1x384xf32>
    %307 = vector.shape_cast %306 : vector<1x1x384xf32> to vector<1x384xf32>
    %c1_158 = arith.constant 1 : index
    %c0_159 = arith.constant 0 : index
    %c0_160 = arith.constant 0 : index
    %308 = vector.load %arg25[%c1_158, %c0_159, %c0_160] : memref<2x1x384xf32, #tpu.memory_space<vmem>>, vector<1x1x384xf32>
    %309 = vector.shape_cast %308 : vector<1x1x384xf32> to vector<1x384xf32>
    %cst_161 = arith.constant dense<0.000000e+00> : vector<12x384xf32>
    %310 = tpu.matmul %301, %303, %cst_161 {dimension_numbers = #tpu.dot_dimension_numbers<[1], [0], [0], [1], [0, 0, 1, 1], [], []>} : vector<12x16xf32>, vector<16x384xf32>, vector<12x384xf32> -> vector<12x384xf32>
    %311 = vector.broadcast %307 : vector<1x384xf32> to vector<12x384xf32>
    %312 = arith.addf %310, %311 : vector<12x384xf32>
    %cst_162 = arith.constant dense<0.000000e+00> : vector<12x384xf32>
    %313 = tpu.matmul %239, %305, %cst_162 {dimension_numbers = #tpu.dot_dimension_numbers<[1], [0], [0], [1], [0, 0, 1, 1], [], []>} : vector<12x16xf32>, vector<16x384xf32>, vector<12x384xf32> -> vector<12x384xf32>
    %314 = vector.broadcast %309 : vector<1x384xf32> to vector<12x384xf32>
    %315 = arith.addf %313, %314 : vector<12x384xf32>
    %316 = vector.extract_strided_slice %312 {offsets = [0, 0], sizes = [12, 16], strides = [1, 1]} : vector<12x384xf32> to vector<12x16xf32>
    %317 = vector.extract_strided_slice %315 {offsets = [0, 0], sizes = [12, 16], strides = [1, 1]} : vector<12x384xf32> to vector<12x16xf32>
    %318 = arith.addf %316, %317 : vector<12x16xf32>
    %cst_163 = arith.constant 0.000000e+00 : f32
    %319 = vector.broadcast %cst_163 : f32 to vector<12x16xf32>
    %320 = arith.subf %319, %318 : vector<12x16xf32>
    %321 = math.exp %320 : vector<12x16xf32>
    %cst_164 = arith.constant 1.000000e+00 : f32
    %322 = vector.broadcast %cst_164 : f32 to vector<12x16xf32>
    %323 = arith.addf %322, %321 : vector<12x16xf32>
    %cst_165 = arith.constant 1.000000e+00 : f32
    %324 = vector.broadcast %cst_165 : f32 to vector<12x16xf32>
    %325 = arith.divf %324, %323 : vector<12x16xf32>
    %326 = vector.extract_strided_slice %312 {offsets = [0, 128], sizes = [12, 16], strides = [1, 1]} : vector<12x384xf32> to vector<12x16xf32>
    %327 = vector.extract_strided_slice %315 {offsets = [0, 128], sizes = [12, 16], strides = [1, 1]} : vector<12x384xf32> to vector<12x16xf32>
    %328 = arith.addf %326, %327 : vector<12x16xf32>
    %cst_166 = arith.constant 0.000000e+00 : f32
    %329 = vector.broadcast %cst_166 : f32 to vector<12x16xf32>
    %330 = arith.subf %329, %328 : vector<12x16xf32>
    %331 = math.exp %330 : vector<12x16xf32>
    %cst_167 = arith.constant 1.000000e+00 : f32
    %332 = vector.broadcast %cst_167 : f32 to vector<12x16xf32>
    %333 = arith.addf %332, %331 : vector<12x16xf32>
    %cst_168 = arith.constant 1.000000e+00 : f32
    %334 = vector.broadcast %cst_168 : f32 to vector<12x16xf32>
    %335 = arith.divf %334, %333 : vector<12x16xf32>
    %336 = vector.extract_strided_slice %312 {offsets = [0, 256], sizes = [12, 16], strides = [1, 1]} : vector<12x384xf32> to vector<12x16xf32>
    %337 = vector.extract_strided_slice %315 {offsets = [0, 256], sizes = [12, 16], strides = [1, 1]} : vector<12x384xf32> to vector<12x16xf32>
    %338 = arith.mulf %325, %337 : vector<12x16xf32>
    %339 = arith.addf %336, %338 : vector<12x16xf32>
    %340 = math.tanh %339 : vector<12x16xf32>
    %cst_169 = arith.constant 1.000000e+00 : f32
    %341 = vector.broadcast %cst_169 : f32 to vector<12x16xf32>
    %342 = arith.subf %341, %335 : vector<12x16xf32>
    %343 = arith.mulf %342, %340 : vector<12x16xf32>
    %344 = arith.mulf %335, %239 : vector<12x16xf32>
    %345 = arith.addf %343, %344 : vector<12x16xf32>
    %cst_170 = arith.constant 0.000000e+00 : f32
    %346 = vector.broadcast %cst_170 : f32 to vector<12x16xf32>
    %347 = arith.maximumf %345, %346 : vector<12x16xf32>
    %cst_171 = arith.constant dense<0.000000e+00> : vector<2x16xf32>
    %348 = tpu.matmul %3, %347, %cst_171 {dimension_numbers = #tpu.dot_dimension_numbers<[1], [0], [0], [1], [0, 0, 1, 1], [], []>} : vector<2x12xf32>, vector<12x16xf32>, vector<2x16xf32> -> vector<2x16xf32>
    %cst_172 = arith.constant 0.000000e+00 : f32
    %349 = vector.broadcast %cst_172 : f32 to vector<2x16xf32>
    %350 = arith.maximumf %348, %349 : vector<2x16xf32>
    %c0_173 = arith.constant 0 : index
    %c0_174 = arith.constant 0 : index
    %351 = vector.load %arg26[%c0_173, %c0_174] : memref<16x16xf32, #tpu.memory_space<vmem>>, vector<16x16xf32>
    %c0_175 = arith.constant 0 : index
    %c0_176 = arith.constant 0 : index
    %352 = vector.load %arg28[%c0_175, %c0_176] : memref<1x16xf32, #tpu.memory_space<vmem>>, vector<1x16xf32>
    %c0_177 = arith.constant 0 : index
    %c0_178 = arith.constant 0 : index
    %353 = vector.load %arg29[%c0_177, %c0_178] : memref<1x16xf32, #tpu.memory_space<vmem>>, vector<1x16xf32>
    %c0_179 = arith.constant 0 : index
    %c0_180 = arith.constant 0 : index
    %354 = vector.load %arg30[%c0_179, %c0_180] : memref<16x384xf32, #tpu.memory_space<vmem>>, vector<16x384xf32>
    %c0_181 = arith.constant 0 : index
    %c0_182 = arith.constant 0 : index
    %355 = vector.load %arg31[%c0_181, %c0_182] : memref<16x384xf32, #tpu.memory_space<vmem>>, vector<16x384xf32>
    %c0_183 = arith.constant 0 : index
    %c0_184 = arith.constant 0 : index
    %356 = vector.load %arg32[%c0_183, %c0_184] : memref<1x384xf32, #tpu.memory_space<vmem>>, vector<1x384xf32>
    %c0_185 = arith.constant 0 : index
    %c0_186 = arith.constant 0 : index
    %357 = vector.load %arg33[%c0_185, %c0_186] : memref<1x384xf32, #tpu.memory_space<vmem>>, vector<1x384xf32>
    %cst_187 = arith.constant dense<0.000000e+00> : vector<12x16xf32>
    %358 = tpu.matmul %347, %351, %cst_187 {dimension_numbers = #tpu.dot_dimension_numbers<[1], [0], [0], [1], [0, 0, 1, 1], [], []>} : vector<12x16xf32>, vector<16x16xf32>, vector<12x16xf32> -> vector<12x16xf32>
    %c0_188 = arith.constant 0 : index
    %c0_189 = arith.constant 0 : index
    %359 = vector.load %arg27[%c0_188, %c0_189] : memref<1x16xf32, #tpu.memory_space<vmem>>, vector<1x16xf32>
    %360 = vector.broadcast %359 : vector<1x16xf32> to vector<12x16xf32>
    %361 = arith.mulf %358, %360 : vector<12x16xf32>
    %cst_190 = arith.constant dense<0.000000e+00> : vector<12xf32>
    %362 = vector.multi_reduction <add>, %361, %cst_190 [1] : vector<12x16xf32> to vector<12xf32>
    %363 = vector.shape_cast %362 : vector<12xf32> to vector<12x1xf32>
    %364 = tpu.iota {dimensions = array<i32: 0>} : vector<12x12xi32>
    %365 = tpu.iota {dimensions = array<i32: 1>} : vector<12x12xi32>
    %366 = arith.cmpi eq, %364, %365 : vector<12x12xi32>
    %cst_191 = arith.constant 0.000000e+00 : f32
    %367 = vector.shape_cast %363 : vector<12x1xf32> to vector<12x1xf32>
    %368 = vector.broadcast %367 : vector<12x1xf32> to vector<12x12xf32>
    %369 = vector.broadcast %cst_191 : f32 to vector<12x12xf32>
    %370 = arith.select %366, %368, %369 : vector<12x12xi1>, vector<12x12xf32>
    %cst_192 = arith.constant dense<0.000000e+00> : vector<12xf32>
    %371 = vector.multi_reduction <add>, %370, %cst_192 [0] : vector<12x12xf32> to vector<12xf32>
    %372 = vector.shape_cast %371 : vector<12xf32> to vector<1x12xf32>
    %c0_i32 = arith.constant 0 : i32
    %cst_193 = arith.constant dense<0.000000e+00> : vector<2x16xf32>
    %373 = tpu.matmul %350, %351, %cst_193 {dimension_numbers = #tpu.dot_dimension_numbers<[1], [0], [0], [1], [0, 0, 1, 1], [], []>} : vector<2x16xf32>, vector<16x16xf32>, vector<2x16xf32> -> vector<2x16xf32>
    %374 = vector.broadcast %352 : vector<1x16xf32> to vector<2x16xf32>
    %375 = arith.mulf %373, %374 : vector<2x16xf32>
    %cst_194 = arith.constant dense<0.000000e+00> : vector<2xf32>
    %376 = vector.multi_reduction <add>, %375, %cst_194 [1] : vector<2x16xf32> to vector<2xf32>
    %377 = vector.shape_cast %376 : vector<2xf32> to vector<2x1xf32>
    %378 = vector.broadcast %377 : vector<2x1xf32> to vector<2x12xf32>
    %379 = arith.mulf %3, %378 : vector<2x12xf32>
    %cst_195 = arith.constant dense<0.000000e+00> : vector<12xf32>
    %380 = vector.multi_reduction <add>, %379, %cst_195 [0] : vector<2x12xf32> to vector<12xf32>
    %381 = vector.shape_cast %380 : vector<12xf32> to vector<1x12xf32>
    %382 = arith.addf %372, %381 : vector<1x12xf32>
    %cst_196 = arith.constant 0.000000e+00 : f32
    %383 = vector.broadcast %cst_196 : f32 to vector<1x12xf32>
    %384 = arith.cmpf oge, %382, %383 : vector<1x12xf32>
    %cst_197 = arith.constant 0.00999999977 : f32
    %385 = vector.broadcast %cst_197 : f32 to vector<1x12xf32>
    %386 = arith.mulf %385, %382 : vector<1x12xf32>
    %387 = arith.select %384, %382, %386 : vector<1x12xi1>, vector<1x12xf32>
    %cst_198 = arith.constant 0.000000e+00 : f32
    %388 = vector.broadcast %cst_198 : f32 to vector<2x12xf32>
    %389 = arith.cmpf ogt, %3, %388 : vector<2x12xf32>
    %cst_199 = arith.constant -1.000000e+30 : f32
    %390 = vector.shape_cast %387 : vector<1x12xf32> to vector<1x12xf32>
    %391 = vector.broadcast %390 : vector<1x12xf32> to vector<2x12xf32>
    %392 = vector.broadcast %cst_199 : f32 to vector<2x12xf32>
    %393 = arith.select %389, %391, %392 : vector<2x12xi1>, vector<2x12xf32>
    %cst_200 = arith.constant dense<0xFF800000> : vector<2xf32>
    %394 = vector.multi_reduction <maximumf>, %393, %cst_200 [1] : vector<2x12xf32> to vector<2xf32>
    %395 = vector.shape_cast %394 : vector<2xf32> to vector<2x1xf32>
    %396 = vector.broadcast %395 : vector<2x1xf32> to vector<2x12xf32>
    %397 = arith.subf %393, %396 : vector<2x12xf32>
    %398 = math.exp %397 : vector<2x12xf32>
    %399 = arith.mulf %398, %3 : vector<2x12xf32>
    %cst_201 = arith.constant dense<0.000000e+00> : vector<2xf32>
    %400 = vector.multi_reduction <add>, %399, %cst_201 [1] : vector<2x12xf32> to vector<2xf32>
    %401 = vector.shape_cast %400 : vector<2xf32> to vector<2x1xf32>
    %cst_202 = arith.constant 1.000000e-16 : f32
    %402 = vector.broadcast %cst_202 : f32 to vector<2x1xf32>
    %403 = arith.addf %401, %402 : vector<2x1xf32>
    %404 = tpu.reciprocal %403 {approx = true} : vector<2x1xf32> -> vector<2x1xf32>
    %405 = vector.broadcast %404 : vector<2x1xf32> to vector<2x12xf32>
    %406 = arith.mulf %399, %405 : vector<2x12xf32>
    %cst_203 = arith.constant dense<0.000000e+00> : vector<2x16xf32>
    %407 = tpu.matmul %406, %358, %cst_203 {dimension_numbers = #tpu.dot_dimension_numbers<[1], [0], [0], [1], [0, 0, 1, 1], [], []>} : vector<2x12xf32>, vector<12x16xf32>, vector<2x16xf32> -> vector<2x16xf32>
    %408 = vector.broadcast %353 : vector<1x16xf32> to vector<2x16xf32>
    %409 = arith.addf %407, %408 : vector<2x16xf32>
    %cst_204 = arith.constant 0.000000e+00 : f32
    %410 = vector.broadcast %cst_204 : f32 to vector<2x16xf32>
    %411 = arith.cmpf ogt, %409, %410 : vector<2x16xf32>
    %cst_205 = arith.constant 0.000000e+00 : f32
    %412 = vector.broadcast %cst_205 : f32 to vector<2x16xf32>
    %413 = arith.minimumf %409, %412 : vector<2x16xf32>
    %414 = math.exp %413 : vector<2x16xf32>
    %cst_206 = arith.constant 1.000000e+00 : f32
    %415 = vector.broadcast %cst_206 : f32 to vector<2x16xf32>
    %416 = arith.subf %414, %415 : vector<2x16xf32>
    %417 = arith.select %411, %409, %416 : vector<2x16xi1>, vector<2x16xf32>
    %cst_207 = arith.constant dense<0.000000e+00> : vector<2x384xf32>
    %418 = tpu.matmul %417, %354, %cst_207 {dimension_numbers = #tpu.dot_dimension_numbers<[1], [0], [0], [1], [0, 0, 1, 1], [], []>} : vector<2x16xf32>, vector<16x384xf32>, vector<2x384xf32> -> vector<2x384xf32>
    %419 = vector.broadcast %356 : vector<1x384xf32> to vector<2x384xf32>
    %420 = arith.addf %418, %419 : vector<2x384xf32>
    %cst_208 = arith.constant dense<0.000000e+00> : vector<2x384xf32>
    %421 = tpu.matmul %350, %355, %cst_208 {dimension_numbers = #tpu.dot_dimension_numbers<[1], [0], [0], [1], [0, 0, 1, 1], [], []>} : vector<2x16xf32>, vector<16x384xf32>, vector<2x384xf32> -> vector<2x384xf32>
    %422 = vector.broadcast %357 : vector<1x384xf32> to vector<2x384xf32>
    %423 = arith.addf %421, %422 : vector<2x384xf32>
    %424 = vector.extract_strided_slice %420 {offsets = [0, 0], sizes = [2, 16], strides = [1, 1]} : vector<2x384xf32> to vector<2x16xf32>
    %425 = vector.extract_strided_slice %423 {offsets = [0, 0], sizes = [2, 16], strides = [1, 1]} : vector<2x384xf32> to vector<2x16xf32>
    %426 = arith.addf %424, %425 : vector<2x16xf32>
    %cst_209 = arith.constant 0.000000e+00 : f32
    %427 = vector.broadcast %cst_209 : f32 to vector<2x16xf32>
    %428 = arith.subf %427, %426 : vector<2x16xf32>
    %429 = math.exp %428 : vector<2x16xf32>
    %cst_210 = arith.constant 1.000000e+00 : f32
    %430 = vector.broadcast %cst_210 : f32 to vector<2x16xf32>
    %431 = arith.addf %430, %429 : vector<2x16xf32>
    %cst_211 = arith.constant 1.000000e+00 : f32
    %432 = vector.broadcast %cst_211 : f32 to vector<2x16xf32>
    %433 = arith.divf %432, %431 : vector<2x16xf32>
    %434 = vector.extract_strided_slice %420 {offsets = [0, 128], sizes = [2, 16], strides = [1, 1]} : vector<2x384xf32> to vector<2x16xf32>
    %435 = vector.extract_strided_slice %423 {offsets = [0, 128], sizes = [2, 16], strides = [1, 1]} : vector<2x384xf32> to vector<2x16xf32>
    %436 = arith.addf %434, %435 : vector<2x16xf32>
    %cst_212 = arith.constant 0.000000e+00 : f32
    %437 = vector.broadcast %cst_212 : f32 to vector<2x16xf32>
    %438 = arith.subf %437, %436 : vector<2x16xf32>
    %439 = math.exp %438 : vector<2x16xf32>
    %cst_213 = arith.constant 1.000000e+00 : f32
    %440 = vector.broadcast %cst_213 : f32 to vector<2x16xf32>
    %441 = arith.addf %440, %439 : vector<2x16xf32>
    %cst_214 = arith.constant 1.000000e+00 : f32
    %442 = vector.broadcast %cst_214 : f32 to vector<2x16xf32>
    %443 = arith.divf %442, %441 : vector<2x16xf32>
    %444 = vector.extract_strided_slice %420 {offsets = [0, 256], sizes = [2, 16], strides = [1, 1]} : vector<2x384xf32> to vector<2x16xf32>
    %445 = vector.extract_strided_slice %423 {offsets = [0, 256], sizes = [2, 16], strides = [1, 1]} : vector<2x384xf32> to vector<2x16xf32>
    %446 = arith.mulf %433, %445 : vector<2x16xf32>
    %447 = arith.addf %444, %446 : vector<2x16xf32>
    %448 = math.tanh %447 : vector<2x16xf32>
    %cst_215 = arith.constant 1.000000e+00 : f32
    %449 = vector.broadcast %cst_215 : f32 to vector<2x16xf32>
    %450 = arith.subf %449, %443 : vector<2x16xf32>
    %451 = arith.mulf %450, %448 : vector<2x16xf32>
    %452 = arith.mulf %443, %350 : vector<2x16xf32>
    %453 = arith.addf %451, %452 : vector<2x16xf32>
    %cst_216 = arith.constant 0.000000e+00 : f32
    %454 = vector.broadcast %cst_216 : f32 to vector<2x16xf32>
    %455 = arith.maximumf %453, %454 : vector<2x16xf32>
    %c1_i32 = arith.constant 1 : i32
    %cst_217 = arith.constant dense<0.000000e+00> : vector<2x16xf32>
    %456 = tpu.matmul %455, %351, %cst_217 {dimension_numbers = #tpu.dot_dimension_numbers<[1], [0], [0], [1], [0, 0, 1, 1], [], []>} : vector<2x16xf32>, vector<16x16xf32>, vector<2x16xf32> -> vector<2x16xf32>
    %457 = vector.broadcast %352 : vector<1x16xf32> to vector<2x16xf32>
    %458 = arith.mulf %456, %457 : vector<2x16xf32>
    %cst_218 = arith.constant dense<0.000000e+00> : vector<2xf32>
    %459 = vector.multi_reduction <add>, %458, %cst_218 [1] : vector<2x16xf32> to vector<2xf32>
    %460 = vector.shape_cast %459 : vector<2xf32> to vector<2x1xf32>
    %461 = vector.broadcast %460 : vector<2x1xf32> to vector<2x12xf32>
    %462 = arith.mulf %3, %461 : vector<2x12xf32>
    %cst_219 = arith.constant dense<0.000000e+00> : vector<12xf32>
    %463 = vector.multi_reduction <add>, %462, %cst_219 [0] : vector<2x12xf32> to vector<12xf32>
    %464 = vector.shape_cast %463 : vector<12xf32> to vector<1x12xf32>
    %465 = arith.addf %372, %464 : vector<1x12xf32>
    %cst_220 = arith.constant 0.000000e+00 : f32
    %466 = vector.broadcast %cst_220 : f32 to vector<1x12xf32>
    %467 = arith.cmpf oge, %465, %466 : vector<1x12xf32>
    %cst_221 = arith.constant 0.00999999977 : f32
    %468 = vector.broadcast %cst_221 : f32 to vector<1x12xf32>
    %469 = arith.mulf %468, %465 : vector<1x12xf32>
    %470 = arith.select %467, %465, %469 : vector<1x12xi1>, vector<1x12xf32>
    %cst_222 = arith.constant 0.000000e+00 : f32
    %471 = vector.broadcast %cst_222 : f32 to vector<2x12xf32>
    %472 = arith.cmpf ogt, %3, %471 : vector<2x12xf32>
    %cst_223 = arith.constant -1.000000e+30 : f32
    %473 = vector.shape_cast %470 : vector<1x12xf32> to vector<1x12xf32>
    %474 = vector.broadcast %473 : vector<1x12xf32> to vector<2x12xf32>
    %475 = vector.broadcast %cst_223 : f32 to vector<2x12xf32>
    %476 = arith.select %472, %474, %475 : vector<2x12xi1>, vector<2x12xf32>
    %cst_224 = arith.constant dense<0xFF800000> : vector<2xf32>
    %477 = vector.multi_reduction <maximumf>, %476, %cst_224 [1] : vector<2x12xf32> to vector<2xf32>
    %478 = vector.shape_cast %477 : vector<2xf32> to vector<2x1xf32>
    %479 = vector.broadcast %478 : vector<2x1xf32> to vector<2x12xf32>
    %480 = arith.subf %476, %479 : vector<2x12xf32>
    %481 = math.exp %480 : vector<2x12xf32>
    %482 = arith.mulf %481, %3 : vector<2x12xf32>
    %cst_225 = arith.constant dense<0.000000e+00> : vector<2xf32>
    %483 = vector.multi_reduction <add>, %482, %cst_225 [1] : vector<2x12xf32> to vector<2xf32>
    %484 = vector.shape_cast %483 : vector<2xf32> to vector<2x1xf32>
    %cst_226 = arith.constant 1.000000e-16 : f32
    %485 = vector.broadcast %cst_226 : f32 to vector<2x1xf32>
    %486 = arith.addf %484, %485 : vector<2x1xf32>
    %487 = tpu.reciprocal %486 {approx = true} : vector<2x1xf32> -> vector<2x1xf32>
    %488 = vector.broadcast %487 : vector<2x1xf32> to vector<2x12xf32>
    %489 = arith.mulf %482, %488 : vector<2x12xf32>
    %cst_227 = arith.constant dense<0.000000e+00> : vector<2x16xf32>
    %490 = tpu.matmul %489, %358, %cst_227 {dimension_numbers = #tpu.dot_dimension_numbers<[1], [0], [0], [1], [0, 0, 1, 1], [], []>} : vector<2x12xf32>, vector<12x16xf32>, vector<2x16xf32> -> vector<2x16xf32>
    %491 = vector.broadcast %353 : vector<1x16xf32> to vector<2x16xf32>
    %492 = arith.addf %490, %491 : vector<2x16xf32>
    %cst_228 = arith.constant 0.000000e+00 : f32
    %493 = vector.broadcast %cst_228 : f32 to vector<2x16xf32>
    %494 = arith.cmpf ogt, %492, %493 : vector<2x16xf32>
    %cst_229 = arith.constant 0.000000e+00 : f32
    %495 = vector.broadcast %cst_229 : f32 to vector<2x16xf32>
    %496 = arith.minimumf %492, %495 : vector<2x16xf32>
    %497 = math.exp %496 : vector<2x16xf32>
    %cst_230 = arith.constant 1.000000e+00 : f32
    %498 = vector.broadcast %cst_230 : f32 to vector<2x16xf32>
    %499 = arith.subf %497, %498 : vector<2x16xf32>
    %500 = arith.select %494, %492, %499 : vector<2x16xi1>, vector<2x16xf32>
    %cst_231 = arith.constant dense<0.000000e+00> : vector<2x384xf32>
    %501 = tpu.matmul %500, %354, %cst_231 {dimension_numbers = #tpu.dot_dimension_numbers<[1], [0], [0], [1], [0, 0, 1, 1], [], []>} : vector<2x16xf32>, vector<16x384xf32>, vector<2x384xf32> -> vector<2x384xf32>
    %502 = vector.broadcast %356 : vector<1x384xf32> to vector<2x384xf32>
    %503 = arith.addf %501, %502 : vector<2x384xf32>
    %cst_232 = arith.constant dense<0.000000e+00> : vector<2x384xf32>
    %504 = tpu.matmul %455, %355, %cst_232 {dimension_numbers = #tpu.dot_dimension_numbers<[1], [0], [0], [1], [0, 0, 1, 1], [], []>} : vector<2x16xf32>, vector<16x384xf32>, vector<2x384xf32> -> vector<2x384xf32>
    %505 = vector.broadcast %357 : vector<1x384xf32> to vector<2x384xf32>
    %506 = arith.addf %504, %505 : vector<2x384xf32>
    %507 = vector.extract_strided_slice %503 {offsets = [0, 0], sizes = [2, 16], strides = [1, 1]} : vector<2x384xf32> to vector<2x16xf32>
    %508 = vector.extract_strided_slice %506 {offsets = [0, 0], sizes = [2, 16], strides = [1, 1]} : vector<2x384xf32> to vector<2x16xf32>
    %509 = arith.addf %507, %508 : vector<2x16xf32>
    %cst_233 = arith.constant 0.000000e+00 : f32
    %510 = vector.broadcast %cst_233 : f32 to vector<2x16xf32>
    %511 = arith.subf %510, %509 : vector<2x16xf32>
    %512 = math.exp %511 : vector<2x16xf32>
    %cst_234 = arith.constant 1.000000e+00 : f32
    %513 = vector.broadcast %cst_234 : f32 to vector<2x16xf32>
    %514 = arith.addf %513, %512 : vector<2x16xf32>
    %cst_235 = arith.constant 1.000000e+00 : f32
    %515 = vector.broadcast %cst_235 : f32 to vector<2x16xf32>
    %516 = arith.divf %515, %514 : vector<2x16xf32>
    %517 = vector.extract_strided_slice %503 {offsets = [0, 128], sizes = [2, 16], strides = [1, 1]} : vector<2x384xf32> to vector<2x16xf32>
    %518 = vector.extract_strided_slice %506 {offsets = [0, 128], sizes = [2, 16], strides = [1, 1]} : vector<2x384xf32> to vector<2x16xf32>
    %519 = arith.addf %517, %518 : vector<2x16xf32>
    %cst_236 = arith.constant 0.000000e+00 : f32
    %520 = vector.broadcast %cst_236 : f32 to vector<2x16xf32>
    %521 = arith.subf %520, %519 : vector<2x16xf32>
    %522 = math.exp %521 : vector<2x16xf32>
    %cst_237 = arith.constant 1.000000e+00 : f32
    %523 = vector.broadcast %cst_237 : f32 to vector<2x16xf32>
    %524 = arith.addf %523, %522 : vector<2x16xf32>
    %cst_238 = arith.constant 1.000000e+00 : f32
    %525 = vector.broadcast %cst_238 : f32 to vector<2x16xf32>
    %526 = arith.divf %525, %524 : vector<2x16xf32>
    %527 = vector.extract_strided_slice %503 {offsets = [0, 256], sizes = [2, 16], strides = [1, 1]} : vector<2x384xf32> to vector<2x16xf32>
    %528 = vector.extract_strided_slice %506 {offsets = [0, 256], sizes = [2, 16], strides = [1, 1]} : vector<2x384xf32> to vector<2x16xf32>
    %529 = arith.mulf %516, %528 : vector<2x16xf32>
    %530 = arith.addf %527, %529 : vector<2x16xf32>
    %531 = math.tanh %530 : vector<2x16xf32>
    %cst_239 = arith.constant 1.000000e+00 : f32
    %532 = vector.broadcast %cst_239 : f32 to vector<2x16xf32>
    %533 = arith.subf %532, %526 : vector<2x16xf32>
    %534 = arith.mulf %533, %531 : vector<2x16xf32>
    %535 = arith.mulf %526, %455 : vector<2x16xf32>
    %536 = arith.addf %534, %535 : vector<2x16xf32>
    %cst_240 = arith.constant 0.000000e+00 : f32
    %537 = vector.broadcast %cst_240 : f32 to vector<2x16xf32>
    %538 = arith.maximumf %536, %537 : vector<2x16xf32>
    %c2_i32 = arith.constant 2 : i32
    %cst_241 = arith.constant dense<0.000000e+00> : vector<2x16xf32>
    %539 = tpu.matmul %538, %351, %cst_241 {dimension_numbers = #tpu.dot_dimension_numbers<[1], [0], [0], [1], [0, 0, 1, 1], [], []>} : vector<2x16xf32>, vector<16x16xf32>, vector<2x16xf32> -> vector<2x16xf32>
    %540 = vector.broadcast %352 : vector<1x16xf32> to vector<2x16xf32>
    %541 = arith.mulf %539, %540 : vector<2x16xf32>
    %cst_242 = arith.constant dense<0.000000e+00> : vector<2xf32>
    %542 = vector.multi_reduction <add>, %541, %cst_242 [1] : vector<2x16xf32> to vector<2xf32>
    %543 = vector.shape_cast %542 : vector<2xf32> to vector<2x1xf32>
    %544 = vector.broadcast %543 : vector<2x1xf32> to vector<2x12xf32>
    %545 = arith.mulf %3, %544 : vector<2x12xf32>
    %cst_243 = arith.constant dense<0.000000e+00> : vector<12xf32>
    %546 = vector.multi_reduction <add>, %545, %cst_243 [0] : vector<2x12xf32> to vector<12xf32>
    %547 = vector.shape_cast %546 : vector<12xf32> to vector<1x12xf32>
    %548 = arith.addf %372, %547 : vector<1x12xf32>
    %cst_244 = arith.constant 0.000000e+00 : f32
    %549 = vector.broadcast %cst_244 : f32 to vector<1x12xf32>
    %550 = arith.cmpf oge, %548, %549 : vector<1x12xf32>
    %cst_245 = arith.constant 0.00999999977 : f32
    %551 = vector.broadcast %cst_245 : f32 to vector<1x12xf32>
    %552 = arith.mulf %551, %548 : vector<1x12xf32>
    %553 = arith.select %550, %548, %552 : vector<1x12xi1>, vector<1x12xf32>
    %cst_246 = arith.constant 0.000000e+00 : f32
    %554 = vector.broadcast %cst_246 : f32 to vector<2x12xf32>
    %555 = arith.cmpf ogt, %3, %554 : vector<2x12xf32>
    %cst_247 = arith.constant -1.000000e+30 : f32
    %556 = vector.shape_cast %553 : vector<1x12xf32> to vector<1x12xf32>
    %557 = vector.broadcast %556 : vector<1x12xf32> to vector<2x12xf32>
    %558 = vector.broadcast %cst_247 : f32 to vector<2x12xf32>
    %559 = arith.select %555, %557, %558 : vector<2x12xi1>, vector<2x12xf32>
    %cst_248 = arith.constant dense<0xFF800000> : vector<2xf32>
    %560 = vector.multi_reduction <maximumf>, %559, %cst_248 [1] : vector<2x12xf32> to vector<2xf32>
    %561 = vector.shape_cast %560 : vector<2xf32> to vector<2x1xf32>
    %562 = vector.broadcast %561 : vector<2x1xf32> to vector<2x12xf32>
    %563 = arith.subf %559, %562 : vector<2x12xf32>
    %564 = math.exp %563 : vector<2x12xf32>
    %565 = arith.mulf %564, %3 : vector<2x12xf32>
    %cst_249 = arith.constant dense<0.000000e+00> : vector<2xf32>
    %566 = vector.multi_reduction <add>, %565, %cst_249 [1] : vector<2x12xf32> to vector<2xf32>
    %567 = vector.shape_cast %566 : vector<2xf32> to vector<2x1xf32>
    %cst_250 = arith.constant 1.000000e-16 : f32
    %568 = vector.broadcast %cst_250 : f32 to vector<2x1xf32>
    %569 = arith.addf %567, %568 : vector<2x1xf32>
    %570 = tpu.reciprocal %569 {approx = true} : vector<2x1xf32> -> vector<2x1xf32>
    %571 = vector.broadcast %570 : vector<2x1xf32> to vector<2x12xf32>
    %572 = arith.mulf %565, %571 : vector<2x12xf32>
    %cst_251 = arith.constant dense<0.000000e+00> : vector<2x16xf32>
    %573 = tpu.matmul %572, %358, %cst_251 {dimension_numbers = #tpu.dot_dimension_numbers<[1], [0], [0], [1], [0, 0, 1, 1], [], []>} : vector<2x12xf32>, vector<12x16xf32>, vector<2x16xf32> -> vector<2x16xf32>
    %574 = vector.broadcast %353 : vector<1x16xf32> to vector<2x16xf32>
    %575 = arith.addf %573, %574 : vector<2x16xf32>
    %cst_252 = arith.constant 0.000000e+00 : f32
    %576 = vector.broadcast %cst_252 : f32 to vector<2x16xf32>
    %577 = arith.cmpf ogt, %575, %576 : vector<2x16xf32>
    %cst_253 = arith.constant 0.000000e+00 : f32
    %578 = vector.broadcast %cst_253 : f32 to vector<2x16xf32>
    %579 = arith.minimumf %575, %578 : vector<2x16xf32>
    %580 = math.exp %579 : vector<2x16xf32>
    %cst_254 = arith.constant 1.000000e+00 : f32
    %581 = vector.broadcast %cst_254 : f32 to vector<2x16xf32>
    %582 = arith.subf %580, %581 : vector<2x16xf32>
    %583 = arith.select %577, %575, %582 : vector<2x16xi1>, vector<2x16xf32>
    %cst_255 = arith.constant dense<0.000000e+00> : vector<2x384xf32>
    %584 = tpu.matmul %583, %354, %cst_255 {dimension_numbers = #tpu.dot_dimension_numbers<[1], [0], [0], [1], [0, 0, 1, 1], [], []>} : vector<2x16xf32>, vector<16x384xf32>, vector<2x384xf32> -> vector<2x384xf32>
    %585 = vector.broadcast %356 : vector<1x384xf32> to vector<2x384xf32>
    %586 = arith.addf %584, %585 : vector<2x384xf32>
    %cst_256 = arith.constant dense<0.000000e+00> : vector<2x384xf32>
    %587 = tpu.matmul %538, %355, %cst_256 {dimension_numbers = #tpu.dot_dimension_numbers<[1], [0], [0], [1], [0, 0, 1, 1], [], []>} : vector<2x16xf32>, vector<16x384xf32>, vector<2x384xf32> -> vector<2x384xf32>
    %588 = vector.broadcast %357 : vector<1x384xf32> to vector<2x384xf32>
    %589 = arith.addf %587, %588 : vector<2x384xf32>
    %590 = vector.extract_strided_slice %586 {offsets = [0, 0], sizes = [2, 16], strides = [1, 1]} : vector<2x384xf32> to vector<2x16xf32>
    %591 = vector.extract_strided_slice %589 {offsets = [0, 0], sizes = [2, 16], strides = [1, 1]} : vector<2x384xf32> to vector<2x16xf32>
    %592 = arith.addf %590, %591 : vector<2x16xf32>
    %cst_257 = arith.constant 0.000000e+00 : f32
    %593 = vector.broadcast %cst_257 : f32 to vector<2x16xf32>
    %594 = arith.subf %593, %592 : vector<2x16xf32>
    %595 = math.exp %594 : vector<2x16xf32>
    %cst_258 = arith.constant 1.000000e+00 : f32
    %596 = vector.broadcast %cst_258 : f32 to vector<2x16xf32>
    %597 = arith.addf %596, %595 : vector<2x16xf32>
    %cst_259 = arith.constant 1.000000e+00 : f32
    %598 = vector.broadcast %cst_259 : f32 to vector<2x16xf32>
    %599 = arith.divf %598, %597 : vector<2x16xf32>
    %600 = vector.extract_strided_slice %586 {offsets = [0, 128], sizes = [2, 16], strides = [1, 1]} : vector<2x384xf32> to vector<2x16xf32>
    %601 = vector.extract_strided_slice %589 {offsets = [0, 128], sizes = [2, 16], strides = [1, 1]} : vector<2x384xf32> to vector<2x16xf32>
    %602 = arith.addf %600, %601 : vector<2x16xf32>
    %cst_260 = arith.constant 0.000000e+00 : f32
    %603 = vector.broadcast %cst_260 : f32 to vector<2x16xf32>
    %604 = arith.subf %603, %602 : vector<2x16xf32>
    %605 = math.exp %604 : vector<2x16xf32>
    %cst_261 = arith.constant 1.000000e+00 : f32
    %606 = vector.broadcast %cst_261 : f32 to vector<2x16xf32>
    %607 = arith.addf %606, %605 : vector<2x16xf32>
    %cst_262 = arith.constant 1.000000e+00 : f32
    %608 = vector.broadcast %cst_262 : f32 to vector<2x16xf32>
    %609 = arith.divf %608, %607 : vector<2x16xf32>
    %610 = vector.extract_strided_slice %586 {offsets = [0, 256], sizes = [2, 16], strides = [1, 1]} : vector<2x384xf32> to vector<2x16xf32>
    %611 = vector.extract_strided_slice %589 {offsets = [0, 256], sizes = [2, 16], strides = [1, 1]} : vector<2x384xf32> to vector<2x16xf32>
    %612 = arith.mulf %599, %611 : vector<2x16xf32>
    %613 = arith.addf %610, %612 : vector<2x16xf32>
    %614 = math.tanh %613 : vector<2x16xf32>
    %cst_263 = arith.constant 1.000000e+00 : f32
    %615 = vector.broadcast %cst_263 : f32 to vector<2x16xf32>
    %616 = arith.subf %615, %609 : vector<2x16xf32>
    %617 = arith.mulf %616, %614 : vector<2x16xf32>
    %618 = arith.mulf %609, %538 : vector<2x16xf32>
    %619 = arith.addf %617, %618 : vector<2x16xf32>
    %cst_264 = arith.constant 0.000000e+00 : f32
    %620 = vector.broadcast %cst_264 : f32 to vector<2x16xf32>
    %621 = arith.maximumf %619, %620 : vector<2x16xf32>
    %c3_i32 = arith.constant 3 : i32
    %cst_265 = arith.constant dense<0.000000e+00> : vector<2x16xf32>
    %622 = tpu.matmul %621, %351, %cst_265 {dimension_numbers = #tpu.dot_dimension_numbers<[1], [0], [0], [1], [0, 0, 1, 1], [], []>} : vector<2x16xf32>, vector<16x16xf32>, vector<2x16xf32> -> vector<2x16xf32>
    %623 = vector.broadcast %352 : vector<1x16xf32> to vector<2x16xf32>
    %624 = arith.mulf %622, %623 : vector<2x16xf32>
    %cst_266 = arith.constant dense<0.000000e+00> : vector<2xf32>
    %625 = vector.multi_reduction <add>, %624, %cst_266 [1] : vector<2x16xf32> to vector<2xf32>
    %626 = vector.shape_cast %625 : vector<2xf32> to vector<2x1xf32>
    %627 = vector.broadcast %626 : vector<2x1xf32> to vector<2x12xf32>
    %628 = arith.mulf %3, %627 : vector<2x12xf32>
    %cst_267 = arith.constant dense<0.000000e+00> : vector<12xf32>
    %629 = vector.multi_reduction <add>, %628, %cst_267 [0] : vector<2x12xf32> to vector<12xf32>
    %630 = vector.shape_cast %629 : vector<12xf32> to vector<1x12xf32>
    %631 = arith.addf %372, %630 : vector<1x12xf32>
    %cst_268 = arith.constant 0.000000e+00 : f32
    %632 = vector.broadcast %cst_268 : f32 to vector<1x12xf32>
    %633 = arith.cmpf oge, %631, %632 : vector<1x12xf32>
    %cst_269 = arith.constant 0.00999999977 : f32
    %634 = vector.broadcast %cst_269 : f32 to vector<1x12xf32>
    %635 = arith.mulf %634, %631 : vector<1x12xf32>
    %636 = arith.select %633, %631, %635 : vector<1x12xi1>, vector<1x12xf32>
    %cst_270 = arith.constant 0.000000e+00 : f32
    %637 = vector.broadcast %cst_270 : f32 to vector<2x12xf32>
    %638 = arith.cmpf ogt, %3, %637 : vector<2x12xf32>
    %cst_271 = arith.constant -1.000000e+30 : f32
    %639 = vector.shape_cast %636 : vector<1x12xf32> to vector<1x12xf32>
    %640 = vector.broadcast %639 : vector<1x12xf32> to vector<2x12xf32>
    %641 = vector.broadcast %cst_271 : f32 to vector<2x12xf32>
    %642 = arith.select %638, %640, %641 : vector<2x12xi1>, vector<2x12xf32>
    %cst_272 = arith.constant dense<0xFF800000> : vector<2xf32>
    %643 = vector.multi_reduction <maximumf>, %642, %cst_272 [1] : vector<2x12xf32> to vector<2xf32>
    %644 = vector.shape_cast %643 : vector<2xf32> to vector<2x1xf32>
    %645 = vector.broadcast %644 : vector<2x1xf32> to vector<2x12xf32>
    %646 = arith.subf %642, %645 : vector<2x12xf32>
    %647 = math.exp %646 : vector<2x12xf32>
    %648 = arith.mulf %647, %3 : vector<2x12xf32>
    %cst_273 = arith.constant dense<0.000000e+00> : vector<2xf32>
    %649 = vector.multi_reduction <add>, %648, %cst_273 [1] : vector<2x12xf32> to vector<2xf32>
    %650 = vector.shape_cast %649 : vector<2xf32> to vector<2x1xf32>
    %cst_274 = arith.constant 1.000000e-16 : f32
    %651 = vector.broadcast %cst_274 : f32 to vector<2x1xf32>
    %652 = arith.addf %650, %651 : vector<2x1xf32>
    %653 = tpu.reciprocal %652 {approx = true} : vector<2x1xf32> -> vector<2x1xf32>
    %654 = vector.broadcast %653 : vector<2x1xf32> to vector<2x12xf32>
    %655 = arith.mulf %648, %654 : vector<2x12xf32>
    %cst_275 = arith.constant dense<0.000000e+00> : vector<2x16xf32>
    %656 = tpu.matmul %655, %358, %cst_275 {dimension_numbers = #tpu.dot_dimension_numbers<[1], [0], [0], [1], [0, 0, 1, 1], [], []>} : vector<2x12xf32>, vector<12x16xf32>, vector<2x16xf32> -> vector<2x16xf32>
    %657 = vector.broadcast %353 : vector<1x16xf32> to vector<2x16xf32>
    %658 = arith.addf %656, %657 : vector<2x16xf32>
    %cst_276 = arith.constant 0.000000e+00 : f32
    %659 = vector.broadcast %cst_276 : f32 to vector<2x16xf32>
    %660 = arith.cmpf ogt, %658, %659 : vector<2x16xf32>
    %cst_277 = arith.constant 0.000000e+00 : f32
    %661 = vector.broadcast %cst_277 : f32 to vector<2x16xf32>
    %662 = arith.minimumf %658, %661 : vector<2x16xf32>
    %663 = math.exp %662 : vector<2x16xf32>
    %cst_278 = arith.constant 1.000000e+00 : f32
    %664 = vector.broadcast %cst_278 : f32 to vector<2x16xf32>
    %665 = arith.subf %663, %664 : vector<2x16xf32>
    %666 = arith.select %660, %658, %665 : vector<2x16xi1>, vector<2x16xf32>
    %cst_279 = arith.constant dense<0.000000e+00> : vector<2x384xf32>
    %667 = tpu.matmul %666, %354, %cst_279 {dimension_numbers = #tpu.dot_dimension_numbers<[1], [0], [0], [1], [0, 0, 1, 1], [], []>} : vector<2x16xf32>, vector<16x384xf32>, vector<2x384xf32> -> vector<2x384xf32>
    %668 = vector.broadcast %356 : vector<1x384xf32> to vector<2x384xf32>
    %669 = arith.addf %667, %668 : vector<2x384xf32>
    %cst_280 = arith.constant dense<0.000000e+00> : vector<2x384xf32>
    %670 = tpu.matmul %621, %355, %cst_280 {dimension_numbers = #tpu.dot_dimension_numbers<[1], [0], [0], [1], [0, 0, 1, 1], [], []>} : vector<2x16xf32>, vector<16x384xf32>, vector<2x384xf32> -> vector<2x384xf32>
    %671 = vector.broadcast %357 : vector<1x384xf32> to vector<2x384xf32>
    %672 = arith.addf %670, %671 : vector<2x384xf32>
    %673 = vector.extract_strided_slice %669 {offsets = [0, 0], sizes = [2, 16], strides = [1, 1]} : vector<2x384xf32> to vector<2x16xf32>
    %674 = vector.extract_strided_slice %672 {offsets = [0, 0], sizes = [2, 16], strides = [1, 1]} : vector<2x384xf32> to vector<2x16xf32>
    %675 = arith.addf %673, %674 : vector<2x16xf32>
    %cst_281 = arith.constant 0.000000e+00 : f32
    %676 = vector.broadcast %cst_281 : f32 to vector<2x16xf32>
    %677 = arith.subf %676, %675 : vector<2x16xf32>
    %678 = math.exp %677 : vector<2x16xf32>
    %cst_282 = arith.constant 1.000000e+00 : f32
    %679 = vector.broadcast %cst_282 : f32 to vector<2x16xf32>
    %680 = arith.addf %679, %678 : vector<2x16xf32>
    %cst_283 = arith.constant 1.000000e+00 : f32
    %681 = vector.broadcast %cst_283 : f32 to vector<2x16xf32>
    %682 = arith.divf %681, %680 : vector<2x16xf32>
    %683 = vector.extract_strided_slice %669 {offsets = [0, 128], sizes = [2, 16], strides = [1, 1]} : vector<2x384xf32> to vector<2x16xf32>
    %684 = vector.extract_strided_slice %672 {offsets = [0, 128], sizes = [2, 16], strides = [1, 1]} : vector<2x384xf32> to vector<2x16xf32>
    %685 = arith.addf %683, %684 : vector<2x16xf32>
    %cst_284 = arith.constant 0.000000e+00 : f32
    %686 = vector.broadcast %cst_284 : f32 to vector<2x16xf32>
    %687 = arith.subf %686, %685 : vector<2x16xf32>
    %688 = math.exp %687 : vector<2x16xf32>
    %cst_285 = arith.constant 1.000000e+00 : f32
    %689 = vector.broadcast %cst_285 : f32 to vector<2x16xf32>
    %690 = arith.addf %689, %688 : vector<2x16xf32>
    %cst_286 = arith.constant 1.000000e+00 : f32
    %691 = vector.broadcast %cst_286 : f32 to vector<2x16xf32>
    %692 = arith.divf %691, %690 : vector<2x16xf32>
    %693 = vector.extract_strided_slice %669 {offsets = [0, 256], sizes = [2, 16], strides = [1, 1]} : vector<2x384xf32> to vector<2x16xf32>
    %694 = vector.extract_strided_slice %672 {offsets = [0, 256], sizes = [2, 16], strides = [1, 1]} : vector<2x384xf32> to vector<2x16xf32>
    %695 = arith.mulf %682, %694 : vector<2x16xf32>
    %696 = arith.addf %693, %695 : vector<2x16xf32>
    %697 = math.tanh %696 : vector<2x16xf32>
    %cst_287 = arith.constant 1.000000e+00 : f32
    %698 = vector.broadcast %cst_287 : f32 to vector<2x16xf32>
    %699 = arith.subf %698, %692 : vector<2x16xf32>
    %700 = arith.mulf %699, %697 : vector<2x16xf32>
    %701 = arith.mulf %692, %621 : vector<2x16xf32>
    %702 = arith.addf %700, %701 : vector<2x16xf32>
    %cst_288 = arith.constant 0.000000e+00 : f32
    %703 = vector.broadcast %cst_288 : f32 to vector<2x16xf32>
    %704 = arith.maximumf %702, %703 : vector<2x16xf32>
    %c0_289 = arith.constant 0 : index
    %c0_290 = arith.constant 0 : index
    %705 = vector.load %arg34[%c0_289, %c0_290] : memref<16x1xf32, #tpu.memory_space<vmem>>, vector<16x1xf32>
    %cst_291 = arith.constant dense<0.000000e+00> : vector<2x1xf32>
    %706 = tpu.matmul %704, %705, %cst_291 {dimension_numbers = #tpu.dot_dimension_numbers<[1], [0], [0], [1], [0, 0, 1, 1], [], []>} : vector<2x16xf32>, vector<16x1xf32>, vector<2x1xf32> -> vector<2x1xf32>
    %c0_292 = arith.constant 0 : index
    %c0_293 = arith.constant 0 : index
    %707 = vector.load %arg35[%c0_292, %c0_293] : memref<1x1xf32, #tpu.memory_space<vmem>>, vector<1x1xf32>
    %708 = vector.broadcast %707 : vector<1x1xf32> to vector<2x1xf32>
    %709 = arith.addf %706, %708 : vector<2x1xf32>
    %c0_294 = arith.constant 0 : index
    %c0_295 = arith.constant 0 : index
    %710 = vector.load %arg36[%c0_294, %c0_295] : memref<2x1xf32, #tpu.memory_space<vmem>>, vector<2x1xf32>
    tpu.vector_store %arg36[%c0_294, %c0_295], %709 {strides = array<i32>} : memref<2x1xf32, #tpu.memory_space<vmem>>, vector<2x1xf32>,
    return
  }
}

</mosaic_0001>

<llo_original>
// kernel: attentive_fp_forward.1
$region0: #{attentive_fp_forward.1}
  #allocation0 [shape = 'u32[]', space=smem, size = 0x4, offset = 0x4, fixed_abs, tag = 'smem constant byte address 0x4 - core index']
  #allocation1 [shape = 'u32[144,128]{1,0:T(1,128)}', space=vmem, size = 0x12000, scoped, tag = 'internal scratch']
  #allocation2 [shape = 'f32[1,1]{1,0:T(1,128)S(1)}', space=vmem, size = 0x200, scoped, tag = 'scoped memory for attentive_fp_forward.1']
  %s0 = inlined_call_operand.smem [shape: u32[37], index: -1, kind: input, shape index: {}]
  %s1 = sld [smem:[%s0]]
  %s2 = scalar_lea.smem %s0, 1
  %s3 = sld [smem:[%s2]]
  %s4 = scalar_lea.smem %s0, 2
  %s5 = sld [smem:[%s4]]
  %s6 = scalar_lea.smem %s0, 3
  %s7 = sld [smem:[%s6]]
  %s8 = scalar_lea.smem %s0, 4
  %s9 = sld [smem:[%s8]]
  %s10 = scalar_lea.smem %s0, 5
  %s11 = sld [smem:[%s10]]
  %s12 = scalar_lea.smem %s0, 6
  %s13 = sld [smem:[%s12]]
  %s14 = scalar_lea.smem %s0, 7
  %s15 = sld [smem:[%s14]]
  %s16 = scalar_lea.smem %s0, 8
  %s17 = sld [smem:[%s16]]
  %s18 = scalar_lea.smem %s0, 9
  %s19 = sld [smem:[%s18]]
  %s20 = scalar_lea.smem %s0, 10
  %s21 = sld [smem:[%s20]]
  %s22 = scalar_lea.smem %s0, 11
  %s23 = sld [smem:[%s22]]
  %s24 = scalar_lea.smem %s0, 12
  %s25 = sld [smem:[%s24]]
  %s26 = scalar_lea.smem %s0, 13
  %s27 = sld [smem:[%s26]]
  %s28 = scalar_lea.smem %s0, 14
  %s29 = sld [smem:[%s28]]
  %s30 = scalar_lea.smem %s0, 15
  %s31 = sld [smem:[%s30]]
  %s32 = scalar_lea.smem %s0, 16
  %s33 = sld [smem:[%s32]]
  %s34 = scalar_lea.smem %s0, 17
  %s35 = sld [smem:[%s34]]
  %s36 = scalar_lea.smem %s0, 18
  %s37 = sld [smem:[%s36]]
  %s38 = scalar_lea.smem %s0, 19
  %s39 = sld [smem:[%s38]]
  %s40 = scalar_lea.smem %s0, 20
  %s41 = sld [smem:[%s40]]
  %s42 = scalar_lea.smem %s0, 21
  %s43 = sld [smem:[%s42]]
  %s44 = scalar_lea.smem %s0, 22
  %s45 = sld [smem:[%s44]]
  %s46 = scalar_lea.smem %s0, 23
  %s47 = sld [smem:[%s46]]
  %s48 = scalar_lea.smem %s0, 24
  %s49 = sld [smem:[%s48]]
  %s50 = scalar_lea.smem %s0, 25
  %s51 = sld [smem:[%s50]]
  %s52 = scalar_lea.smem %s0, 26
  %s53 = sld [smem:[%s52]]
  %s54 = scalar_lea.smem %s0, 27
  %s55 = sld [smem:[%s54]]
  %s56 = scalar_lea.smem %s0, 28
  %s57 = sld [smem:[%s56]]
  %s58 = scalar_lea.smem %s0, 29
  %s59 = sld [smem:[%s58]]
  %s60 = scalar_lea.smem %s0, 30
  %s61 = sld [smem:[%s60]]
  %s62 = scalar_lea.smem %s0, 31
  %s63 = sld [smem:[%s62]]
  %s64 = scalar_lea.smem %s0, 32
  %s65 = sld [smem:[%s64]]
  %s66 = scalar_lea.smem %s0, 33
  %s67 = sld [smem:[%s66]]
  %s68 = scalar_lea.smem %s0, 34
  %s69 = sld [smem:[%s68]]
  %s70 = scalar_lea.smem %s0, 35
  %s71 = sld [smem:[%s70]]
  %s72 = scalar_lea.smem %s0, 36
  %s73 = sld [smem:[%s72]]
  %s74 = sld [smem:[#allocation0]]
  $region238: #{attentive_fp_forward.1} parent=0
    _
  %s76 = ssub.s32 1, %s74
  %s77 = scalar_select 0, %s76, %s74
  %v78 = vstv %s71
  %79 = vst [vmem:[#allocation2] sm:$0x1] %v78
  $region1: #{attentive_fp_forward.1} parent=0
    #allocation3 [shape = 'u8[8192]{0}', space=vmem, size = 0x2000, scoped, tag = 'input window, operand 0, single buffered']
    #allocation4 [shape = 's32[1]{0}', space=sflag, size = 0x4, scoped, tag = 'scoped memory for attentive_fp_forward.1']
    #allocation5 [shape = 'u8[512]{0}', space=vmem, size = 0x400, scoped, tag = 'input window, operand 7, single buffered']
    #allocation6 [shape = 's32[1]{0}', space=sflag, size = 0x4, scoped, tag = 'scoped memory for attentive_fp_forward.1']
    #allocation7 [shape = 'u8[8192]{0}', space=vmem, size = 0x2000, scoped, tag = 'input window, operand 8, single buffered']
    #allocation8 [shape = 'u8[8192]{0}', space=vmem, size = 0x2000, scoped, tag = 'input window, operand 9, single buffered']
    #allocation9 [shape = 's32[1]{0}', space=sflag, size = 0x4, scoped, tag = 'scoped memory for attentive_fp_forward.1']
    #allocation10 [shape = 'u8[8192]{0}', space=vmem, size = 0x2000, scoped, tag = 'input window, operand 10, single buffered']
    #allocation11 [shape = 'u8[512]{0}', space=vmem, size = 0x400, scoped, tag = 'input window, operand 11, single buffered']
    #allocation12 [shape = 's32[1]{0}', space=sflag, size = 0x4, scoped, tag = 'scoped memory for attentive_fp_forward.1']
    #allocation13 [shape = 'u8[512]{0}', space=vmem, size = 0x400, scoped, tag = 'input window, operand 12, single buffered']
    #allocation14 [shape = 'u8[512]{0}', space=vmem, size = 0x400, scoped, tag = 'input window, operand 13, single buffered']
    #allocation15 [shape = 's32[1]{0}', space=sflag, size = 0x4, scoped, tag = 'scoped memory for attentive_fp_forward.1']
    #allocation16 [shape = 'u8[24576]{0}', space=vmem, size = 0x6000, scoped, tag = 'input window, operand 14, single buffered']
    #allocation17 [shape = 'u8[24576]{0}', space=vmem, size = 0x6000, scoped, tag = 'input window, operand 15, single buffered']
    #allocation18 [shape = 's32[1]{0}', space=sflag, size = 0x4, scoped, tag = 'scoped memory for attentive_fp_forward.1']
    #allocation19 [shape = 'u8[1536]{0}', space=vmem, size = 0x800, scoped, tag = 'input window, operand 16, single buffered']
    #allocation20 [shape = 'u8[1536]{0}', space=vmem, size = 0x800, scoped, tag = 'input window, operand 17, single buffered']
    #allocation21 [shape = 's32[1]{0}', space=sflag, size = 0x4, scoped, tag = 'scoped memory for attentive_fp_forward.1']
    #allocation22 [shape = 'u8[1024]{0}', space=vmem, size = 0x400, scoped, tag = 'input window, operand 21, single buffered']
    #allocation23 [shape = 'u8[8192]{0}', space=vmem, size = 0x2000, scoped, tag = 'input window, operand 26, single buffered']
    #allocation24 [shape = 's32[1]{0}', space=sflag, size = 0x4, scoped, tag = 'scoped memory for attentive_fp_forward.1']
    #allocation25 [shape = 'u8[512]{0}', space=vmem, size = 0x400, scoped, tag = 'input window, operand 27, single buffered']
    #allocation26 [shape = 'u8[512]{0}', space=vmem, size = 0x400, scoped, tag = 'input window, operand 28, single buffered']
    #allocation27 [shape = 's32[1]{0}', space=sflag, size = 0x4, scoped, tag = 'scoped memory for attentive_fp_forward.1']
    #allocation28 [shape = 'u8[512]{0}', space=vmem, size = 0x400, scoped, tag = 'input window, operand 29, single buffered']
    #allocation29 [shape = 'u8[24576]{0}', space=vmem, size = 0x6000, scoped, tag = 'input window, operand 30, single buffered']
    #allocation30 [shape = 's32[1]{0}', space=sflag, size = 0x4, scoped, tag = 'scoped memory for attentive_fp_forward.1']
    #allocation31 [shape = 'u8[24576]{0}', space=vmem, size = 0x6000, scoped, tag = 'input window, operand 31, single buffered']
    #allocation32 [shape = 'u8[1536]{0}', space=vmem, size = 0x800, scoped, tag = 'input window, operand 32, single buffered']
    #allocation33 [shape = 's32[1]{0}', space=sflag, size = 0x4, scoped, tag = 'scoped memory for attentive_fp_forward.1']
    #allocation34 [shape = 'u8[1536]{0}', space=vmem, size = 0x800, scoped, tag = 'input window, operand 33, single buffered']
    %80 = vsyncpa [#allocation4], 0
    %81 = vsyncpa [#allocation6], 0
    %82 = vsyncpa [#allocation9], 0
    %83 = vsyncpa [#allocation12], 0
    %84 = vsyncpa [#allocation15], 0
    %85 = vsyncpa [#allocation18], 0
    %86 = vsyncpa [#allocation21], 0
    %87 = vsyncpa [#allocation24], 0
    %88 = vsyncpa [#allocation27], 0
    %89 = vsyncpa [#allocation30], 0
    %90 = vsyncpa [#allocation33], 0
    // Predicated region
    $region2: #{attentive_fp_forward.1} parent=1 // pred_check
      _
    $region3: #{attentive_fp_forward.1} parent=1 // pred_check_branch
      %92 = sbr.rel (0) target = $region5
    $region4: #{attentive_fp_forward.1} parent=1 // pred_region
      %s94 = ssub.s32 256, 256
      %95 = vsyncadd [#allocation4], %s94
      %s96 = sshll.u32 [#allocation3], 4
      %s97 = int_to_ptr.vmem [resolvable:$true] %s96
      %102 = dma.hbm_to_vmem [thread:$0]  %s1, 256, %s97, [#allocation4], 128, 128, 8
    $region5: #{attentive_fp_forward.1} parent=1 // pred_fallthru
      _
    // Predicated region
    $region6: #{attentive_fp_forward.1} parent=1 // pred_check
      _
    $region7: #{attentive_fp_forward.1} parent=1 // pred_check_branch
      %104 = sbr.rel (0) target = $region9
    $region8: #{attentive_fp_forward.1} parent=1 // pred_region
      _
    $region9: #{attentive_fp_forward.1} parent=1 // pred_fallthru
      _
    // Predicated region
    $region10: #{attentive_fp_forward.1} parent=1 // pred_check
      _
    $region11: #{attentive_fp_forward.1} parent=1 // pred_check_branch
      %106 = sbr.rel (0) target = $region13
    $region12: #{attentive_fp_forward.1} parent=1 // pred_region
      _
    $region13: #{attentive_fp_forward.1} parent=1 // pred_fallthru
      _
    // Predicated region
    $region14: #{attentive_fp_forward.1} parent=1 // pred_check
      _
    $region15: #{attentive_fp_forward.1} parent=1 // pred_check_branch
      %108 = sbr.rel (0) target = $region17
    $region16: #{attentive_fp_forward.1} parent=1 // pred_region
      _
    $region17: #{attentive_fp_forward.1} parent=1 // pred_fallthru
      _
    // Predicated region
    $region18: #{attentive_fp_forward.1} parent=1 // pred_check
      _
    $region19: #{attentive_fp_forward.1} parent=1 // pred_check_branch
      %110 = sbr.rel (0) target = $region21
    $region20: #{attentive_fp_forward.1} parent=1 // pred_region
      _
    $region21: #{attentive_fp_forward.1} parent=1 // pred_fallthru
      _
    // Predicated region
    $region22: #{attentive_fp_forward.1} parent=1 // pred_check
      _
    $region23: #{attentive_fp_forward.1} parent=1 // pred_check_branch
      %112 = sbr.rel (0) target = $region25
    $region24: #{attentive_fp_forward.1} parent=1 // pred_region
      _
    $region25: #{attentive_fp_forward.1} parent=1 // pred_fallthru
      _
    // Predicated region
    $region26: #{attentive_fp_forward.1} parent=1 // pred_check
      _
    $region27: #{attentive_fp_forward.1} parent=1 // pred_check_branch
      %114 = sbr.rel (0) target = $region29
    $region28: #{attentive_fp_forward.1} parent=1 // pred_region
      _
    $region29: #{attentive_fp_forward.1} parent=1 // pred_fallthru
      _
    // Predicated region
    $region30: #{attentive_fp_forward.1} parent=1 // pred_check
      _
    $region31: #{attentive_fp_forward.1} parent=1 // pred_check_branch
      %116 = sbr.rel (0) target = $region33
    $region32: #{attentive_fp_forward.1} parent=1 // pred_region
      %s118 = ssub.s32 16, 16
      %119 = vsyncadd [#allocation6], %s118
      %s121 = sshll.u32 [#allocation5], 4
      %s122 = int_to_ptr.vmem [resolvable:$true] %s121
      %124 = dma.hbm_to_vmem [thread:$0]  %s15, 16, %s122, [#allocation6]
    $region33: #{attentive_fp_forward.1} parent=1 // pred_fallthru
      _
    // Predicated region
    $region34: #{attentive_fp_forward.1} parent=1 // pred_check
      _
    $region35: #{attentive_fp_forward.1} parent=1 // pred_check_branch
      %126 = sbr.rel (0) target = $region37
    $region36: #{attentive_fp_forward.1} parent=1 // pred_region
      %s128 = ssub.s32 256, 256
      %129 = vsyncadd [#allocation6], %s128
      %s130 = sshll.u32 [#allocation7], 4
      %s131 = int_to_ptr.vmem [resolvable:$true] %s130
      %136 = dma.hbm_to_vmem [thread:$0]  %s17, 256, %s131, [#allocation6], 128, 128, 8
    $region37: #{attentive_fp_forward.1} parent=1 // pred_fallthru
      _
    // Predicated region
    $region38: #{attentive_fp_forward.1} parent=1 // pred_check
      _
    $region39: #{attentive_fp_forward.1} parent=1 // pred_check_branch
      %138 = sbr.rel (0) target = $region41
    $region40: #{attentive_fp_forward.1} parent=1 // pred_region
      %s140 = ssub.s32 256, 256
      %141 = vsyncadd [#allocation9], %s140
      %s142 = sshll.u32 [#allocation8], 4
      %s143 = int_to_ptr.vmem [resolvable:$true] %s142
      %148 = dma.hbm_to_vmem [thread:$0]  %s19, 256, %s143, [#allocation9], 128, 128, 8
    $region41: #{attentive_fp_forward.1} parent=1 // pred_fallthru
      _
    // Predicated region
    $region42: #{attentive_fp_forward.1} parent=1 // pred_check
      _
    $region43: #{attentive_fp_forward.1} parent=1 // pred_check_branch
      %150 = sbr.rel (0) target = $region45
    $region44: #{attentive_fp_forward.1} parent=1 // pred_region
      %s152 = ssub.s32 256, 256
      %153 = vsyncadd [#allocation9], %s152
      %s154 = sshll.u32 [#allocation10], 4
      %s155 = int_to_ptr.vmem [resolvable:$true] %s154
      %160 = dma.hbm_to_vmem [thread:$0]  %s21, 256, %s155, [#allocation9], 128, 128, 8
    $region45: #{attentive_fp_forward.1} parent=1 // pred_fallthru
      _
    // Predicated region
    $region46: #{attentive_fp_forward.1} parent=1 // pred_check
      _
    $region47: #{attentive_fp_forward.1} parent=1 // pred_check_branch
      %162 = sbr.rel (0) target = $region49
    $region48: #{attentive_fp_forward.1} parent=1 // pred_region
      %s164 = ssub.s32 16, 16
      %165 = vsyncadd [#allocation12], %s164
      %s167 = sshll.u32 [#allocation11], 4
      %s168 = int_to_ptr.vmem [resolvable:$true] %s167
      %170 = dma.hbm_to_vmem [thread:$0]  %s23, 16, %s168, [#allocation12]
    $region49: #{attentive_fp_forward.1} parent=1 // pred_fallthru
      _
    // Predicated region
    $region50: #{attentive_fp_forward.1} parent=1 // pred_check
      _
    $region51: #{attentive_fp_forward.1} parent=1 // pred_check_branch
      %172 = sbr.rel (0) target = $region53
    $region52: #{attentive_fp_forward.1} parent=1 // pred_region
      %s174 = ssub.s32 16, 16
      %175 = vsyncadd [#allocation12], %s174
      %s177 = sshll.u32 [#allocation13], 4
      %s178 = int_to_ptr.vmem [resolvable:$true] %s177
      %180 = dma.hbm_to_vmem [thread:$0]  %s25, 16, %s178, [#allocation12]
    $region53: #{attentive_fp_forward.1} parent=1 // pred_fallthru
      _
    // Predicated region
    $region54: #{attentive_fp_forward.1} parent=1 // pred_check
      _
    $region55: #{attentive_fp_forward.1} parent=1 // pred_check_branch
      %182 = sbr.rel (0) target = $region57
    $region56: #{attentive_fp_forward.1} parent=1 // pred_region
      %s184 = ssub.s32 16, 16
      %185 = vsyncadd [#allocation15], %s184
      %s187 = sshll.u32 [#allocation14], 4
      %s188 = int_to_ptr.vmem [resolvable:$true] %s187
      %190 = dma.hbm_to_vmem [thread:$0]  %s27, 16, %s188, [#allocation15]
    $region57: #{attentive_fp_forward.1} parent=1 // pred_fallthru
      _
    // Predicated region
    $region58: #{attentive_fp_forward.1} parent=1 // pred_check
      _
    $region59: #{attentive_fp_forward.1} parent=1 // pred_check_branch
      %192 = sbr.rel (0) target = $region61
    $region60: #{attentive_fp_forward.1} parent=1 // pred_region
      %s194 = ssub.s32 768, 768
      %195 = vsyncadd [#allocation15], %s194
      %s196 = sshll.u32 [#allocation16], 4
      %s197 = int_to_ptr.vmem [resolvable:$true] %s196
      %202 = dma.hbm_to_vmem [thread:$0]  %s29, 768, %s197, [#allocation15], 384, 384, 24
    $region61: #{attentive_fp_forward.1} parent=1 // pred_fallthru
      _
    // Predicated region
    $region62: #{attentive_fp_forward.1} parent=1 // pred_check
      _
    $region63: #{attentive_fp_forward.1} parent=1 // pred_check_branch
      %204 = sbr.rel (0) target = $region65
    $region64: #{attentive_fp_forward.1} parent=1 // pred_region
      %s206 = ssub.s32 768, 768
      %207 = vsyncadd [#allocation18], %s206
      %s208 = sshll.u32 [#allocation17], 4
      %s209 = int_to_ptr.vmem [resolvable:$true] %s208
      %214 = dma.hbm_to_vmem [thread:$0]  %s31, 768, %s209, [#allocation18], 384, 384, 24
    $region65: #{attentive_fp_forward.1} parent=1 // pred_fallthru
      _
    // Predicated region
    $region66: #{attentive_fp_forward.1} parent=1 // pred_check
      _
    $region67: #{attentive_fp_forward.1} parent=1 // pred_check_branch
      %216 = sbr.rel (0) target = $region69
    $region68: #{attentive_fp_forward.1} parent=1 // pred_region
      %s218 = ssub.s32 48, 48
      %219 = vsyncadd [#allocation18], %s218
      %s221 = sshll.u32 [#allocation19], 4
      %s222 = int_to_ptr.vmem [resolvable:$true] %s221
      %224 = dma.hbm_to_vmem [thread:$0]  %s33, 48, %s222, [#allocation18]
    $region69: #{attentive_fp_forward.1} parent=1 // pred_fallthru
      _
    // Predicated region
    $region70: #{attentive_fp_forward.1} parent=1 // pred_check
      _
    $region71: #{attentive_fp_forward.1} parent=1 // pred_check_branch
      %226 = sbr.rel (0) target = $region73
    $region72: #{attentive_fp_forward.1} parent=1 // pred_region
      %s228 = ssub.s32 48, 48
      %229 = vsyncadd [#allocation21], %s228
      %s231 = sshll.u32 [#allocation20], 4
      %s232 = int_to_ptr.vmem [resolvable:$true] %s231
      %234 = dma.hbm_to_vmem [thread:$0]  %s35, 48, %s232, [#allocation21]
    $region73: #{attentive_fp_forward.1} parent=1 // pred_fallthru
      _
    // Predicated region
    $region74: #{attentive_fp_forward.1} parent=1 // pred_check
      _
    $region75: #{attentive_fp_forward.1} parent=1 // pred_check_branch
      %236 = sbr.rel (0) target = $region77
    $region76: #{attentive_fp_forward.1} parent=1 // pred_region
      _
    $region77: #{attentive_fp_forward.1} parent=1 // pred_fallthru
      _
    // Predicated region
    $region78: #{attentive_fp_forward.1} parent=1 // pred_check
      _
    $region79: #{attentive_fp_forward.1} parent=1 // pred_check_branch
      %238 = sbr.rel (0) target = $region81
    $region80: #{attentive_fp_forward.1} parent=1 // pred_region
      _
    $region81: #{attentive_fp_forward.1} parent=1 // pred_fallthru
      _
    // Predicated region
    $region82: #{attentive_fp_forward.1} parent=1 // pred_check
      _
    $region83: #{attentive_fp_forward.1} parent=1 // pred_check_branch
      %240 = sbr.rel (0) target = $region85
    $region84: #{attentive_fp_forward.1} parent=1 // pred_region
      _
    $region85: #{attentive_fp_forward.1} parent=1 // pred_fallthru
      _
    // Predicated region
    $region86: #{attentive_fp_forward.1} parent=1 // pred_check
      _
    $region87: #{attentive_fp_forward.1} parent=1 // pred_check_branch
      %242 = sbr.rel (0) target = $region89
    $region88: #{attentive_fp_forward.1} parent=1 // pred_region
      %s244 = ssub.s32 32, 32
      %245 = vsyncadd [#allocation21], %s244
      %s246 = sshll.u32 [#allocation22], 4
      %s247 = int_to_ptr.vmem [resolvable:$true] %s246
      %252 = dma.hbm_to_vmem [thread:$0]  %s43, 32, %s247, [#allocation21], 16, 16, 1
    $region89: #{attentive_fp_forward.1} parent=1 // pred_fallthru
      _
    // Predicated region
    $region90: #{attentive_fp_forward.1} parent=1 // pred_check
      _
    $region91: #{attentive_fp_forward.1} parent=1 // pred_check_branch
      %254 = sbr.rel (0) target = $region93
    $region92: #{attentive_fp_forward.1} parent=1 // pred_region
      _
    $region93: #{attentive_fp_forward.1} parent=1 // pred_fallthru
      _
    // Predicated region
    $region94: #{attentive_fp_forward.1} parent=1 // pred_check
      _
    $region95: #{attentive_fp_forward.1} parent=1 // pred_check_branch
      %256 = sbr.rel (0) target = $region97
    $region96: #{attentive_fp_forward.1} parent=1 // pred_region
      _
    $region97: #{attentive_fp_forward.1} parent=1 // pred_fallthru
      _
    // Predicated region
    $region98: #{attentive_fp_forward.1} parent=1 // pred_check
      _
    $region99: #{attentive_fp_forward.1} parent=1 // pred_check_branch
      %258 = sbr.rel (0) target = $region101
    $region100: #{attentive_fp_forward.1} parent=1 // pred_region
      _
    $region101: #{attentive_fp_forward.1} parent=1 // pred_fallthru
      _
    // Predicated region
    $region102: #{attentive_fp_forward.1} parent=1 // pred_check
      _
    $region103: #{attentive_fp_forward.1} parent=1 // pred_check_branch
      %260 = sbr.rel (0) target = $region105
    $region104: #{attentive_fp_forward.1} parent=1 // pred_region
      _
    $region105: #{attentive_fp_forward.1} parent=1 // pred_fallthru
      _
    // Predicated region
    $region106: #{attentive_fp_forward.1} parent=1 // pred_check
      _
    $region107: #{attentive_fp_forward.1} parent=1 // pred_check_branch
      %262 = sbr.rel (0) target = $region109
    $region108: #{attentive_fp_forward.1} parent=1 // pred_region
      %s264 = ssub.s32 256, 256
      %265 = vsyncadd [#allocation24], %s264
      %s266 = sshll.u32 [#allocation23], 4
      %s267 = int_to_ptr.vmem [resolvable:$true] %s266
      %272 = dma.hbm_to_vmem [thread:$0]  %s53, 256, %s267, [#allocation24], 128, 128, 8
    $region109: #{attentive_fp_forward.1} parent=1 // pred_fallthru
      _
    // Predicated region
    $region110: #{attentive_fp_forward.1} parent=1 // pred_check
      _
    $region111: #{attentive_fp_forward.1} parent=1 // pred_check_branch
      %274 = sbr.rel (0) target = $region113
    $region112: #{attentive_fp_forward.1} parent=1 // pred_region
      %s276 = ssub.s32 16, 16
      %277 = vsyncadd [#allocation24], %s276
      %s279 = sshll.u32 [#allocation25], 4
      %s280 = int_to_ptr.vmem [resolvable:$true] %s279
      %282 = dma.hbm_to_vmem [thread:$0]  %s55, 16, %s280, [#allocation24]
    $region113: #{attentive_fp_forward.1} parent=1 // pred_fallthru
      _
    // Predicated region
    $region114: #{attentive_fp_forward.1} parent=1 // pred_check
      _
    $region115: #{attentive_fp_forward.1} parent=1 // pred_check_branch
      %284 = sbr.rel (0) target = $region117
    $region116: #{attentive_fp_forward.1} parent=1 // pred_region
      %s286 = ssub.s32 16, 16
      %287 = vsyncadd [#allocation27], %s286
      %s289 = sshll.u32 [#allocation26], 4
      %s290 = int_to_ptr.vmem [resolvable:$true] %s289
      %292 = dma.hbm_to_vmem [thread:$0]  %s57, 16, %s290, [#allocation27]
    $region117: #{attentive_fp_forward.1} parent=1 // pred_fallthru
      _
    // Predicated region
    $region118: #{attentive_fp_forward.1} parent=1 // pred_check
      _
    $region119: #{attentive_fp_forward.1} parent=1 // pred_check_branch
      %294 = sbr.rel (0) target = $region121
    $region120: #{attentive_fp_forward.1} parent=1 // pred_region
      %s296 = ssub.s32 16, 16
      %297 = vsyncadd [#allocation27], %s296
      %s299 = sshll.u32 [#allocation28], 4
      %s300 = int_to_ptr.vmem [resolvable:$true] %s299
      %302 = dma.hbm_to_vmem [thread:$0]  %s59, 16, %s300, [#allocation27]
    $region121: #{attentive_fp_forward.1} parent=1 // pred_fallthru
      _
    // Predicated region
    $region122: #{attentive_fp_forward.1} parent=1 // pred_check
      _
    $region123: #{attentive_fp_forward.1} parent=1 // pred_check_branch
      %304 = sbr.rel (0) target = $region125
    $region124: #{attentive_fp_forward.1} parent=1 // pred_region
      %s306 = ssub.s32 768, 768
      %307 = vsyncadd [#allocation30], %s306
      %s308 = sshll.u32 [#allocation29], 4
      %s309 = int_to_ptr.vmem [resolvable:$true] %s308
      %314 = dma.hbm_to_vmem [thread:$0]  %s61, 768, %s309, [#allocation30], 384, 384, 24
    $region125: #{attentive_fp_forward.1} parent=1 // pred_fallthru
      _
    // Predicated region
    $region126: #{attentive_fp_forward.1} parent=1 // pred_check
      _
    $region127: #{attentive_fp_forward.1} parent=1 // pred_check_branch
      %316 = sbr.rel (0) target = $region129
    $region128: #{attentive_fp_forward.1} parent=1 // pred_region
      %s318 = ssub.s32 768, 768
      %319 = vsyncadd [#allocation30], %s318
      %s320 = sshll.u32 [#allocation31], 4
      %s321 = int_to_ptr.vmem [resolvable:$true] %s320
      %326 = dma.hbm_to_vmem [thread:$0]  %s63, 768, %s321, [#allocation30], 384, 384, 24
    $region129: #{attentive_fp_forward.1} parent=1 // pred_fallthru
      _
    // Predicated region
    $region130: #{attentive_fp_forward.1} parent=1 // pred_check
      _
    $region131: #{attentive_fp_forward.1} parent=1 // pred_check_branch
      %328 = sbr.rel (0) target = $region133
    $region132: #{attentive_fp_forward.1} parent=1 // pred_region
      %s330 = ssub.s32 48, 48
      %331 = vsyncadd [#allocation33], %s330
      %s333 = sshll.u32 [#allocation32], 4
      %s334 = int_to_ptr.vmem [resolvable:$true] %s333
      %336 = dma.hbm_to_vmem [thread:$0]  %s65, 48, %s334, [#allocation33]
    $region133: #{attentive_fp_forward.1} parent=1 // pred_fallthru
      _
    // Predicated region
    $region134: #{attentive_fp_forward.1} parent=1 // pred_check
      _
    $region135: #{attentive_fp_forward.1} parent=1 // pred_check_branch
      %338 = sbr.rel (0) target = $region137
    $region136: #{attentive_fp_forward.1} parent=1 // pred_region
      %s340 = ssub.s32 48, 48
      %341 = vsyncadd [#allocation33], %s340
      %s343 = sshll.u32 [#allocation34], 4
      %s344 = int_to_ptr.vmem [resolvable:$true] %s343
      %346 = dma.hbm_to_vmem [thread:$0]  %s67, 48, %s344, [#allocation33]
    $region137: #{attentive_fp_forward.1} parent=1 // pred_fallthru
      _
    // Predicated region
    $region138: #{attentive_fp_forward.1} parent=1 // pred_check
      _
    $region139: #{attentive_fp_forward.1} parent=1 // pred_check_branch
      %348 = sbr.rel (0) target = $region141
    $region140: #{attentive_fp_forward.1} parent=1 // pred_region
      _
    $region141: #{attentive_fp_forward.1} parent=1 // pred_fallthru
      _
    // Predicated region
    $region142: #{attentive_fp_forward.1} parent=1 // pred_check
      _
    $region143: #{attentive_fp_forward.1} parent=1 // pred_check_branch
      %350 = sbr.rel (0) target = $region145
    $region144: #{attentive_fp_forward.1} parent=1 // pred_region
      _
    $region145: #{attentive_fp_forward.1} parent=1 // pred_fallthru
      _
    // Predicated region
    $region146: #{attentive_fp_forward.1} parent=1 // pred_check
      _
    $region147: #{attentive_fp_forward.1} parent=1 // pred_check_branch
      %352 = sbr.rel (0) target = $region149
    $region148: #{attentive_fp_forward.1} parent=1 // pred_region
      %353 = dma.done [#allocation4], 256
    $region149: #{attentive_fp_forward.1} parent=1 // pred_fallthru
      _
    // Predicated region
    $region150: #{attentive_fp_forward.1} parent=1 // pred_check
      _
    $region151: #{attentive_fp_forward.1} parent=1 // pred_check_branch
      %355 = sbr.rel (0) target = $region153
    $region152: #{attentive_fp_forward.1} parent=1 // pred_region
      %356 = dma.done [#allocation6], 16
    $region153: #{attentive_fp_forward.1} parent=1 // pred_fallthru
      _
    // Predicated region
    $region154: #{attentive_fp_forward.1} parent=1 // pred_check
      _
    $region155: #{attentive_fp_forward.1} parent=1 // pred_check_branch
      %358 = sbr.rel (0) target = $region157
    $region156: #{attentive_fp_forward.1} parent=1 // pred_region
      %359 = dma.done [#allocation6], 256
    $region157: #{attentive_fp_forward.1} parent=1 // pred_fallthru
      _
    // Predicated region
    $region158: #{attentive_fp_forward.1} parent=1 // pred_check
      _
    $region159: #{attentive_fp_forward.1} parent=1 // pred_check_branch
      %361 = sbr.rel (0) target = $region161
    $region160: #{attentive_fp_forward.1} parent=1 // pred_region
      %362 = dma.done [#allocation9], 256
    $region161: #{attentive_fp_forward.1} parent=1 // pred_fallthru
      _
    // Predicated region
    $region162: #{attentive_fp_forward.1} parent=1 // pred_check
      _
    $region163: #{attentive_fp_forward.1} parent=1 // pred_check_branch
      %364 = sbr.rel (0) target = $region165
    $region164: #{attentive_fp_forward.1} parent=1 // pred_region
      %365 = dma.done [#allocation9], 256
    $region165: #{attentive_fp_forward.1} parent=1 // pred_fallthru
      _
    // Predicated region
    $region166: #{attentive_fp_forward.1} parent=1 // pred_check
      _
    $region167: #{attentive_fp_forward.1} parent=1 // pred_check_branch
      %367 = sbr.rel (0) target = $region169
    $region168: #{attentive_fp_forward.1} parent=1 // pred_region
      %368 = dma.done [#allocation12], 16
    $region169: #{attentive_fp_forward.1} parent=1 // pred_fallthru
      _
    // Predicated region
    $region170: #{attentive_fp_forward.1} parent=1 // pred_check
      _
    $region171: #{attentive_fp_forward.1} parent=1 // pred_check_branch
      %370 = sbr.rel (0) target = $region173
    $region172: #{attentive_fp_forward.1} parent=1 // pred_region
      %371 = dma.done [#allocation12], 16
    $region173: #{attentive_fp_forward.1} parent=1 // pred_fallthru
      _
    // Predicated region
    $region174: #{attentive_fp_forward.1} parent=1 // pred_check
      _
    $region175: #{attentive_fp_forward.1} parent=1 // pred_check_branch
      %373 = sbr.rel (0) target = $region177
    $region176: #{attentive_fp_forward.1} parent=1 // pred_region
      %374 = dma.done [#allocation15], 16
    $region177: #{attentive_fp_forward.1} parent=1 // pred_fallthru
      _
    // Predicated region
    $region178: #{attentive_fp_forward.1} parent=1 // pred_check
      _
    $region179: #{attentive_fp_forward.1} parent=1 // pred_check_branch
      %376 = sbr.rel (0) target = $region181
    $region180: #{attentive_fp_forward.1} parent=1 // pred_region
      %377 = dma.done [#allocation15], 768
    $region181: #{attentive_fp_forward.1} parent=1 // pred_fallthru
      _
    // Predicated region
    $region182: #{attentive_fp_forward.1} parent=1 // pred_check
      _
    $region183: #{attentive_fp_forward.1} parent=1 // pred_check_branch
      %379 = sbr.rel (0) target = $region185
    $region184: #{attentive_fp_forward.1} parent=1 // pred_region
      %380 = dma.done [#allocation18], 768
    $region185: #{attentive_fp_forward.1} parent=1 // pred_fallthru
      _
    // Predicated region
    $region186: #{attentive_fp_forward.1} parent=1 // pred_check
      _
    $region187: #{attentive_fp_forward.1} parent=1 // pred_check_branch
      %382 = sbr.rel (0) target = $region189
    $region188: #{attentive_fp_forward.1} parent=1 // pred_region
      %383 = dma.done [#allocation18], 48
    $region189: #{attentive_fp_forward.1} parent=1 // pred_fallthru
      _
    // Predicated region
    $region190: #{attentive_fp_forward.1} parent=1 // pred_check
      _
    $region191: #{attentive_fp_forward.1} parent=1 // pred_check_branch
      %385 = sbr.rel (0) target = $region193
    $region192: #{attentive_fp_forward.1} parent=1 // pred_region
      %386 = dma.done [#allocation21], 48
    $region193: #{attentive_fp_forward.1} parent=1 // pred_fallthru
      _
    // Predicated region
    $region194: #{attentive_fp_forward.1} parent=1 // pred_check
      _
    $region195: #{attentive_fp_forward.1} parent=1 // pred_check_branch
      %388 = sbr.rel (0) target = $region197
    $region196: #{attentive_fp_forward.1} parent=1 // pred_region
      %389 = dma.done [#allocation21], 32
    $region197: #{attentive_fp_forward.1} parent=1 // pred_fallthru
      _
    // Predicated region
    $region198: #{attentive_fp_forward.1} parent=1 // pred_check
      _
    $region199: #{attentive_fp_forward.1} parent=1 // pred_check_branch
      %391 = sbr.rel (0) target = $region201
    $region200: #{attentive_fp_forward.1} parent=1 // pred_region
      %392 = dma.done [#allocation24], 256
    $region201: #{attentive_fp_forward.1} parent=1 // pred_fallthru
      _
    // Predicated region
    $region202: #{attentive_fp_forward.1} parent=1 // pred_check
      _
    $region203: #{attentive_fp_forward.1} parent=1 // pred_check_branch
      %394 = sbr.rel (0) target = $region205
    $region204: #{attentive_fp_forward.1} parent=1 // pred_region
      %395 = dma.done [#allocation24], 16
    $region205: #{attentive_fp_forward.1} parent=1 // pred_fallthru
      _
    // Predicated region
    $region206: #{attentive_fp_forward.1} parent=1 // pred_check
      _
    $region207: #{attentive_fp_forward.1} parent=1 // pred_check_branch
      %397 = sbr.rel (0) target = $region209
    $region208: #{attentive_fp_forward.1} parent=1 // pred_region
      %398 = dma.done [#allocation27], 16
    $region209: #{attentive_fp_forward.1} parent=1 // pred_fallthru
      _
    // Predicated region
    $region210: #{attentive_fp_forward.1} parent=1 // pred_check
      _
    $region211: #{attentive_fp_forward.1} parent=1 // pred_check_branch
      %400 = sbr.rel (0) target = $region213
    $region212: #{attentive_fp_forward.1} parent=1 // pred_region
      %401 = dma.done [#allocation27], 16
    $region213: #{attentive_fp_forward.1} parent=1 // pred_fallthru
      _
    // Predicated region
    $region214: #{attentive_fp_forward.1} parent=1 // pred_check
      _
    $region215: #{attentive_fp_forward.1} parent=1 // pred_check_branch
      %403 = sbr.rel (0) target = $region217
    $region216: #{attentive_fp_forward.1} parent=1 // pred_region
      %404 = dma.done [#allocation30], 768
    $region217: #{attentive_fp_forward.1} parent=1 // pred_fallthru
      _
    // Predicated region
    $region218: #{attentive_fp_forward.1} parent=1 // pred_check
      _
    $region219: #{attentive_fp_forward.1} parent=1 // pred_check_branch
      %406 = sbr.rel (0) target = $region221
    $region220: #{attentive_fp_forward.1} parent=1 // pred_region
      %407 = dma.done [#allocation30], 768
    $region221: #{attentive_fp_forward.1} parent=1 // pred_fallthru
      _
    // Predicated region
    $region222: #{attentive_fp_forward.1} parent=1 // pred_check
      _
    $region223: #{attentive_fp_forward.1} parent=1 // pred_check_branch
      %409 = sbr.rel (0) target = $region225
    $region224: #{attentive_fp_forward.1} parent=1 // pred_region
      %410 = dma.done [#allocation33], 48
    $region225: #{attentive_fp_forward.1} parent=1 // pred_fallthru
      _
    // Predicated region
    $region226: #{attentive_fp_forward.1} parent=1 // pred_check
      _
    $region227: #{attentive_fp_forward.1} parent=1 // pred_check_branch
      %412 = sbr.rel (0) target = $region229
    $region228: #{attentive_fp_forward.1} parent=1 // pred_region
      %413 = dma.done [#allocation33], 48
    $region229: #{attentive_fp_forward.1} parent=1 // pred_fallthru
      _
    %v414 = vld [vmem:[%s5] sm:$0xff]
    %v415 = vld [vmem:[%s5 + $0x8] sm:$0xff]
    %v416 = vld [vmem:[%s5 + $0x10] sm:$0xf]
    %v417 = vld [vmem:[%s7] sm:$0xff]
    %v418 = vld [vmem:[%s7 + $0x8] sm:$0xf]
    %v419 = vld [vmem:[%s9] sm:$0xff]
    %v420 = vld [vmem:[%s9 + $0x8] sm:$0xf]
    %v421 = vld [vmem:[%s11] sm:$0x3]
    %v422 = vld [vmem:[#allocation3] sm:$0xff]
    %v423 = vld [vmem:[#allocation3 + $0x8] sm:$0xf]
    %v424 = vld [vmem:[%s13] sm:$0xff]
    %v425 = vld [vmem:[%s13 + $0x8] sm:$0xff]
    %v426 = vld [vmem:[%s13 + $0x10] sm:$0xff]
    %v427 = vld [vmem:[#allocation5] sm:$0x1]
    %v429 = vlaneseq
    %v430 = vshrl.u32 %v429, 7
    %v431 = vsub.s32 0, %v430
    %v432 = vrot.slane %v427, %v431
    %vm434 = vcmask 195584
    %v436 = vsel %vm434, %v422, 0
    %v439 = vsel %vm434, %v423, 0
    %441 = vmatprep.subr.mxu0 0.0
    %442 = vmatpush1.msra.mxu0 %v424
    %443 = vmatprep.subr.mxu0 0.0
    %444 = vmatpush1.msra.mxu0 %v425
    %445 = vmatprep.subr.mxu0 0.0
    %446 = vmatpush1.msra.mxu0 %v426
    %447 = vmatprep.subr.mxu0 0.0
    %448 = vmatpush1.msra.mxu0 0.0
    %449 = vmatprep.subr.mxu0 0.0
    %450 = vmatpush1.msra.mxu0 0.0
    %451 = vmatprep.subr.mxu0 0.0
    %452 = vmatpush1.msra.mxu0 0.0
    %453 = vmatprep.subr.mxu0 0.0
    %454 = vmatpush1.msra.mxu0 0.0
    %455 = vmatprep.subr.mxu0 0.0
    %456 = vmatpush1.msra.mxu0 0.0
    %457 = vmatprep.subr.mxu0 0.0
    %458 = vmatpush1.msra.mxu0 0.0
    %459 = vmatprep.subr.mxu0 0.0
    %460 = vmatpush1.msra.mxu0 0.0
    %461 = vmatprep.subr.mxu0 0.0
    %462 = vmatpush1.msra.mxu0 0.0
    %463 = vmatprep.subr.mxu0 0.0
    %464 = vmatpush1.msra.mxu0 0.0
    %465 = vmatprep.subr.mxu0 0.0
    %466 = vmatpush1.msra.mxu0 0.0
    %467 = vmatprep.subr.mxu0 0.0
    %468 = vmatpush1.msra.mxu0 0.0
    %469 = vmatprep.subr.mxu0 0.0
    %470 = vmatpush1.msra.mxu0 0.0
    %471 = vmatprep.subr.mxu0 0.0
    %472 = vmatpush1.msra.mxu0 0.0
    %473 = vmatprep.subr.mxu0 0.0
    %474 = vmatpush1.msra.mxu0 0.0
    %475 = vmatprep.subr.mxu0 0.0
    %476 = vmatpush1.msra.mxu0 0.0
    %477 = vmatprep.subr.mxu0 0.0
    %478 = vmatpush1.msra.mxu0 0.0
    %479 = vmatprep.subr.mxu0 0.0
    %480 = vmatpush1.msra.mxu0 0.0
    %481 = vmatprep.subr.mxu0 0.0
    %482 = vmatpush1.msra.mxu0 0.0
    %483 = vmatprep.subr.mxu0 0.0
    %484 = vmatpush1.msra.mxu0 0.0
    %485 = vmatprep.subr.mxu0 0.0
    %486 = vmatpush1.msra.mxu0 0.0
    %487 = vmatprep.subr.mxu0 0.0
    %488 = vmatpush1.msra.mxu0 0.0
    %489 = vmatprep.subr.mxu0 0.0
    %490 = vmatpush1.msra.mxu0 0.0
    %491 = vmatprep.subr.mxu0 0.0
    %492 = vmatpush1.msra.mxu0 0.0
    %493 = vmatprep.subr.mxu0 0.0
    %494 = vmatpush1.msra.mxu0 0.0
    %495 = vmatprep.subr.mxu0 0.0
    %496 = vmatpush1.msra.mxu0 0.0
    %497 = vmatprep.subr.mxu0 0.0
    %498 = vmatpush1.msra.mxu0 0.0
    %499 = vmatprep.subr.mxu0 0.0
    %500 = vmatpush1.msra.mxu0 0.0
    %501 = vmatprep.subr.mxu0 0.0
    %502 = vmatpush1.msra.mxu0 0.0
    %503 = vmatprep.subr.mxu0 0.0
    %504 = vmatpush1.msra.mxu0 0.0
    %505 = vmatprep.mubr.f32.mxu0 0.0
    %506 = vmatmul.mubr.f32.gmra.mrb[0].mxu0 %v436
    %v507 = vpop.f32.mrb[0].mxu0
    %v508 = vadd.f32 %v432, %v507
    %v509 = vpop.f32.mrb[0].mxu0
    %510 = vmatprep.mubr.f32.mxu0 0.0
    %511 = vmatmul.mubr.f32.gmra.mrb[0].mxu0 %v439
    %v512 = vpop.f32.mrb[0].mxu0
    %v513 = vadd.f32 %v432, %v512
    %v514 = vpop.f32.mrb[0].mxu0
    %515 = vdwg.mxu0
    %vm516 = vcmp.ge.f32.partialorder %v508, 0.0
    %vm517 = vcmp.ge.f32.partialorder %v513, 0.0
    %v518 = vmul.f32 %v508, 0.01
    %v519 = vmul.f32 %v513, 0.01
    %v520 = vsel %vm516, %v508, %v518
    %v521 = vsel %vm517, %v513, %v519
    %vm522 = vcmask 97280
    %v524 = vsel %vm522, %v414, 0
    %v527 = vsel %vm522, %v415, 0
    %v530 = vsel %vm522, %v416, 0
    %vm532 = vcmask 1043456
    %v534 = vsel %vm532, %v521, 0
    %536 = vmatprep.subr.mxu0 0.0
    %537 = vmatpush1.msra.mxu0 %v520
    %538 = vmatprep.subr.mxu0 0.0
    %539 = vmatpush1.msra.mxu0 %v534
    %540 = vmatprep.subr.mxu0 0.0
    %541 = vmatpush1.msra.mxu0 0.0
    %542 = vmatprep.subr.mxu0 0.0
    %543 = vmatpush1.msra.mxu0 0.0
    %544 = vmatprep.subr.mxu0 0.0
    %545 = vmatpush1.msra.mxu0 0.0
    %546 = vmatprep.subr.mxu0 0.0
    %547 = vmatpush1.msra.mxu0 0.0
    %548 = vmatprep.subr.mxu0 0.0
    %549 = vmatpush1.msra.mxu0 0.0
    %550 = vmatprep.subr.mxu0 0.0
    %551 = vmatpush1.msra.mxu0 0.0
    %552 = vmatprep.subr.mxu0 0.0
    %553 = vmatpush1.msra.mxu0 0.0
    %554 = vmatprep.subr.mxu0 0.0
    %555 = vmatpush1.msra.mxu0 0.0
    %556 = vmatprep.subr.mxu0 0.0
    %557 = vmatpush1.msra.mxu0 0.0
    %558 = vmatprep.subr.mxu0 0.0
    %559 = vmatpush1.msra.mxu0 0.0
    %560 = vmatprep.subr.mxu0 0.0
    %561 = vmatpush1.msra.mxu0 0.0
    %562 = vmatprep.subr.mxu0 0.0
    %563 = vmatpush1.msra.mxu0 0.0
    %564 = vmatprep.subr.mxu0 0.0
    %565 = vmatpush1.msra.mxu0 0.0
    %566 = vmatprep.subr.mxu0 0.0
    %567 = vmatpush1.msra.mxu0 0.0
    %568 = vmatprep.subr.mxu0 0.0
    %569 = vmatpush1.msra.mxu0 0.0
    %570 = vmatprep.subr.mxu0 0.0
    %571 = vmatpush1.msra.mxu0 0.0
    %572 = vmatprep.subr.mxu0 0.0
    %573 = vmatpush1.msra.mxu0 0.0
    %574 = vmatprep.subr.mxu0 0.0
    %575 = vmatpush1.msra.mxu0 0.0
    %576 = vmatprep.subr.mxu0 0.0
    %577 = vmatpush1.msra.mxu0 0.0
    %578 = vmatprep.subr.mxu0 0.0
    %579 = vmatpush1.msra.mxu0 0.0
    %580 = vmatprep.subr.mxu0 0.0
    %581 = vmatpush1.msra.mxu0 0.0
    %582 = vmatprep.subr.mxu0 0.0
    %583 = vmatpush1.msra.mxu0 0.0
    %584 = vmatprep.subr.mxu0 0.0
    %585 = vmatpush1.msra.mxu0 0.0
    %586 = vmatprep.subr.mxu0 0.0
    %587 = vmatpush1.msra.mxu0 0.0
    %588 = vmatprep.subr.mxu0 0.0
    %589 = vmatpush1.msra.mxu0 0.0
    %590 = vmatprep.subr.mxu0 0.0
    %591 = vmatpush1.msra.mxu0 0.0
    %592 = vmatprep.subr.mxu0 0.0
    %593 = vmatpush1.msra.mxu0 0.0
    %594 = vmatprep.subr.mxu0 0.0
    %595 = vmatpush1.msra.mxu0 0.0
    %596 = vmatprep.subr.mxu0 0.0
    %597 = vmatpush1.msra.mxu0 0.0
    %598 = vmatprep.subr.mxu0 0.0
    %599 = vmatpush1.msra.mxu0 0.0
    %600 = vmatprep.mubr.f32.mxu0 0.0
    %601 = vmatmul.mubr.f32.gmra.mrb[0].mxu0 %v524
    %v602 = vpop.f32.mrb[0].mxu0
    %v603 = vadd.f32 0.0, %v602
    %v604 = vpop.f32.mrb[0].mxu0
    %605 = vmatprep.mubr.f32.mxu0 0.0
    %606 = vmatmul.mubr.f32.gmra.mrb[0].mxu0 %v527
    %v607 = vpop.f32.mrb[0].mxu0
    %v608 = vadd.f32 0.0, %v607
    %v609 = vpop.f32.mrb[0].mxu0
    %610 = vmatprep.mubr.f32.mxu0 0.0
    %611 = vmatmul.mubr.f32.gmra.mrb[0].mxu0 %v530
    %v612 = vpop.f32.mrb[0].mxu0
    %v613 = vadd.f32 0.0, %v612
    %v614 = vpop.f32.mrb[0].mxu0
    %615 = vdwg.mxu0
    %v616 = vld [vmem:[#allocation7] sm:$0xff]
    %v617 = vld [vmem:[#allocation7 + $0x8] sm:$0xff]
    %v618 = vld [vmem:[%s3] sm:$0xff]
    %v619 = vld [vmem:[%s3 + $0x8] sm:$0xff]
    %v620 = vld [vmem:[%s3 + $0x10] sm:$0xf]
    %v621 = vld [vmem:[#allocation8] sm:$0xff]
    %v622 = vld [vmem:[#allocation8 + $0x8] sm:$0x3]
    %vm623 = vcmask 80896
    %v625 = vsel %vm623, %v618, 0
    %v628 = vsel %vm623, %v619, 0
    %v631 = vsel %vm623, %v620, 0
    %vm633 = vcmask 1041408
    %v635 = vsel %vm633, %v622, 0
    %637 = vmatprep.subr.mxu0 0.0
    %638 = vmatpush1.msra.mxu0 %v621
    %639 = vmatprep.subr.mxu0 0.0
    %640 = vmatpush1.msra.mxu0 %v635
    %641 = vmatprep.subr.mxu0 0.0
    %642 = vmatpush1.msra.mxu0 0.0
    %643 = vmatprep.subr.mxu0 0.0
    %644 = vmatpush1.msra.mxu0 0.0
    %645 = vmatprep.subr.mxu0 0.0
    %646 = vmatpush1.msra.mxu0 0.0
    %647 = vmatprep.subr.mxu0 0.0
    %648 = vmatpush1.msra.mxu0 0.0
    %649 = vmatprep.subr.mxu0 0.0
    %650 = vmatpush1.msra.mxu0 0.0
    %651 = vmatprep.subr.mxu0 0.0
    %652 = vmatpush1.msra.mxu0 0.0
    %653 = vmatprep.subr.mxu0 0.0
    %654 = vmatpush1.msra.mxu0 0.0
    %655 = vmatprep.subr.mxu0 0.0
    %656 = vmatpush1.msra.mxu0 0.0
    %657 = vmatprep.subr.mxu0 0.0
    %658 = vmatpush1.msra.mxu0 0.0
    %659 = vmatprep.subr.mxu0 0.0
    %660 = vmatpush1.msra.mxu0 0.0
    %661 = vmatprep.subr.mxu0 0.0
    %662 = vmatpush1.msra.mxu0 0.0
    %663 = vmatprep.subr.mxu0 0.0
    %664 = vmatpush1.msra.mxu0 0.0
    %665 = vmatprep.subr.mxu0 0.0
    %666 = vmatpush1.msra.mxu0 0.0
    %667 = vmatprep.subr.mxu0 0.0
    %668 = vmatpush1.msra.mxu0 0.0
    %669 = vmatprep.subr.mxu0 0.0
    %670 = vmatpush1.msra.mxu0 0.0
    %671 = vmatprep.subr.mxu0 0.0
    %672 = vmatpush1.msra.mxu0 0.0
    %673 = vmatprep.subr.mxu0 0.0
    %674 = vmatpush1.msra.mxu0 0.0
    %675 = vmatprep.subr.mxu0 0.0
    %676 = vmatpush1.msra.mxu0 0.0
    %677 = vmatprep.subr.mxu0 0.0
    %678 = vmatpush1.msra.mxu0 0.0
    %679 = vmatprep.subr.mxu0 0.0
    %680 = vmatpush1.msra.mxu0 0.0
    %681 = vmatprep.subr.mxu0 0.0
    %682 = vmatpush1.msra.mxu0 0.0
    %683 = vmatprep.subr.mxu0 0.0
    %684 = vmatpush1.msra.mxu0 0.0
    %685 = vmatprep.subr.mxu0 0.0
    %686 = vmatpush1.msra.mxu0 0.0
    %687 = vmatprep.subr.mxu0 0.0
    %688 = vmatpush1.msra.mxu0 0.0
    %689 = vmatprep.subr.mxu0 0.0
    %690 = vmatpush1.msra.mxu0 0.0
    %691 = vmatprep.subr.mxu0 0.0
    %692 = vmatpush1.msra.mxu0 0.0
    %693 = vmatprep.subr.mxu0 0.0
    %694 = vmatpush1.msra.mxu0 0.0
    %695 = vmatprep.subr.mxu0 0.0
    %696 = vmatpush1.msra.mxu0 0.0
    %697 = vmatprep.subr.mxu0 0.0
    %698 = vmatpush1.msra.mxu0 0.0
    %699 = vmatprep.subr.mxu0 0.0
    %700 = vmatpush1.msra.mxu0 0.0
    %701 = vmatprep.mubr.f32.mxu0 0.0
    %702 = vmatmul.mubr.f32.gmra.mrb[0].mxu0 %v625
    %v703 = vpop.f32.mrb[0].mxu0
    %v704 = vadd.f32 0.0, %v703
    %v705 = vpop.f32.mrb[0].mxu0
    %706 = vmatprep.mubr.f32.mxu0 0.0
    %707 = vmatmul.mubr.f32.gmra.mrb[0].mxu0 %v628
    %v708 = vpop.f32.mrb[0].mxu0
    %v709 = vadd.f32 0.0, %v708
    %v710 = vpop.f32.mrb[0].mxu0
    %711 = vmatprep.mubr.f32.mxu0 0.0
    %712 = vmatmul.mubr.f32.gmra.mrb[0].mxu0 %v631
    %v713 = vpop.f32.mrb[0].mxu0
    %v714 = vadd.f32 0.0, %v713
    %v715 = vpop.f32.mrb[0].mxu0
    %716 = vdwg.mxu0
    %vm717 = vcmask 130048
    %v719 = vsel %vm717, %v603, 0
    %v722 = vsel %vm717, %v608, 0
    %v725 = vsel %vm717, %v613, 0
    %727 = vmatprep.subr.mxu0 0.0
    %728 = vmatpush1.msra.mxu0 %v616
    %729 = vmatprep.subr.mxu0 0.0
    %730 = vmatpush1.msra.mxu0 %v617
    %731 = vmatprep.subr.mxu0 0.0
    %732 = vmatpush1.msra.mxu0 0.0
    %733 = vmatprep.subr.mxu0 0.0
    %734 = vmatpush1.msra.mxu0 0.0
    %735 = vmatprep.subr.mxu0 0.0
    %736 = vmatpush1.msra.mxu0 0.0
    %737 = vmatprep.subr.mxu0 0.0
    %738 = vmatpush1.msra.mxu0 0.0
    %739 = vmatprep.subr.mxu0 0.0
    %740 = vmatpush1.msra.mxu0 0.0
    %741 = vmatprep.subr.mxu0 0.0
    %742 = vmatpush1.msra.mxu0 0.0
    %743 = vmatprep.subr.mxu0 0.0
    %744 = vmatpush1.msra.mxu0 0.0
    %745 = vmatprep.subr.mxu0 0.0
    %746 = vmatpush1.msra.mxu0 0.0
    %747 = vmatprep.subr.mxu0 0.0
    %748 = vmatpush1.msra.mxu0 0.0
    %749 = vmatprep.subr.mxu0 0.0
    %750 = vmatpush1.msra.mxu0 0.0
    %751 = vmatprep.subr.mxu0 0.0
    %752 = vmatpush1.msra.mxu0 0.0
    %753 = vmatprep.subr.mxu0 0.0
    %754 = vmatpush1.msra.mxu0 0.0
    %755 = vmatprep.subr.mxu0 0.0
    %756 = vmatpush1.msra.mxu0 0.0
    %757 = vmatprep.subr.mxu0 0.0
    %758 = vmatpush1.msra.mxu0 0.0
    %759 = vmatprep.subr.mxu0 0.0
    %760 = vmatpush1.msra.mxu0 0.0
    %761 = vmatprep.subr.mxu0 0.0
    %762 = vmatpush1.msra.mxu0 0.0
    %763 = vmatprep.subr.mxu0 0.0
    %764 = vmatpush1.msra.mxu0 0.0
    %765 = vmatprep.subr.mxu0 0.0
    %766 = vmatpush1.msra.mxu0 0.0
    %767 = vmatprep.subr.mxu0 0.0
    %768 = vmatpush1.msra.mxu0 0.0
    %769 = vmatprep.subr.mxu0 0.0
    %770 = vmatpush1.msra.mxu0 0.0
    %771 = vmatprep.subr.mxu0 0.0
    %772 = vmatpush1.msra.mxu0 0.0
    %773 = vmatprep.subr.mxu0 0.0
    %774 = vmatpush1.msra.mxu0 0.0
    %775 = vmatprep.subr.mxu0 0.0
    %776 = vmatpush1.msra.mxu0 0.0
    %777 = vmatprep.subr.mxu0 0.0
    %778 = vmatpush1.msra.mxu0 0.0
    %779 = vmatprep.subr.mxu0 0.0
    %780 = vmatpush1.msra.mxu0 0.0
    %781 = vmatprep.subr.mxu0 0.0
    %782 = vmatpush1.msra.mxu0 0.0
    %783 = vmatprep.subr.mxu0 0.0
    %784 = vmatpush1.msra.mxu0 0.0
    %785 = vmatprep.subr.mxu0 0.0
    %786 = vmatpush1.msra.mxu0 0.0
    %787 = vmatprep.subr.mxu0 0.0
    %788 = vmatpush1.msra.mxu0 0.0
    %789 = vmatprep.subr.mxu0 0.0
    %790 = vmatpush1.msra.mxu0 0.0
    %791 = vmatprep.mubr.f32.mxu0 0.0
    %792 = vmatmul.mubr.f32.gmra.mrb[0].mxu0 %v719
    %v793 = vpop.f32.mrb[0].mxu0
    %v794 = vadd.f32 %v704, %v793
    %v795 = vpop.f32.mrb[0].mxu0
    %796 = vmatprep.mubr.f32.mxu0 0.0
    %797 = vmatmul.mubr.f32.gmra.mrb[0].mxu0 %v722
    %v798 = vpop.f32.mrb[0].mxu0
    %v799 = vadd.f32 %v709, %v798
    %v800 = vpop.f32.mrb[0].mxu0
    %801 = vmatprep.mubr.f32.mxu0 0.0
    %802 = vmatmul.mubr.f32.gmra.mrb[0].mxu0 %v725
    %v803 = vpop.f32.mrb[0].mxu0
    %v804 = vadd.f32 %v714, %v803
    %v805 = vpop.f32.mrb[0].mxu0
    %806 = vdwg.mxu0
    %vm807 = vcmp.ge.f32.partialorder %v794, 0.0
    %vm808 = vcmp.ge.f32.partialorder %v799, 0.0
    %vm809 = vcmp.ge.f32.partialorder %v804, 0.0
    %v810 = vmul.f32 %v794, 0.01
    %v811 = vmul.f32 %v799, 0.01
    %v812 = vmul.f32 %v804, 0.01
    %v813 = vsel %vm807, %v794, %v810
    %v814 = vsel %vm808, %v799, %v811
    %v815 = vsel %vm809, %v804, %v812
    %v816 = vld [vmem:[#allocation11] sm:$0x1]
    %v818 = vlaneseq
    %v819 = vshrl.u32 %v818, 7
    %v820 = vsub.s32 0, %v819
    %v821 = vrot.slane %v816, %v820
    %v823 = vmul.f32 %v813, %v821
    %v824 = vmul.f32 %v814, %v821
    %v825 = vmul.f32 %v815, %v821
    %v826 = vsel %vm717, %v823, 0.0
    %827 = vadd.xlane.f32.xlu0 %v826
    %v828 = vpop.xlane.xlu0 %827
    %v829 = vsel %vm717, %v824, 0.0
    %830 = vadd.xlane.f32.xlu0 %v829
    %v831 = vpop.xlane.xlu0 %830
    %vm832 = vcmask 125952
    %v833 = vsel %vm832, %v825, 0.0
    %834 = vadd.xlane.f32.xlu0 %v833
    %v835 = vpop.xlane.xlu0 %834
    %v836 = vlaneseq
    %v837 = vshrl.u32 %v836, 7
    %v838 = vadd.s32 %v837, 8
    %v839 = vadd.s32 %v837, 16
    %v840 = vlaneseq
    %v841 = vand.u32 %v840, 127
    %vm842 = vcmp.eq.s32.totalorder %v837, %v841
    %vm843 = vcmp.eq.s32.totalorder %v838, %v841
    %vm844 = vcmp.eq.s32.totalorder %v839, %v841
    %v845 = vsel %vm842, %v828, 0.0
    %v846 = vsel %vm843, %v831, 0.0
    %v847 = vsel %vm844, %v835, 0.0
    %vm848 = vcmask 162816
    %v849 = vsel %vm848, %v845, 0.0
    %v850 = vsel %vm848, %v846, 0.0
    %v851 = vadd.f32 %v849, %v850
    %vm852 = vcmask 158720
    %v853 = vsel %vm852, %v847, 0.0
    %v854 = vadd.f32 %v851, %v853
    %v855 = vrot.slane %v854, 4
    %v856 = vadd.f32 %v854, %v855
    %v857 = vrot.slane %v856, 2
    %v858 = vadd.f32 %v856, %v857
    %v859 = vrot.slane %v858, 1
    %v860 = vadd.f32 %v858, %v859
    %v861 = vld [vmem:[#allocation13] sm:$0x1]
    %v863 = vlaneseq
    %v864 = vshrl.u32 %v863, 7
    %v865 = vsub.s32 0, %v864
    %v866 = vrot.slane %v861, %v865
    %v868 = vmul.f32 %v520, %v866
    %v869 = vmul.f32 %v521, %v866
    %v870 = vsel %vm717, %v868, 0.0
    %871 = vadd.xlane.f32.xlu0 %v870
    %v872 = vpop.xlane.xlu0 %871
    %v873 = vsel %vm832, %v869, 0.0
    %874 = vadd.xlane.f32.xlu0 %v873
    %v875 = vpop.xlane.xlu0 %874
    %v876 = vmul.f32 %v419, %v872
    %v877 = vmul.f32 %v420, %v875
    %v878 = vsel %vm848, %v876, 0.0
    %v879 = vsel %vm852, %v877, 0.0
    %v880 = vadd.f32 %v878, %v879
    %v881 = vrot.slane %v880, 4
    %v882 = vadd.f32 %v880, %v881
    %v883 = vrot.slane %v882, 2
    %v884 = vadd.f32 %v882, %v883
    %v885 = vrot.slane %v884, 1
    %v886 = vadd.f32 %v884, %v885
    %v887 = vld [vmem:[#allocation10] sm:$0xff]
    %v888 = vld [vmem:[#allocation10 + $0x8] sm:$0xff]
    %v890 = vsel %vm717, %v520, 0
    %v892 = vsel %vm717, %v521, 0
    %894 = vmatprep.subr.mxu0 0.0
    %895 = vmatpush1.msra.mxu0 %v887
    %896 = vmatprep.subr.mxu0 0.0
    %897 = vmatpush1.msra.mxu0 %v888
    %898 = vmatprep.subr.mxu0 0.0
    %899 = vmatpush1.msra.mxu0 0.0
    %900 = vmatprep.subr.mxu0 0.0
    %901 = vmatpush1.msra.mxu0 0.0
    %902 = vmatprep.subr.mxu0 0.0
    %903 = vmatpush1.msra.mxu0 0.0
    %904 = vmatprep.subr.mxu0 0.0
    %905 = vmatpush1.msra.mxu0 0.0
    %906 = vmatprep.subr.mxu0 0.0
    %907 = vmatpush1.msra.mxu0 0.0
    %908 = vmatprep.subr.mxu0 0.0
    %909 = vmatpush1.msra.mxu0 0.0
    %910 = vmatprep.subr.mxu0 0.0
    %911 = vmatpush1.msra.mxu0 0.0
    %912 = vmatprep.subr.mxu0 0.0
    %913 = vmatpush1.msra.mxu0 0.0
    %914 = vmatprep.subr.mxu0 0.0
    %915 = vmatpush1.msra.mxu0 0.0
    %916 = vmatprep.subr.mxu0 0.0
    %917 = vmatpush1.msra.mxu0 0.0
    %918 = vmatprep.subr.mxu0 0.0
    %919 = vmatpush1.msra.mxu0 0.0
    %920 = vmatprep.subr.mxu0 0.0
    %921 = vmatpush1.msra.mxu0 0.0
    %922 = vmatprep.subr.mxu0 0.0
    %923 = vmatpush1.msra.mxu0 0.0
    %924 = vmatprep.subr.mxu0 0.0
    %925 = vmatpush1.msra.mxu0 0.0
    %926 = vmatprep.subr.mxu0 0.0
    %927 = vmatpush1.msra.mxu0 0.0
    %928 = vmatprep.subr.mxu0 0.0
    %929 = vmatpush1.msra.mxu0 0.0
    %930 = vmatprep.subr.mxu0 0.0
    %931 = vmatpush1.msra.mxu0 0.0
    %932 = vmatprep.subr.mxu0 0.0
    %933 = vmatpush1.msra.mxu0 0.0
    %934 = vmatprep.subr.mxu0 0.0
    %935 = vmatpush1.msra.mxu0 0.0
    %936 = vmatprep.subr.mxu0 0.0
    %937 = vmatpush1.msra.mxu0 0.0
    %938 = vmatprep.subr.mxu0 0.0
    %939 = vmatpush1.msra.mxu0 0.0
    %940 = vmatprep.subr.mxu0 0.0
    %941 = vmatpush1.msra.mxu0 0.0
    %942 = vmatprep.subr.mxu0 0.0
    %943 = vmatpush1.msra.mxu0 0.0
    %944 = vmatprep.subr.mxu0 0.0
    %945 = vmatpush1.msra.mxu0 0.0
    %946 = vmatprep.subr.mxu0 0.0
    %947 = vmatpush1.msra.mxu0 0.0
    %948 = vmatprep.subr.mxu0 0.0
    %949 = vmatpush1.msra.mxu0 0.0
    %950 = vmatprep.subr.mxu0 0.0
    %951 = vmatpush1.msra.mxu0 0.0
    %952 = vmatprep.subr.mxu0 0.0
    %953 = vmatpush1.msra.mxu0 0.0
    %954 = vmatprep.subr.mxu0 0.0
    %955 = vmatpush1.msra.mxu0 0.0
    %956 = vmatprep.subr.mxu0 0.0
    %957 = vmatpush1.msra.mxu0 0.0
    %958 = vmatprep.mubr.f32.mxu0 0.0
    %959 = vmatmul.mubr.f32.gmra.mrb[0].mxu0 %v890
    %v960 = vpop.f32.mrb[0].mxu0
    %v961 = vadd.f32 0.0, %v960
    %v962 = vpop.f32.mrb[0].mxu0
    %963 = vmatprep.mubr.f32.mxu0 0.0
    %964 = vmatmul.mubr.f32.gmra.mrb[0].mxu0 %v892
    %v965 = vpop.f32.mrb[0].mxu0
    %v966 = vadd.f32 0.0, %v965
    %v967 = vpop.f32.mrb[0].mxu0
    %968 = vdwg.mxu0
    %v970 = vsel %vm532, %v966, 0
    %972 = vmatprep.subr.mxu0 0.0
    %973 = vmatpush1.msra.mxu0 %v961
    %974 = vmatprep.subr.mxu0 0.0
    %975 = vmatpush1.msra.mxu0 %v970
    %976 = vmatprep.subr.mxu0 0.0
    %977 = vmatpush1.msra.mxu0 0.0
    %978 = vmatprep.subr.mxu0 0.0
    %979 = vmatpush1.msra.mxu0 0.0
    %980 = vmatprep.subr.mxu0 0.0
    %981 = vmatpush1.msra.mxu0 0.0
    %982 = vmatprep.subr.mxu0 0.0
    %983 = vmatpush1.msra.mxu0 0.0
    %984 = vmatprep.subr.mxu0 0.0
    %985 = vmatpush1.msra.mxu0 0.0
    %986 = vmatprep.subr.mxu0 0.0
    %987 = vmatpush1.msra.mxu0 0.0
    %988 = vmatprep.subr.mxu0 0.0
    %989 = vmatpush1.msra.mxu0 0.0
    %990 = vmatprep.subr.mxu0 0.0
    %991 = vmatpush1.msra.mxu0 0.0
    %992 = vmatprep.subr.mxu0 0.0
    %993 = vmatpush1.msra.mxu0 0.0
    %994 = vmatprep.subr.mxu0 0.0
    %995 = vmatpush1.msra.mxu0 0.0
    %996 = vmatprep.subr.mxu0 0.0
    %997 = vmatpush1.msra.mxu0 0.0
    %998 = vmatprep.subr.mxu0 0.0
    %999 = vmatpush1.msra.mxu0 0.0
    %1000 = vmatprep.subr.mxu0 0.0
    %1001 = vmatpush1.msra.mxu0 0.0
    %1002 = vmatprep.subr.mxu0 0.0
    %1003 = vmatpush1.msra.mxu0 0.0
    %1004 = vmatprep.subr.mxu0 0.0
    %1005 = vmatpush1.msra.mxu0 0.0
    %1006 = vmatprep.subr.mxu0 0.0
    %1007 = vmatpush1.msra.mxu0 0.0
    %1008 = vmatprep.subr.mxu0 0.0
    %1009 = vmatpush1.msra.mxu0 0.0
    %1010 = vmatprep.subr.mxu0 0.0
    %1011 = vmatpush1.msra.mxu0 0.0
    %1012 = vmatprep.subr.mxu0 0.0
    %1013 = vmatpush1.msra.mxu0 0.0
    %1014 = vmatprep.subr.mxu0 0.0
    %1015 = vmatpush1.msra.mxu0 0.0
    %1016 = vmatprep.subr.mxu0 0.0
    %1017 = vmatpush1.msra.mxu0 0.0
    %1018 = vmatprep.subr.mxu0 0.0
    %1019 = vmatpush1.msra.mxu0 0.0
    %1020 = vmatprep.subr.mxu0 0.0
    %1021 = vmatpush1.msra.mxu0 0.0
    %1022 = vmatprep.subr.mxu0 0.0
    %1023 = vmatpush1.msra.mxu0 0.0
    %1024 = vmatprep.subr.mxu0 0.0
    %1025 = vmatpush1.msra.mxu0 0.0
    %1026 = vmatprep.subr.mxu0 0.0
    %1027 = vmatpush1.msra.mxu0 0.0
    %1028 = vmatprep.subr.mxu0 0.0
    %1029 = vmatpush1.msra.mxu0 0.0
    %1030 = vmatprep.subr.mxu0 0.0
    %1031 = vmatpush1.msra.mxu0 0.0
    %1032 = vmatprep.subr.mxu0 0.0
    %1033 = vmatpush1.msra.mxu0 0.0
    %1034 = vmatprep.subr.mxu0 0.0
    %1035 = vmatpush1.msra.mxu0 0.0
    %1036 = vmatprep.mubr.f32.mxu0 0.0
    %1037 = vmatmul.mubr.f32.gmra.mrb[0].mxu0 %v524
    %v1038 = vpop.f32.mrb[0].mxu0
    %v1039 = vadd.f32 0.0, %v1038
    %v1040 = vpop.f32.mrb[0].mxu0
    %1041 = vmatprep.mubr.f32.mxu0 0.0
    %1042 = vmatmul.mubr.f32.gmra.mrb[0].mxu0 %v527
    %v1043 = vpop.f32.mrb[0].mxu0
    %v1044 = vadd.f32 0.0, %v1043
    %v1045 = vpop.f32.mrb[0].mxu0
    %1046 = vmatprep.mubr.f32.mxu0 0.0
    %1047 = vmatmul.mubr.f32.gmra.mrb[0].mxu0 %v530
    %v1048 = vpop.f32.mrb[0].mxu0
    %v1049 = vadd.f32 0.0, %v1048
    %v1050 = vpop.f32.mrb[0].mxu0
    %1051 = vdwg.mxu0
    %v1052 = vadd.f32 %v860, %v886
    %v1053 = vld [vmem:[#allocation14] sm:$0x1]
    %vm1054 = vcmp.ge.f32.partialorder %v1052, 0.0
    %v1055 = vmul.f32 %v1052, 0.01
    %v1056 = vsel %vm1054, %v1052, %v1055
    %vm1057 = vcmp.gt.f32.partialorder %v419, 0.0
    %vm1058 = vcmp.gt.f32.partialorder %v420, 0.0
    %v1059 = vsel %vm1057, %v1056, -1e+30
    %v1060 = vsel %vm1058, %v1056, -1e+30
    %v1061 = vsel %vm848, %v1059, -inf
    %1062 = vmax.xlane.f32.xlu0 %v1061
    %v1063 = vpop.xlane.xlu0 %1062
    %v1064 = vsel %vm852, %v1060, -inf
    %1065 = vmax.xlane.f32.xlu0 %v1064
    %v1066 = vpop.xlane.xlu0 %1065
    %v1067 = vsub.f32 %v1059, %v1063
    %v1068 = vsub.f32 %v1060, %v1066
    %v1069 = vmul.f32 %v1067, 1.442695
    %v1070 = vpow.pop %v1069
    %v1071 = vmul.f32 %v1068, 1.442695
    %v1072 = vpow.pop %v1071
    %v1073 = vmul.f32 %v1070, %v419
    %v1074 = vmul.f32 %v1072, %v420
    %v1075 = vsel %vm848, %v1073, 0.0
    %1076 = vadd.xlane.f32.xlu0 %v1075
    %v1077 = vpop.xlane.xlu0 %1076
    %v1078 = vsel %vm852, %v1074, 0.0
    %1079 = vadd.xlane.f32.xlu0 %v1078
    %v1080 = vpop.xlane.xlu0 %1079
    %v1081 = vadd.f32 %v1077, 1e-16
    %v1082 = vadd.f32 %v1080, 1e-16
    %v1083 = vrcp.pop %v1081
    %v1084 = vrcp.pop %v1082
    %v1085 = vmul.f32 %v1073, %v1083
    %v1086 = vmul.f32 %v1074, %v1084
    %v1088 = vlaneseq
    %v1089 = vshrl.u32 %v1088, 7
    %v1090 = vsub.s32 0, %v1089
    %v1091 = vrot.slane %v1053, %v1090
    %v1094 = vsel %vm848, %v1085, 0
    %v1097 = vsel %vm848, %v1086, 0
    %v1100 = vsel %vm532, %v1049, 0
    %1102 = vmatprep.subr.mxu0 0.0
    %1103 = vmatpush1.msra.mxu0 %v1039
    %1104 = vmatprep.subr.mxu0 0.0
    %1105 = vmatpush1.msra.mxu0 %v1044
    %1106 = vmatprep.subr.mxu0 0.0
    %1107 = vmatpush1.msra.mxu0 %v1100
    %1108 = vmatprep.subr.mxu0 0.0
    %1109 = vmatpush1.msra.mxu0 0.0
    %1110 = vmatprep.subr.mxu0 0.0
    %1111 = vmatpush1.msra.mxu0 0.0
    %1112 = vmatprep.subr.mxu0 0.0
    %1113 = vmatpush1.msra.mxu0 0.0
    %1114 = vmatprep.subr.mxu0 0.0
    %1115 = vmatpush1.msra.mxu0 0.0
    %1116 = vmatprep.subr.mxu0 0.0
    %1117 = vmatpush1.msra.mxu0 0.0
    %1118 = vmatprep.subr.mxu0 0.0
    %1119 = vmatpush1.msra.mxu0 0.0
    %1120 = vmatprep.subr.mxu0 0.0
    %1121 = vmatpush1.msra.mxu0 0.0
    %1122 = vmatprep.subr.mxu0 0.0
    %1123 = vmatpush1.msra.mxu0 0.0
    %1124 = vmatprep.subr.mxu0 0.0
    %1125 = vmatpush1.msra.mxu0 0.0
    %1126 = vmatprep.subr.mxu0 0.0
    %1127 = vmatpush1.msra.mxu0 0.0
    %1128 = vmatprep.subr.mxu0 0.0
    %1129 = vmatpush1.msra.mxu0 0.0
    %1130 = vmatprep.subr.mxu0 0.0
    %1131 = vmatpush1.msra.mxu0 0.0
    %1132 = vmatprep.subr.mxu0 0.0
    %1133 = vmatpush1.msra.mxu0 0.0
    %1134 = vmatprep.subr.mxu0 0.0
    %1135 = vmatpush1.msra.mxu0 0.0
    %1136 = vmatprep.subr.mxu0 0.0
    %1137 = vmatpush1.msra.mxu0 0.0
    %1138 = vmatprep.subr.mxu0 0.0
    %1139 = vmatpush1.msra.mxu0 0.0
    %1140 = vmatprep.subr.mxu0 0.0
    %1141 = vmatpush1.msra.mxu0 0.0
    %1142 = vmatprep.subr.mxu0 0.0
    %1143 = vmatpush1.msra.mxu0 0.0
    %1144 = vmatprep.subr.mxu0 0.0
    %1145 = vmatpush1.msra.mxu0 0.0
    %1146 = vmatprep.subr.mxu0 0.0
    %1147 = vmatpush1.msra.mxu0 0.0
    %1148 = vmatprep.subr.mxu0 0.0
    %1149 = vmatpush1.msra.mxu0 0.0
    %1150 = vmatprep.subr.mxu0 0.0
    %1151 = vmatpush1.msra.mxu0 0.0
    %1152 = vmatprep.subr.mxu0 0.0
    %1153 = vmatpush1.msra.mxu0 0.0
    %1154 = vmatprep.subr.mxu0 0.0
    %1155 = vmatpush1.msra.mxu0 0.0
    %1156 = vmatprep.subr.mxu0 0.0
    %1157 = vmatpush1.msra.mxu0 0.0
    %1158 = vmatprep.subr.mxu0 0.0
    %1159 = vmatpush1.msra.mxu0 0.0
    %1160 = vmatprep.subr.mxu0 0.0
    %1161 = vmatpush1.msra.mxu0 0.0
    %1162 = vmatprep.subr.mxu0 0.0
    %1163 = vmatpush1.msra.mxu0 0.0
    %1164 = vmatprep.subr.mxu0 0.0
    %1165 = vmatpush1.msra.mxu0 0.0
    %1166 = vmatprep.mubr.f32.mxu0 0.0
    %1167 = vmatmul.mubr.f32.gmra.mrb[0].mxu0 %v1094
    %v1168 = vpop.f32.mrb[0].mxu0
    %v1169 = vadd.f32 %v1091, %v1168
    %v1170 = vpop.f32.mrb[0].mxu0
    %1171 = vmatprep.mubr.f32.mxu0 0.0
    %1172 = vmatmul.mubr.f32.gmra.mrb[0].mxu0 %v1097
    %v1173 = vpop.f32.mrb[0].mxu0
    %v1174 = vadd.f32 %v1091, %v1173
    %v1175 = vpop.f32.mrb[0].mxu0
    %1176 = vdwg.mxu0
    %vm1177 = vcmp.gt.f32.partialorder %v1169, 0.0
    %vm1178 = vcmp.gt.f32.partialorder %v1174, 0.0
    %v1179 = vmin.f32 %v1169, 0.0
    %v1180 = vmin.f32 %v1174, 0.0
    %v1181 = vmul.f32 %v1179, 1.442695
    %v1182 = vpow.pop %v1181
    %v1183 = vmul.f32 %v1180, 1.442695
    %v1184 = vpow.pop %v1183
    %v1185 = vsub.f32 %v1182, 1.0
    %v1186 = vsub.f32 %v1184, 1.0
    %v1187 = vsel %vm1177, %v1169, %v1185
    %v1188 = vsel %vm1178, %v1174, %v1186
    %v1189 = vld [vmem:[#allocation16] sm:$0xff]
    %v1190 = vld [vmem:[#allocation16 + $0x8] sm:$0xff]
    %v1191 = vld [vmem:[#allocation16 + $0x10] sm:$0xff]
    %v1192 = vld [vmem:[#allocation16 + $0x18] sm:$0xff]
    %v1193 = vld [vmem:[#allocation16 + $0x20] sm:$0xff]
    %v1194 = vld [vmem:[#allocation16 + $0x28] sm:$0xff]
    %v1195 = vld [vmem:[#allocation17] sm:$0xff]
    %v1196 = vld [vmem:[#allocation17 + $0x8] sm:$0xff]
    %v1197 = vld [vmem:[#allocation17 + $0x10] sm:$0xff]
    %v1198 = vld [vmem:[#allocation17 + $0x18] sm:$0xff]
    %v1199 = vld [vmem:[#allocation17 + $0x20] sm:$0xff]
    %v1200 = vld [vmem:[#allocation17 + $0x28] sm:$0xff]
    %v1201 = vld [vmem:[#allocation19] sm:$0x7]
    %v1202 = vld [vmem:[#allocation20] sm:$0x7]
    %v1204 = vlaneseq
    %v1205 = vshrl.u32 %v1204, 7
    %v1206 = vsub.s32 0, %v1205
    %v1207 = vrot.slane %v1201, %v1206
    %v1208 = vlaneseq
    %v1209 = vshrl.u32 %v1208, 7
    %v1210 = vsub.s32 1, %v1209
    %v1211 = vrot.slane %v1201, %v1210
    %v1212 = vlaneseq
    %v1213 = vshrl.u32 %v1212, 7
    %v1214 = vsub.s32 2, %v1213
    %v1215 = vrot.slane %v1201, %v1214
    %v1220 = vsel %vm717, %v1187, 0
    %v1223 = vsel %vm717, %v1188, 0
    %1225 = vmatprep.subr.mxu0 %v1190
    %1226 = vmatpush1.msra.mxu0 %v1189
    %1227 = vmatprep.subr.mxu0 %v1193
    %1228 = vmatpush1.msra.mxu0 %v1192
    %1229 = vmatprep.subr.mxu0 0.0
    %1230 = vmatpush1.msra.mxu0 0.0
    %1231 = vmatprep.subr.mxu0 0.0
    %1232 = vmatpush1.msra.mxu0 0.0
    %1233 = vmatprep.subr.mxu0 0.0
    %1234 = vmatpush1.msra.mxu0 0.0
    %1235 = vmatprep.subr.mxu0 0.0
    %1236 = vmatpush1.msra.mxu0 0.0
    %1237 = vmatprep.subr.mxu0 0.0
    %1238 = vmatpush1.msra.mxu0 0.0
    %1239 = vmatprep.subr.mxu0 0.0
    %1240 = vmatpush1.msra.mxu0 0.0
    %1241 = vmatprep.subr.mxu0 0.0
    %1242 = vmatpush1.msra.mxu0 0.0
    %1243 = vmatprep.subr.mxu0 0.0
    %1244 = vmatpush1.msra.mxu0 0.0
    %1245 = vmatprep.subr.mxu0 0.0
    %1246 = vmatpush1.msra.mxu0 0.0
    %1247 = vmatprep.subr.mxu0 0.0
    %1248 = vmatpush1.msra.mxu0 0.0
    %1249 = vmatprep.subr.mxu0 0.0
    %1250 = vmatpush1.msra.mxu0 0.0
    %1251 = vmatprep.subr.mxu0 0.0
    %1252 = vmatpush1.msra.mxu0 0.0
    %1253 = vmatprep.subr.mxu0 0.0
    %1254 = vmatpush1.msra.mxu0 0.0
    %1255 = vmatprep.subr.mxu0 0.0
    %1256 = vmatpush1.msra.mxu0 0.0
    %1257 = vmatprep.subr.mxu0 0.0
    %1258 = vmatpush1.msra.mxu0 0.0
    %1259 = vmatprep.subr.mxu0 0.0
    %1260 = vmatpush1.msra.mxu0 0.0
    %1261 = vmatprep.subr.mxu0 0.0
    %1262 = vmatpush1.msra.mxu0 0.0
    %1263 = vmatprep.subr.mxu0 0.0
    %1264 = vmatpush1.msra.mxu0 0.0
    %1265 = vmatprep.subr.mxu0 0.0
    %1266 = vmatpush1.msra.mxu0 0.0
    %1267 = vmatprep.subr.mxu0 0.0
    %1268 = vmatpush1.msra.mxu0 0.0
    %1269 = vmatprep.subr.mxu0 0.0
    %1270 = vmatpush1.msra.mxu0 0.0
    %1271 = vmatprep.subr.mxu0 0.0
    %1272 = vmatpush1.msra.mxu0 0.0
    %1273 = vmatprep.subr.mxu0 0.0
    %1274 = vmatpush1.msra.mxu0 0.0
    %1275 = vmatprep.subr.mxu0 0.0
    %1276 = vmatpush1.msra.mxu0 0.0
    %1277 = vmatprep.subr.mxu0 0.0
    %1278 = vmatpush1.msra.mxu0 0.0
    %1279 = vmatprep.subr.mxu0 0.0
    %1280 = vmatpush1.msra.mxu0 0.0
    %1281 = vmatprep.subr.mxu0 0.0
    %1282 = vmatpush1.msra.mxu0 0.0
    %1283 = vmatprep.subr.mxu0 0.0
    %1284 = vmatpush1.msra.mxu0 0.0
    %1285 = vmatprep.subr.mxu0 0.0
    %1286 = vmatpush1.msra.mxu0 0.0
    %1287 = vmatprep.subr.mxu0 0.0
    %1288 = vmatpush1.msra.mxu0 0.0
    %1289 = vmatprep.mubr.f32.mxu0 0.0
    %1290 = vmatmul.mubr.f32.gmra.mrb[0].mxu0 %v1220
    %v1291 = vpop.f32.mrb[0].mxu0
    %v1292 = vadd.f32 %v1207, %v1291
    %v1293 = vpop.f32.mrb[0].mxu0
    %v1294 = vadd.f32 %v1211, %v1293
    %1295 = vmatprep.mubr.f32.mxu0 0.0
    %1296 = vmatmul.mubr.f32.gmra.mrb[0].mxu0 %v1223
    %v1297 = vpop.f32.mrb[0].mxu0
    %v1298 = vadd.f32 %v1207, %v1297
    %v1299 = vpop.f32.mrb[0].mxu0
    %v1300 = vadd.f32 %v1211, %v1299
    %1301 = vdwg.mxu0
    %1302 = vmatprep.subr.mxu0 0.0
    %1303 = vmatpush1.msra.mxu0 %v1191
    %1304 = vmatprep.subr.mxu0 0.0
    %1305 = vmatpush1.msra.mxu0 %v1194
    %1306 = vmatprep.subr.mxu0 0.0
    %1307 = vmatpush1.msra.mxu0 0.0
    %1308 = vmatprep.subr.mxu0 0.0
    %1309 = vmatpush1.msra.mxu0 0.0
    %1310 = vmatprep.subr.mxu0 0.0
    %1311 = vmatpush1.msra.mxu0 0.0
    %1312 = vmatprep.subr.mxu0 0.0
    %1313 = vmatpush1.msra.mxu0 0.0
    %1314 = vmatprep.subr.mxu0 0.0
    %1315 = vmatpush1.msra.mxu0 0.0
    %1316 = vmatprep.subr.mxu0 0.0
    %1317 = vmatpush1.msra.mxu0 0.0
    %1318 = vmatprep.subr.mxu0 0.0
    %1319 = vmatpush1.msra.mxu0 0.0
    %1320 = vmatprep.subr.mxu0 0.0
    %1321 = vmatpush1.msra.mxu0 0.0
    %1322 = vmatprep.subr.mxu0 0.0
    %1323 = vmatpush1.msra.mxu0 0.0
    %1324 = vmatprep.subr.mxu0 0.0
    %1325 = vmatpush1.msra.mxu0 0.0
    %1326 = vmatprep.subr.mxu0 0.0
    %1327 = vmatpush1.msra.mxu0 0.0
    %1328 = vmatprep.subr.mxu0 0.0
    %1329 = vmatpush1.msra.mxu0 0.0
    %1330 = vmatprep.subr.mxu0 0.0
    %1331 = vmatpush1.msra.mxu0 0.0
    %1332 = vmatprep.subr.mxu0 0.0
    %1333 = vmatpush1.msra.mxu0 0.0
    %1334 = vmatprep.subr.mxu0 0.0
    %1335 = vmatpush1.msra.mxu0 0.0
    %1336 = vmatprep.subr.mxu0 0.0
    %1337 = vmatpush1.msra.mxu0 0.0
    %1338 = vmatprep.subr.mxu0 0.0
    %1339 = vmatpush1.msra.mxu0 0.0
    %1340 = vmatprep.subr.mxu0 0.0
    %1341 = vmatpush1.msra.mxu0 0.0
    %1342 = vmatprep.subr.mxu0 0.0
    %1343 = vmatpush1.msra.mxu0 0.0
    %1344 = vmatprep.subr.mxu0 0.0
    %1345 = vmatpush1.msra.mxu0 0.0
    %1346 = vmatprep.subr.mxu0 0.0
    %1347 = vmatpush1.msra.mxu0 0.0
    %1348 = vmatprep.subr.mxu0 0.0
    %1349 = vmatpush1.msra.mxu0 0.0
    %1350 = vmatprep.subr.mxu0 0.0
    %1351 = vmatpush1.msra.mxu0 0.0
    %1352 = vmatprep.subr.mxu0 0.0
    %1353 = vmatpush1.msra.mxu0 0.0
    %1354 = vmatprep.subr.mxu0 0.0
    %1355 = vmatpush1.msra.mxu0 0.0
    %1356 = vmatprep.subr.mxu0 0.0
    %1357 = vmatpush1.msra.mxu0 0.0
    %1358 = vmatprep.subr.mxu0 0.0
    %1359 = vmatpush1.msra.mxu0 0.0
    %1360 = vmatprep.subr.mxu0 0.0
    %1361 = vmatpush1.msra.mxu0 0.0
    %1362 = vmatprep.subr.mxu0 0.0
    %1363 = vmatpush1.msra.mxu0 0.0
    %1364 = vmatprep.subr.mxu0 0.0
    %1365 = vmatpush1.msra.mxu0 0.0
    %1366 = vmatprep.mubr.f32.mxu0 0.0
    %1367 = vmatmul.mubr.f32.gmra.mrb[0].mxu0 %v1220
    %v1368 = vpop.f32.mrb[0].mxu0
    %v1369 = vadd.f32 %v1215, %v1368
    %v1370 = vpop.f32.mrb[0].mxu0
    %1371 = vmatprep.mubr.f32.mxu0 0.0
    %1372 = vmatmul.mubr.f32.gmra.mrb[0].mxu0 %v1223
    %v1373 = vpop.f32.mrb[0].mxu0
    %v1374 = vadd.f32 %v1215, %v1373
    %v1375 = vpop.f32.mrb[0].mxu0
    %1376 = vdwg.mxu0
    %v1378 = vlaneseq
    %v1379 = vshrl.u32 %v1378, 7
    %v1380 = vsub.s32 0, %v1379
    %v1381 = vrot.slane %v1202, %v1380
    %v1382 = vlaneseq
    %v1383 = vshrl.u32 %v1382, 7
    %v1384 = vsub.s32 1, %v1383
    %v1385 = vrot.slane %v1202, %v1384
    %v1386 = vlaneseq
    %v1387 = vshrl.u32 %v1386, 7
    %v1388 = vsub.s32 2, %v1387
    %v1389 = vrot.slane %v1202, %v1388
    %1393 = vmatprep.subr.mxu0 %v1196
    %1394 = vmatpush1.msra.mxu0 %v1195
    %1395 = vmatprep.subr.mxu0 %v1199
    %1396 = vmatpush1.msra.mxu0 %v1198
    %1397 = vmatprep.subr.mxu0 0.0
    %1398 = vmatpush1.msra.mxu0 0.0
    %1399 = vmatprep.subr.mxu0 0.0
    %1400 = vmatpush1.msra.mxu0 0.0
    %1401 = vmatprep.subr.mxu0 0.0
    %1402 = vmatpush1.msra.mxu0 0.0
    %1403 = vmatprep.subr.mxu0 0.0
    %1404 = vmatpush1.msra.mxu0 0.0
    %1405 = vmatprep.subr.mxu0 0.0
    %1406 = vmatpush1.msra.mxu0 0.0
    %1407 = vmatprep.subr.mxu0 0.0
    %1408 = vmatpush1.msra.mxu0 0.0
    %1409 = vmatprep.subr.mxu0 0.0
    %1410 = vmatpush1.msra.mxu0 0.0
    %1411 = vmatprep.subr.mxu0 0.0
    %1412 = vmatpush1.msra.mxu0 0.0
    %1413 = vmatprep.subr.mxu0 0.0
    %1414 = vmatpush1.msra.mxu0 0.0
    %1415 = vmatprep.subr.mxu0 0.0
    %1416 = vmatpush1.msra.mxu0 0.0
    %1417 = vmatprep.subr.mxu0 0.0
    %1418 = vmatpush1.msra.mxu0 0.0
    %1419 = vmatprep.subr.mxu0 0.0
    %1420 = vmatpush1.msra.mxu0 0.0
    %1421 = vmatprep.subr.mxu0 0.0
    %1422 = vmatpush1.msra.mxu0 0.0
    %1423 = vmatprep.subr.mxu0 0.0
    %1424 = vmatpush1.msra.mxu0 0.0
    %1425 = vmatprep.subr.mxu0 0.0
    %1426 = vmatpush1.msra.mxu0 0.0
    %1427 = vmatprep.subr.mxu0 0.0
    %1428 = vmatpush1.msra.mxu0 0.0
    %1429 = vmatprep.subr.mxu0 0.0
    %1430 = vmatpush1.msra.mxu0 0.0
    %1431 = vmatprep.subr.mxu0 0.0
    %1432 = vmatpush1.msra.mxu0 0.0
    %1433 = vmatprep.subr.mxu0 0.0
    %1434 = vmatpush1.msra.mxu0 0.0
    %1435 = vmatprep.subr.mxu0 0.0
    %1436 = vmatpush1.msra.mxu0 0.0
    %1437 = vmatprep.subr.mxu0 0.0
    %1438 = vmatpush1.msra.mxu0 0.0
    %1439 = vmatprep.subr.mxu0 0.0
    %1440 = vmatpush1.msra.mxu0 0.0
    %1441 = vmatprep.subr.mxu0 0.0
    %1442 = vmatpush1.msra.mxu0 0.0
    %1443 = vmatprep.subr.mxu0 0.0
    %1444 = vmatpush1.msra.mxu0 0.0
    %1445 = vmatprep.subr.mxu0 0.0
    %1446 = vmatpush1.msra.mxu0 0.0
    %1447 = vmatprep.subr.mxu0 0.0
    %1448 = vmatpush1.msra.mxu0 0.0
    %1449 = vmatprep.subr.mxu0 0.0
    %1450 = vmatpush1.msra.mxu0 0.0
    %1451 = vmatprep.subr.mxu0 0.0
    %1452 = vmatpush1.msra.mxu0 0.0
    %1453 = vmatprep.subr.mxu0 0.0
    %1454 = vmatpush1.msra.mxu0 0.0
    %1455 = vmatprep.subr.mxu0 0.0
    %1456 = vmatpush1.msra.mxu0 0.0
    %1457 = vmatprep.mubr.f32.mxu0 0.0
    %1458 = vmatmul.mubr.f32.gmra.mrb[0].mxu0 %v890
    %v1459 = vpop.f32.mrb[0].mxu0
    %v1460 = vadd.f32 %v1381, %v1459
    %v1461 = vpop.f32.mrb[0].mxu0
    %v1462 = vadd.f32 %v1385, %v1461
    %1463 = vmatprep.mubr.f32.mxu0 0.0
    %1464 = vmatmul.mubr.f32.gmra.mrb[0].mxu0 %v892
    %v1465 = vpop.f32.mrb[0].mxu0
    %v1466 = vadd.f32 %v1381, %v1465
    %v1467 = vpop.f32.mrb[0].mxu0
    %v1468 = vadd.f32 %v1385, %v1467
    %1469 = vdwg.mxu0
    %1470 = vmatprep.subr.mxu0 0.0
    %1471 = vmatpush1.msra.mxu0 %v1197
    %1472 = vmatprep.subr.mxu0 0.0
    %1473 = vmatpush1.msra.mxu0 %v1200
    %1474 = vmatprep.subr.mxu0 0.0
    %1475 = vmatpush1.msra.mxu0 0.0
    %1476 = vmatprep.subr.mxu0 0.0
    %1477 = vmatpush1.msra.mxu0 0.0
    %1478 = vmatprep.subr.mxu0 0.0
    %1479 = vmatpush1.msra.mxu0 0.0
    %1480 = vmatprep.subr.mxu0 0.0
    %1481 = vmatpush1.msra.mxu0 0.0
    %1482 = vmatprep.subr.mxu0 0.0
    %1483 = vmatpush1.msra.mxu0 0.0
    %1484 = vmatprep.subr.mxu0 0.0
    %1485 = vmatpush1.msra.mxu0 0.0
    %1486 = vmatprep.subr.mxu0 0.0
    %1487 = vmatpush1.msra.mxu0 0.0
    %1488 = vmatprep.subr.mxu0 0.0
    %1489 = vmatpush1.msra.mxu0 0.0
    %1490 = vmatprep.subr.mxu0 0.0
    %1491 = vmatpush1.msra.mxu0 0.0
    %1492 = vmatprep.subr.mxu0 0.0
    %1493 = vmatpush1.msra.mxu0 0.0
    %1494 = vmatprep.subr.mxu0 0.0
    %1495 = vmatpush1.msra.mxu0 0.0
    %1496 = vmatprep.subr.mxu0 0.0
    %1497 = vmatpush1.msra.mxu0 0.0
    %1498 = vmatprep.subr.mxu0 0.0
    %1499 = vmatpush1.msra.mxu0 0.0
    %1500 = vmatprep.subr.mxu0 0.0
    %1501 = vmatpush1.msra.mxu0 0.0
    %1502 = vmatprep.subr.mxu0 0.0
    %1503 = vmatpush1.msra.mxu0 0.0
    %1504 = vmatprep.subr.mxu0 0.0
    %1505 = vmatpush1.msra.mxu0 0.0
    %1506 = vmatprep.subr.mxu0 0.0
    %1507 = vmatpush1.msra.mxu0 0.0
    %1508 = vmatprep.subr.mxu0 0.0
    %1509 = vmatpush1.msra.mxu0 0.0
    %1510 = vmatprep.subr.mxu0 0.0
    %1511 = vmatpush1.msra.mxu0 0.0
    %1512 = vmatprep.subr.mxu0 0.0
    %1513 = vmatpush1.msra.mxu0 0.0
    %1514 = vmatprep.subr.mxu0 0.0
    %1515 = vmatpush1.msra.mxu0 0.0
    %1516 = vmatprep.subr.mxu0 0.0
    %1517 = vmatpush1.msra.mxu0 0.0
    %1518 = vmatprep.subr.mxu0 0.0
    %1519 = vmatpush1.msra.mxu0 0.0
    %1520 = vmatprep.subr.mxu0 0.0
    %1521 = vmatpush1.msra.mxu0 0.0
    %1522 = vmatprep.subr.mxu0 0.0
    %1523 = vmatpush1.msra.mxu0 0.0
    %1524 = vmatprep.subr.mxu0 0.0
    %1525 = vmatpush1.msra.mxu0 0.0
    %1526 = vmatprep.subr.mxu0 0.0
    %1527 = vmatpush1.msra.mxu0 0.0
    %1528 = vmatprep.subr.mxu0 0.0
    %1529 = vmatpush1.msra.mxu0 0.0
    %1530 = vmatprep.subr.mxu0 0.0
    %1531 = vmatpush1.msra.mxu0 0.0
    %1532 = vmatprep.subr.mxu0 0.0
    %1533 = vmatpush1.msra.mxu0 0.0
    %1534 = vmatprep.mubr.f32.mxu0 0.0
    %1535 = vmatmul.mubr.f32.gmra.mrb[0].mxu0 %v890
    %v1536 = vpop.f32.mrb[0].mxu0
    %v1537 = vadd.f32 %v1389, %v1536
    %v1538 = vpop.f32.mrb[0].mxu0
    %1539 = vmatprep.mubr.f32.mxu0 0.0
    %1540 = vmatmul.mubr.f32.gmra.mrb[0].mxu0 %v892
    %v1541 = vpop.f32.mrb[0].mxu0
    %v1542 = vadd.f32 %v1389, %v1541
    %v1543 = vpop.f32.mrb[0].mxu0
    %1544 = vdwg.mxu0
    %v1545 = vadd.f32 %v1292, %v1460
    %v1546 = vadd.f32 %v1298, %v1466
    %v1547 = vsub.f32 0.0, %v1545
    %v1548 = vsub.f32 0.0, %v1546
    %v1549 = vmul.f32 %v1547, 1.442695
    %v1550 = vpow.pop %v1549
    %v1551 = vmul.f32 %v1548, 1.442695
    %v1552 = vpow.pop %v1551
    %v1553 = vadd.f32 %v1550, 1.0
    %v1554 = vadd.f32 %v1552, 1.0
    %v1555 = vrcp.pop %v1553
    %v1556 = vmul.f32 1.0, %v1555
    %v1557 = vrcp.pop %v1554
    %v1558 = vmul.f32 1.0, %v1557
    %v1559 = vadd.f32 %v1294, %v1462
    %v1560 = vadd.f32 %v1300, %v1468
    %v1561 = vsub.f32 0.0, %v1559
    %v1562 = vsub.f32 0.0, %v1560
    %v1563 = vmul.f32 %v1561, 1.442695
    %v1564 = vpow.pop %v1563
    %v1565 = vmul.f32 %v1562, 1.442695
    %v1566 = vpow.pop %v1565
    %v1567 = vadd.f32 %v1564, 1.0
    %v1568 = vadd.f32 %v1566, 1.0
    %v1569 = vrcp.pop %v1567
    %v1570 = vmul.f32 1.0, %v1569
    %v1571 = vrcp.pop %v1568
    %v1572 = vmul.f32 1.0, %v1571
    %v1573 = vmul.f32 %v1556, %v1537
    %v1574 = vmul.f32 %v1558, %v1542
    %v1575 = vadd.f32 %v1369, %v1573
    %v1576 = vadd.f32 %v1374, %v1574
    %v1577 = vtanh.pop %v1575
    %v1578 = vtanh.pop %v1576
    %v1579 = vsub.f32 1.0, %v1570
    %v1580 = vsub.f32 1.0, %v1572
    %v1581 = vmul.f32 %v1579, %v1577
    %v1582 = vmul.f32 %v1580, %v1578
    %v1583 = vmul.f32 %v1570, %v520
    %v1584 = vmul.f32 %v1572, %v521
    %v1585 = vadd.f32 %v1581, %v1583
    %v1586 = vadd.f32 %v1582, %v1584
    %v1587 = vmax.f32 %v1585, 0.0
    %v1588 = vmax.f32 %v1586, 0.0
    %v1589 = vld [vmem:[%s37] sm:$0xff]
    %v1590 = vld [vmem:[%s37 + $0x8] sm:$0xff]
    %v1592 = vsel %vm717, %v1587, 0
    %v1595 = vsel %vm717, %v1588, 0
    %1597 = vmatprep.subr.mxu0 0.0
    %1598 = vmatpush1.msra.mxu0 %v1589
    %1599 = vmatprep.subr.mxu0 0.0
    %1600 = vmatpush1.msra.mxu0 %v1590
    %1601 = vmatprep.subr.mxu0 0.0
    %1602 = vmatpush1.msra.mxu0 0.0
    %1603 = vmatprep.subr.mxu0 0.0
    %1604 = vmatpush1.msra.mxu0 0.0
    %1605 = vmatprep.subr.mxu0 0.0
    %1606 = vmatpush1.msra.mxu0 0.0
    %1607 = vmatprep.subr.mxu0 0.0
    %1608 = vmatpush1.msra.mxu0 0.0
    %1609 = vmatprep.subr.mxu0 0.0
    %1610 = vmatpush1.msra.mxu0 0.0
    %1611 = vmatprep.subr.mxu0 0.0
    %1612 = vmatpush1.msra.mxu0 0.0
    %1613 = vmatprep.subr.mxu0 0.0
    %1614 = vmatpush1.msra.mxu0 0.0
    %1615 = vmatprep.subr.mxu0 0.0
    %1616 = vmatpush1.msra.mxu0 0.0
    %1617 = vmatprep.subr.mxu0 0.0
    %1618 = vmatpush1.msra.mxu0 0.0
    %1619 = vmatprep.subr.mxu0 0.0
    %1620 = vmatpush1.msra.mxu0 0.0
    %1621 = vmatprep.subr.mxu0 0.0
    %1622 = vmatpush1.msra.mxu0 0.0
    %1623 = vmatprep.subr.mxu0 0.0
    %1624 = vmatpush1.msra.mxu0 0.0
    %1625 = vmatprep.subr.mxu0 0.0
    %1626 = vmatpush1.msra.mxu0 0.0
    %1627 = vmatprep.subr.mxu0 0.0
    %1628 = vmatpush1.msra.mxu0 0.0
    %1629 = vmatprep.subr.mxu0 0.0
    %1630 = vmatpush1.msra.mxu0 0.0
    %1631 = vmatprep.subr.mxu0 0.0
    %1632 = vmatpush1.msra.mxu0 0.0
    %1633 = vmatprep.subr.mxu0 0.0
    %1634 = vmatpush1.msra.mxu0 0.0
    %1635 = vmatprep.subr.mxu0 0.0
    %1636 = vmatpush1.msra.mxu0 0.0
    %1637 = vmatprep.subr.mxu0 0.0
    %1638 = vmatpush1.msra.mxu0 0.0
    %1639 = vmatprep.subr.mxu0 0.0
    %1640 = vmatpush1.msra.mxu0 0.0
    %1641 = vmatprep.subr.mxu0 0.0
    %1642 = vmatpush1.msra.mxu0 0.0
    %1643 = vmatprep.subr.mxu0 0.0
    %1644 = vmatpush1.msra.mxu0 0.0
    %1645 = vmatprep.subr.mxu0 0.0
    %1646 = vmatpush1.msra.mxu0 0.0
    %1647 = vmatprep.subr.mxu0 0.0
    %1648 = vmatpush1.msra.mxu0 0.0
    %1649 = vmatprep.subr.mxu0 0.0
    %1650 = vmatpush1.msra.mxu0 0.0
    %1651 = vmatprep.subr.mxu0 0.0
    %1652 = vmatpush1.msra.mxu0 0.0
    %1653 = vmatprep.subr.mxu0 0.0
    %1654 = vmatpush1.msra.mxu0 0.0
    %1655 = vmatprep.subr.mxu0 0.0
    %1656 = vmatpush1.msra.mxu0 0.0
    %1657 = vmatprep.subr.mxu0 0.0
    %1658 = vmatpush1.msra.mxu0 0.0
    %1659 = vmatprep.subr.mxu0 0.0
    %1660 = vmatpush1.msra.mxu0 0.0
    %1661 = vmatprep.mubr.f32.mxu0 0.0
    %1662 = vmatmul.mubr.f32.gmra.mrb[0].mxu0 %v1592
    %v1663 = vpop.f32.mrb[0].mxu0
    %v1664 = vadd.f32 0.0, %v1663
    %v1665 = vpop.f32.mrb[0].mxu0
    %1666 = vmatprep.mubr.f32.mxu0 0.0
    %1667 = vmatmul.mubr.f32.gmra.mrb[0].mxu0 %v1595
    %v1668 = vpop.f32.mrb[0].mxu0
    %v1669 = vadd.f32 0.0, %v1668
    %v1670 = vpop.f32.mrb[0].mxu0
    %1671 = vdwg.mxu0
    %v1672 = vld [vmem:[%s39] sm:$0x1]
    %v1674 = vlaneseq
    %v1675 = vshrl.u32 %v1674, 7
    %v1676 = vsub.s32 0, %v1675
    %v1677 = vrot.slane %v1672, %v1676
    %v1679 = vmul.f32 %v1664, %v1677
    %v1680 = vmul.f32 %v1669, %v1677
    %v1681 = vsel %vm717, %v1679, 0.0
    %1682 = vadd.xlane.f32.xlu0 %v1681
    %v1683 = vpop.xlane.xlu0 %1682
    %v1684 = vsel %vm832, %v1680, 0.0
    %1685 = vadd.xlane.f32.xlu0 %v1684
    %v1686 = vpop.xlane.xlu0 %1685
    %v1687 = vld [vmem:[%s41] sm:$0x1]
    %v1689 = vlaneseq
    %v1690 = vshrl.u32 %v1689, 7
    %v1691 = vsub.s32 0, %v1690
    %v1692 = vrot.slane %v1687, %v1691
    %v1694 = vmul.f32 %v1664, %v1692
    %v1695 = vmul.f32 %v1669, %v1692
    %v1696 = vsel %vm717, %v1694, 0.0
    %1697 = vadd.xlane.f32.xlu0 %v1696
    %v1698 = vpop.xlane.xlu0 %1697
    %v1699 = vsel %vm832, %v1695, 0.0
    %1700 = vadd.xlane.f32.xlu0 %v1699
    %v1701 = vpop.xlane.xlu0 %1700
    %v1702 = vmul.f32 %v417, %v1683
    %v1703 = vmul.f32 %v418, %v1686
    %v1704 = vsel %vm848, %v1702, 0.0
    %v1705 = vsel %vm852, %v1703, 0.0
    %v1706 = vadd.f32 %v1704, %v1705
    %v1707 = vrot.slane %v1706, 4
    %v1708 = vadd.f32 %v1706, %v1707
    %v1709 = vrot.slane %v1708, 2
    %v1710 = vadd.f32 %v1708, %v1709
    %v1711 = vrot.slane %v1710, 1
    %v1712 = vadd.f32 %v1710, %v1711
    %v1713 = vmul.f32 %v419, %v1698
    %v1714 = vmul.f32 %v420, %v1701
    %v1715 = vsel %vm848, %v1713, 0.0
    %v1716 = vsel %vm852, %v1714, 0.0
    %v1717 = vadd.f32 %v1715, %v1716
    %v1718 = vrot.slane %v1717, 4
    %v1719 = vadd.f32 %v1717, %v1718
    %v1720 = vrot.slane %v1719, 2
    %v1721 = vadd.f32 %v1719, %v1720
    %v1722 = vrot.slane %v1721, 1
    %v1723 = vadd.f32 %v1721, %v1722
    %v1725 = vsel %vm532, %v1669, 0
    %1727 = vmatprep.subr.mxu0 0.0
    %1728 = vmatpush1.msra.mxu0 %v1664
    %1729 = vmatprep.subr.mxu0 0.0
    %1730 = vmatpush1.msra.mxu0 %v1725
    %1731 = vmatprep.subr.mxu0 0.0
    %1732 = vmatpush1.msra.mxu0 0.0
    %1733 = vmatprep.subr.mxu0 0.0
    %1734 = vmatpush1.msra.mxu0 0.0
    %1735 = vmatprep.subr.mxu0 0.0
    %1736 = vmatpush1.msra.mxu0 0.0
    %1737 = vmatprep.subr.mxu0 0.0
    %1738 = vmatpush1.msra.mxu0 0.0
    %1739 = vmatprep.subr.mxu0 0.0
    %1740 = vmatpush1.msra.mxu0 0.0
    %1741 = vmatprep.subr.mxu0 0.0
    %1742 = vmatpush1.msra.mxu0 0.0
    %1743 = vmatprep.subr.mxu0 0.0
    %1744 = vmatpush1.msra.mxu0 0.0
    %1745 = vmatprep.subr.mxu0 0.0
    %1746 = vmatpush1.msra.mxu0 0.0
    %1747 = vmatprep.subr.mxu0 0.0
    %1748 = vmatpush1.msra.mxu0 0.0
    %1749 = vmatprep.subr.mxu0 0.0
    %1750 = vmatpush1.msra.mxu0 0.0
    %1751 = vmatprep.subr.mxu0 0.0
    %1752 = vmatpush1.msra.mxu0 0.0
    %1753 = vmatprep.subr.mxu0 0.0
    %1754 = vmatpush1.msra.mxu0 0.0
    %1755 = vmatprep.subr.mxu0 0.0
    %1756 = vmatpush1.msra.mxu0 0.0
    %1757 = vmatprep.subr.mxu0 0.0
    %1758 = vmatpush1.msra.mxu0 0.0
    %1759 = vmatprep.subr.mxu0 0.0
    %1760 = vmatpush1.msra.mxu0 0.0
    %1761 = vmatprep.subr.mxu0 0.0
    %1762 = vmatpush1.msra.mxu0 0.0
    %1763 = vmatprep.subr.mxu0 0.0
    %1764 = vmatpush1.msra.mxu0 0.0
    %1765 = vmatprep.subr.mxu0 0.0
    %1766 = vmatpush1.msra.mxu0 0.0
    %1767 = vmatprep.subr.mxu0 0.0
    %1768 = vmatpush1.msra.mxu0 0.0
    %1769 = vmatprep.subr.mxu0 0.0
    %1770 = vmatpush1.msra.mxu0 0.0
    %1771 = vmatprep.subr.mxu0 0.0
    %1772 = vmatpush1.msra.mxu0 0.0
    %1773 = vmatprep.subr.mxu0 0.0
    %1774 = vmatpush1.msra.mxu0 0.0
    %1775 = vmatprep.subr.mxu0 0.0
    %1776 = vmatpush1.msra.mxu0 0.0
    %1777 = vmatprep.subr.mxu0 0.0
    %1778 = vmatpush1.msra.mxu0 0.0
    %1779 = vmatprep.subr.mxu0 0.0
    %1780 = vmatpush1.msra.mxu0 0.0
    %1781 = vmatprep.subr.mxu0 0.0
    %1782 = vmatpush1.msra.mxu0 0.0
    %1783 = vmatprep.subr.mxu0 0.0
    %1784 = vmatpush1.msra.mxu0 0.0
    %1785 = vmatprep.subr.mxu0 0.0
    %1786 = vmatpush1.msra.mxu0 0.0
    %1787 = vmatprep.subr.mxu0 0.0
    %1788 = vmatpush1.msra.mxu0 0.0
    %1789 = vmatprep.subr.mxu0 0.0
    %1790 = vmatpush1.msra.mxu0 0.0
    %1791 = vmatprep.mubr.f32.mxu0 0.0
    %1792 = vmatmul.mubr.f32.gmra.mrb[0].mxu0 %v524
    %v1793 = vpop.f32.mrb[0].mxu0
    %v1794 = vadd.f32 0.0, %v1793
    %v1795 = vpop.f32.mrb[0].mxu0
    %1796 = vmatprep.mubr.f32.mxu0 0.0
    %1797 = vmatmul.mubr.f32.gmra.mrb[0].mxu0 %v527
    %v1798 = vpop.f32.mrb[0].mxu0
    %v1799 = vadd.f32 0.0, %v1798
    %v1800 = vpop.f32.mrb[0].mxu0
    %1801 = vmatprep.mubr.f32.mxu0 0.0
    %1802 = vmatmul.mubr.f32.gmra.mrb[0].mxu0 %v530
    %v1803 = vpop.f32.mrb[0].mxu0
    %v1804 = vadd.f32 0.0, %v1803
    %v1805 = vpop.f32.mrb[0].mxu0
    %1806 = vdwg.mxu0
    %v1807 = vadd.f32 %v1712, %v1723
    %v1808 = vld [vmem:[#allocation22] sm:$0x1]
    %vm1809 = vcmp.ge.f32.partialorder %v1807, 0.0
    %v1810 = vmul.f32 %v1807, 0.01
    %v1811 = vsel %vm1809, %v1807, %v1810
    %v1812 = vsel %vm1057, %v1811, -1e+30
    %v1813 = vsel %vm1058, %v1811, -1e+30
    %v1814 = vsel %vm848, %v1812, -inf
    %1815 = vmax.xlane.f32.xlu0 %v1814
    %v1816 = vpop.xlane.xlu0 %1815
    %v1817 = vsel %vm852, %v1813, -inf
    %1818 = vmax.xlane.f32.xlu0 %v1817
    %v1819 = vpop.xlane.xlu0 %1818
    %v1820 = vsub.f32 %v1812, %v1816
    %v1821 = vsub.f32 %v1813, %v1819
    %v1822 = vmul.f32 %v1820, 1.442695
    %v1823 = vpow.pop %v1822
    %v1824 = vmul.f32 %v1821, 1.442695
    %v1825 = vpow.pop %v1824
    %v1826 = vmul.f32 %v1823, %v419
    %v1827 = vmul.f32 %v1825, %v420
    %v1828 = vsel %vm848, %v1826, 0.0
    %1829 = vadd.xlane.f32.xlu0 %v1828
    %v1830 = vpop.xlane.xlu0 %1829
    %v1831 = vsel %vm852, %v1827, 0.0
    %1832 = vadd.xlane.f32.xlu0 %v1831
    %v1833 = vpop.xlane.xlu0 %1832
    %v1834 = vadd.f32 %v1830, 1e-16
    %v1835 = vadd.f32 %v1833, 1e-16
    %v1836 = vrcp.pop %v1834
    %v1837 = vrcp.pop %v1835
    %v1838 = vmul.f32 %v1826, %v1836
    %v1839 = vmul.f32 %v1827, %v1837
    %v1841 = vlaneseq
    %v1842 = vshrl.u32 %v1841, 7
    %v1843 = vsub.s32 0, %v1842
    %v1844 = vrot.slane %v1808, %v1843
    %v1847 = vsel %vm848, %v1838, 0
    %v1850 = vsel %vm848, %v1839, 0
    %v1853 = vsel %vm532, %v1804, 0
    %1855 = vmatprep.subr.mxu0 0.0
    %1856 = vmatpush1.msra.mxu0 %v1794
    %1857 = vmatprep.subr.mxu0 0.0
    %1858 = vmatpush1.msra.mxu0 %v1799
    %1859 = vmatprep.subr.mxu0 0.0
    %1860 = vmatpush1.msra.mxu0 %v1853
    %1861 = vmatprep.subr.mxu0 0.0
    %1862 = vmatpush1.msra.mxu0 0.0
    %1863 = vmatprep.subr.mxu0 0.0
    %1864 = vmatpush1.msra.mxu0 0.0
    %1865 = vmatprep.subr.mxu0 0.0
    %1866 = vmatpush1.msra.mxu0 0.0
    %1867 = vmatprep.subr.mxu0 0.0
    %1868 = vmatpush1.msra.mxu0 0.0
    %1869 = vmatprep.subr.mxu0 0.0
    %1870 = vmatpush1.msra.mxu0 0.0
    %1871 = vmatprep.subr.mxu0 0.0
    %1872 = vmatpush1.msra.mxu0 0.0
    %1873 = vmatprep.subr.mxu0 0.0
    %1874 = vmatpush1.msra.mxu0 0.0
    %1875 = vmatprep.subr.mxu0 0.0
    %1876 = vmatpush1.msra.mxu0 0.0
    %1877 = vmatprep.subr.mxu0 0.0
    %1878 = vmatpush1.msra.mxu0 0.0
    %1879 = vmatprep.subr.mxu0 0.0
    %1880 = vmatpush1.msra.mxu0 0.0
    %1881 = vmatprep.subr.mxu0 0.0
    %1882 = vmatpush1.msra.mxu0 0.0
    %1883 = vmatprep.subr.mxu0 0.0
    %1884 = vmatpush1.msra.mxu0 0.0
    %1885 = vmatprep.subr.mxu0 0.0
    %1886 = vmatpush1.msra.mxu0 0.0
    %1887 = vmatprep.subr.mxu0 0.0
    %1888 = vmatpush1.msra.mxu0 0.0
    %1889 = vmatprep.subr.mxu0 0.0
    %1890 = vmatpush1.msra.mxu0 0.0
    %1891 = vmatprep.subr.mxu0 0.0
    %1892 = vmatpush1.msra.mxu0 0.0
    %1893 = vmatprep.subr.mxu0 0.0
    %1894 = vmatpush1.msra.mxu0 0.0
    %1895 = vmatprep.subr.mxu0 0.0
    %1896 = vmatpush1.msra.mxu0 0.0
    %1897 = vmatprep.subr.mxu0 0.0
    %1898 = vmatpush1.msra.mxu0 0.0
    %1899 = vmatprep.subr.mxu0 0.0
    %1900 = vmatpush1.msra.mxu0 0.0
    %1901 = vmatprep.subr.mxu0 0.0
    %1902 = vmatpush1.msra.mxu0 0.0
    %1903 = vmatprep.subr.mxu0 0.0
    %1904 = vmatpush1.msra.mxu0 0.0
    %1905 = vmatprep.subr.mxu0 0.0
    %1906 = vmatpush1.msra.mxu0 0.0
    %1907 = vmatprep.subr.mxu0 0.0
    %1908 = vmatpush1.msra.mxu0 0.0
    %1909 = vmatprep.subr.mxu0 0.0
    %1910 = vmatpush1.msra.mxu0 0.0
    %1911 = vmatprep.subr.mxu0 0.0
    %1912 = vmatpush1.msra.mxu0 0.0
    %1913 = vmatprep.subr.mxu0 0.0
    %1914 = vmatpush1.msra.mxu0 0.0
    %1915 = vmatprep.subr.mxu0 0.0
    %1916 = vmatpush1.msra.mxu0 0.0
    %1917 = vmatprep.subr.mxu0 0.0
    %1918 = vmatpush1.msra.mxu0 0.0
    %1919 = vmatprep.mubr.f32.mxu0 0.0
    %1920 = vmatmul.mubr.f32.gmra.mrb[0].mxu0 %v1847
    %v1921 = vpop.f32.mrb[0].mxu0
    %v1922 = vadd.f32 %v1844, %v1921
    %v1923 = vpop.f32.mrb[0].mxu0
    %1924 = vmatprep.mubr.f32.mxu0 0.0
    %1925 = vmatmul.mubr.f32.gmra.mrb[0].mxu0 %v1850
    %v1926 = vpop.f32.mrb[0].mxu0
    %v1927 = vadd.f32 %v1844, %v1926
    %v1928 = vpop.f32.mrb[0].mxu0
    %1929 = vdwg.mxu0
    %vm1930 = vcmp.gt.f32.partialorder %v1922, 0.0
    %vm1931 = vcmp.gt.f32.partialorder %v1927, 0.0
    %v1932 = vmin.f32 %v1922, 0.0
    %v1933 = vmin.f32 %v1927, 0.0
    %v1934 = vmul.f32 %v1932, 1.442695
    %v1935 = vpow.pop %v1934
    %v1936 = vmul.f32 %v1933, 1.442695
    %v1937 = vpow.pop %v1936
    %v1938 = vsub.f32 %v1935, 1.0
    %v1939 = vsub.f32 %v1937, 1.0
    %v1940 = vsel %vm1930, %v1922, %v1938
    %v1941 = vsel %vm1931, %v1927, %v1939
    %v1942 = vld [vmem:[%s45] sm:$0xff]
    %v1943 = vld [vmem:[%s45 + $0x8] sm:$0xff]
    %v1944 = vld [vmem:[%s45 + $0x10] sm:$0xff]
    %v1945 = vld [vmem:[%s45 + $0x18] sm:$0xff]
    %v1946 = vld [vmem:[%s45 + $0x20] sm:$0xff]
    %v1947 = vld [vmem:[%s45 + $0x28] sm:$0xff]
    %v1948 = vld [vmem:[%s47] sm:$0xff]
    %v1949 = vld [vmem:[%s47 + $0x8] sm:$0xff]
    %v1950 = vld [vmem:[%s47 + $0x10] sm:$0xff]
    %v1951 = vld [vmem:[%s47 + $0x18] sm:$0xff]
    %v1952 = vld [vmem:[%s47 + $0x20] sm:$0xff]
    %v1953 = vld [vmem:[%s47 + $0x28] sm:$0xff]
    %v1954 = vld [vmem:[%s49] sm:$0x7]
    %v1955 = vld [vmem:[%s51] sm:$0x7]
    %v1957 = vlaneseq
    %v1958 = vshrl.u32 %v1957, 7
    %v1959 = vsub.s32 0, %v1958
    %v1960 = vrot.slane %v1954, %v1959
    %v1961 = vlaneseq
    %v1962 = vshrl.u32 %v1961, 7
    %v1963 = vsub.s32 1, %v1962
    %v1964 = vrot.slane %v1954, %v1963
    %v1965 = vlaneseq
    %v1966 = vshrl.u32 %v1965, 7
    %v1967 = vsub.s32 2, %v1966
    %v1968 = vrot.slane %v1954, %v1967
    %v1973 = vsel %vm717, %v1940, 0
    %v1976 = vsel %vm717, %v1941, 0
    %1978 = vmatprep.subr.mxu0 %v1943
    %1979 = vmatpush1.msra.mxu0 %v1942
    %1980 = vmatprep.subr.mxu0 %v1946
    %1981 = vmatpush1.msra.mxu0 %v1945
    %1982 = vmatprep.subr.mxu0 0.0
    %1983 = vmatpush1.msra.mxu0 0.0
    %1984 = vmatprep.subr.mxu0 0.0
    %1985 = vmatpush1.msra.mxu0 0.0
    %1986 = vmatprep.subr.mxu0 0.0
    %1987 = vmatpush1.msra.mxu0 0.0
    %1988 = vmatprep.subr.mxu0 0.0
    %1989 = vmatpush1.msra.mxu0 0.0
    %1990 = vmatprep.subr.mxu0 0.0
    %1991 = vmatpush1.msra.mxu0 0.0
    %1992 = vmatprep.subr.mxu0 0.0
    %1993 = vmatpush1.msra.mxu0 0.0
    %1994 = vmatprep.subr.mxu0 0.0
    %1995 = vmatpush1.msra.mxu0 0.0
    %1996 = vmatprep.subr.mxu0 0.0
    %1997 = vmatpush1.msra.mxu0 0.0
    %1998 = vmatprep.subr.mxu0 0.0
    %1999 = vmatpush1.msra.mxu0 0.0
    %2000 = vmatprep.subr.mxu0 0.0
    %2001 = vmatpush1.msra.mxu0 0.0
    %2002 = vmatprep.subr.mxu0 0.0
    %2003 = vmatpush1.msra.mxu0 0.0
    %2004 = vmatprep.subr.mxu0 0.0
    %2005 = vmatpush1.msra.mxu0 0.0
    %2006 = vmatprep.subr.mxu0 0.0
    %2007 = vmatpush1.msra.mxu0 0.0
    %2008 = vmatprep.subr.mxu0 0.0
    %2009 = vmatpush1.msra.mxu0 0.0
    %2010 = vmatprep.subr.mxu0 0.0
    %2011 = vmatpush1.msra.mxu0 0.0
    %2012 = vmatprep.subr.mxu0 0.0
    %2013 = vmatpush1.msra.mxu0 0.0
    %2014 = vmatprep.subr.mxu0 0.0
    %2015 = vmatpush1.msra.mxu0 0.0
    %2016 = vmatprep.subr.mxu0 0.0
    %2017 = vmatpush1.msra.mxu0 0.0
    %2018 = vmatprep.subr.mxu0 0.0
    %2019 = vmatpush1.msra.mxu0 0.0
    %2020 = vmatprep.subr.mxu0 0.0
    %2021 = vmatpush1.msra.mxu0 0.0
    %2022 = vmatprep.subr.mxu0 0.0
    %2023 = vmatpush1.msra.mxu0 0.0
    %2024 = vmatprep.subr.mxu0 0.0
    %2025 = vmatpush1.msra.mxu0 0.0
    %2026 = vmatprep.subr.mxu0 0.0
    %2027 = vmatpush1.msra.mxu0 0.0
    %2028 = vmatprep.subr.mxu0 0.0
    %2029 = vmatpush1.msra.mxu0 0.0
    %2030 = vmatprep.subr.mxu0 0.0
    %2031 = vmatpush1.msra.mxu0 0.0
    %2032 = vmatprep.subr.mxu0 0.0
    %2033 = vmatpush1.msra.mxu0 0.0
    %2034 = vmatprep.subr.mxu0 0.0
    %2035 = vmatpush1.msra.mxu0 0.0
    %2036 = vmatprep.subr.mxu0 0.0
    %2037 = vmatpush1.msra.mxu0 0.0
    %2038 = vmatprep.subr.mxu0 0.0
    %2039 = vmatpush1.msra.mxu0 0.0
    %2040 = vmatprep.subr.mxu0 0.0
    %2041 = vmatpush1.msra.mxu0 0.0
    %2042 = vmatprep.mubr.f32.mxu0 0.0
    %2043 = vmatmul.mubr.f32.gmra.mrb[0].mxu0 %v1973
    %v2044 = vpop.f32.mrb[0].mxu0
    %v2045 = vadd.f32 %v1960, %v2044
    %v2046 = vpop.f32.mrb[0].mxu0
    %v2047 = vadd.f32 %v1964, %v2046
    %2048 = vmatprep.mubr.f32.mxu0 0.0
    %2049 = vmatmul.mubr.f32.gmra.mrb[0].mxu0 %v1976
    %v2050 = vpop.f32.mrb[0].mxu0
    %v2051 = vadd.f32 %v1960, %v2050
    %v2052 = vpop.f32.mrb[0].mxu0
    %v2053 = vadd.f32 %v1964, %v2052
    %2054 = vdwg.mxu0
    %2055 = vmatprep.subr.mxu0 0.0
    %2056 = vmatpush1.msra.mxu0 %v1944
    %2057 = vmatprep.subr.mxu0 0.0
    %2058 = vmatpush1.msra.mxu0 %v1947
    %2059 = vmatprep.subr.mxu0 0.0
    %2060 = vmatpush1.msra.mxu0 0.0
    %2061 = vmatprep.subr.mxu0 0.0
    %2062 = vmatpush1.msra.mxu0 0.0
    %2063 = vmatprep.subr.mxu0 0.0
    %2064 = vmatpush1.msra.mxu0 0.0
    %2065 = vmatprep.subr.mxu0 0.0
    %2066 = vmatpush1.msra.mxu0 0.0
    %2067 = vmatprep.subr.mxu0 0.0
    %2068 = vmatpush1.msra.mxu0 0.0
    %2069 = vmatprep.subr.mxu0 0.0
    %2070 = vmatpush1.msra.mxu0 0.0
    %2071 = vmatprep.subr.mxu0 0.0
    %2072 = vmatpush1.msra.mxu0 0.0
    %2073 = vmatprep.subr.mxu0 0.0
    %2074 = vmatpush1.msra.mxu0 0.0
    %2075 = vmatprep.subr.mxu0 0.0
    %2076 = vmatpush1.msra.mxu0 0.0
    %2077 = vmatprep.subr.mxu0 0.0
    %2078 = vmatpush1.msra.mxu0 0.0
    %2079 = vmatprep.subr.mxu0 0.0
    %2080 = vmatpush1.msra.mxu0 0.0
    %2081 = vmatprep.subr.mxu0 0.0
    %2082 = vmatpush1.msra.mxu0 0.0
    %2083 = vmatprep.subr.mxu0 0.0
    %2084 = vmatpush1.msra.mxu0 0.0
    %2085 = vmatprep.subr.mxu0 0.0
    %2086 = vmatpush1.msra.mxu0 0.0
    %2087 = vmatprep.subr.mxu0 0.0
    %2088 = vmatpush1.msra.mxu0 0.0
    %2089 = vmatprep.subr.mxu0 0.0
    %2090 = vmatpush1.msra.mxu0 0.0
    %2091 = vmatprep.subr.mxu0 0.0
    %2092 = vmatpush1.msra.mxu0 0.0
    %2093 = vmatprep.subr.mxu0 0.0
    %2094 = vmatpush1.msra.mxu0 0.0
    %2095 = vmatprep.subr.mxu0 0.0
    %2096 = vmatpush1.msra.mxu0 0.0
    %2097 = vmatprep.subr.mxu0 0.0
    %2098 = vmatpush1.msra.mxu0 0.0
    %2099 = vmatprep.subr.mxu0 0.0
    %2100 = vmatpush1.msra.mxu0 0.0
    %2101 = vmatprep.subr.mxu0 0.0
    %2102 = vmatpush1.msra.mxu0 0.0
    %2103 = vmatprep.subr.mxu0 0.0
    %2104 = vmatpush1.msra.mxu0 0.0
    %2105 = vmatprep.subr.mxu0 0.0
    %2106 = vmatpush1.msra.mxu0 0.0
    %2107 = vmatprep.subr.mxu0 0.0
    %2108 = vmatpush1.msra.mxu0 0.0
    %2109 = vmatprep.subr.mxu0 0.0
    %2110 = vmatpush1.msra.mxu0 0.0
    %2111 = vmatprep.subr.mxu0 0.0
    %2112 = vmatpush1.msra.mxu0 0.0
    %2113 = vmatprep.subr.mxu0 0.0
    %2114 = vmatpush1.msra.mxu0 0.0
    %2115 = vmatprep.subr.mxu0 0.0
    %2116 = vmatpush1.msra.mxu0 0.0
    %2117 = vmatprep.subr.mxu0 0.0
    %2118 = vmatpush1.msra.mxu0 0.0
    %2119 = vmatprep.mubr.f32.mxu0 0.0
    %2120 = vmatmul.mubr.f32.gmra.mrb[0].mxu0 %v1973
    %v2121 = vpop.f32.mrb[0].mxu0
    %v2122 = vadd.f32 %v1968, %v2121
    %v2123 = vpop.f32.mrb[0].mxu0
    %2124 = vmatprep.mubr.f32.mxu0 0.0
    %2125 = vmatmul.mubr.f32.gmra.mrb[0].mxu0 %v1976
    %v2126 = vpop.f32.mrb[0].mxu0
    %v2127 = vadd.f32 %v1968, %v2126
    %v2128 = vpop.f32.mrb[0].mxu0
    %2129 = vdwg.mxu0
    %v2131 = vlaneseq
    %v2132 = vshrl.u32 %v2131, 7
    %v2133 = vsub.s32 0, %v2132
    %v2134 = vrot.slane %v1955, %v2133
    %v2135 = vlaneseq
    %v2136 = vshrl.u32 %v2135, 7
    %v2137 = vsub.s32 1, %v2136
    %v2138 = vrot.slane %v1955, %v2137
    %v2139 = vlaneseq
    %v2140 = vshrl.u32 %v2139, 7
    %v2141 = vsub.s32 2, %v2140
    %v2142 = vrot.slane %v1955, %v2141
    %2146 = vmatprep.subr.mxu0 %v1949
    %2147 = vmatpush1.msra.mxu0 %v1948
    %2148 = vmatprep.subr.mxu0 %v1952
    %2149 = vmatpush1.msra.mxu0 %v1951
    %2150 = vmatprep.subr.mxu0 0.0
    %2151 = vmatpush1.msra.mxu0 0.0
    %2152 = vmatprep.subr.mxu0 0.0
    %2153 = vmatpush1.msra.mxu0 0.0
    %2154 = vmatprep.subr.mxu0 0.0
    %2155 = vmatpush1.msra.mxu0 0.0
    %2156 = vmatprep.subr.mxu0 0.0
    %2157 = vmatpush1.msra.mxu0 0.0
    %2158 = vmatprep.subr.mxu0 0.0
    %2159 = vmatpush1.msra.mxu0 0.0
    %2160 = vmatprep.subr.mxu0 0.0
    %2161 = vmatpush1.msra.mxu0 0.0
    %2162 = vmatprep.subr.mxu0 0.0
    %2163 = vmatpush1.msra.mxu0 0.0
    %2164 = vmatprep.subr.mxu0 0.0
    %2165 = vmatpush1.msra.mxu0 0.0
    %2166 = vmatprep.subr.mxu0 0.0
    %2167 = vmatpush1.msra.mxu0 0.0
    %2168 = vmatprep.subr.mxu0 0.0
    %2169 = vmatpush1.msra.mxu0 0.0
    %2170 = vmatprep.subr.mxu0 0.0
    %2171 = vmatpush1.msra.mxu0 0.0
    %2172 = vmatprep.subr.mxu0 0.0
    %2173 = vmatpush1.msra.mxu0 0.0
    %2174 = vmatprep.subr.mxu0 0.0
    %2175 = vmatpush1.msra.mxu0 0.0
    %2176 = vmatprep.subr.mxu0 0.0
    %2177 = vmatpush1.msra.mxu0 0.0
    %2178 = vmatprep.subr.mxu0 0.0
    %2179 = vmatpush1.msra.mxu0 0.0
    %2180 = vmatprep.subr.mxu0 0.0
    %2181 = vmatpush1.msra.mxu0 0.0
    %2182 = vmatprep.subr.mxu0 0.0
    %2183 = vmatpush1.msra.mxu0 0.0
    %2184 = vmatprep.subr.mxu0 0.0
    %2185 = vmatpush1.msra.mxu0 0.0
    %2186 = vmatprep.subr.mxu0 0.0
    %2187 = vmatpush1.msra.mxu0 0.0
    %2188 = vmatprep.subr.mxu0 0.0
    %2189 = vmatpush1.msra.mxu0 0.0
    %2190 = vmatprep.subr.mxu0 0.0
    %2191 = vmatpush1.msra.mxu0 0.0
    %2192 = vmatprep.subr.mxu0 0.0
    %2193 = vmatpush1.msra.mxu0 0.0
    %2194 = vmatprep.subr.mxu0 0.0
    %2195 = vmatpush1.msra.mxu0 0.0
    %2196 = vmatprep.subr.mxu0 0.0
    %2197 = vmatpush1.msra.mxu0 0.0
    %2198 = vmatprep.subr.mxu0 0.0
    %2199 = vmatpush1.msra.mxu0 0.0
    %2200 = vmatprep.subr.mxu0 0.0
    %2201 = vmatpush1.msra.mxu0 0.0
    %2202 = vmatprep.subr.mxu0 0.0
    %2203 = vmatpush1.msra.mxu0 0.0
    %2204 = vmatprep.subr.mxu0 0.0
    %2205 = vmatpush1.msra.mxu0 0.0
    %2206 = vmatprep.subr.mxu0 0.0
    %2207 = vmatpush1.msra.mxu0 0.0
    %2208 = vmatprep.subr.mxu0 0.0
    %2209 = vmatpush1.msra.mxu0 0.0
    %2210 = vmatprep.mubr.f32.mxu0 0.0
    %2211 = vmatmul.mubr.f32.gmra.mrb[0].mxu0 %v1592
    %v2212 = vpop.f32.mrb[0].mxu0
    %v2213 = vadd.f32 %v2134, %v2212
    %v2214 = vpop.f32.mrb[0].mxu0
    %v2215 = vadd.f32 %v2138, %v2214
    %2216 = vmatprep.mubr.f32.mxu0 0.0
    %2217 = vmatmul.mubr.f32.gmra.mrb[0].mxu0 %v1595
    %v2218 = vpop.f32.mrb[0].mxu0
    %v2219 = vadd.f32 %v2134, %v2218
    %v2220 = vpop.f32.mrb[0].mxu0
    %v2221 = vadd.f32 %v2138, %v2220
    %2222 = vdwg.mxu0
    %2223 = vmatprep.subr.mxu0 0.0
    %2224 = vmatpush1.msra.mxu0 %v1950
    %2225 = vmatprep.subr.mxu0 0.0
    %2226 = vmatpush1.msra.mxu0 %v1953
    %2227 = vmatprep.subr.mxu0 0.0
    %2228 = vmatpush1.msra.mxu0 0.0
    %2229 = vmatprep.subr.mxu0 0.0
    %2230 = vmatpush1.msra.mxu0 0.0
    %2231 = vmatprep.subr.mxu0 0.0
    %2232 = vmatpush1.msra.mxu0 0.0
    %2233 = vmatprep.subr.mxu0 0.0
    %2234 = vmatpush1.msra.mxu0 0.0
    %2235 = vmatprep.subr.mxu0 0.0
    %2236 = vmatpush1.msra.mxu0 0.0
    %2237 = vmatprep.subr.mxu0 0.0
    %2238 = vmatpush1.msra.mxu0 0.0
    %2239 = vmatprep.subr.mxu0 0.0
    %2240 = vmatpush1.msra.mxu0 0.0
    %2241 = vmatprep.subr.mxu0 0.0
    %2242 = vmatpush1.msra.mxu0 0.0
    %2243 = vmatprep.subr.mxu0 0.0
    %2244 = vmatpush1.msra.mxu0 0.0
    %2245 = vmatprep.subr.mxu0 0.0
    %2246 = vmatpush1.msra.mxu0 0.0
    %2247 = vmatprep.subr.mxu0 0.0
    %2248 = vmatpush1.msra.mxu0 0.0
    %2249 = vmatprep.subr.mxu0 0.0
    %2250 = vmatpush1.msra.mxu0 0.0
    %2251 = vmatprep.subr.mxu0 0.0
    %2252 = vmatpush1.msra.mxu0 0.0
    %2253 = vmatprep.subr.mxu0 0.0
    %2254 = vmatpush1.msra.mxu0 0.0
    %2255 = vmatprep.subr.mxu0 0.0
    %2256 = vmatpush1.msra.mxu0 0.0
    %2257 = vmatprep.subr.mxu0 0.0
    %2258 = vmatpush1.msra.mxu0 0.0
    %2259 = vmatprep.subr.mxu0 0.0
    %2260 = vmatpush1.msra.mxu0 0.0
    %2261 = vmatprep.subr.mxu0 0.0
    %2262 = vmatpush1.msra.mxu0 0.0
    %2263 = vmatprep.subr.mxu0 0.0
    %2264 = vmatpush1.msra.mxu0 0.0
    %2265 = vmatprep.subr.mxu0 0.0
    %2266 = vmatpush1.msra.mxu0 0.0
    %2267 = vmatprep.subr.mxu0 0.0
    %2268 = vmatpush1.msra.mxu0 0.0
    %2269 = vmatprep.subr.mxu0 0.0
    %2270 = vmatpush1.msra.mxu0 0.0
    %2271 = vmatprep.subr.mxu0 0.0
    %2272 = vmatpush1.msra.mxu0 0.0
    %2273 = vmatprep.subr.mxu0 0.0
    %2274 = vmatpush1.msra.mxu0 0.0
    %2275 = vmatprep.subr.mxu0 0.0
    %2276 = vmatpush1.msra.mxu0 0.0
    %2277 = vmatprep.subr.mxu0 0.0
    %2278 = vmatpush1.msra.mxu0 0.0
    %2279 = vmatprep.subr.mxu0 0.0
    %2280 = vmatpush1.msra.mxu0 0.0
    %2281 = vmatprep.subr.mxu0 0.0
    %2282 = vmatpush1.msra.mxu0 0.0
    %2283 = vmatprep.subr.mxu0 0.0
    %2284 = vmatpush1.msra.mxu0 0.0
    %2285 = vmatprep.subr.mxu0 0.0
    %2286 = vmatpush1.msra.mxu0 0.0
    %2287 = vmatprep.mubr.f32.mxu0 0.0
    %2288 = vmatmul.mubr.f32.gmra.mrb[0].mxu0 %v1592
    %v2289 = vpop.f32.mrb[0].mxu0
    %v2290 = vadd.f32 %v2142, %v2289
    %v2291 = vpop.f32.mrb[0].mxu0
    %2292 = vmatprep.mubr.f32.mxu0 0.0
    %2293 = vmatmul.mubr.f32.gmra.mrb[0].mxu0 %v1595
    %v2294 = vpop.f32.mrb[0].mxu0
    %v2295 = vadd.f32 %v2142, %v2294
    %v2296 = vpop.f32.mrb[0].mxu0
    %2297 = vdwg.mxu0
    %v2298 = vadd.f32 %v2045, %v2213
    %v2299 = vadd.f32 %v2051, %v2219
    %v2300 = vsub.f32 0.0, %v2298
    %v2301 = vsub.f32 0.0, %v2299
    %v2302 = vmul.f32 %v2300, 1.442695
    %v2303 = vpow.pop %v2302
    %v2304 = vmul.f32 %v2301, 1.442695
    %v2305 = vpow.pop %v2304
    %v2306 = vadd.f32 %v2303, 1.0
    %v2307 = vadd.f32 %v2305, 1.0
    %v2308 = vrcp.pop %v2306
    %v2309 = vmul.f32 1.0, %v2308
    %v2310 = vrcp.pop %v2307
    %v2311 = vmul.f32 1.0, %v2310
    %v2312 = vadd.f32 %v2047, %v2215
    %v2313 = vadd.f32 %v2053, %v2221
    %v2314 = vsub.f32 0.0, %v2312
    %v2315 = vsub.f32 0.0, %v2313
    %v2316 = vmul.f32 %v2314, 1.442695
    %v2317 = vpow.pop %v2316
    %v2318 = vmul.f32 %v2315, 1.442695
    %v2319 = vpow.pop %v2318
    %v2320 = vadd.f32 %v2317, 1.0
    %v2321 = vadd.f32 %v2319, 1.0
    %v2322 = vrcp.pop %v2320
    %v2323 = vmul.f32 1.0, %v2322
    %v2324 = vrcp.pop %v2321
    %v2325 = vmul.f32 1.0, %v2324
    %v2326 = vmul.f32 %v2309, %v2290
    %v2327 = vmul.f32 %v2311, %v2295
    %v2328 = vadd.f32 %v2122, %v2326
    %v2329 = vadd.f32 %v2127, %v2327
    %v2330 = vtanh.pop %v2328
    %v2331 = vtanh.pop %v2329
    %v2332 = vsub.f32 1.0, %v2323
    %v2333 = vsub.f32 1.0, %v2325
    %v2334 = vmul.f32 %v2332, %v2330
    %v2335 = vmul.f32 %v2333, %v2331
    %v2336 = vmul.f32 %v2323, %v1587
    %v2337 = vmul.f32 %v2325, %v1588
    %v2338 = vadd.f32 %v2334, %v2336
    %v2339 = vadd.f32 %v2335, %v2337
    %v2340 = vmax.f32 %v2338, 0.0
    %v2341 = vmax.f32 %v2339, 0.0
    %s2342 = scalar_lea.vmem %s37, 16
    %v2343 = vld [vmem:[%s2342] sm:$0xff]
    %v2344 = vld [vmem:[%s2342 + $0x8] sm:$0xff]
    %v2346 = vsel %vm717, %v2340, 0
    %v2349 = vsel %vm717, %v2341, 0
    %2351 = vmatprep.subr.mxu0 0.0
    %2352 = vmatpush1.msra.mxu0 %v2343
    %2353 = vmatprep.subr.mxu0 0.0
    %2354 = vmatpush1.msra.mxu0 %v2344
    %2355 = vmatprep.subr.mxu0 0.0
    %2356 = vmatpush1.msra.mxu0 0.0
    %2357 = vmatprep.subr.mxu0 0.0
    %2358 = vmatpush1.msra.mxu0 0.0
    %2359 = vmatprep.subr.mxu0 0.0
    %2360 = vmatpush1.msra.mxu0 0.0
    %2361 = vmatprep.subr.mxu0 0.0
    %2362 = vmatpush1.msra.mxu0 0.0
    %2363 = vmatprep.subr.mxu0 0.0
    %2364 = vmatpush1.msra.mxu0 0.0
    %2365 = vmatprep.subr.mxu0 0.0
    %2366 = vmatpush1.msra.mxu0 0.0
    %2367 = vmatprep.subr.mxu0 0.0
    %2368 = vmatpush1.msra.mxu0 0.0
    %2369 = vmatprep.subr.mxu0 0.0
    %2370 = vmatpush1.msra.mxu0 0.0
    %2371 = vmatprep.subr.mxu0 0.0
    %2372 = vmatpush1.msra.mxu0 0.0
    %2373 = vmatprep.subr.mxu0 0.0
    %2374 = vmatpush1.msra.mxu0 0.0
    %2375 = vmatprep.subr.mxu0 0.0
    %2376 = vmatpush1.msra.mxu0 0.0
    %2377 = vmatprep.subr.mxu0 0.0
    %2378 = vmatpush1.msra.mxu0 0.0
    %2379 = vmatprep.subr.mxu0 0.0
    %2380 = vmatpush1.msra.mxu0 0.0
    %2381 = vmatprep.subr.mxu0 0.0
    %2382 = vmatpush1.msra.mxu0 0.0
    %2383 = vmatprep.subr.mxu0 0.0
    %2384 = vmatpush1.msra.mxu0 0.0
    %2385 = vmatprep.subr.mxu0 0.0
    %2386 = vmatpush1.msra.mxu0 0.0
    %2387 = vmatprep.subr.mxu0 0.0
    %2388 = vmatpush1.msra.mxu0 0.0
    %2389 = vmatprep.subr.mxu0 0.0
    %2390 = vmatpush1.msra.mxu0 0.0
    %2391 = vmatprep.subr.mxu0 0.0
    %2392 = vmatpush1.msra.mxu0 0.0
    %2393 = vmatprep.subr.mxu0 0.0
    %2394 = vmatpush1.msra.mxu0 0.0
    %2395 = vmatprep.subr.mxu0 0.0
    %2396 = vmatpush1.msra.mxu0 0.0
    %2397 = vmatprep.subr.mxu0 0.0
    %2398 = vmatpush1.msra.mxu0 0.0
    %2399 = vmatprep.subr.mxu0 0.0
    %2400 = vmatpush1.msra.mxu0 0.0
    %2401 = vmatprep.subr.mxu0 0.0
    %2402 = vmatpush1.msra.mxu0 0.0
    %2403 = vmatprep.subr.mxu0 0.0
    %2404 = vmatpush1.msra.mxu0 0.0
    %2405 = vmatprep.subr.mxu0 0.0
    %2406 = vmatpush1.msra.mxu0 0.0
    %2407 = vmatprep.subr.mxu0 0.0
    %2408 = vmatpush1.msra.mxu0 0.0
    %2409 = vmatprep.subr.mxu0 0.0
    %2410 = vmatpush1.msra.mxu0 0.0
    %2411 = vmatprep.subr.mxu0 0.0
    %2412 = vmatpush1.msra.mxu0 0.0
    %2413 = vmatprep.subr.mxu0 0.0
    %2414 = vmatpush1.msra.mxu0 0.0
    %2415 = vmatprep.mubr.f32.mxu0 0.0
    %2416 = vmatmul.mubr.f32.gmra.mrb[0].mxu0 %v2346
    %v2417 = vpop.f32.mrb[0].mxu0
    %v2418 = vadd.f32 0.0, %v2417
    %v2419 = vpop.f32.mrb[0].mxu0
    %2420 = vmatprep.mubr.f32.mxu0 0.0
    %2421 = vmatmul.mubr.f32.gmra.mrb[0].mxu0 %v2349
    %v2422 = vpop.f32.mrb[0].mxu0
    %v2423 = vadd.f32 0.0, %v2422
    %v2424 = vpop.f32.mrb[0].mxu0
    %2425 = vdwg.mxu0
    %s2426 = scalar_lea.vmem %s39, 1
    %v2427 = vld [vmem:[%s2426] sm:$0x1]
    %v2429 = vlaneseq
    %v2430 = vshrl.u32 %v2429, 7
    %v2431 = vsub.s32 0, %v2430
    %v2432 = vrot.slane %v2427, %v2431
    %v2434 = vmul.f32 %v2418, %v2432
    %v2435 = vmul.f32 %v2423, %v2432
    %v2436 = vsel %vm717, %v2434, 0.0
    %2437 = vadd.xlane.f32.xlu0 %v2436
    %v2438 = vpop.xlane.xlu0 %2437
    %v2439 = vsel %vm832, %v2435, 0.0
    %2440 = vadd.xlane.f32.xlu0 %v2439
    %v2441 = vpop.xlane.xlu0 %2440
    %s2442 = scalar_lea.vmem %s41, 1
    %v2443 = vld [vmem:[%s2442] sm:$0x1]
    %v2445 = vlaneseq
    %v2446 = vshrl.u32 %v2445, 7
    %v2447 = vsub.s32 0, %v2446
    %v2448 = vrot.slane %v2443, %v2447
    %v2450 = vmul.f32 %v2418, %v2448
    %v2451 = vmul.f32 %v2423, %v2448
    %v2452 = vsel %vm717, %v2450, 0.0
    %2453 = vadd.xlane.f32.xlu0 %v2452
    %v2454 = vpop.xlane.xlu0 %2453
    %v2455 = vsel %vm832, %v2451, 0.0
    %2456 = vadd.xlane.f32.xlu0 %v2455
    %v2457 = vpop.xlane.xlu0 %2456
    %v2458 = vmul.f32 %v417, %v2438
    %v2459 = vmul.f32 %v418, %v2441
    %v2460 = vsel %vm848, %v2458, 0.0
    %v2461 = vsel %vm852, %v2459, 0.0
    %v2462 = vadd.f32 %v2460, %v2461
    %v2463 = vrot.slane %v2462, 4
    %v2464 = vadd.f32 %v2462, %v2463
    %v2465 = vrot.slane %v2464, 2
    %v2466 = vadd.f32 %v2464, %v2465
    %v2467 = vrot.slane %v2466, 1
    %v2468 = vadd.f32 %v2466, %v2467
    %v2469 = vmul.f32 %v419, %v2454
    %v2470 = vmul.f32 %v420, %v2457
    %v2471 = vsel %vm848, %v2469, 0.0
    %v2472 = vsel %vm852, %v2470, 0.0
    %v2473 = vadd.f32 %v2471, %v2472
    %v2474 = vrot.slane %v2473, 4
    %v2475 = vadd.f32 %v2473, %v2474
    %v2476 = vrot.slane %v2475, 2
    %v2477 = vadd.f32 %v2475, %v2476
    %v2478 = vrot.slane %v2477, 1
    %v2479 = vadd.f32 %v2477, %v2478
    %v2481 = vsel %vm532, %v2423, 0
    %2483 = vmatprep.subr.mxu0 0.0
    %2484 = vmatpush1.msra.mxu0 %v2418
    %2485 = vmatprep.subr.mxu0 0.0
    %2486 = vmatpush1.msra.mxu0 %v2481
    %2487 = vmatprep.subr.mxu0 0.0
    %2488 = vmatpush1.msra.mxu0 0.0
    %2489 = vmatprep.subr.mxu0 0.0
    %2490 = vmatpush1.msra.mxu0 0.0
    %2491 = vmatprep.subr.mxu0 0.0
    %2492 = vmatpush1.msra.mxu0 0.0
    %2493 = vmatprep.subr.mxu0 0.0
    %2494 = vmatpush1.msra.mxu0 0.0
    %2495 = vmatprep.subr.mxu0 0.0
    %2496 = vmatpush1.msra.mxu0 0.0
    %2497 = vmatprep.subr.mxu0 0.0
    %2498 = vmatpush1.msra.mxu0 0.0
    %2499 = vmatprep.subr.mxu0 0.0
    %2500 = vmatpush1.msra.mxu0 0.0
    %2501 = vmatprep.subr.mxu0 0.0
    %2502 = vmatpush1.msra.mxu0 0.0
    %2503 = vmatprep.subr.mxu0 0.0
    %2504 = vmatpush1.msra.mxu0 0.0
    %2505 = vmatprep.subr.mxu0 0.0
    %2506 = vmatpush1.msra.mxu0 0.0
    %2507 = vmatprep.subr.mxu0 0.0
    %2508 = vmatpush1.msra.mxu0 0.0
    %2509 = vmatprep.subr.mxu0 0.0
    %2510 = vmatpush1.msra.mxu0 0.0
    %2511 = vmatprep.subr.mxu0 0.0
    %2512 = vmatpush1.msra.mxu0 0.0
    %2513 = vmatprep.subr.mxu0 0.0
    %2514 = vmatpush1.msra.mxu0 0.0
    %2515 = vmatprep.subr.mxu0 0.0
    %2516 = vmatpush1.msra.mxu0 0.0
    %2517 = vmatprep.subr.mxu0 0.0
    %2518 = vmatpush1.msra.mxu0 0.0
    %2519 = vmatprep.subr.mxu0 0.0
    %2520 = vmatpush1.msra.mxu0 0.0
    %2521 = vmatprep.subr.mxu0 0.0
    %2522 = vmatpush1.msra.mxu0 0.0
    %2523 = vmatprep.subr.mxu0 0.0
    %2524 = vmatpush1.msra.mxu0 0.0
    %2525 = vmatprep.subr.mxu0 0.0
    %2526 = vmatpush1.msra.mxu0 0.0
    %2527 = vmatprep.subr.mxu0 0.0
    %2528 = vmatpush1.msra.mxu0 0.0
    %2529 = vmatprep.subr.mxu0 0.0
    %2530 = vmatpush1.msra.mxu0 0.0
    %2531 = vmatprep.subr.mxu0 0.0
    %2532 = vmatpush1.msra.mxu0 0.0
    %2533 = vmatprep.subr.mxu0 0.0
    %2534 = vmatpush1.msra.mxu0 0.0
    %2535 = vmatprep.subr.mxu0 0.0
    %2536 = vmatpush1.msra.mxu0 0.0
    %2537 = vmatprep.subr.mxu0 0.0
    %2538 = vmatpush1.msra.mxu0 0.0
    %2539 = vmatprep.subr.mxu0 0.0
    %2540 = vmatpush1.msra.mxu0 0.0
    %2541 = vmatprep.subr.mxu0 0.0
    %2542 = vmatpush1.msra.mxu0 0.0
    %2543 = vmatprep.subr.mxu0 0.0
    %2544 = vmatpush1.msra.mxu0 0.0
    %2545 = vmatprep.subr.mxu0 0.0
    %2546 = vmatpush1.msra.mxu0 0.0
    %2547 = vmatprep.mubr.f32.mxu0 0.0
    %2548 = vmatmul.mubr.f32.gmra.mrb[0].mxu0 %v524
    %v2549 = vpop.f32.mrb[0].mxu0
    %v2550 = vadd.f32 0.0, %v2549
    %v2551 = vpop.f32.mrb[0].mxu0
    %2552 = vmatprep.mubr.f32.mxu0 0.0
    %2553 = vmatmul.mubr.f32.gmra.mrb[0].mxu0 %v527
    %v2554 = vpop.f32.mrb[0].mxu0
    %v2555 = vadd.f32 0.0, %v2554
    %v2556 = vpop.f32.mrb[0].mxu0
    %2557 = vmatprep.mubr.f32.mxu0 0.0
    %2558 = vmatmul.mubr.f32.gmra.mrb[0].mxu0 %v530
    %v2559 = vpop.f32.mrb[0].mxu0
    %v2560 = vadd.f32 0.0, %v2559
    %v2561 = vpop.f32.mrb[0].mxu0
    %2562 = vdwg.mxu0
    %v2563 = vadd.f32 %v2468, %v2479
    %s2564 = scalar_lea.vmem [#allocation22], 1
    %v2565 = vld [vmem:[%s2564] sm:$0x1]
    %vm2566 = vcmp.ge.f32.partialorder %v2563, 0.0
    %v2567 = vmul.f32 %v2563, 0.01
    %v2568 = vsel %vm2566, %v2563, %v2567
    %v2569 = vsel %vm1057, %v2568, -1e+30
    %v2570 = vsel %vm1058, %v2568, -1e+30
    %v2571 = vsel %vm848, %v2569, -inf
    %2572 = vmax.xlane.f32.xlu0 %v2571
    %v2573 = vpop.xlane.xlu0 %2572
    %v2574 = vsel %vm852, %v2570, -inf
    %2575 = vmax.xlane.f32.xlu0 %v2574
    %v2576 = vpop.xlane.xlu0 %2575
    %v2577 = vsub.f32 %v2569, %v2573
    %v2578 = vsub.f32 %v2570, %v2576
    %v2579 = vmul.f32 %v2577, 1.442695
    %v2580 = vpow.pop %v2579
    %v2581 = vmul.f32 %v2578, 1.442695
    %v2582 = vpow.pop %v2581
    %v2583 = vmul.f32 %v2580, %v419
    %v2584 = vmul.f32 %v2582, %v420
    %v2585 = vsel %vm848, %v2583, 0.0
    %2586 = vadd.xlane.f32.xlu0 %v2585
    %v2587 = vpop.xlane.xlu0 %2586
    %v2588 = vsel %vm852, %v2584, 0.0
    %2589 = vadd.xlane.f32.xlu0 %v2588
    %v2590 = vpop.xlane.xlu0 %2589
    %v2591 = vadd.f32 %v2587, 1e-16
    %v2592 = vadd.f32 %v2590, 1e-16
    %v2593 = vrcp.pop %v2591
    %v2594 = vrcp.pop %v2592
    %v2595 = vmul.f32 %v2583, %v2593
    %v2596 = vmul.f32 %v2584, %v2594
    %v2598 = vlaneseq
    %v2599 = vshrl.u32 %v2598, 7
    %v2600 = vsub.s32 0, %v2599
    %v2601 = vrot.slane %v2565, %v2600
    %v2604 = vsel %vm848, %v2595, 0
    %v2607 = vsel %vm848, %v2596, 0
    %v2610 = vsel %vm532, %v2560, 0
    %2612 = vmatprep.subr.mxu0 0.0
    %2613 = vmatpush1.msra.mxu0 %v2550
    %2614 = vmatprep.subr.mxu0 0.0
    %2615 = vmatpush1.msra.mxu0 %v2555
    %2616 = vmatprep.subr.mxu0 0.0
    %2617 = vmatpush1.msra.mxu0 %v2610
    %2618 = vmatprep.subr.mxu0 0.0
    %2619 = vmatpush1.msra.mxu0 0.0
    %2620 = vmatprep.subr.mxu0 0.0
    %2621 = vmatpush1.msra.mxu0 0.0
    %2622 = vmatprep.subr.mxu0 0.0
    %2623 = vmatpush1.msra.mxu0 0.0
    %2624 = vmatprep.subr.mxu0 0.0
    %2625 = vmatpush1.msra.mxu0 0.0
    %2626 = vmatprep.subr.mxu0 0.0
    %2627 = vmatpush1.msra.mxu0 0.0
    %2628 = vmatprep.subr.mxu0 0.0
    %2629 = vmatpush1.msra.mxu0 0.0
    %2630 = vmatprep.subr.mxu0 0.0
    %2631 = vmatpush1.msra.mxu0 0.0
    %2632 = vmatprep.subr.mxu0 0.0
    %2633 = vmatpush1.msra.mxu0 0.0
    %2634 = vmatprep.subr.mxu0 0.0
    %2635 = vmatpush1.msra.mxu0 0.0
    %2636 = vmatprep.subr.mxu0 0.0
    %2637 = vmatpush1.msra.mxu0 0.0
    %2638 = vmatprep.subr.mxu0 0.0
    %2639 = vmatpush1.msra.mxu0 0.0
    %2640 = vmatprep.subr.mxu0 0.0
    %2641 = vmatpush1.msra.mxu0 0.0
    %2642 = vmatprep.subr.mxu0 0.0
    %2643 = vmatpush1.msra.mxu0 0.0
    %2644 = vmatprep.subr.mxu0 0.0
    %2645 = vmatpush1.msra.mxu0 0.0
    %2646 = vmatprep.subr.mxu0 0.0
    %2647 = vmatpush1.msra.mxu0 0.0
    %2648 = vmatprep.subr.mxu0 0.0
    %2649 = vmatpush1.msra.mxu0 0.0
    %2650 = vmatprep.subr.mxu0 0.0
    %2651 = vmatpush1.msra.mxu0 0.0
    %2652 = vmatprep.subr.mxu0 0.0
    %2653 = vmatpush1.msra.mxu0 0.0
    %2654 = vmatprep.subr.mxu0 0.0
    %2655 = vmatpush1.msra.mxu0 0.0
    %2656 = vmatprep.subr.mxu0 0.0
    %2657 = vmatpush1.msra.mxu0 0.0
    %2658 = vmatprep.subr.mxu0 0.0
    %2659 = vmatpush1.msra.mxu0 0.0
    %2660 = vmatprep.subr.mxu0 0.0
    %2661 = vmatpush1.msra.mxu0 0.0
    %2662 = vmatprep.subr.mxu0 0.0
    %2663 = vmatpush1.msra.mxu0 0.0
    %2664 = vmatprep.subr.mxu0 0.0
    %2665 = vmatpush1.msra.mxu0 0.0
    %2666 = vmatprep.subr.mxu0 0.0
    %2667 = vmatpush1.msra.mxu0 0.0
    %2668 = vmatprep.subr.mxu0 0.0
    %2669 = vmatpush1.msra.mxu0 0.0
    %2670 = vmatprep.subr.mxu0 0.0
    %2671 = vmatpush1.msra.mxu0 0.0
    %2672 = vmatprep.subr.mxu0 0.0
    %2673 = vmatpush1.msra.mxu0 0.0
    %2674 = vmatprep.subr.mxu0 0.0
    %2675 = vmatpush1.msra.mxu0 0.0
    %2676 = vmatprep.mubr.f32.mxu0 0.0
    %2677 = vmatmul.mubr.f32.gmra.mrb[0].mxu0 %v2604
    %v2678 = vpop.f32.mrb[0].mxu0
    %v2679 = vadd.f32 %v2601, %v2678
    %v2680 = vpop.f32.mrb[0].mxu0
    %2681 = vmatprep.mubr.f32.mxu0 0.0
    %2682 = vmatmul.mubr.f32.gmra.mrb[0].mxu0 %v2607
    %v2683 = vpop.f32.mrb[0].mxu0
    %v2684 = vadd.f32 %v2601, %v2683
    %v2685 = vpop.f32.mrb[0].mxu0
    %2686 = vdwg.mxu0
    %vm2687 = vcmp.gt.f32.partialorder %v2679, 0.0
    %vm2688 = vcmp.gt.f32.partialorder %v2684, 0.0
    %v2689 = vmin.f32 %v2679, 0.0
    %v2690 = vmin.f32 %v2684, 0.0
    %v2691 = vmul.f32 %v2689, 1.442695
    %v2692 = vpow.pop %v2691
    %v2693 = vmul.f32 %v2690, 1.442695
    %v2694 = vpow.pop %v2693
    %v2695 = vsub.f32 %v2692, 1.0
    %v2696 = vsub.f32 %v2694, 1.0
    %v2697 = vsel %vm2687, %v2679, %v2695
    %v2698 = vsel %vm2688, %v2684, %v2696
    %s2699 = scalar_lea.vmem %s45, 48
    %v2700 = vld [vmem:[%s2699] sm:$0xff]
    %v2701 = vld [vmem:[%s2699 + $0x8] sm:$0xff]
    %v2702 = vld [vmem:[%s2699 + $0x10] sm:$0xff]
    %v2703 = vld [vmem:[%s2699 + $0x18] sm:$0xff]
    %v2704 = vld [vmem:[%s2699 + $0x20] sm:$0xff]
    %v2705 = vld [vmem:[%s2699 + $0x28] sm:$0xff]
    %s2706 = scalar_lea.vmem %s47, 48
    %v2707 = vld [vmem:[%s2706] sm:$0xff]
    %v2708 = vld [vmem:[%s2706 + $0x8] sm:$0xff]
    %v2709 = vld [vmem:[%s2706 + $0x10] sm:$0xff]
    %v2710 = vld [vmem:[%s2706 + $0x18] sm:$0xff]
    %v2711 = vld [vmem:[%s2706 + $0x20] sm:$0xff]
    %v2712 = vld [vmem:[%s2706 + $0x28] sm:$0xff]
    %s2713 = scalar_lea.vmem %s49, 3
    %v2714 = vld [vmem:[%s2713] sm:$0x7]
    %s2715 = scalar_lea.vmem %s51, 3
    %v2716 = vld [vmem:[%s2715] sm:$0x7]
    %v2718 = vlaneseq
    %v2719 = vshrl.u32 %v2718, 7
    %v2720 = vsub.s32 0, %v2719
    %v2721 = vrot.slane %v2714, %v2720
    %v2722 = vlaneseq
    %v2723 = vshrl.u32 %v2722, 7
    %v2724 = vsub.s32 1, %v2723
    %v2725 = vrot.slane %v2714, %v2724
    %v2726 = vlaneseq
    %v2727 = vshrl.u32 %v2726, 7
    %v2728 = vsub.s32 2, %v2727
    %v2729 = vrot.slane %v2714, %v2728
    %v2734 = vsel %vm717, %v2697, 0
    %v2737 = vsel %vm717, %v2698, 0
    %2739 = vmatprep.subr.mxu0 %v2701
    %2740 = vmatpush1.msra.mxu0 %v2700
    %2741 = vmatprep.subr.mxu0 %v2704
    %2742 = vmatpush1.msra.mxu0 %v2703
    %2743 = vmatprep.subr.mxu0 0.0
    %2744 = vmatpush1.msra.mxu0 0.0
    %2745 = vmatprep.subr.mxu0 0.0
    %2746 = vmatpush1.msra.mxu0 0.0
    %2747 = vmatprep.subr.mxu0 0.0
    %2748 = vmatpush1.msra.mxu0 0.0
    %2749 = vmatprep.subr.mxu0 0.0
    %2750 = vmatpush1.msra.mxu0 0.0
    %2751 = vmatprep.subr.mxu0 0.0
    %2752 = vmatpush1.msra.mxu0 0.0
    %2753 = vmatprep.subr.mxu0 0.0
    %2754 = vmatpush1.msra.mxu0 0.0
    %2755 = vmatprep.subr.mxu0 0.0
    %2756 = vmatpush1.msra.mxu0 0.0
    %2757 = vmatprep.subr.mxu0 0.0
    %2758 = vmatpush1.msra.mxu0 0.0
    %2759 = vmatprep.subr.mxu0 0.0
    %2760 = vmatpush1.msra.mxu0 0.0
    %2761 = vmatprep.subr.mxu0 0.0
    %2762 = vmatpush1.msra.mxu0 0.0
    %2763 = vmatprep.subr.mxu0 0.0
    %2764 = vmatpush1.msra.mxu0 0.0
    %2765 = vmatprep.subr.mxu0 0.0
    %2766 = vmatpush1.msra.mxu0 0.0
    %2767 = vmatprep.subr.mxu0 0.0
    %2768 = vmatpush1.msra.mxu0 0.0
    %2769 = vmatprep.subr.mxu0 0.0
    %2770 = vmatpush1.msra.mxu0 0.0
    %2771 = vmatprep.subr.mxu0 0.0
    %2772 = vmatpush1.msra.mxu0 0.0
    %2773 = vmatprep.subr.mxu0 0.0
    %2774 = vmatpush1.msra.mxu0 0.0
    %2775 = vmatprep.subr.mxu0 0.0
    %2776 = vmatpush1.msra.mxu0 0.0
    %2777 = vmatprep.subr.mxu0 0.0
    %2778 = vmatpush1.msra.mxu0 0.0
    %2779 = vmatprep.subr.mxu0 0.0
    %2780 = vmatpush1.msra.mxu0 0.0
    %2781 = vmatprep.subr.mxu0 0.0
    %2782 = vmatpush1.msra.mxu0 0.0
    %2783 = vmatprep.subr.mxu0 0.0
    %2784 = vmatpush1.msra.mxu0 0.0
    %2785 = vmatprep.subr.mxu0 0.0
    %2786 = vmatpush1.msra.mxu0 0.0
    %2787 = vmatprep.subr.mxu0 0.0
    %2788 = vmatpush1.msra.mxu0 0.0
    %2789 = vmatprep.subr.mxu0 0.0
    %2790 = vmatpush1.msra.mxu0 0.0
    %2791 = vmatprep.subr.mxu0 0.0
    %2792 = vmatpush1.msra.mxu0 0.0
    %2793 = vmatprep.subr.mxu0 0.0
    %2794 = vmatpush1.msra.mxu0 0.0
    %2795 = vmatprep.subr.mxu0 0.0
    %2796 = vmatpush1.msra.mxu0 0.0
    %2797 = vmatprep.subr.mxu0 0.0
    %2798 = vmatpush1.msra.mxu0 0.0
    %2799 = vmatprep.subr.mxu0 0.0
    %2800 = vmatpush1.msra.mxu0 0.0
    %2801 = vmatprep.subr.mxu0 0.0
    %2802 = vmatpush1.msra.mxu0 0.0
    %2803 = vmatprep.mubr.f32.mxu0 0.0
    %2804 = vmatmul.mubr.f32.gmra.mrb[0].mxu0 %v2734
    %v2805 = vpop.f32.mrb[0].mxu0
    %v2806 = vadd.f32 %v2721, %v2805
    %v2807 = vpop.f32.mrb[0].mxu0
    %v2808 = vadd.f32 %v2725, %v2807
    %2809 = vmatprep.mubr.f32.mxu0 0.0
    %2810 = vmatmul.mubr.f32.gmra.mrb[0].mxu0 %v2737
    %v2811 = vpop.f32.mrb[0].mxu0
    %v2812 = vadd.f32 %v2721, %v2811
    %v2813 = vpop.f32.mrb[0].mxu0
    %v2814 = vadd.f32 %v2725, %v2813
    %2815 = vdwg.mxu0
    %2816 = vmatprep.subr.mxu0 0.0
    %2817 = vmatpush1.msra.mxu0 %v2702
    %2818 = vmatprep.subr.mxu0 0.0
    %2819 = vmatpush1.msra.mxu0 %v2705
    %2820 = vmatprep.subr.mxu0 0.0
    %2821 = vmatpush1.msra.mxu0 0.0
    %2822 = vmatprep.subr.mxu0 0.0
    %2823 = vmatpush1.msra.mxu0 0.0
    %2824 = vmatprep.subr.mxu0 0.0
    %2825 = vmatpush1.msra.mxu0 0.0
    %2826 = vmatprep.subr.mxu0 0.0
    %2827 = vmatpush1.msra.mxu0 0.0
    %2828 = vmatprep.subr.mxu0 0.0
    %2829 = vmatpush1.msra.mxu0 0.0
    %2830 = vmatprep.subr.mxu0 0.0
    %2831 = vmatpush1.msra.mxu0 0.0
    %2832 = vmatprep.subr.mxu0 0.0
    %2833 = vmatpush1.msra.mxu0 0.0
    %2834 = vmatprep.subr.mxu0 0.0
    %2835 = vmatpush1.msra.mxu0 0.0
    %2836 = vmatprep.subr.mxu0 0.0
    %2837 = vmatpush1.msra.mxu0 0.0
    %2838 = vmatprep.subr.mxu0 0.0
    %2839 = vmatpush1.msra.mxu0 0.0
    %2840 = vmatprep.subr.mxu0 0.0
    %2841 = vmatpush1.msra.mxu0 0.0
    %2842 = vmatprep.subr.mxu0 0.0
    %2843 = vmatpush1.msra.mxu0 0.0
    %2844 = vmatprep.subr.mxu0 0.0
    %2845 = vmatpush1.msra.mxu0 0.0
    %2846 = vmatprep.subr.mxu0 0.0
    %2847 = vmatpush1.msra.mxu0 0.0
    %2848 = vmatprep.subr.mxu0 0.0
    %2849 = vmatpush1.msra.mxu0 0.0
    %2850 = vmatprep.subr.mxu0 0.0
    %2851 = vmatpush1.msra.mxu0 0.0
    %2852 = vmatprep.subr.mxu0 0.0
    %2853 = vmatpush1.msra.mxu0 0.0
    %2854 = vmatprep.subr.mxu0 0.0
    %2855 = vmatpush1.msra.mxu0 0.0
    %2856 = vmatprep.subr.mxu0 0.0
    %2857 = vmatpush1.msra.mxu0 0.0
    %2858 = vmatprep.subr.mxu0 0.0
    %2859 = vmatpush1.msra.mxu0 0.0
    %2860 = vmatprep.subr.mxu0 0.0
    %2861 = vmatpush1.msra.mxu0 0.0
    %2862 = vmatprep.subr.mxu0 0.0
    %2863 = vmatpush1.msra.mxu0 0.0
    %2864 = vmatprep.subr.mxu0 0.0
    %2865 = vmatpush1.msra.mxu0 0.0
    %2866 = vmatprep.subr.mxu0 0.0
    %2867 = vmatpush1.msra.mxu0 0.0
    %2868 = vmatprep.subr.mxu0 0.0
    %2869 = vmatpush1.msra.mxu0 0.0
    %2870 = vmatprep.subr.mxu0 0.0
    %2871 = vmatpush1.msra.mxu0 0.0
    %2872 = vmatprep.subr.mxu0 0.0
    %2873 = vmatpush1.msra.mxu0 0.0
    %2874 = vmatprep.subr.mxu0 0.0
    %2875 = vmatpush1.msra.mxu0 0.0
    %2876 = vmatprep.subr.mxu0 0.0
    %2877 = vmatpush1.msra.mxu0 0.0
    %2878 = vmatprep.subr.mxu0 0.0
    %2879 = vmatpush1.msra.mxu0 0.0
    %2880 = vmatprep.mubr.f32.mxu0 0.0
    %2881 = vmatmul.mubr.f32.gmra.mrb[0].mxu0 %v2734
    %v2882 = vpop.f32.mrb[0].mxu0
    %v2883 = vadd.f32 %v2729, %v2882
    %v2884 = vpop.f32.mrb[0].mxu0
    %2885 = vmatprep.mubr.f32.mxu0 0.0
    %2886 = vmatmul.mubr.f32.gmra.mrb[0].mxu0 %v2737
    %v2887 = vpop.f32.mrb[0].mxu0
    %v2888 = vadd.f32 %v2729, %v2887
    %v2889 = vpop.f32.mrb[0].mxu0
    %2890 = vdwg.mxu0
    %v2892 = vlaneseq
    %v2893 = vshrl.u32 %v2892, 7
    %v2894 = vsub.s32 0, %v2893
    %v2895 = vrot.slane %v2716, %v2894
    %v2896 = vlaneseq
    %v2897 = vshrl.u32 %v2896, 7
    %v2898 = vsub.s32 1, %v2897
    %v2899 = vrot.slane %v2716, %v2898
    %v2900 = vlaneseq
    %v2901 = vshrl.u32 %v2900, 7
    %v2902 = vsub.s32 2, %v2901
    %v2903 = vrot.slane %v2716, %v2902
    %2907 = vmatprep.subr.mxu0 %v2708
    %2908 = vmatpush1.msra.mxu0 %v2707
    %2909 = vmatprep.subr.mxu0 %v2711
    %2910 = vmatpush1.msra.mxu0 %v2710
    %2911 = vmatprep.subr.mxu0 0.0
    %2912 = vmatpush1.msra.mxu0 0.0
    %2913 = vmatprep.subr.mxu0 0.0
    %2914 = vmatpush1.msra.mxu0 0.0
    %2915 = vmatprep.subr.mxu0 0.0
    %2916 = vmatpush1.msra.mxu0 0.0
    %2917 = vmatprep.subr.mxu0 0.0
    %2918 = vmatpush1.msra.mxu0 0.0
    %2919 = vmatprep.subr.mxu0 0.0
    %2920 = vmatpush1.msra.mxu0 0.0
    %2921 = vmatprep.subr.mxu0 0.0
    %2922 = vmatpush1.msra.mxu0 0.0
    %2923 = vmatprep.subr.mxu0 0.0
    %2924 = vmatpush1.msra.mxu0 0.0
    %2925 = vmatprep.subr.mxu0 0.0
    %2926 = vmatpush1.msra.mxu0 0.0
    %2927 = vmatprep.subr.mxu0 0.0
    %2928 = vmatpush1.msra.mxu0 0.0
    %2929 = vmatprep.subr.mxu0 0.0
    %2930 = vmatpush1.msra.mxu0 0.0
    %2931 = vmatprep.subr.mxu0 0.0
    %2932 = vmatpush1.msra.mxu0 0.0
    %2933 = vmatprep.subr.mxu0 0.0
    %2934 = vmatpush1.msra.mxu0 0.0
    %2935 = vmatprep.subr.mxu0 0.0
    %2936 = vmatpush1.msra.mxu0 0.0
    %2937 = vmatprep.subr.mxu0 0.0
    %2938 = vmatpush1.msra.mxu0 0.0
    %2939 = vmatprep.subr.mxu0 0.0
    %2940 = vmatpush1.msra.mxu0 0.0
    %2941 = vmatprep.subr.mxu0 0.0
    %2942 = vmatpush1.msra.mxu0 0.0
    %2943 = vmatprep.subr.mxu0 0.0
    %2944 = vmatpush1.msra.mxu0 0.0
    %2945 = vmatprep.subr.mxu0 0.0
    %2946 = vmatpush1.msra.mxu0 0.0
    %2947 = vmatprep.subr.mxu0 0.0
    %2948 = vmatpush1.msra.mxu0 0.0
    %2949 = vmatprep.subr.mxu0 0.0
    %2950 = vmatpush1.msra.mxu0 0.0
    %2951 = vmatprep.subr.mxu0 0.0
    %2952 = vmatpush1.msra.mxu0 0.0
    %2953 = vmatprep.subr.mxu0 0.0
    %2954 = vmatpush1.msra.mxu0 0.0
    %2955 = vmatprep.subr.mxu0 0.0
    %2956 = vmatpush1.msra.mxu0 0.0
    %2957 = vmatprep.subr.mxu0 0.0
    %2958 = vmatpush1.msra.mxu0 0.0
    %2959 = vmatprep.subr.mxu0 0.0
    %2960 = vmatpush1.msra.mxu0 0.0
    %2961 = vmatprep.subr.mxu0 0.0
    %2962 = vmatpush1.msra.mxu0 0.0
    %2963 = vmatprep.subr.mxu0 0.0
    %2964 = vmatpush1.msra.mxu0 0.0
    %2965 = vmatprep.subr.mxu0 0.0
    %2966 = vmatpush1.msra.mxu0 0.0
    %2967 = vmatprep.subr.mxu0 0.0
    %2968 = vmatpush1.msra.mxu0 0.0
    %2969 = vmatprep.subr.mxu0 0.0
    %2970 = vmatpush1.msra.mxu0 0.0
    %2971 = vmatprep.mubr.f32.mxu0 0.0
    %2972 = vmatmul.mubr.f32.gmra.mrb[0].mxu0 %v2346
    %v2973 = vpop.f32.mrb[0].mxu0
    %v2974 = vadd.f32 %v2895, %v2973
    %v2975 = vpop.f32.mrb[0].mxu0
    %v2976 = vadd.f32 %v2899, %v2975
    %2977 = vmatprep.mubr.f32.mxu0 0.0
    %2978 = vmatmul.mubr.f32.gmra.mrb[0].mxu0 %v2349
    %v2979 = vpop.f32.mrb[0].mxu0
    %v2980 = vadd.f32 %v2895, %v2979
    %v2981 = vpop.f32.mrb[0].mxu0
    %v2982 = vadd.f32 %v2899, %v2981
    %2983 = vdwg.mxu0
    %2984 = vmatprep.subr.mxu0 0.0
    %2985 = vmatpush1.msra.mxu0 %v2709
    %2986 = vmatprep.subr.mxu0 0.0
    %2987 = vmatpush1.msra.mxu0 %v2712
    %2988 = vmatprep.subr.mxu0 0.0
    %2989 = vmatpush1.msra.mxu0 0.0
    %2990 = vmatprep.subr.mxu0 0.0
    %2991 = vmatpush1.msra.mxu0 0.0
    %2992 = vmatprep.subr.mxu0 0.0
    %2993 = vmatpush1.msra.mxu0 0.0
    %2994 = vmatprep.subr.mxu0 0.0
    %2995 = vmatpush1.msra.mxu0 0.0
    %2996 = vmatprep.subr.mxu0 0.0
    %2997 = vmatpush1.msra.mxu0 0.0
    %2998 = vmatprep.subr.mxu0 0.0
    %2999 = vmatpush1.msra.mxu0 0.0
    %3000 = vmatprep.subr.mxu0 0.0
    %3001 = vmatpush1.msra.mxu0 0.0
    %3002 = vmatprep.subr.mxu0 0.0
    %3003 = vmatpush1.msra.mxu0 0.0
    %3004 = vmatprep.subr.mxu0 0.0
    %3005 = vmatpush1.msra.mxu0 0.0
    %3006 = vmatprep.subr.mxu0 0.0
    %3007 = vmatpush1.msra.mxu0 0.0
    %3008 = vmatprep.subr.mxu0 0.0
    %3009 = vmatpush1.msra.mxu0 0.0
    %3010 = vmatprep.subr.mxu0 0.0
    %3011 = vmatpush1.msra.mxu0 0.0
    %3012 = vmatprep.subr.mxu0 0.0
    %3013 = vmatpush1.msra.mxu0 0.0
    %3014 = vmatprep.subr.mxu0 0.0
    %3015 = vmatpush1.msra.mxu0 0.0
    %3016 = vmatprep.subr.mxu0 0.0
    %3017 = vmatpush1.msra.mxu0 0.0
    %3018 = vmatprep.subr.mxu0 0.0
    %3019 = vmatpush1.msra.mxu0 0.0
    %3020 = vmatprep.subr.mxu0 0.0
    %3021 = vmatpush1.msra.mxu0 0.0
    %3022 = vmatprep.subr.mxu0 0.0
    %3023 = vmatpush1.msra.mxu0 0.0
    %3024 = vmatprep.subr.mxu0 0.0
    %3025 = vmatpush1.msra.mxu0 0.0
    %3026 = vmatprep.subr.mxu0 0.0
    %3027 = vmatpush1.msra.mxu0 0.0
    %3028 = vmatprep.subr.mxu0 0.0
    %3029 = vmatpush1.msra.mxu0 0.0
    %3030 = vmatprep.subr.mxu0 0.0
    %3031 = vmatpush1.msra.mxu0 0.0
    %3032 = vmatprep.subr.mxu0 0.0
    %3033 = vmatpush1.msra.mxu0 0.0
    %3034 = vmatprep.subr.mxu0 0.0
    %3035 = vmatpush1.msra.mxu0 0.0
    %3036 = vmatprep.subr.mxu0 0.0
    %3037 = vmatpush1.msra.mxu0 0.0
    %3038 = vmatprep.subr.mxu0 0.0
    %3039 = vmatpush1.msra.mxu0 0.0
    %3040 = vmatprep.subr.mxu0 0.0
    %3041 = vmatpush1.msra.mxu0 0.0
    %3042 = vmatprep.subr.mxu0 0.0
    %3043 = vmatpush1.msra.mxu0 0.0
    %3044 = vmatprep.subr.mxu0 0.0
    %3045 = vmatpush1.msra.mxu0 0.0
    %3046 = vmatprep.subr.mxu0 0.0
    %3047 = vmatpush1.msra.mxu0 0.0
    %3048 = vmatprep.mubr.f32.mxu0 0.0
    %3049 = vmatmul.mubr.f32.gmra.mrb[0].mxu0 %v2346
    %v3050 = vpop.f32.mrb[0].mxu0
    %v3051 = vadd.f32 %v2903, %v3050
    %v3052 = vpop.f32.mrb[0].mxu0
    %3053 = vmatprep.mubr.f32.mxu0 0.0
    %3054 = vmatmul.mubr.f32.gmra.mrb[0].mxu0 %v2349
    %v3055 = vpop.f32.mrb[0].mxu0
    %v3056 = vadd.f32 %v2903, %v3055
    %v3057 = vpop.f32.mrb[0].mxu0
    %3058 = vdwg.mxu0
    %v3059 = vadd.f32 %v2806, %v2974
    %v3060 = vadd.f32 %v2812, %v2980
    %v3061 = vsub.f32 0.0, %v3059
    %v3062 = vsub.f32 0.0, %v3060
    %v3063 = vmul.f32 %v3061, 1.442695
    %v3064 = vpow.pop %v3063
    %v3065 = vmul.f32 %v3062, 1.442695
    %v3066 = vpow.pop %v3065
    %v3067 = vadd.f32 %v3064, 1.0
    %v3068 = vadd.f32 %v3066, 1.0
    %v3069 = vrcp.pop %v3067
    %v3070 = vmul.f32 1.0, %v3069
    %v3071 = vrcp.pop %v3068
    %v3072 = vmul.f32 1.0, %v3071
    %v3073 = vadd.f32 %v2808, %v2976
    %v3074 = vadd.f32 %v2814, %v2982
    %v3075 = vsub.f32 0.0, %v3073
    %v3076 = vsub.f32 0.0, %v3074
    %v3077 = vmul.f32 %v3075, 1.442695
    %v3078 = vpow.pop %v3077
    %v3079 = vmul.f32 %v3076, 1.442695
    %v3080 = vpow.pop %v3079
    %v3081 = vadd.f32 %v3078, 1.0
    %v3082 = vadd.f32 %v3080, 1.0
    %v3083 = vrcp.pop %v3081
    %v3084 = vmul.f32 1.0, %v3083
    %v3085 = vrcp.pop %v3082
    %v3086 = vmul.f32 1.0, %v3085
    %v3087 = vmul.f32 %v3070, %v3051
    %v3088 = vmul.f32 %v3072, %v3056
    %v3089 = vadd.f32 %v2883, %v3087
    %v3090 = vadd.f32 %v2888, %v3088
    %v3091 = vtanh.pop %v3089
    %v3092 = vtanh.pop %v3090
    %v3093 = vsub.f32 1.0, %v3084
    %v3094 = vsub.f32 1.0, %v3086
    %v3095 = vmul.f32 %v3093, %v3091
    %v3096 = vmul.f32 %v3094, %v3092
    %v3097 = vmul.f32 %v3084, %v2340
    %v3098 = vmul.f32 %v3086, %v2341
    %v3099 = vadd.f32 %v3095, %v3097
    %v3100 = vadd.f32 %v3096, %v3098
    %v3101 = vmax.f32 %v3099, 0.0
    %v3102 = vmax.f32 %v3100, 0.0
    %v3104 = vsel %vm522, %v421, 0
    %v3107 = vsel %vm532, %v3102, 0
    %3109 = vmatprep.subr.mxu0 0.0
    %3110 = vmatpush1.msra.mxu0 %v3101
    %3111 = vmatprep.subr.mxu0 0.0
    %3112 = vmatpush1.msra.mxu0 %v3107
    %3113 = vmatprep.subr.mxu0 0.0
    %3114 = vmatpush1.msra.mxu0 0.0
    %3115 = vmatprep.subr.mxu0 0.0
    %3116 = vmatpush1.msra.mxu0 0.0
    %3117 = vmatprep.subr.mxu0 0.0
    %3118 = vmatpush1.msra.mxu0 0.0
    %3119 = vmatprep.subr.mxu0 0.0
    %3120 = vmatpush1.msra.mxu0 0.0
    %3121 = vmatprep.subr.mxu0 0.0
    %3122 = vmatpush1.msra.mxu0 0.0
    %3123 = vmatprep.subr.mxu0 0.0
    %3124 = vmatpush1.msra.mxu0 0.0
    %3125 = vmatprep.subr.mxu0 0.0
    %3126 = vmatpush1.msra.mxu0 0.0
    %3127 = vmatprep.subr.mxu0 0.0
    %3128 = vmatpush1.msra.mxu0 0.0
    %3129 = vmatprep.subr.mxu0 0.0
    %3130 = vmatpush1.msra.mxu0 0.0
    %3131 = vmatprep.subr.mxu0 0.0
    %3132 = vmatpush1.msra.mxu0 0.0
    %3133 = vmatprep.subr.mxu0 0.0
    %3134 = vmatpush1.msra.mxu0 0.0
    %3135 = vmatprep.subr.mxu0 0.0
    %3136 = vmatpush1.msra.mxu0 0.0
    %3137 = vmatprep.subr.mxu0 0.0
    %3138 = vmatpush1.msra.mxu0 0.0
    %3139 = vmatprep.subr.mxu0 0.0
    %3140 = vmatpush1.msra.mxu0 0.0
    %3141 = vmatprep.subr.mxu0 0.0
    %3142 = vmatpush1.msra.mxu0 0.0
    %3143 = vmatprep.subr.mxu0 0.0
    %3144 = vmatpush1.msra.mxu0 0.0
    %3145 = vmatprep.subr.mxu0 0.0
    %3146 = vmatpush1.msra.mxu0 0.0
    %3147 = vmatprep.subr.mxu0 0.0
    %3148 = vmatpush1.msra.mxu0 0.0
    %3149 = vmatprep.subr.mxu0 0.0
    %3150 = vmatpush1.msra.mxu0 0.0
    %3151 = vmatprep.subr.mxu0 0.0
    %3152 = vmatpush1.msra.mxu0 0.0
    %3153 = vmatprep.subr.mxu0 0.0
    %3154 = vmatpush1.msra.mxu0 0.0
    %3155 = vmatprep.subr.mxu0 0.0
    %3156 = vmatpush1.msra.mxu0 0.0
    %3157 = vmatprep.subr.mxu0 0.0
    %3158 = vmatpush1.msra.mxu0 0.0
    %3159 = vmatprep.subr.mxu0 0.0
    %3160 = vmatpush1.msra.mxu0 0.0
    %3161 = vmatprep.subr.mxu0 0.0
    %3162 = vmatpush1.msra.mxu0 0.0
    %3163 = vmatprep.subr.mxu0 0.0
    %3164 = vmatpush1.msra.mxu0 0.0
    %3165 = vmatprep.subr.mxu0 0.0
    %3166 = vmatpush1.msra.mxu0 0.0
    %3167 = vmatprep.subr.mxu0 0.0
    %3168 = vmatpush1.msra.mxu0 0.0
    %3169 = vmatprep.subr.mxu0 0.0
    %3170 = vmatpush1.msra.mxu0 0.0
    %3171 = vmatprep.subr.mxu0 0.0
    %3172 = vmatpush1.msra.mxu0 0.0
    %3173 = vmatprep.mubr.f32.mxu0 0.0
    %3174 = vmatmul.mubr.f32.gmra.mrb[0].mxu0 %v3104
    %v3175 = vpop.f32.mrb[0].mxu0
    %v3176 = vadd.f32 0.0, %v3175
    %v3177 = vpop.f32.mrb[0].mxu0
    %3178 = vdwg.mxu0
    %v3179 = vmax.f32 %v3176, 0.0
    %v3180 = vld [vmem:[#allocation23] sm:$0xff]
    %v3181 = vld [vmem:[#allocation23 + $0x8] sm:$0xff]
    %v3182 = vld [vmem:[#allocation26] sm:$0x1]
    %v3183 = vld [vmem:[#allocation28] sm:$0x1]
    %v3184 = vld [vmem:[#allocation29] sm:$0xff]
    %v3185 = vld [vmem:[#allocation29 + $0x8] sm:$0xff]
    %v3186 = vld [vmem:[#allocation29 + $0x10] sm:$0xff]
    %v3187 = vld [vmem:[#allocation29 + $0x18] sm:$0xff]
    %v3188 = vld [vmem:[#allocation29 + $0x20] sm:$0xff]
    %v3189 = vld [vmem:[#allocation29 + $0x28] sm:$0xff]
    %v3190 = vld [vmem:[#allocation31] sm:$0xff]
    %v3191 = vld [vmem:[#allocation31 + $0x8] sm:$0xff]
    %v3192 = vld [vmem:[#allocation31 + $0x10] sm:$0xff]
    %v3193 = vld [vmem:[#allocation31 + $0x18] sm:$0xff]
    %v3194 = vld [vmem:[#allocation31 + $0x20] sm:$0xff]
    %v3195 = vld [vmem:[#allocation31 + $0x28] sm:$0xff]
    %v3196 = vld [vmem:[#allocation32] sm:$0x7]
    %v3197 = vld [vmem:[#allocation34] sm:$0x7]
    %v3199 = vsel %vm717, %v3101, 0
    %v3201 = vsel %vm717, %v3102, 0
    %3203 = vmatprep.subr.mxu0 0.0
    %3204 = vmatpush1.msra.mxu0 %v3180
    %3205 = vmatprep.subr.mxu0 0.0
    %3206 = vmatpush1.msra.mxu0 %v3181
    %3207 = vmatprep.subr.mxu0 0.0
    %3208 = vmatpush1.msra.mxu0 0.0
    %3209 = vmatprep.subr.mxu0 0.0
    %3210 = vmatpush1.msra.mxu0 0.0
    %3211 = vmatprep.subr.mxu0 0.0
    %3212 = vmatpush1.msra.mxu0 0.0
    %3213 = vmatprep.subr.mxu0 0.0
    %3214 = vmatpush1.msra.mxu0 0.0
    %3215 = vmatprep.subr.mxu0 0.0
    %3216 = vmatpush1.msra.mxu0 0.0
    %3217 = vmatprep.subr.mxu0 0.0
    %3218 = vmatpush1.msra.mxu0 0.0
    %3219 = vmatprep.subr.mxu0 0.0
    %3220 = vmatpush1.msra.mxu0 0.0
    %3221 = vmatprep.subr.mxu0 0.0
    %3222 = vmatpush1.msra.mxu0 0.0
    %3223 = vmatprep.subr.mxu0 0.0
    %3224 = vmatpush1.msra.mxu0 0.0
    %3225 = vmatprep.subr.mxu0 0.0
    %3226 = vmatpush1.msra.mxu0 0.0
    %3227 = vmatprep.subr.mxu0 0.0
    %3228 = vmatpush1.msra.mxu0 0.0
    %3229 = vmatprep.subr.mxu0 0.0
    %3230 = vmatpush1.msra.mxu0 0.0
    %3231 = vmatprep.subr.mxu0 0.0
    %3232 = vmatpush1.msra.mxu0 0.0
    %3233 = vmatprep.subr.mxu0 0.0
    %3234 = vmatpush1.msra.mxu0 0.0
    %3235 = vmatprep.subr.mxu0 0.0
    %3236 = vmatpush1.msra.mxu0 0.0
    %3237 = vmatprep.subr.mxu0 0.0
    %3238 = vmatpush1.msra.mxu0 0.0
    %3239 = vmatprep.subr.mxu0 0.0
    %3240 = vmatpush1.msra.mxu0 0.0
    %3241 = vmatprep.subr.mxu0 0.0
    %3242 = vmatpush1.msra.mxu0 0.0
    %3243 = vmatprep.subr.mxu0 0.0
    %3244 = vmatpush1.msra.mxu0 0.0
    %3245 = vmatprep.subr.mxu0 0.0
    %3246 = vmatpush1.msra.mxu0 0.0
    %3247 = vmatprep.subr.mxu0 0.0
    %3248 = vmatpush1.msra.mxu0 0.0
    %3249 = vmatprep.subr.mxu0 0.0
    %3250 = vmatpush1.msra.mxu0 0.0
    %3251 = vmatprep.subr.mxu0 0.0
    %3252 = vmatpush1.msra.mxu0 0.0
    %3253 = vmatprep.subr.mxu0 0.0
    %3254 = vmatpush1.msra.mxu0 0.0
    %3255 = vmatprep.subr.mxu0 0.0
    %3256 = vmatpush1.msra.mxu0 0.0
    %3257 = vmatprep.subr.mxu0 0.0
    %3258 = vmatpush1.msra.mxu0 0.0
    %3259 = vmatprep.subr.mxu0 0.0
    %3260 = vmatpush1.msra.mxu0 0.0
    %3261 = vmatprep.subr.mxu0 0.0
    %3262 = vmatpush1.msra.mxu0 0.0
    %3263 = vmatprep.subr.mxu0 0.0
    %3264 = vmatpush1.msra.mxu0 0.0
    %3265 = vmatprep.subr.mxu0 0.0
    %3266 = vmatpush1.msra.mxu0 0.0
    %3267 = vmatprep.mubr.f32.mxu0 0.0
    %3268 = vmatmul.mubr.f32.gmra.mrb[0].mxu0 %v3199
    %v3269 = vpop.f32.mrb[0].mxu0
    %v3270 = vadd.f32 0.0, %v3269
    %v3271 = vpop.f32.mrb[0].mxu0
    %3272 = vmatprep.mubr.f32.mxu0 0.0
    %3273 = vmatmul.mubr.f32.gmra.mrb[0].mxu0 %v3201
    %v3274 = vpop.f32.mrb[0].mxu0
    %v3275 = vadd.f32 0.0, %v3274
    %v3276 = vpop.f32.mrb[0].mxu0
    %3277 = vdwg.mxu0
    %v3278 = vld [vmem:[#allocation25] sm:$0x1]
    %v3280 = vlaneseq
    %v3281 = vshrl.u32 %v3280, 7
    %v3282 = vsub.s32 0, %v3281
    %v3283 = vrot.slane %v3278, %v3282
    %v3285 = vmul.f32 %v3270, %v3283
    %v3286 = vmul.f32 %v3275, %v3283
    %v3287 = vsel %vm717, %v3285, 0.0
    %3288 = vadd.xlane.f32.xlu0 %v3287
    %v3289 = vpop.xlane.xlu0 %3288
    %v3290 = vsel %vm832, %v3286, 0.0
    %3291 = vadd.xlane.f32.xlu0 %v3290
    %v3292 = vpop.xlane.xlu0 %3291
    %v3293 = vsel %vm842, %v3289, 0.0
    %v3294 = vsel %vm843, %v3292, 0.0
    %v3295 = vsel %vm522, %v3293, 0.0
    %vm3296 = vcmask 93184
    %v3297 = vsel %vm3296, %v3294, 0.0
    %v3298 = vadd.f32 %v3295, %v3297
    %v3299 = vrot.slane %v3298, 4
    %v3300 = vadd.f32 %v3298, %v3299
    %v3301 = vrot.slane %v3300, 2
    %v3302 = vadd.f32 %v3300, %v3301
    %v3303 = vrot.slane %v3302, 1
    %v3304 = vadd.f32 %v3302, %v3303
    %v3306 = vsel %vm717, %v3179, 0
    %3308 = vmatprep.subr.mxu0 0.0
    %3309 = vmatpush1.msra.mxu0 %v3180
    %3310 = vmatprep.subr.mxu0 0.0
    %3311 = vmatpush1.msra.mxu0 %v3181
    %3312 = vmatprep.subr.mxu0 0.0
    %3313 = vmatpush1.msra.mxu0 0.0
    %3314 = vmatprep.subr.mxu0 0.0
    %3315 = vmatpush1.msra.mxu0 0.0
    %3316 = vmatprep.subr.mxu0 0.0
    %3317 = vmatpush1.msra.mxu0 0.0
    %3318 = vmatprep.subr.mxu0 0.0
    %3319 = vmatpush1.msra.mxu0 0.0
    %3320 = vmatprep.subr.mxu0 0.0
    %3321 = vmatpush1.msra.mxu0 0.0
    %3322 = vmatprep.subr.mxu0 0.0
    %3323 = vmatpush1.msra.mxu0 0.0
    %3324 = vmatprep.subr.mxu0 0.0
    %3325 = vmatpush1.msra.mxu0 0.0
    %3326 = vmatprep.subr.mxu0 0.0
    %3327 = vmatpush1.msra.mxu0 0.0
    %3328 = vmatprep.subr.mxu0 0.0
    %3329 = vmatpush1.msra.mxu0 0.0
    %3330 = vmatprep.subr.mxu0 0.0
    %3331 = vmatpush1.msra.mxu0 0.0
    %3332 = vmatprep.subr.mxu0 0.0
    %3333 = vmatpush1.msra.mxu0 0.0
    %3334 = vmatprep.subr.mxu0 0.0
    %3335 = vmatpush1.msra.mxu0 0.0
    %3336 = vmatprep.subr.mxu0 0.0
    %3337 = vmatpush1.msra.mxu0 0.0
    %3338 = vmatprep.subr.mxu0 0.0
    %3339 = vmatpush1.msra.mxu0 0.0
    %3340 = vmatprep.subr.mxu0 0.0
    %3341 = vmatpush1.msra.mxu0 0.0
    %3342 = vmatprep.subr.mxu0 0.0
    %3343 = vmatpush1.msra.mxu0 0.0
    %3344 = vmatprep.subr.mxu0 0.0
    %3345 = vmatpush1.msra.mxu0 0.0
    %3346 = vmatprep.subr.mxu0 0.0
    %3347 = vmatpush1.msra.mxu0 0.0
    %3348 = vmatprep.subr.mxu0 0.0
    %3349 = vmatpush1.msra.mxu0 0.0
    %3350 = vmatprep.subr.mxu0 0.0
    %3351 = vmatpush1.msra.mxu0 0.0
    %3352 = vmatprep.subr.mxu0 0.0
    %3353 = vmatpush1.msra.mxu0 0.0
    %3354 = vmatprep.subr.mxu0 0.0
    %3355 = vmatpush1.msra.mxu0 0.0
    %3356 = vmatprep.subr.mxu0 0.0
    %3357 = vmatpush1.msra.mxu0 0.0
    %3358 = vmatprep.subr.mxu0 0.0
    %3359 = vmatpush1.msra.mxu0 0.0
    %3360 = vmatprep.subr.mxu0 0.0
    %3361 = vmatpush1.msra.mxu0 0.0
    %3362 = vmatprep.subr.mxu0 0.0
    %3363 = vmatpush1.msra.mxu0 0.0
    %3364 = vmatprep.subr.mxu0 0.0
    %3365 = vmatpush1.msra.mxu0 0.0
    %3366 = vmatprep.subr.mxu0 0.0
    %3367 = vmatpush1.msra.mxu0 0.0
    %3368 = vmatprep.subr.mxu0 0.0
    %3369 = vmatpush1.msra.mxu0 0.0
    %3370 = vmatprep.subr.mxu0 0.0
    %3371 = vmatpush1.msra.mxu0 0.0
    %3372 = vmatprep.mubr.f32.mxu0 0.0
    %3373 = vmatmul.mubr.f32.gmra.mrb[0].mxu0 %v3306
    %v3374 = vpop.f32.mrb[0].mxu0
    %v3375 = vadd.f32 0.0, %v3374
    %v3376 = vpop.f32.mrb[0].mxu0
    %3377 = vdwg.mxu0
    %v3379 = vlaneseq
    %v3380 = vshrl.u32 %v3379, 7
    %v3381 = vsub.s32 0, %v3380
    %v3382 = vrot.slane %v3182, %v3381
    %v3384 = vmul.f32 %v3375, %v3382
    %vm3385 = vcmask 123904
    %v3386 = vsel %vm3385, %v3384, 0.0
    %3387 = vadd.xlane.f32.xlu0 %v3386
    %v3388 = vpop.xlane.xlu0 %3387
    %v3389 = vmul.f32 %v421, %v3388
    %vm3390 = vcmask 91136
    %v3391 = vsel %vm3390, %v3389, 0.0
    %v3392 = vrot.slane %v3391, 4
    %v3393 = vadd.f32 %v3391, %v3392
    %v3394 = vrot.slane %v3393, 2
    %v3395 = vadd.f32 %v3393, %v3394
    %v3396 = vrot.slane %v3395, 1
    %v3397 = vadd.f32 %v3395, %v3396
    %v3398 = vadd.f32 %v3304, %v3397
    %vm3399 = vcmp.ge.f32.partialorder %v3398, 0.0
    %v3400 = vmul.f32 %v3398, 0.01
    %v3401 = vsel %vm3399, %v3398, %v3400
    %vm3402 = vcmp.gt.f32.partialorder %v421, 0.0
    %v3403 = vsel %vm3402, %v3401, -1e+30
    %v3404 = vsel %vm3390, %v3403, -inf
    %3405 = vmax.xlane.f32.xlu0 %v3404
    %v3406 = vpop.xlane.xlu0 %3405
    %v3407 = vsub.f32 %v3403, %v3406
    %v3408 = vmul.f32 %v3407, 1.442695
    %v3409 = vpow.pop %v3408
    %v3410 = vmul.f32 %v3409, %v421
    %v3411 = vsel %vm3390, %v3410, 0.0
    %3412 = vadd.xlane.f32.xlu0 %v3411
    %v3413 = vpop.xlane.xlu0 %3412
    %v3414 = vadd.f32 %v3413, 1e-16
    %v3415 = vrcp.pop %v3414
    %v3416 = vmul.f32 %v3410, %v3415
    %v3418 = vlaneseq
    %v3419 = vshrl.u32 %v3418, 7
    %v3420 = vsub.s32 0, %v3419
    %v3421 = vrot.slane %v3183, %v3420
    %v3424 = vsel %vm522, %v3416, 0
    %v3427 = vsel %vm532, %v3275, 0
    %3429 = vmatprep.subr.mxu0 0.0
    %3430 = vmatpush1.msra.mxu0 %v3270
    %3431 = vmatprep.subr.mxu0 0.0
    %3432 = vmatpush1.msra.mxu0 %v3427
    %3433 = vmatprep.subr.mxu0 0.0
    %3434 = vmatpush1.msra.mxu0 0.0
    %3435 = vmatprep.subr.mxu0 0.0
    %3436 = vmatpush1.msra.mxu0 0.0
    %3437 = vmatprep.subr.mxu0 0.0
    %3438 = vmatpush1.msra.mxu0 0.0
    %3439 = vmatprep.subr.mxu0 0.0
    %3440 = vmatpush1.msra.mxu0 0.0
    %3441 = vmatprep.subr.mxu0 0.0
    %3442 = vmatpush1.msra.mxu0 0.0
    %3443 = vmatprep.subr.mxu0 0.0
    %3444 = vmatpush1.msra.mxu0 0.0
    %3445 = vmatprep.subr.mxu0 0.0
    %3446 = vmatpush1.msra.mxu0 0.0
    %3447 = vmatprep.subr.mxu0 0.0
    %3448 = vmatpush1.msra.mxu0 0.0
    %3449 = vmatprep.subr.mxu0 0.0
    %3450 = vmatpush1.msra.mxu0 0.0
    %3451 = vmatprep.subr.mxu0 0.0
    %3452 = vmatpush1.msra.mxu0 0.0
    %3453 = vmatprep.subr.mxu0 0.0
    %3454 = vmatpush1.msra.mxu0 0.0
    %3455 = vmatprep.subr.mxu0 0.0
    %3456 = vmatpush1.msra.mxu0 0.0
    %3457 = vmatprep.subr.mxu0 0.0
    %3458 = vmatpush1.msra.mxu0 0.0
    %3459 = vmatprep.subr.mxu0 0.0
    %3460 = vmatpush1.msra.mxu0 0.0
    %3461 = vmatprep.subr.mxu0 0.0
    %3462 = vmatpush1.msra.mxu0 0.0
    %3463 = vmatprep.subr.mxu0 0.0
    %3464 = vmatpush1.msra.mxu0 0.0
    %3465 = vmatprep.subr.mxu0 0.0
    %3466 = vmatpush1.msra.mxu0 0.0
    %3467 = vmatprep.subr.mxu0 0.0
    %3468 = vmatpush1.msra.mxu0 0.0
    %3469 = vmatprep.subr.mxu0 0.0
    %3470 = vmatpush1.msra.mxu0 0.0
    %3471 = vmatprep.subr.mxu0 0.0
    %3472 = vmatpush1.msra.mxu0 0.0
    %3473 = vmatprep.subr.mxu0 0.0
    %3474 = vmatpush1.msra.mxu0 0.0
    %3475 = vmatprep.subr.mxu0 0.0
    %3476 = vmatpush1.msra.mxu0 0.0
    %3477 = vmatprep.subr.mxu0 0.0
    %3478 = vmatpush1.msra.mxu0 0.0
    %3479 = vmatprep.subr.mxu0 0.0
    %3480 = vmatpush1.msra.mxu0 0.0
    %3481 = vmatprep.subr.mxu0 0.0
    %3482 = vmatpush1.msra.mxu0 0.0
    %3483 = vmatprep.subr.mxu0 0.0
    %3484 = vmatpush1.msra.mxu0 0.0
    %3485 = vmatprep.subr.mxu0 0.0
    %3486 = vmatpush1.msra.mxu0 0.0
    %3487 = vmatprep.subr.mxu0 0.0
    %3488 = vmatpush1.msra.mxu0 0.0
    %3489 = vmatprep.subr.mxu0 0.0
    %3490 = vmatpush1.msra.mxu0 0.0
    %3491 = vmatprep.subr.mxu0 0.0
    %3492 = vmatpush1.msra.mxu0 0.0
    %3493 = vmatprep.mubr.f32.mxu0 0.0
    %3494 = vmatmul.mubr.f32.gmra.mrb[0].mxu0 %v3424
    %v3495 = vpop.f32.mrb[0].mxu0
    %v3496 = vadd.f32 %v3421, %v3495
    %v3497 = vpop.f32.mrb[0].mxu0
    %3498 = vdwg.mxu0
    %vm3499 = vcmp.gt.f32.partialorder %v3496, 0.0
    %v3500 = vmin.f32 %v3496, 0.0
    %v3501 = vmul.f32 %v3500, 1.442695
    %v3502 = vpow.pop %v3501
    %v3503 = vsub.f32 %v3502, 1.0
    %v3504 = vsel %vm3499, %v3496, %v3503
    %v3506 = vlaneseq
    %v3507 = vshrl.u32 %v3506, 7
    %v3508 = vsub.s32 0, %v3507
    %v3509 = vrot.slane %v3196, %v3508
    %v3510 = vlaneseq
    %v3511 = vshrl.u32 %v3510, 7
    %v3512 = vsub.s32 1, %v3511
    %v3513 = vrot.slane %v3196, %v3512
    %v3514 = vlaneseq
    %v3515 = vshrl.u32 %v3514, 7
    %v3516 = vsub.s32 2, %v3515
    %v3517 = vrot.slane %v3196, %v3516
    %v3522 = vsel %vm717, %v3504, 0
    %3524 = vmatprep.subr.mxu0 %v3185
    %3525 = vmatpush1.msra.mxu0 %v3184
    %3526 = vmatprep.subr.mxu0 %v3188
    %3527 = vmatpush1.msra.mxu0 %v3187
    %3528 = vmatprep.subr.mxu0 0.0
    %3529 = vmatpush1.msra.mxu0 0.0
    %3530 = vmatprep.subr.mxu0 0.0
    %3531 = vmatpush1.msra.mxu0 0.0
    %3532 = vmatprep.subr.mxu0 0.0
    %3533 = vmatpush1.msra.mxu0 0.0
    %3534 = vmatprep.subr.mxu0 0.0
    %3535 = vmatpush1.msra.mxu0 0.0
    %3536 = vmatprep.subr.mxu0 0.0
    %3537 = vmatpush1.msra.mxu0 0.0
    %3538 = vmatprep.subr.mxu0 0.0
    %3539 = vmatpush1.msra.mxu0 0.0
    %3540 = vmatprep.subr.mxu0 0.0
    %3541 = vmatpush1.msra.mxu0 0.0
    %3542 = vmatprep.subr.mxu0 0.0
    %3543 = vmatpush1.msra.mxu0 0.0
    %3544 = vmatprep.subr.mxu0 0.0
    %3545 = vmatpush1.msra.mxu0 0.0
    %3546 = vmatprep.subr.mxu0 0.0
    %3547 = vmatpush1.msra.mxu0 0.0
    %3548 = vmatprep.subr.mxu0 0.0
    %3549 = vmatpush1.msra.mxu0 0.0
    %3550 = vmatprep.subr.mxu0 0.0
    %3551 = vmatpush1.msra.mxu0 0.0
    %3552 = vmatprep.subr.mxu0 0.0
    %3553 = vmatpush1.msra.mxu0 0.0
    %3554 = vmatprep.subr.mxu0 0.0
    %3555 = vmatpush1.msra.mxu0 0.0
    %3556 = vmatprep.subr.mxu0 0.0
    %3557 = vmatpush1.msra.mxu0 0.0
    %3558 = vmatprep.subr.mxu0 0.0
    %3559 = vmatpush1.msra.mxu0 0.0
    %3560 = vmatprep.subr.mxu0 0.0
    %3561 = vmatpush1.msra.mxu0 0.0
    %3562 = vmatprep.subr.mxu0 0.0
    %3563 = vmatpush1.msra.mxu0 0.0
    %3564 = vmatprep.subr.mxu0 0.0
    %3565 = vmatpush1.msra.mxu0 0.0
    %3566 = vmatprep.subr.mxu0 0.0
    %3567 = vmatpush1.msra.mxu0 0.0
    %3568 = vmatprep.subr.mxu0 0.0
    %3569 = vmatpush1.msra.mxu0 0.0
    %3570 = vmatprep.subr.mxu0 0.0
    %3571 = vmatpush1.msra.mxu0 0.0
    %3572 = vmatprep.subr.mxu0 0.0
    %3573 = vmatpush1.msra.mxu0 0.0
    %3574 = vmatprep.subr.mxu0 0.0
    %3575 = vmatpush1.msra.mxu0 0.0
    %3576 = vmatprep.subr.mxu0 0.0
    %3577 = vmatpush1.msra.mxu0 0.0
    %3578 = vmatprep.subr.mxu0 0.0
    %3579 = vmatpush1.msra.mxu0 0.0
    %3580 = vmatprep.subr.mxu0 0.0
    %3581 = vmatpush1.msra.mxu0 0.0
    %3582 = vmatprep.subr.mxu0 0.0
    %3583 = vmatpush1.msra.mxu0 0.0
    %3584 = vmatprep.subr.mxu0 0.0
    %3585 = vmatpush1.msra.mxu0 0.0
    %3586 = vmatprep.subr.mxu0 0.0
    %3587 = vmatpush1.msra.mxu0 0.0
    %3588 = vmatprep.mubr.f32.mxu0 0.0
    %3589 = vmatmul.mubr.f32.gmra.mrb[0].mxu0 %v3522
    %v3590 = vpop.f32.mrb[0].mxu0
    %v3591 = vadd.f32 %v3509, %v3590
    %v3592 = vpop.f32.mrb[0].mxu0
    %v3593 = vadd.f32 %v3513, %v3592
    %3594 = vdwg.mxu0
    %3595 = vmatprep.subr.mxu0 0.0
    %3596 = vmatpush1.msra.mxu0 %v3186
    %3597 = vmatprep.subr.mxu0 0.0
    %3598 = vmatpush1.msra.mxu0 %v3189
    %3599 = vmatprep.subr.mxu0 0.0
    %3600 = vmatpush1.msra.mxu0 0.0
    %3601 = vmatprep.subr.mxu0 0.0
    %3602 = vmatpush1.msra.mxu0 0.0
    %3603 = vmatprep.subr.mxu0 0.0
    %3604 = vmatpush1.msra.mxu0 0.0
    %3605 = vmatprep.subr.mxu0 0.0
    %3606 = vmatpush1.msra.mxu0 0.0
    %3607 = vmatprep.subr.mxu0 0.0
    %3608 = vmatpush1.msra.mxu0 0.0
    %3609 = vmatprep.subr.mxu0 0.0
    %3610 = vmatpush1.msra.mxu0 0.0
    %3611 = vmatprep.subr.mxu0 0.0
    %3612 = vmatpush1.msra.mxu0 0.0
    %3613 = vmatprep.subr.mxu0 0.0
    %3614 = vmatpush1.msra.mxu0 0.0
    %3615 = vmatprep.subr.mxu0 0.0
    %3616 = vmatpush1.msra.mxu0 0.0
    %3617 = vmatprep.subr.mxu0 0.0
    %3618 = vmatpush1.msra.mxu0 0.0
    %3619 = vmatprep.subr.mxu0 0.0
    %3620 = vmatpush1.msra.mxu0 0.0
    %3621 = vmatprep.subr.mxu0 0.0
    %3622 = vmatpush1.msra.mxu0 0.0
    %3623 = vmatprep.subr.mxu0 0.0
    %3624 = vmatpush1.msra.mxu0 0.0
    %3625 = vmatprep.subr.mxu0 0.0
    %3626 = vmatpush1.msra.mxu0 0.0
    %3627 = vmatprep.subr.mxu0 0.0
    %3628 = vmatpush1.msra.mxu0 0.0
    %3629 = vmatprep.subr.mxu0 0.0
    %3630 = vmatpush1.msra.mxu0 0.0
    %3631 = vmatprep.subr.mxu0 0.0
    %3632 = vmatpush1.msra.mxu0 0.0
    %3633 = vmatprep.subr.mxu0 0.0
    %3634 = vmatpush1.msra.mxu0 0.0
    %3635 = vmatprep.subr.mxu0 0.0
    %3636 = vmatpush1.msra.mxu0 0.0
    %3637 = vmatprep.subr.mxu0 0.0
    %3638 = vmatpush1.msra.mxu0 0.0
    %3639 = vmatprep.subr.mxu0 0.0
    %3640 = vmatpush1.msra.mxu0 0.0
    %3641 = vmatprep.subr.mxu0 0.0
    %3642 = vmatpush1.msra.mxu0 0.0
    %3643 = vmatprep.subr.mxu0 0.0
    %3644 = vmatpush1.msra.mxu0 0.0
    %3645 = vmatprep.subr.mxu0 0.0
    %3646 = vmatpush1.msra.mxu0 0.0
    %3647 = vmatprep.subr.mxu0 0.0
    %3648 = vmatpush1.msra.mxu0 0.0
    %3649 = vmatprep.subr.mxu0 0.0
    %3650 = vmatpush1.msra.mxu0 0.0
    %3651 = vmatprep.subr.mxu0 0.0
    %3652 = vmatpush1.msra.mxu0 0.0
    %3653 = vmatprep.subr.mxu0 0.0
    %3654 = vmatpush1.msra.mxu0 0.0
    %3655 = vmatprep.subr.mxu0 0.0
    %3656 = vmatpush1.msra.mxu0 0.0
    %3657 = vmatprep.subr.mxu0 0.0
    %3658 = vmatpush1.msra.mxu0 0.0
    %3659 = vmatprep.mubr.f32.mxu0 0.0
    %3660 = vmatmul.mubr.f32.gmra.mrb[0].mxu0 %v3522
    %v3661 = vpop.f32.mrb[0].mxu0
    %v3662 = vadd.f32 %v3517, %v3661
    %v3663 = vpop.f32.mrb[0].mxu0
    %3664 = vdwg.mxu0
    %v3666 = vlaneseq
    %v3667 = vshrl.u32 %v3666, 7
    %v3668 = vsub.s32 0, %v3667
    %v3669 = vrot.slane %v3197, %v3668
    %v3670 = vlaneseq
    %v3671 = vshrl.u32 %v3670, 7
    %v3672 = vsub.s32 1, %v3671
    %v3673 = vrot.slane %v3197, %v3672
    %v3674 = vlaneseq
    %v3675 = vshrl.u32 %v3674, 7
    %v3676 = vsub.s32 2, %v3675
    %v3677 = vrot.slane %v3197, %v3676
    %3681 = vmatprep.subr.mxu0 %v3191
    %3682 = vmatpush1.msra.mxu0 %v3190
    %3683 = vmatprep.subr.mxu0 %v3194
    %3684 = vmatpush1.msra.mxu0 %v3193
    %3685 = vmatprep.subr.mxu0 0.0
    %3686 = vmatpush1.msra.mxu0 0.0
    %3687 = vmatprep.subr.mxu0 0.0
    %3688 = vmatpush1.msra.mxu0 0.0
    %3689 = vmatprep.subr.mxu0 0.0
    %3690 = vmatpush1.msra.mxu0 0.0
    %3691 = vmatprep.subr.mxu0 0.0
    %3692 = vmatpush1.msra.mxu0 0.0
    %3693 = vmatprep.subr.mxu0 0.0
    %3694 = vmatpush1.msra.mxu0 0.0
    %3695 = vmatprep.subr.mxu0 0.0
    %3696 = vmatpush1.msra.mxu0 0.0
    %3697 = vmatprep.subr.mxu0 0.0
    %3698 = vmatpush1.msra.mxu0 0.0
    %3699 = vmatprep.subr.mxu0 0.0
    %3700 = vmatpush1.msra.mxu0 0.0
    %3701 = vmatprep.subr.mxu0 0.0
    %3702 = vmatpush1.msra.mxu0 0.0
    %3703 = vmatprep.subr.mxu0 0.0
    %3704 = vmatpush1.msra.mxu0 0.0
    %3705 = vmatprep.subr.mxu0 0.0
    %3706 = vmatpush1.msra.mxu0 0.0
    %3707 = vmatprep.subr.mxu0 0.0
    %3708 = vmatpush1.msra.mxu0 0.0
    %3709 = vmatprep.subr.mxu0 0.0
    %3710 = vmatpush1.msra.mxu0 0.0
    %3711 = vmatprep.subr.mxu0 0.0
    %3712 = vmatpush1.msra.mxu0 0.0
    %3713 = vmatprep.subr.mxu0 0.0
    %3714 = vmatpush1.msra.mxu0 0.0
    %3715 = vmatprep.subr.mxu0 0.0
    %3716 = vmatpush1.msra.mxu0 0.0
    %3717 = vmatprep.subr.mxu0 0.0
    %3718 = vmatpush1.msra.mxu0 0.0
    %3719 = vmatprep.subr.mxu0 0.0
    %3720 = vmatpush1.msra.mxu0 0.0
    %3721 = vmatprep.subr.mxu0 0.0
    %3722 = vmatpush1.msra.mxu0 0.0
    %3723 = vmatprep.subr.mxu0 0.0
    %3724 = vmatpush1.msra.mxu0 0.0
    %3725 = vmatprep.subr.mxu0 0.0
    %3726 = vmatpush1.msra.mxu0 0.0
    %3727 = vmatprep.subr.mxu0 0.0
    %3728 = vmatpush1.msra.mxu0 0.0
    %3729 = vmatprep.subr.mxu0 0.0
    %3730 = vmatpush1.msra.mxu0 0.0
    %3731 = vmatprep.subr.mxu0 0.0
    %3732 = vmatpush1.msra.mxu0 0.0
    %3733 = vmatprep.subr.mxu0 0.0
    %3734 = vmatpush1.msra.mxu0 0.0
    %3735 = vmatprep.subr.mxu0 0.0
    %3736 = vmatpush1.msra.mxu0 0.0
    %3737 = vmatprep.subr.mxu0 0.0
    %3738 = vmatpush1.msra.mxu0 0.0
    %3739 = vmatprep.subr.mxu0 0.0
    %3740 = vmatpush1.msra.mxu0 0.0
    %3741 = vmatprep.subr.mxu0 0.0
    %3742 = vmatpush1.msra.mxu0 0.0
    %3743 = vmatprep.subr.mxu0 0.0
    %3744 = vmatpush1.msra.mxu0 0.0
    %3745 = vmatprep.mubr.f32.mxu0 0.0
    %3746 = vmatmul.mubr.f32.gmra.mrb[0].mxu0 %v3306
    %v3747 = vpop.f32.mrb[0].mxu0
    %v3748 = vadd.f32 %v3669, %v3747
    %v3749 = vpop.f32.mrb[0].mxu0
    %v3750 = vadd.f32 %v3673, %v3749
    %3751 = vdwg.mxu0
    %3752 = vmatprep.subr.mxu0 0.0
    %3753 = vmatpush1.msra.mxu0 %v3192
    %3754 = vmatprep.subr.mxu0 0.0
    %3755 = vmatpush1.msra.mxu0 %v3195
    %3756 = vmatprep.subr.mxu0 0.0
    %3757 = vmatpush1.msra.mxu0 0.0
    %3758 = vmatprep.subr.mxu0 0.0
    %3759 = vmatpush1.msra.mxu0 0.0
    %3760 = vmatprep.subr.mxu0 0.0
    %3761 = vmatpush1.msra.mxu0 0.0
    %3762 = vmatprep.subr.mxu0 0.0
    %3763 = vmatpush1.msra.mxu0 0.0
    %3764 = vmatprep.subr.mxu0 0.0
    %3765 = vmatpush1.msra.mxu0 0.0
    %3766 = vmatprep.subr.mxu0 0.0
    %3767 = vmatpush1.msra.mxu0 0.0
    %3768 = vmatprep.subr.mxu0 0.0
    %3769 = vmatpush1.msra.mxu0 0.0
    %3770 = vmatprep.subr.mxu0 0.0
    %3771 = vmatpush1.msra.mxu0 0.0
    %3772 = vmatprep.subr.mxu0 0.0
    %3773 = vmatpush1.msra.mxu0 0.0
    %3774 = vmatprep.subr.mxu0 0.0
    %3775 = vmatpush1.msra.mxu0 0.0
    %3776 = vmatprep.subr.mxu0 0.0
    %3777 = vmatpush1.msra.mxu0 0.0
    %3778 = vmatprep.subr.mxu0 0.0
    %3779 = vmatpush1.msra.mxu0 0.0
    %3780 = vmatprep.subr.mxu0 0.0
    %3781 = vmatpush1.msra.mxu0 0.0
    %3782 = vmatprep.subr.mxu0 0.0
    %3783 = vmatpush1.msra.mxu0 0.0
    %3784 = vmatprep.subr.mxu0 0.0
    %3785 = vmatpush1.msra.mxu0 0.0
    %3786 = vmatprep.subr.mxu0 0.0
    %3787 = vmatpush1.msra.mxu0 0.0
    %3788 = vmatprep.subr.mxu0 0.0
    %3789 = vmatpush1.msra.mxu0 0.0
    %3790 = vmatprep.subr.mxu0 0.0
    %3791 = vmatpush1.msra.mxu0 0.0
    %3792 = vmatprep.subr.mxu0 0.0
    %3793 = vmatpush1.msra.mxu0 0.0
    %3794 = vmatprep.subr.mxu0 0.0
    %3795 = vmatpush1.msra.mxu0 0.0
    %3796 = vmatprep.subr.mxu0 0.0
    %3797 = vmatpush1.msra.mxu0 0.0
    %3798 = vmatprep.subr.mxu0 0.0
    %3799 = vmatpush1.msra.mxu0 0.0
    %3800 = vmatprep.subr.mxu0 0.0
    %3801 = vmatpush1.msra.mxu0 0.0
    %3802 = vmatprep.subr.mxu0 0.0
    %3803 = vmatpush1.msra.mxu0 0.0
    %3804 = vmatprep.subr.mxu0 0.0
    %3805 = vmatpush1.msra.mxu0 0.0
    %3806 = vmatprep.subr.mxu0 0.0
    %3807 = vmatpush1.msra.mxu0 0.0
    %3808 = vmatprep.subr.mxu0 0.0
    %3809 = vmatpush1.msra.mxu0 0.0
    %3810 = vmatprep.subr.mxu0 0.0
    %3811 = vmatpush1.msra.mxu0 0.0
    %3812 = vmatprep.subr.mxu0 0.0
    %3813 = vmatpush1.msra.mxu0 0.0
    %3814 = vmatprep.subr.mxu0 0.0
    %3815 = vmatpush1.msra.mxu0 0.0
    %3816 = vmatprep.mubr.f32.mxu0 0.0
    %3817 = vmatmul.mubr.f32.gmra.mrb[0].mxu0 %v3306
    %v3818 = vpop.f32.mrb[0].mxu0
    %v3819 = vadd.f32 %v3677, %v3818
    %v3820 = vpop.f32.mrb[0].mxu0
    %3821 = vdwg.mxu0
    %v3822 = vadd.f32 %v3591, %v3748
    %v3823 = vsub.f32 0.0, %v3822
    %v3824 = vmul.f32 %v3823, 1.442695
    %v3825 = vpow.pop %v3824
    %v3826 = vadd.f32 %v3825, 1.0
    %v3827 = vrcp.pop %v3826
    %v3828 = vmul.f32 1.0, %v3827
    %v3829 = vadd.f32 %v3593, %v3750
    %v3830 = vsub.f32 0.0, %v3829
    %v3831 = vmul.f32 %v3830, 1.442695
    %v3832 = vpow.pop %v3831
    %v3833 = vadd.f32 %v3832, 1.0
    %v3834 = vrcp.pop %v3833
    %v3835 = vmul.f32 1.0, %v3834
    %v3836 = vmul.f32 %v3828, %v3819
    %v3837 = vadd.f32 %v3662, %v3836
    %v3838 = vtanh.pop %v3837
    %v3839 = vsub.f32 1.0, %v3835
    %v3840 = vmul.f32 %v3839, %v3838
    %v3841 = vmul.f32 %v3835, %v3179
    %v3842 = vadd.f32 %v3840, %v3841
    %v3843 = vmax.f32 %v3842, 0.0
    %v3845 = vsel %vm717, %v3843, 0
    %3847 = vmatprep.subr.mxu0 0.0
    %3848 = vmatpush1.msra.mxu0 %v3180
    %3849 = vmatprep.subr.mxu0 0.0
    %3850 = vmatpush1.msra.mxu0 %v3181
    %3851 = vmatprep.subr.mxu0 0.0
    %3852 = vmatpush1.msra.mxu0 0.0
    %3853 = vmatprep.subr.mxu0 0.0
    %3854 = vmatpush1.msra.mxu0 0.0
    %3855 = vmatprep.subr.mxu0 0.0
    %3856 = vmatpush1.msra.mxu0 0.0
    %3857 = vmatprep.subr.mxu0 0.0
    %3858 = vmatpush1.msra.mxu0 0.0
    %3859 = vmatprep.subr.mxu0 0.0
    %3860 = vmatpush1.msra.mxu0 0.0
    %3861 = vmatprep.subr.mxu0 0.0
    %3862 = vmatpush1.msra.mxu0 0.0
    %3863 = vmatprep.subr.mxu0 0.0
    %3864 = vmatpush1.msra.mxu0 0.0
    %3865 = vmatprep.subr.mxu0 0.0
    %3866 = vmatpush1.msra.mxu0 0.0
    %3867 = vmatprep.subr.mxu0 0.0
    %3868 = vmatpush1.msra.mxu0 0.0
    %3869 = vmatprep.subr.mxu0 0.0
    %3870 = vmatpush1.msra.mxu0 0.0
    %3871 = vmatprep.subr.mxu0 0.0
    %3872 = vmatpush1.msra.mxu0 0.0
    %3873 = vmatprep.subr.mxu0 0.0
    %3874 = vmatpush1.msra.mxu0 0.0
    %3875 = vmatprep.subr.mxu0 0.0
    %3876 = vmatpush1.msra.mxu0 0.0
    %3877 = vmatprep.subr.mxu0 0.0
    %3878 = vmatpush1.msra.mxu0 0.0
    %3879 = vmatprep.subr.mxu0 0.0
    %3880 = vmatpush1.msra.mxu0 0.0
    %3881 = vmatprep.subr.mxu0 0.0
    %3882 = vmatpush1.msra.mxu0 0.0
    %3883 = vmatprep.subr.mxu0 0.0
    %3884 = vmatpush1.msra.mxu0 0.0
    %3885 = vmatprep.subr.mxu0 0.0
    %3886 = vmatpush1.msra.mxu0 0.0
    %3887 = vmatprep.subr.mxu0 0.0
    %3888 = vmatpush1.msra.mxu0 0.0
    %3889 = vmatprep.subr.mxu0 0.0
    %3890 = vmatpush1.msra.mxu0 0.0
    %3891 = vmatprep.subr.mxu0 0.0
    %3892 = vmatpush1.msra.mxu0 0.0
    %3893 = vmatprep.subr.mxu0 0.0
    %3894 = vmatpush1.msra.mxu0 0.0
    %3895 = vmatprep.subr.mxu0 0.0
    %3896 = vmatpush1.msra.mxu0 0.0
    %3897 = vmatprep.subr.mxu0 0.0
    %3898 = vmatpush1.msra.mxu0 0.0
    %3899 = vmatprep.subr.mxu0 0.0
    %3900 = vmatpush1.msra.mxu0 0.0
    %3901 = vmatprep.subr.mxu0 0.0
    %3902 = vmatpush1.msra.mxu0 0.0
    %3903 = vmatprep.subr.mxu0 0.0
    %3904 = vmatpush1.msra.mxu0 0.0
    %3905 = vmatprep.subr.mxu0 0.0
    %3906 = vmatpush1.msra.mxu0 0.0
    %3907 = vmatprep.subr.mxu0 0.0
    %3908 = vmatpush1.msra.mxu0 0.0
    %3909 = vmatprep.subr.mxu0 0.0
    %3910 = vmatpush1.msra.mxu0 0.0
    %3911 = vmatprep.mubr.f32.mxu0 0.0
    %3912 = vmatmul.mubr.f32.gmra.mrb[0].mxu0 %v3845
    %v3913 = vpop.f32.mrb[0].mxu0
    %v3914 = vadd.f32 0.0, %v3913
    %v3915 = vpop.f32.mrb[0].mxu0
    %3916 = vdwg.mxu0
    %v3917 = vmul.f32 %v3914, %v3382
    %v3918 = vsel %vm3385, %v3917, 0.0
    %3919 = vadd.xlane.f32.xlu0 %v3918
    %v3920 = vpop.xlane.xlu0 %3919
    %v3921 = vmul.f32 %v421, %v3920
    %v3922 = vsel %vm3390, %v3921, 0.0
    %v3923 = vrot.slane %v3922, 4
    %v3924 = vadd.f32 %v3922, %v3923
    %v3925 = vrot.slane %v3924, 2
    %v3926 = vadd.f32 %v3924, %v3925
    %v3927 = vrot.slane %v3926, 1
    %v3928 = vadd.f32 %v3926, %v3927
    %v3929 = vadd.f32 %v3304, %v3928
    %vm3930 = vcmp.ge.f32.partialorder %v3929, 0.0
    %v3931 = vmul.f32 %v3929, 0.01
    %v3932 = vsel %vm3930, %v3929, %v3931
    %v3933 = vsel %vm3402, %v3932, -1e+30
    %v3934 = vsel %vm3390, %v3933, -inf
    %3935 = vmax.xlane.f32.xlu0 %v3934
    %v3936 = vpop.xlane.xlu0 %3935
    %v3937 = vsub.f32 %v3933, %v3936
    %v3938 = vmul.f32 %v3937, 1.442695
    %v3939 = vpow.pop %v3938
    %v3940 = vmul.f32 %v3939, %v421
    %v3941 = vsel %vm3390, %v3940, 0.0
    %3942 = vadd.xlane.f32.xlu0 %v3941
    %v3943 = vpop.xlane.xlu0 %3942
    %v3944 = vadd.f32 %v3943, 1e-16
    %v3945 = vrcp.pop %v3944
    %v3946 = vmul.f32 %v3940, %v3945
    %v3948 = vsel %vm522, %v3946, 0
    %3950 = vmatprep.subr.mxu0 0.0
    %3951 = vmatpush1.msra.mxu0 %v3270
    %3952 = vmatprep.subr.mxu0 0.0
    %3953 = vmatpush1.msra.mxu0 %v3427
    %3954 = vmatprep.subr.mxu0 0.0
    %3955 = vmatpush1.msra.mxu0 0.0
    %3956 = vmatprep.subr.mxu0 0.0
    %3957 = vmatpush1.msra.mxu0 0.0
    %3958 = vmatprep.subr.mxu0 0.0
    %3959 = vmatpush1.msra.mxu0 0.0
    %3960 = vmatprep.subr.mxu0 0.0
    %3961 = vmatpush1.msra.mxu0 0.0
    %3962 = vmatprep.subr.mxu0 0.0
    %3963 = vmatpush1.msra.mxu0 0.0
    %3964 = vmatprep.subr.mxu0 0.0
    %3965 = vmatpush1.msra.mxu0 0.0
    %3966 = vmatprep.subr.mxu0 0.0
    %3967 = vmatpush1.msra.mxu0 0.0
    %3968 = vmatprep.subr.mxu0 0.0
    %3969 = vmatpush1.msra.mxu0 0.0
    %3970 = vmatprep.subr.mxu0 0.0
    %3971 = vmatpush1.msra.mxu0 0.0
    %3972 = vmatprep.subr.mxu0 0.0
    %3973 = vmatpush1.msra.mxu0 0.0
    %3974 = vmatprep.subr.mxu0 0.0
    %3975 = vmatpush1.msra.mxu0 0.0
    %3976 = vmatprep.subr.mxu0 0.0
    %3977 = vmatpush1.msra.mxu0 0.0
    %3978 = vmatprep.subr.mxu0 0.0
    %3979 = vmatpush1.msra.mxu0 0.0
    %3980 = vmatprep.subr.mxu0 0.0
    %3981 = vmatpush1.msra.mxu0 0.0
    %3982 = vmatprep.subr.mxu0 0.0
    %3983 = vmatpush1.msra.mxu0 0.0
    %3984 = vmatprep.subr.mxu0 0.0
    %3985 = vmatpush1.msra.mxu0 0.0
    %3986 = vmatprep.subr.mxu0 0.0
    %3987 = vmatpush1.msra.mxu0 0.0
    %3988 = vmatprep.subr.mxu0 0.0
    %3989 = vmatpush1.msra.mxu0 0.0
    %3990 = vmatprep.subr.mxu0 0.0
    %3991 = vmatpush1.msra.mxu0 0.0
    %3992 = vmatprep.subr.mxu0 0.0
    %3993 = vmatpush1.msra.mxu0 0.0
    %3994 = vmatprep.subr.mxu0 0.0
    %3995 = vmatpush1.msra.mxu0 0.0
    %3996 = vmatprep.subr.mxu0 0.0
    %3997 = vmatpush1.msra.mxu0 0.0
    %3998 = vmatprep.subr.mxu0 0.0
    %3999 = vmatpush1.msra.mxu0 0.0
    %4000 = vmatprep.subr.mxu0 0.0
    %4001 = vmatpush1.msra.mxu0 0.0
    %4002 = vmatprep.subr.mxu0 0.0
    %4003 = vmatpush1.msra.mxu0 0.0
    %4004 = vmatprep.subr.mxu0 0.0
    %4005 = vmatpush1.msra.mxu0 0.0
    %4006 = vmatprep.subr.mxu0 0.0
    %4007 = vmatpush1.msra.mxu0 0.0
    %4008 = vmatprep.subr.mxu0 0.0
    %4009 = vmatpush1.msra.mxu0 0.0
    %4010 = vmatprep.subr.mxu0 0.0
    %4011 = vmatpush1.msra.mxu0 0.0
    %4012 = vmatprep.subr.mxu0 0.0
    %4013 = vmatpush1.msra.mxu0 0.0
    %4014 = vmatprep.mubr.f32.mxu0 0.0
    %4015 = vmatmul.mubr.f32.gmra.mrb[0].mxu0 %v3948
    %v4016 = vpop.f32.mrb[0].mxu0
    %v4017 = vadd.f32 %v3421, %v4016
    %v4018 = vpop.f32.mrb[0].mxu0
    %4019 = vdwg.mxu0
    %vm4020 = vcmp.gt.f32.partialorder %v4017, 0.0
    %v4021 = vmin.f32 %v4017, 0.0
    %v4022 = vmul.f32 %v4021, 1.442695
    %v4023 = vpow.pop %v4022
    %v4024 = vsub.f32 %v4023, 1.0
    %v4025 = vsel %vm4020, %v4017, %v4024
    %v4027 = vsel %vm717, %v4025, 0
    %4029 = vmatprep.subr.mxu0 %v3185
    %4030 = vmatpush1.msra.mxu0 %v3184
    %4031 = vmatprep.subr.mxu0 %v3188
    %4032 = vmatpush1.msra.mxu0 %v3187
    %4033 = vmatprep.subr.mxu0 0.0
    %4034 = vmatpush1.msra.mxu0 0.0
    %4035 = vmatprep.subr.mxu0 0.0
    %4036 = vmatpush1.msra.mxu0 0.0
    %4037 = vmatprep.subr.mxu0 0.0
    %4038 = vmatpush1.msra.mxu0 0.0
    %4039 = vmatprep.subr.mxu0 0.0
    %4040 = vmatpush1.msra.mxu0 0.0
    %4041 = vmatprep.subr.mxu0 0.0
    %4042 = vmatpush1.msra.mxu0 0.0
    %4043 = vmatprep.subr.mxu0 0.0
    %4044 = vmatpush1.msra.mxu0 0.0
    %4045 = vmatprep.subr.mxu0 0.0
    %4046 = vmatpush1.msra.mxu0 0.0
    %4047 = vmatprep.subr.mxu0 0.0
    %4048 = vmatpush1.msra.mxu0 0.0
    %4049 = vmatprep.subr.mxu0 0.0
    %4050 = vmatpush1.msra.mxu0 0.0
    %4051 = vmatprep.subr.mxu0 0.0
    %4052 = vmatpush1.msra.mxu0 0.0
    %4053 = vmatprep.subr.mxu0 0.0
    %4054 = vmatpush1.msra.mxu0 0.0
    %4055 = vmatprep.subr.mxu0 0.0
    %4056 = vmatpush1.msra.mxu0 0.0
    %4057 = vmatprep.subr.mxu0 0.0
    %4058 = vmatpush1.msra.mxu0 0.0
    %4059 = vmatprep.subr.mxu0 0.0
    %4060 = vmatpush1.msra.mxu0 0.0
    %4061 = vmatprep.subr.mxu0 0.0
    %4062 = vmatpush1.msra.mxu0 0.0
    %4063 = vmatprep.subr.mxu0 0.0
    %4064 = vmatpush1.msra.mxu0 0.0
    %4065 = vmatprep.subr.mxu0 0.0
    %4066 = vmatpush1.msra.mxu0 0.0
    %4067 = vmatprep.subr.mxu0 0.0
    %4068 = vmatpush1.msra.mxu0 0.0
    %4069 = vmatprep.subr.mxu0 0.0
    %4070 = vmatpush1.msra.mxu0 0.0
    %4071 = vmatprep.subr.mxu0 0.0
    %4072 = vmatpush1.msra.mxu0 0.0
    %4073 = vmatprep.subr.mxu0 0.0
    %4074 = vmatpush1.msra.mxu0 0.0
    %4075 = vmatprep.subr.mxu0 0.0
    %4076 = vmatpush1.msra.mxu0 0.0
    %4077 = vmatprep.subr.mxu0 0.0
    %4078 = vmatpush1.msra.mxu0 0.0
    %4079 = vmatprep.subr.mxu0 0.0
    %4080 = vmatpush1.msra.mxu0 0.0
    %4081 = vmatprep.subr.mxu0 0.0
    %4082 = vmatpush1.msra.mxu0 0.0
    %4083 = vmatprep.subr.mxu0 0.0
    %4084 = vmatpush1.msra.mxu0 0.0
    %4085 = vmatprep.subr.mxu0 0.0
    %4086 = vmatpush1.msra.mxu0 0.0
    %4087 = vmatprep.subr.mxu0 0.0
    %4088 = vmatpush1.msra.mxu0 0.0
    %4089 = vmatprep.subr.mxu0 0.0
    %4090 = vmatpush1.msra.mxu0 0.0
    %4091 = vmatprep.subr.mxu0 0.0
    %4092 = vmatpush1.msra.mxu0 0.0
    %4093 = vmatprep.mubr.f32.mxu0 0.0
    %4094 = vmatmul.mubr.f32.gmra.mrb[0].mxu0 %v4027
    %v4095 = vpop.f32.mrb[0].mxu0
    %v4096 = vadd.f32 %v3509, %v4095
    %v4097 = vpop.f32.mrb[0].mxu0
    %v4098 = vadd.f32 %v3513, %v4097
    %4099 = vdwg.mxu0
    %4100 = vmatprep.subr.mxu0 0.0
    %4101 = vmatpush1.msra.mxu0 %v3186
    %4102 = vmatprep.subr.mxu0 0.0
    %4103 = vmatpush1.msra.mxu0 %v3189
    %4104 = vmatprep.subr.mxu0 0.0
    %4105 = vmatpush1.msra.mxu0 0.0
    %4106 = vmatprep.subr.mxu0 0.0
    %4107 = vmatpush1.msra.mxu0 0.0
    %4108 = vmatprep.subr.mxu0 0.0
    %4109 = vmatpush1.msra.mxu0 0.0
    %4110 = vmatprep.subr.mxu0 0.0
    %4111 = vmatpush1.msra.mxu0 0.0
    %4112 = vmatprep.subr.mxu0 0.0
    %4113 = vmatpush1.msra.mxu0 0.0
    %4114 = vmatprep.subr.mxu0 0.0
    %4115 = vmatpush1.msra.mxu0 0.0
    %4116 = vmatprep.subr.mxu0 0.0
    %4117 = vmatpush1.msra.mxu0 0.0
    %4118 = vmatprep.subr.mxu0 0.0
    %4119 = vmatpush1.msra.mxu0 0.0
    %4120 = vmatprep.subr.mxu0 0.0
    %4121 = vmatpush1.msra.mxu0 0.0
    %4122 = vmatprep.subr.mxu0 0.0
    %4123 = vmatpush1.msra.mxu0 0.0
    %4124 = vmatprep.subr.mxu0 0.0
    %4125 = vmatpush1.msra.mxu0 0.0
    %4126 = vmatprep.subr.mxu0 0.0
    %4127 = vmatpush1.msra.mxu0 0.0
    %4128 = vmatprep.subr.mxu0 0.0
    %4129 = vmatpush1.msra.mxu0 0.0
    %4130 = vmatprep.subr.mxu0 0.0
    %4131 = vmatpush1.msra.mxu0 0.0
    %4132 = vmatprep.subr.mxu0 0.0
    %4133 = vmatpush1.msra.mxu0 0.0
    %4134 = vmatprep.subr.mxu0 0.0
    %4135 = vmatpush1.msra.mxu0 0.0
    %4136 = vmatprep.subr.mxu0 0.0
    %4137 = vmatpush1.msra.mxu0 0.0
    %4138 = vmatprep.subr.mxu0 0.0
    %4139 = vmatpush1.msra.mxu0 0.0
    %4140 = vmatprep.subr.mxu0 0.0
    %4141 = vmatpush1.msra.mxu0 0.0
    %4142 = vmatprep.subr.mxu0 0.0
    %4143 = vmatpush1.msra.mxu0 0.0
    %4144 = vmatprep.subr.mxu0 0.0
    %4145 = vmatpush1.msra.mxu0 0.0
    %4146 = vmatprep.subr.mxu0 0.0
    %4147 = vmatpush1.msra.mxu0 0.0
    %4148 = vmatprep.subr.mxu0 0.0
    %4149 = vmatpush1.msra.mxu0 0.0
    %4150 = vmatprep.subr.mxu0 0.0
    %4151 = vmatpush1.msra.mxu0 0.0
    %4152 = vmatprep.subr.mxu0 0.0
    %4153 = vmatpush1.msra.mxu0 0.0
    %4154 = vmatprep.subr.mxu0 0.0
    %4155 = vmatpush1.msra.mxu0 0.0
    %4156 = vmatprep.subr.mxu0 0.0
    %4157 = vmatpush1.msra.mxu0 0.0
    %4158 = vmatprep.subr.mxu0 0.0
    %4159 = vmatpush1.msra.mxu0 0.0
    %4160 = vmatprep.subr.mxu0 0.0
    %4161 = vmatpush1.msra.mxu0 0.0
    %4162 = vmatprep.subr.mxu0 0.0
    %4163 = vmatpush1.msra.mxu0 0.0
    %4164 = vmatprep.mubr.f32.mxu0 0.0
    %4165 = vmatmul.mubr.f32.gmra.mrb[0].mxu0 %v4027
    %v4166 = vpop.f32.mrb[0].mxu0
    %v4167 = vadd.f32 %v3517, %v4166
    %v4168 = vpop.f32.mrb[0].mxu0
    %4169 = vdwg.mxu0
    %4170 = vmatprep.subr.mxu0 %v3191
    %4171 = vmatpush1.msra.mxu0 %v3190
    %4172 = vmatprep.subr.mxu0 %v3194
    %4173 = vmatpush1.msra.mxu0 %v3193
    %4174 = vmatprep.subr.mxu0 0.0
    %4175 = vmatpush1.msra.mxu0 0.0
    %4176 = vmatprep.subr.mxu0 0.0
    %4177 = vmatpush1.msra.mxu0 0.0
    %4178 = vmatprep.subr.mxu0 0.0
    %4179 = vmatpush1.msra.mxu0 0.0
    %4180 = vmatprep.subr.mxu0 0.0
    %4181 = vmatpush1.msra.mxu0 0.0
    %4182 = vmatprep.subr.mxu0 0.0
    %4183 = vmatpush1.msra.mxu0 0.0
    %4184 = vmatprep.subr.mxu0 0.0
    %4185 = vmatpush1.msra.mxu0 0.0
    %4186 = vmatprep.subr.mxu0 0.0
    %4187 = vmatpush1.msra.mxu0 0.0
    %4188 = vmatprep.subr.mxu0 0.0
    %4189 = vmatpush1.msra.mxu0 0.0
    %4190 = vmatprep.subr.mxu0 0.0
    %4191 = vmatpush1.msra.mxu0 0.0
    %4192 = vmatprep.subr.mxu0 0.0
    %4193 = vmatpush1.msra.mxu0 0.0
    %4194 = vmatprep.subr.mxu0 0.0
    %4195 = vmatpush1.msra.mxu0 0.0
    %4196 = vmatprep.subr.mxu0 0.0
    %4197 = vmatpush1.msra.mxu0 0.0
    %4198 = vmatprep.subr.mxu0 0.0
    %4199 = vmatpush1.msra.mxu0 0.0
    %4200 = vmatprep.subr.mxu0 0.0
    %4201 = vmatpush1.msra.mxu0 0.0
    %4202 = vmatprep.subr.mxu0 0.0
    %4203 = vmatpush1.msra.mxu0 0.0
    %4204 = vmatprep.subr.mxu0 0.0
    %4205 = vmatpush1.msra.mxu0 0.0
    %4206 = vmatprep.subr.mxu0 0.0
    %4207 = vmatpush1.msra.mxu0 0.0
    %4208 = vmatprep.subr.mxu0 0.0
    %4209 = vmatpush1.msra.mxu0 0.0
    %4210 = vmatprep.subr.mxu0 0.0
    %4211 = vmatpush1.msra.mxu0 0.0
    %4212 = vmatprep.subr.mxu0 0.0
    %4213 = vmatpush1.msra.mxu0 0.0
    %4214 = vmatprep.subr.mxu0 0.0
    %4215 = vmatpush1.msra.mxu0 0.0
    %4216 = vmatprep.subr.mxu0 0.0
    %4217 = vmatpush1.msra.mxu0 0.0
    %4218 = vmatprep.subr.mxu0 0.0
    %4219 = vmatpush1.msra.mxu0 0.0
    %4220 = vmatprep.subr.mxu0 0.0
    %4221 = vmatpush1.msra.mxu0 0.0
    %4222 = vmatprep.subr.mxu0 0.0
    %4223 = vmatpush1.msra.mxu0 0.0
    %4224 = vmatprep.subr.mxu0 0.0
    %4225 = vmatpush1.msra.mxu0 0.0
    %4226 = vmatprep.subr.mxu0 0.0
    %4227 = vmatpush1.msra.mxu0 0.0
    %4228 = vmatprep.subr.mxu0 0.0
    %4229 = vmatpush1.msra.mxu0 0.0
    %4230 = vmatprep.subr.mxu0 0.0
    %4231 = vmatpush1.msra.mxu0 0.0
    %4232 = vmatprep.subr.mxu0 0.0
    %4233 = vmatpush1.msra.mxu0 0.0
    %4234 = vmatprep.mubr.f32.mxu0 0.0
    %4235 = vmatmul.mubr.f32.gmra.mrb[0].mxu0 %v3845
    %v4236 = vpop.f32.mrb[0].mxu0
    %v4237 = vadd.f32 %v3669, %v4236
    %v4238 = vpop.f32.mrb[0].mxu0
    %v4239 = vadd.f32 %v3673, %v4238
    %4240 = vdwg.mxu0
    %4241 = vmatprep.subr.mxu0 0.0
    %4242 = vmatpush1.msra.mxu0 %v3192
    %4243 = vmatprep.subr.mxu0 0.0
    %4244 = vmatpush1.msra.mxu0 %v3195
    %4245 = vmatprep.subr.mxu0 0.0
    %4246 = vmatpush1.msra.mxu0 0.0
    %4247 = vmatprep.subr.mxu0 0.0
    %4248 = vmatpush1.msra.mxu0 0.0
    %4249 = vmatprep.subr.mxu0 0.0
    %4250 = vmatpush1.msra.mxu0 0.0
    %4251 = vmatprep.subr.mxu0 0.0
    %4252 = vmatpush1.msra.mxu0 0.0
    %4253 = vmatprep.subr.mxu0 0.0
    %4254 = vmatpush1.msra.mxu0 0.0
    %4255 = vmatprep.subr.mxu0 0.0
    %4256 = vmatpush1.msra.mxu0 0.0
    %4257 = vmatprep.subr.mxu0 0.0
    %4258 = vmatpush1.msra.mxu0 0.0
    %4259 = vmatprep.subr.mxu0 0.0
    %4260 = vmatpush1.msra.mxu0 0.0
    %4261 = vmatprep.subr.mxu0 0.0
    %4262 = vmatpush1.msra.mxu0 0.0
    %4263 = vmatprep.subr.mxu0 0.0
    %4264 = vmatpush1.msra.mxu0 0.0
    %4265 = vmatprep.subr.mxu0 0.0
    %4266 = vmatpush1.msra.mxu0 0.0
    %4267 = vmatprep.subr.mxu0 0.0
    %4268 = vmatpush1.msra.mxu0 0.0
    %4269 = vmatprep.subr.mxu0 0.0
    %4270 = vmatpush1.msra.mxu0 0.0
    %4271 = vmatprep.subr.mxu0 0.0
    %4272 = vmatpush1.msra.mxu0 0.0
    %4273 = vmatprep.subr.mxu0 0.0
    %4274 = vmatpush1.msra.mxu0 0.0
    %4275 = vmatprep.subr.mxu0 0.0
    %4276 = vmatpush1.msra.mxu0 0.0
    %4277 = vmatprep.subr.mxu0 0.0
    %4278 = vmatpush1.msra.mxu0 0.0
    %4279 = vmatprep.subr.mxu0 0.0
    %4280 = vmatpush1.msra.mxu0 0.0
    %4281 = vmatprep.subr.mxu0 0.0
    %4282 = vmatpush1.msra.mxu0 0.0
    %4283 = vmatprep.subr.mxu0 0.0
    %4284 = vmatpush1.msra.mxu0 0.0
    %4285 = vmatprep.subr.mxu0 0.0
    %4286 = vmatpush1.msra.mxu0 0.0
    %4287 = vmatprep.subr.mxu0 0.0
    %4288 = vmatpush1.msra.mxu0 0.0
    %4289 = vmatprep.subr.mxu0 0.0
    %4290 = vmatpush1.msra.mxu0 0.0
    %4291 = vmatprep.subr.mxu0 0.0
    %4292 = vmatpush1.msra.mxu0 0.0
    %4293 = vmatprep.subr.mxu0 0.0
    %4294 = vmatpush1.msra.mxu0 0.0
    %4295 = vmatprep.subr.mxu0 0.0
    %4296 = vmatpush1.msra.mxu0 0.0
    %4297 = vmatprep.subr.mxu0 0.0
    %4298 = vmatpush1.msra.mxu0 0.0
    %4299 = vmatprep.subr.mxu0 0.0
    %4300 = vmatpush1.msra.mxu0 0.0
    %4301 = vmatprep.subr.mxu0 0.0
    %4302 = vmatpush1.msra.mxu0 0.0
    %4303 = vmatprep.subr.mxu0 0.0
    %4304 = vmatpush1.msra.mxu0 0.0
    %4305 = vmatprep.mubr.f32.mxu0 0.0
    %4306 = vmatmul.mubr.f32.gmra.mrb[0].mxu0 %v3845
    %v4307 = vpop.f32.mrb[0].mxu0
    %v4308 = vadd.f32 %v3677, %v4307
    %v4309 = vpop.f32.mrb[0].mxu0
    %4310 = vdwg.mxu0
    %v4311 = vadd.f32 %v4096, %v4237
    %v4312 = vsub.f32 0.0, %v4311
    %v4313 = vmul.f32 %v4312, 1.442695
    %v4314 = vpow.pop %v4313
    %v4315 = vadd.f32 %v4314, 1.0
    %v4316 = vrcp.pop %v4315
    %v4317 = vmul.f32 1.0, %v4316
    %v4318 = vadd.f32 %v4098, %v4239
    %v4319 = vsub.f32 0.0, %v4318
    %v4320 = vmul.f32 %v4319, 1.442695
    %v4321 = vpow.pop %v4320
    %v4322 = vadd.f32 %v4321, 1.0
    %v4323 = vrcp.pop %v4322
    %v4324 = vmul.f32 1.0, %v4323
    %v4325 = vmul.f32 %v4317, %v4308
    %v4326 = vadd.f32 %v4167, %v4325
    %v4327 = vtanh.pop %v4326
    %v4328 = vsub.f32 1.0, %v4324
    %v4329 = vmul.f32 %v4328, %v4327
    %v4330 = vmul.f32 %v4324, %v3843
    %v4331 = vadd.f32 %v4329, %v4330
    %v4332 = vmax.f32 %v4331, 0.0
    %v4334 = vsel %vm717, %v4332, 0
    %4336 = vmatprep.subr.mxu0 0.0
    %4337 = vmatpush1.msra.mxu0 %v3180
    %4338 = vmatprep.subr.mxu0 0.0
    %4339 = vmatpush1.msra.mxu0 %v3181
    %4340 = vmatprep.subr.mxu0 0.0
    %4341 = vmatpush1.msra.mxu0 0.0
    %4342 = vmatprep.subr.mxu0 0.0
    %4343 = vmatpush1.msra.mxu0 0.0
    %4344 = vmatprep.subr.mxu0 0.0
    %4345 = vmatpush1.msra.mxu0 0.0
    %4346 = vmatprep.subr.mxu0 0.0
    %4347 = vmatpush1.msra.mxu0 0.0
    %4348 = vmatprep.subr.mxu0 0.0
    %4349 = vmatpush1.msra.mxu0 0.0
    %4350 = vmatprep.subr.mxu0 0.0
    %4351 = vmatpush1.msra.mxu0 0.0
    %4352 = vmatprep.subr.mxu0 0.0
    %4353 = vmatpush1.msra.mxu0 0.0
    %4354 = vmatprep.subr.mxu0 0.0
    %4355 = vmatpush1.msra.mxu0 0.0
    %4356 = vmatprep.subr.mxu0 0.0
    %4357 = vmatpush1.msra.mxu0 0.0
    %4358 = vmatprep.subr.mxu0 0.0
    %4359 = vmatpush1.msra.mxu0 0.0
    %4360 = vmatprep.subr.mxu0 0.0
    %4361 = vmatpush1.msra.mxu0 0.0
    %4362 = vmatprep.subr.mxu0 0.0
    %4363 = vmatpush1.msra.mxu0 0.0
    %4364 = vmatprep.subr.mxu0 0.0
    %4365 = vmatpush1.msra.mxu0 0.0
    %4366 = vmatprep.subr.mxu0 0.0
    %4367 = vmatpush1.msra.mxu0 0.0
    %4368 = vmatprep.subr.mxu0 0.0
    %4369 = vmatpush1.msra.mxu0 0.0
    %4370 = vmatprep.subr.mxu0 0.0
    %4371 = vmatpush1.msra.mxu0 0.0
    %4372 = vmatprep.subr.mxu0 0.0
    %4373 = vmatpush1.msra.mxu0 0.0
    %4374 = vmatprep.subr.mxu0 0.0
    %4375 = vmatpush1.msra.mxu0 0.0
    %4376 = vmatprep.subr.mxu0 0.0
    %4377 = vmatpush1.msra.mxu0 0.0
    %4378 = vmatprep.subr.mxu0 0.0
    %4379 = vmatpush1.msra.mxu0 0.0
    %4380 = vmatprep.subr.mxu0 0.0
    %4381 = vmatpush1.msra.mxu0 0.0
    %4382 = vmatprep.subr.mxu0 0.0
    %4383 = vmatpush1.msra.mxu0 0.0
    %4384 = vmatprep.subr.mxu0 0.0
    %4385 = vmatpush1.msra.mxu0 0.0
    %4386 = vmatprep.subr.mxu0 0.0
    %4387 = vmatpush1.msra.mxu0 0.0
    %4388 = vmatprep.subr.mxu0 0.0
    %4389 = vmatpush1.msra.mxu0 0.0
    %4390 = vmatprep.subr.mxu0 0.0
    %4391 = vmatpush1.msra.mxu0 0.0
    %4392 = vmatprep.subr.mxu0 0.0
    %4393 = vmatpush1.msra.mxu0 0.0
    %4394 = vmatprep.subr.mxu0 0.0
    %4395 = vmatpush1.msra.mxu0 0.0
    %4396 = vmatprep.subr.mxu0 0.0
    %4397 = vmatpush1.msra.mxu0 0.0
    %4398 = vmatprep.subr.mxu0 0.0
    %4399 = vmatpush1.msra.mxu0 0.0
    %4400 = vmatprep.mubr.f32.mxu0 0.0
    %4401 = vmatmul.mubr.f32.gmra.mrb[0].mxu0 %v4334
    %v4402 = vpop.f32.mrb[0].mxu0
    %v4403 = vadd.f32 0.0, %v4402
    %v4404 = vpop.f32.mrb[0].mxu0
    %4405 = vdwg.mxu0
    %v4406 = vmul.f32 %v4403, %v3382
    %v4407 = vsel %vm3385, %v4406, 0.0
    %4408 = vadd.xlane.f32.xlu0 %v4407
    %v4409 = vpop.xlane.xlu0 %4408
    %v4410 = vmul.f32 %v421, %v4409
    %v4411 = vsel %vm3390, %v4410, 0.0
    %v4412 = vrot.slane %v4411, 4
    %v4413 = vadd.f32 %v4411, %v4412
    %v4414 = vrot.slane %v4413, 2
    %v4415 = vadd.f32 %v4413, %v4414
    %v4416 = vrot.slane %v4415, 1
    %v4417 = vadd.f32 %v4415, %v4416
    %v4418 = vadd.f32 %v3304, %v4417
    %vm4419 = vcmp.ge.f32.partialorder %v4418, 0.0
    %v4420 = vmul.f32 %v4418, 0.01
    %v4421 = vsel %vm4419, %v4418, %v4420
    %v4422 = vsel %vm3402, %v4421, -1e+30
    %v4423 = vsel %vm3390, %v4422, -inf
    %4424 = vmax.xlane.f32.xlu0 %v4423
    %v4425 = vpop.xlane.xlu0 %4424
    %v4426 = vsub.f32 %v4422, %v4425
    %v4427 = vmul.f32 %v4426, 1.442695
    %v4428 = vpow.pop %v4427
    %v4429 = vmul.f32 %v4428, %v421
    %v4430 = vsel %vm3390, %v4429, 0.0
    %4431 = vadd.xlane.f32.xlu0 %v4430
    %v4432 = vpop.xlane.xlu0 %4431
    %v4433 = vadd.f32 %v4432, 1e-16
    %v4434 = vrcp.pop %v4433
    %v4435 = vmul.f32 %v4429, %v4434
    %v4437 = vsel %vm522, %v4435, 0
    %4439 = vmatprep.subr.mxu0 0.0
    %4440 = vmatpush1.msra.mxu0 %v3270
    %4441 = vmatprep.subr.mxu0 0.0
    %4442 = vmatpush1.msra.mxu0 %v3427
    %4443 = vmatprep.subr.mxu0 0.0
    %4444 = vmatpush1.msra.mxu0 0.0
    %4445 = vmatprep.subr.mxu0 0.0
    %4446 = vmatpush1.msra.mxu0 0.0
    %4447 = vmatprep.subr.mxu0 0.0
    %4448 = vmatpush1.msra.mxu0 0.0
    %4449 = vmatprep.subr.mxu0 0.0
    %4450 = vmatpush1.msra.mxu0 0.0
    %4451 = vmatprep.subr.mxu0 0.0
    %4452 = vmatpush1.msra.mxu0 0.0
    %4453 = vmatprep.subr.mxu0 0.0
    %4454 = vmatpush1.msra.mxu0 0.0
    %4455 = vmatprep.subr.mxu0 0.0
    %4456 = vmatpush1.msra.mxu0 0.0
    %4457 = vmatprep.subr.mxu0 0.0
    %4458 = vmatpush1.msra.mxu0 0.0
    %4459 = vmatprep.subr.mxu0 0.0
    %4460 = vmatpush1.msra.mxu0 0.0
    %4461 = vmatprep.subr.mxu0 0.0
    %4462 = vmatpush1.msra.mxu0 0.0
    %4463 = vmatprep.subr.mxu0 0.0
    %4464 = vmatpush1.msra.mxu0 0.0
    %4465 = vmatprep.subr.mxu0 0.0
    %4466 = vmatpush1.msra.mxu0 0.0
    %4467 = vmatprep.subr.mxu0 0.0
    %4468 = vmatpush1.msra.mxu0 0.0
    %4469 = vmatprep.subr.mxu0 0.0
    %4470 = vmatpush1.msra.mxu0 0.0
    %4471 = vmatprep.subr.mxu0 0.0
    %4472 = vmatpush1.msra.mxu0 0.0
    %4473 = vmatprep.subr.mxu0 0.0
    %4474 = vmatpush1.msra.mxu0 0.0
    %4475 = vmatprep.subr.mxu0 0.0
    %4476 = vmatpush1.msra.mxu0 0.0
    %4477 = vmatprep.subr.mxu0 0.0
    %4478 = vmatpush1.msra.mxu0 0.0
    %4479 = vmatprep.subr.mxu0 0.0
    %4480 = vmatpush1.msra.mxu0 0.0
    %4481 = vmatprep.subr.mxu0 0.0
    %4482 = vmatpush1.msra.mxu0 0.0
    %4483 = vmatprep.subr.mxu0 0.0
    %4484 = vmatpush1.msra.mxu0 0.0
    %4485 = vmatprep.subr.mxu0 0.0
    %4486 = vmatpush1.msra.mxu0 0.0
    %4487 = vmatprep.subr.mxu0 0.0
    %4488 = vmatpush1.msra.mxu0 0.0
    %4489 = vmatprep.subr.mxu0 0.0
    %4490 = vmatpush1.msra.mxu0 0.0
    %4491 = vmatprep.subr.mxu0 0.0
    %4492 = vmatpush1.msra.mxu0 0.0
    %4493 = vmatprep.subr.mxu0 0.0
    %4494 = vmatpush1.msra.mxu0 0.0
    %4495 = vmatprep.subr.mxu0 0.0
    %4496 = vmatpush1.msra.mxu0 0.0
    %4497 = vmatprep.subr.mxu0 0.0
    %4498 = vmatpush1.msra.mxu0 0.0
    %4499 = vmatprep.subr.mxu0 0.0
    %4500 = vmatpush1.msra.mxu0 0.0
    %4501 = vmatprep.subr.mxu0 0.0
    %4502 = vmatpush1.msra.mxu0 0.0
    %4503 = vmatprep.mubr.f32.mxu0 0.0
    %4504 = vmatmul.mubr.f32.gmra.mrb[0].mxu0 %v4437
    %v4505 = vpop.f32.mrb[0].mxu0
    %v4506 = vadd.f32 %v3421, %v4505
    %v4507 = vpop.f32.mrb[0].mxu0
    %4508 = vdwg.mxu0
    %vm4509 = vcmp.gt.f32.partialorder %v4506, 0.0
    %v4510 = vmin.f32 %v4506, 0.0
    %v4511 = vmul.f32 %v4510, 1.442695
    %v4512 = vpow.pop %v4511
    %v4513 = vsub.f32 %v4512, 1.0
    %v4514 = vsel %vm4509, %v4506, %v4513
    %v4516 = vsel %vm717, %v4514, 0
    %4518 = vmatprep.subr.mxu0 %v3185
    %4519 = vmatpush1.msra.mxu0 %v3184
    %4520 = vmatprep.subr.mxu0 %v3188
    %4521 = vmatpush1.msra.mxu0 %v3187
    %4522 = vmatprep.subr.mxu0 0.0
    %4523 = vmatpush1.msra.mxu0 0.0
    %4524 = vmatprep.subr.mxu0 0.0
    %4525 = vmatpush1.msra.mxu0 0.0
    %4526 = vmatprep.subr.mxu0 0.0
    %4527 = vmatpush1.msra.mxu0 0.0
    %4528 = vmatprep.subr.mxu0 0.0
    %4529 = vmatpush1.msra.mxu0 0.0
    %4530 = vmatprep.subr.mxu0 0.0
    %4531 = vmatpush1.msra.mxu0 0.0
    %4532 = vmatprep.subr.mxu0 0.0
    %4533 = vmatpush1.msra.mxu0 0.0
    %4534 = vmatprep.subr.mxu0 0.0
    %4535 = vmatpush1.msra.mxu0 0.0
    %4536 = vmatprep.subr.mxu0 0.0
    %4537 = vmatpush1.msra.mxu0 0.0
    %4538 = vmatprep.subr.mxu0 0.0
    %4539 = vmatpush1.msra.mxu0 0.0
    %4540 = vmatprep.subr.mxu0 0.0
    %4541 = vmatpush1.msra.mxu0 0.0
    %4542 = vmatprep.subr.mxu0 0.0
    %4543 = vmatpush1.msra.mxu0 0.0
    %4544 = vmatprep.subr.mxu0 0.0
    %4545 = vmatpush1.msra.mxu0 0.0
    %4546 = vmatprep.subr.mxu0 0.0
    %4547 = vmatpush1.msra.mxu0 0.0
    %4548 = vmatprep.subr.mxu0 0.0
    %4549 = vmatpush1.msra.mxu0 0.0
    %4550 = vmatprep.subr.mxu0 0.0
    %4551 = vmatpush1.msra.mxu0 0.0
    %4552 = vmatprep.subr.mxu0 0.0
    %4553 = vmatpush1.msra.mxu0 0.0
    %4554 = vmatprep.subr.mxu0 0.0
    %4555 = vmatpush1.msra.mxu0 0.0
    %4556 = vmatprep.subr.mxu0 0.0
    %4557 = vmatpush1.msra.mxu0 0.0
    %4558 = vmatprep.subr.mxu0 0.0
    %4559 = vmatpush1.msra.mxu0 0.0
    %4560 = vmatprep.subr.mxu0 0.0
    %4561 = vmatpush1.msra.mxu0 0.0
    %4562 = vmatprep.subr.mxu0 0.0
    %4563 = vmatpush1.msra.mxu0 0.0
    %4564 = vmatprep.subr.mxu0 0.0
    %4565 = vmatpush1.msra.mxu0 0.0
    %4566 = vmatprep.subr.mxu0 0.0
    %4567 = vmatpush1.msra.mxu0 0.0
    %4568 = vmatprep.subr.mxu0 0.0
    %4569 = vmatpush1.msra.mxu0 0.0
    %4570 = vmatprep.subr.mxu0 0.0
    %4571 = vmatpush1.msra.mxu0 0.0
    %4572 = vmatprep.subr.mxu0 0.0
    %4573 = vmatpush1.msra.mxu0 0.0
    %4574 = vmatprep.subr.mxu0 0.0
    %4575 = vmatpush1.msra.mxu0 0.0
    %4576 = vmatprep.subr.mxu0 0.0
    %4577 = vmatpush1.msra.mxu0 0.0
    %4578 = vmatprep.subr.mxu0 0.0
    %4579 = vmatpush1.msra.mxu0 0.0
    %4580 = vmatprep.subr.mxu0 0.0
    %4581 = vmatpush1.msra.mxu0 0.0
    %4582 = vmatprep.mubr.f32.mxu0 0.0
    %4583 = vmatmul.mubr.f32.gmra.mrb[0].mxu0 %v4516
    %v4584 = vpop.f32.mrb[0].mxu0
    %v4585 = vadd.f32 %v3509, %v4584
    %v4586 = vpop.f32.mrb[0].mxu0
    %v4587 = vadd.f32 %v3513, %v4586
    %4588 = vdwg.mxu0
    %4589 = vmatprep.subr.mxu0 0.0
    %4590 = vmatpush1.msra.mxu0 %v3186
    %4591 = vmatprep.subr.mxu0 0.0
    %4592 = vmatpush1.msra.mxu0 %v3189
    %4593 = vmatprep.subr.mxu0 0.0
    %4594 = vmatpush1.msra.mxu0 0.0
    %4595 = vmatprep.subr.mxu0 0.0
    %4596 = vmatpush1.msra.mxu0 0.0
    %4597 = vmatprep.subr.mxu0 0.0
    %4598 = vmatpush1.msra.mxu0 0.0
    %4599 = vmatprep.subr.mxu0 0.0
    %4600 = vmatpush1.msra.mxu0 0.0
    %4601 = vmatprep.subr.mxu0 0.0
    %4602 = vmatpush1.msra.mxu0 0.0
    %4603 = vmatprep.subr.mxu0 0.0
    %4604 = vmatpush1.msra.mxu0 0.0
    %4605 = vmatprep.subr.mxu0 0.0
    %4606 = vmatpush1.msra.mxu0 0.0
    %4607 = vmatprep.subr.mxu0 0.0
    %4608 = vmatpush1.msra.mxu0 0.0
    %4609 = vmatprep.subr.mxu0 0.0
    %4610 = vmatpush1.msra.mxu0 0.0
    %4611 = vmatprep.subr.mxu0 0.0
    %4612 = vmatpush1.msra.mxu0 0.0
    %4613 = vmatprep.subr.mxu0 0.0
    %4614 = vmatpush1.msra.mxu0 0.0
    %4615 = vmatprep.subr.mxu0 0.0
    %4616 = vmatpush1.msra.mxu0 0.0
    %4617 = vmatprep.subr.mxu0 0.0
    %4618 = vmatpush1.msra.mxu0 0.0
    %4619 = vmatprep.subr.mxu0 0.0
    %4620 = vmatpush1.msra.mxu0 0.0
    %4621 = vmatprep.subr.mxu0 0.0
    %4622 = vmatpush1.msra.mxu0 0.0
    %4623 = vmatprep.subr.mxu0 0.0
    %4624 = vmatpush1.msra.mxu0 0.0
    %4625 = vmatprep.subr.mxu0 0.0
    %4626 = vmatpush1.msra.mxu0 0.0
    %4627 = vmatprep.subr.mxu0 0.0
    %4628 = vmatpush1.msra.mxu0 0.0
    %4629 = vmatprep.subr.mxu0 0.0
    %4630 = vmatpush1.msra.mxu0 0.0
    %4631 = vmatprep.subr.mxu0 0.0
    %4632 = vmatpush1.msra.mxu0 0.0
    %4633 = vmatprep.subr.mxu0 0.0
    %4634 = vmatpush1.msra.mxu0 0.0
    %4635 = vmatprep.subr.mxu0 0.0
    %4636 = vmatpush1.msra.mxu0 0.0
    %4637 = vmatprep.subr.mxu0 0.0
    %4638 = vmatpush1.msra.mxu0 0.0
    %4639 = vmatprep.subr.mxu0 0.0
    %4640 = vmatpush1.msra.mxu0 0.0
    %4641 = vmatprep.subr.mxu0 0.0
    %4642 = vmatpush1.msra.mxu0 0.0
    %4643 = vmatprep.subr.mxu0 0.0
    %4644 = vmatpush1.msra.mxu0 0.0
    %4645 = vmatprep.subr.mxu0 0.0
    %4646 = vmatpush1.msra.mxu0 0.0
    %4647 = vmatprep.subr.mxu0 0.0
    %4648 = vmatpush1.msra.mxu0 0.0
    %4649 = vmatprep.subr.mxu0 0.0
    %4650 = vmatpush1.msra.mxu0 0.0
    %4651 = vmatprep.subr.mxu0 0.0
    %4652 = vmatpush1.msra.mxu0 0.0
    %4653 = vmatprep.mubr.f32.mxu0 0.0
    %4654 = vmatmul.mubr.f32.gmra.mrb[0].mxu0 %v4516
    %v4655 = vpop.f32.mrb[0].mxu0
    %v4656 = vadd.f32 %v3517, %v4655
    %v4657 = vpop.f32.mrb[0].mxu0
    %4658 = vdwg.mxu0
    %4659 = vmatprep.subr.mxu0 %v3191
    %4660 = vmatpush1.msra.mxu0 %v3190
    %4661 = vmatprep.subr.mxu0 %v3194
    %4662 = vmatpush1.msra.mxu0 %v3193
    %4663 = vmatprep.subr.mxu0 0.0
    %4664 = vmatpush1.msra.mxu0 0.0
    %4665 = vmatprep.subr.mxu0 0.0
    %4666 = vmatpush1.msra.mxu0 0.0
    %4667 = vmatprep.subr.mxu0 0.0
    %4668 = vmatpush1.msra.mxu0 0.0
    %4669 = vmatprep.subr.mxu0 0.0
    %4670 = vmatpush1.msra.mxu0 0.0
    %4671 = vmatprep.subr.mxu0 0.0
    %4672 = vmatpush1.msra.mxu0 0.0
    %4673 = vmatprep.subr.mxu0 0.0
    %4674 = vmatpush1.msra.mxu0 0.0
    %4675 = vmatprep.subr.mxu0 0.0
    %4676 = vmatpush1.msra.mxu0 0.0
    %4677 = vmatprep.subr.mxu0 0.0
    %4678 = vmatpush1.msra.mxu0 0.0
    %4679 = vmatprep.subr.mxu0 0.0
    %4680 = vmatpush1.msra.mxu0 0.0
    %4681 = vmatprep.subr.mxu0 0.0
    %4682 = vmatpush1.msra.mxu0 0.0
    %4683 = vmatprep.subr.mxu0 0.0
    %4684 = vmatpush1.msra.mxu0 0.0
    %4685 = vmatprep.subr.mxu0 0.0
    %4686 = vmatpush1.msra.mxu0 0.0
    %4687 = vmatprep.subr.mxu0 0.0
    %4688 = vmatpush1.msra.mxu0 0.0
    %4689 = vmatprep.subr.mxu0 0.0
    %4690 = vmatpush1.msra.mxu0 0.0
    %4691 = vmatprep.subr.mxu0 0.0
    %4692 = vmatpush1.msra.mxu0 0.0
    %4693 = vmatprep.subr.mxu0 0.0
    %4694 = vmatpush1.msra.mxu0 0.0
    %4695 = vmatprep.subr.mxu0 0.0
    %4696 = vmatpush1.msra.mxu0 0.0
    %4697 = vmatprep.subr.mxu0 0.0
    %4698 = vmatpush1.msra.mxu0 0.0
    %4699 = vmatprep.subr.mxu0 0.0
    %4700 = vmatpush1.msra.mxu0 0.0
    %4701 = vmatprep.subr.mxu0 0.0
    %4702 = vmatpush1.msra.mxu0 0.0
    %4703 = vmatprep.subr.mxu0 0.0
    %4704 = vmatpush1.msra.mxu0 0.0
    %4705 = vmatprep.subr.mxu0 0.0
    %4706 = vmatpush1.msra.mxu0 0.0
    %4707 = vmatprep.subr.mxu0 0.0
    %4708 = vmatpush1.msra.mxu0 0.0
    %4709 = vmatprep.subr.mxu0 0.0
    %4710 = vmatpush1.msra.mxu0 0.0
    %4711 = vmatprep.subr.mxu0 0.0
    %4712 = vmatpush1.msra.mxu0 0.0
    %4713 = vmatprep.subr.mxu0 0.0
    %4714 = vmatpush1.msra.mxu0 0.0
    %4715 = vmatprep.subr.mxu0 0.0
    %4716 = vmatpush1.msra.mxu0 0.0
    %4717 = vmatprep.subr.mxu0 0.0
    %4718 = vmatpush1.msra.mxu0 0.0
    %4719 = vmatprep.subr.mxu0 0.0
    %4720 = vmatpush1.msra.mxu0 0.0
    %4721 = vmatprep.subr.mxu0 0.0
    %4722 = vmatpush1.msra.mxu0 0.0
    %4723 = vmatprep.mubr.f32.mxu0 0.0
    %4724 = vmatmul.mubr.f32.gmra.mrb[0].mxu0 %v4334
    %v4725 = vpop.f32.mrb[0].mxu0
    %v4726 = vadd.f32 %v3669, %v4725
    %v4727 = vpop.f32.mrb[0].mxu0
    %v4728 = vadd.f32 %v3673, %v4727
    %4729 = vdwg.mxu0
    %4730 = vmatprep.subr.mxu0 0.0
    %4731 = vmatpush1.msra.mxu0 %v3192
    %4732 = vmatprep.subr.mxu0 0.0
    %4733 = vmatpush1.msra.mxu0 %v3195
    %4734 = vmatprep.subr.mxu0 0.0
    %4735 = vmatpush1.msra.mxu0 0.0
    %4736 = vmatprep.subr.mxu0 0.0
    %4737 = vmatpush1.msra.mxu0 0.0
    %4738 = vmatprep.subr.mxu0 0.0
    %4739 = vmatpush1.msra.mxu0 0.0
    %4740 = vmatprep.subr.mxu0 0.0
    %4741 = vmatpush1.msra.mxu0 0.0
    %4742 = vmatprep.subr.mxu0 0.0
    %4743 = vmatpush1.msra.mxu0 0.0
    %4744 = vmatprep.subr.mxu0 0.0
    %4745 = vmatpush1.msra.mxu0 0.0
    %4746 = vmatprep.subr.mxu0 0.0
    %4747 = vmatpush1.msra.mxu0 0.0
    %4748 = vmatprep.subr.mxu0 0.0
    %4749 = vmatpush1.msra.mxu0 0.0
    %4750 = vmatprep.subr.mxu0 0.0
    %4751 = vmatpush1.msra.mxu0 0.0
    %4752 = vmatprep.subr.mxu0 0.0
    %4753 = vmatpush1.msra.mxu0 0.0
    %4754 = vmatprep.subr.mxu0 0.0
    %4755 = vmatpush1.msra.mxu0 0.0
    %4756 = vmatprep.subr.mxu0 0.0
    %4757 = vmatpush1.msra.mxu0 0.0
    %4758 = vmatprep.subr.mxu0 0.0
    %4759 = vmatpush1.msra.mxu0 0.0
    %4760 = vmatprep.subr.mxu0 0.0
    %4761 = vmatpush1.msra.mxu0 0.0
    %4762 = vmatprep.subr.mxu0 0.0
    %4763 = vmatpush1.msra.mxu0 0.0
    %4764 = vmatprep.subr.mxu0 0.0
    %4765 = vmatpush1.msra.mxu0 0.0
    %4766 = vmatprep.subr.mxu0 0.0
    %4767 = vmatpush1.msra.mxu0 0.0
    %4768 = vmatprep.subr.mxu0 0.0
    %4769 = vmatpush1.msra.mxu0 0.0
    %4770 = vmatprep.subr.mxu0 0.0
    %4771 = vmatpush1.msra.mxu0 0.0
    %4772 = vmatprep.subr.mxu0 0.0
    %4773 = vmatpush1.msra.mxu0 0.0
    %4774 = vmatprep.subr.mxu0 0.0
    %4775 = vmatpush1.msra.mxu0 0.0
    %4776 = vmatprep.subr.mxu0 0.0
    %4777 = vmatpush1.msra.mxu0 0.0
    %4778 = vmatprep.subr.mxu0 0.0
    %4779 = vmatpush1.msra.mxu0 0.0
    %4780 = vmatprep.subr.mxu0 0.0
    %4781 = vmatpush1.msra.mxu0 0.0
    %4782 = vmatprep.subr.mxu0 0.0
    %4783 = vmatpush1.msra.mxu0 0.0
    %4784 = vmatprep.subr.mxu0 0.0
    %4785 = vmatpush1.msra.mxu0 0.0
    %4786 = vmatprep.subr.mxu0 0.0
    %4787 = vmatpush1.msra.mxu0 0.0
    %4788 = vmatprep.subr.mxu0 0.0
    %4789 = vmatpush1.msra.mxu0 0.0
    %4790 = vmatprep.subr.mxu0 0.0
    %4791 = vmatpush1.msra.mxu0 0.0
    %4792 = vmatprep.subr.mxu0 0.0
    %4793 = vmatpush1.msra.mxu0 0.0
    %4794 = vmatprep.mubr.f32.mxu0 0.0
    %4795 = vmatmul.mubr.f32.gmra.mrb[0].mxu0 %v4334
    %v4796 = vpop.f32.mrb[0].mxu0
    %v4797 = vadd.f32 %v3677, %v4796
    %v4798 = vpop.f32.mrb[0].mxu0
    %4799 = vdwg.mxu0
    %v4800 = vadd.f32 %v4585, %v4726
    %v4801 = vsub.f32 0.0, %v4800
    %v4802 = vmul.f32 %v4801, 1.442695
    %v4803 = vpow.pop %v4802
    %v4804 = vadd.f32 %v4803, 1.0
    %v4805 = vrcp.pop %v4804
    %v4806 = vmul.f32 1.0, %v4805
    %v4807 = vadd.f32 %v4587, %v4728
    %v4808 = vsub.f32 0.0, %v4807
    %v4809 = vmul.f32 %v4808, 1.442695
    %v4810 = vpow.pop %v4809
    %v4811 = vadd.f32 %v4810, 1.0
    %v4812 = vrcp.pop %v4811
    %v4813 = vmul.f32 1.0, %v4812
    %v4814 = vmul.f32 %v4806, %v4797
    %v4815 = vadd.f32 %v4656, %v4814
    %v4816 = vtanh.pop %v4815
    %v4817 = vsub.f32 1.0, %v4813
    %v4818 = vmul.f32 %v4817, %v4816
    %v4819 = vmul.f32 %v4813, %v4332
    %v4820 = vadd.f32 %v4818, %v4819
    %v4821 = vmax.f32 %v4820, 0.0
    %v4823 = vsel %vm717, %v4821, 0
    %4825 = vmatprep.subr.mxu0 0.0
    %4826 = vmatpush1.msra.mxu0 %v3180
    %4827 = vmatprep.subr.mxu0 0.0
    %4828 = vmatpush1.msra.mxu0 %v3181
    %4829 = vmatprep.subr.mxu0 0.0
    %4830 = vmatpush1.msra.mxu0 0.0
    %4831 = vmatprep.subr.mxu0 0.0
    %4832 = vmatpush1.msra.mxu0 0.0
    %4833 = vmatprep.subr.mxu0 0.0
    %4834 = vmatpush1.msra.mxu0 0.0
    %4835 = vmatprep.subr.mxu0 0.0
    %4836 = vmatpush1.msra.mxu0 0.0
    %4837 = vmatprep.subr.mxu0 0.0
    %4838 = vmatpush1.msra.mxu0 0.0
    %4839 = vmatprep.subr.mxu0 0.0
    %4840 = vmatpush1.msra.mxu0 0.0
    %4841 = vmatprep.subr.mxu0 0.0
    %4842 = vmatpush1.msra.mxu0 0.0
    %4843 = vmatprep.subr.mxu0 0.0
    %4844 = vmatpush1.msra.mxu0 0.0
    %4845 = vmatprep.subr.mxu0 0.0
    %4846 = vmatpush1.msra.mxu0 0.0
    %4847 = vmatprep.subr.mxu0 0.0
    %4848 = vmatpush1.msra.mxu0 0.0
    %4849 = vmatprep.subr.mxu0 0.0
    %4850 = vmatpush1.msra.mxu0 0.0
    %4851 = vmatprep.subr.mxu0 0.0
    %4852 = vmatpush1.msra.mxu0 0.0
    %4853 = vmatprep.subr.mxu0 0.0
    %4854 = vmatpush1.msra.mxu0 0.0
    %4855 = vmatprep.subr.mxu0 0.0
    %4856 = vmatpush1.msra.mxu0 0.0
    %4857 = vmatprep.subr.mxu0 0.0
    %4858 = vmatpush1.msra.mxu0 0.0
    %4859 = vmatprep.subr.mxu0 0.0
    %4860 = vmatpush1.msra.mxu0 0.0
    %4861 = vmatprep.subr.mxu0 0.0
    %4862 = vmatpush1.msra.mxu0 0.0
    %4863 = vmatprep.subr.mxu0 0.0
    %4864 = vmatpush1.msra.mxu0 0.0
    %4865 = vmatprep.subr.mxu0 0.0
    %4866 = vmatpush1.msra.mxu0 0.0
    %4867 = vmatprep.subr.mxu0 0.0
    %4868 = vmatpush1.msra.mxu0 0.0
    %4869 = vmatprep.subr.mxu0 0.0
    %4870 = vmatpush1.msra.mxu0 0.0
    %4871 = vmatprep.subr.mxu0 0.0
    %4872 = vmatpush1.msra.mxu0 0.0
    %4873 = vmatprep.subr.mxu0 0.0
    %4874 = vmatpush1.msra.mxu0 0.0
    %4875 = vmatprep.subr.mxu0 0.0
    %4876 = vmatpush1.msra.mxu0 0.0
    %4877 = vmatprep.subr.mxu0 0.0
    %4878 = vmatpush1.msra.mxu0 0.0
    %4879 = vmatprep.subr.mxu0 0.0
    %4880 = vmatpush1.msra.mxu0 0.0
    %4881 = vmatprep.subr.mxu0 0.0
    %4882 = vmatpush1.msra.mxu0 0.0
    %4883 = vmatprep.subr.mxu0 0.0
    %4884 = vmatpush1.msra.mxu0 0.0
    %4885 = vmatprep.subr.mxu0 0.0
    %4886 = vmatpush1.msra.mxu0 0.0
    %4887 = vmatprep.subr.mxu0 0.0
    %4888 = vmatpush1.msra.mxu0 0.0
    %4889 = vmatprep.mubr.f32.mxu0 0.0
    %4890 = vmatmul.mubr.f32.gmra.mrb[0].mxu0 %v4823
    %v4891 = vpop.f32.mrb[0].mxu0
    %v4892 = vadd.f32 0.0, %v4891
    %v4893 = vpop.f32.mrb[0].mxu0
    %4894 = vdwg.mxu0
    %v4895 = vmul.f32 %v4892, %v3382
    %v4896 = vsel %vm3385, %v4895, 0.0
    %4897 = vadd.xlane.f32.xlu0 %v4896
    %v4898 = vpop.xlane.xlu0 %4897
    %v4899 = vmul.f32 %v421, %v4898
    %v4900 = vsel %vm3390, %v4899, 0.0
    %v4901 = vrot.slane %v4900, 4
    %v4902 = vadd.f32 %v4900, %v4901
    %v4903 = vrot.slane %v4902, 2
    %v4904 = vadd.f32 %v4902, %v4903
    %v4905 = vrot.slane %v4904, 1
    %v4906 = vadd.f32 %v4904, %v4905
    %v4907 = vadd.f32 %v3304, %v4906
    %vm4908 = vcmp.ge.f32.partialorder %v4907, 0.0
    %v4909 = vmul.f32 %v4907, 0.01
    %v4910 = vsel %vm4908, %v4907, %v4909
    %v4911 = vsel %vm3402, %v4910, -1e+30
    %v4912 = vsel %vm3390, %v4911, -inf
    %4913 = vmax.xlane.f32.xlu0 %v4912
    %v4914 = vpop.xlane.xlu0 %4913
    %v4915 = vsub.f32 %v4911, %v4914
    %v4916 = vmul.f32 %v4915, 1.442695
    %v4917 = vpow.pop %v4916
    %v4918 = vmul.f32 %v4917, %v421
    %v4919 = vsel %vm3390, %v4918, 0.0
    %4920 = vadd.xlane.f32.xlu0 %v4919
    %v4921 = vpop.xlane.xlu0 %4920
    %v4922 = vadd.f32 %v4921, 1e-16
    %v4923 = vrcp.pop %v4922
    %v4924 = vmul.f32 %v4918, %v4923
    %v4926 = vsel %vm522, %v4924, 0
    %4928 = vmatprep.subr.mxu0 0.0
    %4929 = vmatpush1.msra.mxu0 %v3270
    %4930 = vmatprep.subr.mxu0 0.0
    %4931 = vmatpush1.msra.mxu0 %v3427
    %4932 = vmatprep.subr.mxu0 0.0
    %4933 = vmatpush1.msra.mxu0 0.0
    %4934 = vmatprep.subr.mxu0 0.0
    %4935 = vmatpush1.msra.mxu0 0.0
    %4936 = vmatprep.subr.mxu0 0.0
    %4937 = vmatpush1.msra.mxu0 0.0
    %4938 = vmatprep.subr.mxu0 0.0
    %4939 = vmatpush1.msra.mxu0 0.0
    %4940 = vmatprep.subr.mxu0 0.0
    %4941 = vmatpush1.msra.mxu0 0.0
    %4942 = vmatprep.subr.mxu0 0.0
    %4943 = vmatpush1.msra.mxu0 0.0
    %4944 = vmatprep.subr.mxu0 0.0
    %4945 = vmatpush1.msra.mxu0 0.0
    %4946 = vmatprep.subr.mxu0 0.0
    %4947 = vmatpush1.msra.mxu0 0.0
    %4948 = vmatprep.subr.mxu0 0.0
    %4949 = vmatpush1.msra.mxu0 0.0
    %4950 = vmatprep.subr.mxu0 0.0
    %4951 = vmatpush1.msra.mxu0 0.0
    %4952 = vmatprep.subr.mxu0 0.0
    %4953 = vmatpush1.msra.mxu0 0.0
    %4954 = vmatprep.subr.mxu0 0.0
    %4955 = vmatpush1.msra.mxu0 0.0
    %4956 = vmatprep.subr.mxu0 0.0
    %4957 = vmatpush1.msra.mxu0 0.0
    %4958 = vmatprep.subr.mxu0 0.0
    %4959 = vmatpush1.msra.mxu0 0.0
    %4960 = vmatprep.subr.mxu0 0.0
    %4961 = vmatpush1.msra.mxu0 0.0
    %4962 = vmatprep.subr.mxu0 0.0
    %4963 = vmatpush1.msra.mxu0 0.0
    %4964 = vmatprep.subr.mxu0 0.0
    %4965 = vmatpush1.msra.mxu0 0.0
    %4966 = vmatprep.subr.mxu0 0.0
    %4967 = vmatpush1.msra.mxu0 0.0
    %4968 = vmatprep.subr.mxu0 0.0
    %4969 = vmatpush1.msra.mxu0 0.0
    %4970 = vmatprep.subr.mxu0 0.0
    %4971 = vmatpush1.msra.mxu0 0.0
    %4972 = vmatprep.subr.mxu0 0.0
    %4973 = vmatpush1.msra.mxu0 0.0
    %4974 = vmatprep.subr.mxu0 0.0
    %4975 = vmatpush1.msra.mxu0 0.0
    %4976 = vmatprep.subr.mxu0 0.0
    %4977 = vmatpush1.msra.mxu0 0.0
    %4978 = vmatprep.subr.mxu0 0.0
    %4979 = vmatpush1.msra.mxu0 0.0
    %4980 = vmatprep.subr.mxu0 0.0
    %4981 = vmatpush1.msra.mxu0 0.0
    %4982 = vmatprep.subr.mxu0 0.0
    %4983 = vmatpush1.msra.mxu0 0.0
    %4984 = vmatprep.subr.mxu0 0.0
    %4985 = vmatpush1.msra.mxu0 0.0
    %4986 = vmatprep.subr.mxu0 0.0
    %4987 = vmatpush1.msra.mxu0 0.0
    %4988 = vmatprep.subr.mxu0 0.0
    %4989 = vmatpush1.msra.mxu0 0.0
    %4990 = vmatprep.subr.mxu0 0.0
    %4991 = vmatpush1.msra.mxu0 0.0
    %4992 = vmatprep.mubr.f32.mxu0 0.0
    %4993 = vmatmul.mubr.f32.gmra.mrb[0].mxu0 %v4926
    %v4994 = vpop.f32.mrb[0].mxu0
    %v4995 = vadd.f32 %v3421, %v4994
    %v4996 = vpop.f32.mrb[0].mxu0
    %4997 = vdwg.mxu0
    %vm4998 = vcmp.gt.f32.partialorder %v4995, 0.0
    %v4999 = vmin.f32 %v4995, 0.0
    %v5000 = vmul.f32 %v4999, 1.442695
    %v5001 = vpow.pop %v5000
    %v5002 = vsub.f32 %v5001, 1.0
    %v5003 = vsel %vm4998, %v4995, %v5002
    %v5005 = vsel %vm717, %v5003, 0
    %5007 = vmatprep.subr.mxu0 %v3185
    %5008 = vmatpush1.msra.mxu0 %v3184
    %5009 = vmatprep.subr.mxu0 %v3188
    %5010 = vmatpush1.msra.mxu0 %v3187
    %5011 = vmatprep.subr.mxu0 0.0
    %5012 = vmatpush1.msra.mxu0 0.0
    %5013 = vmatprep.subr.mxu0 0.0
    %5014 = vmatpush1.msra.mxu0 0.0
    %5015 = vmatprep.subr.mxu0 0.0
    %5016 = vmatpush1.msra.mxu0 0.0
    %5017 = vmatprep.subr.mxu0 0.0
    %5018 = vmatpush1.msra.mxu0 0.0
    %5019 = vmatprep.subr.mxu0 0.0
    %5020 = vmatpush1.msra.mxu0 0.0
    %5021 = vmatprep.subr.mxu0 0.0
    %5022 = vmatpush1.msra.mxu0 0.0
    %5023 = vmatprep.subr.mxu0 0.0
    %5024 = vmatpush1.msra.mxu0 0.0
    %5025 = vmatprep.subr.mxu0 0.0
    %5026 = vmatpush1.msra.mxu0 0.0
    %5027 = vmatprep.subr.mxu0 0.0
    %5028 = vmatpush1.msra.mxu0 0.0
    %5029 = vmatprep.subr.mxu0 0.0
    %5030 = vmatpush1.msra.mxu0 0.0
    %5031 = vmatprep.subr.mxu0 0.0
    %5032 = vmatpush1.msra.mxu0 0.0
    %5033 = vmatprep.subr.mxu0 0.0
    %5034 = vmatpush1.msra.mxu0 0.0
    %5035 = vmatprep.subr.mxu0 0.0
    %5036 = vmatpush1.msra.mxu0 0.0
    %5037 = vmatprep.subr.mxu0 0.0
    %5038 = vmatpush1.msra.mxu0 0.0
    %5039 = vmatprep.subr.mxu0 0.0
    %5040 = vmatpush1.msra.mxu0 0.0
    %5041 = vmatprep.subr.mxu0 0.0
    %5042 = vmatpush1.msra.mxu0 0.0
    %5043 = vmatprep.subr.mxu0 0.0
    %5044 = vmatpush1.msra.mxu0 0.0
    %5045 = vmatprep.subr.mxu0 0.0
    %5046 = vmatpush1.msra.mxu0 0.0
    %5047 = vmatprep.subr.mxu0 0.0
    %5048 = vmatpush1.msra.mxu0 0.0
    %5049 = vmatprep.subr.mxu0 0.0
    %5050 = vmatpush1.msra.mxu0 0.0
    %5051 = vmatprep.subr.mxu0 0.0
    %5052 = vmatpush1.msra.mxu0 0.0
    %5053 = vmatprep.subr.mxu0 0.0
    %5054 = vmatpush1.msra.mxu0 0.0
    %5055 = vmatprep.subr.mxu0 0.0
    %5056 = vmatpush1.msra.mxu0 0.0
    %5057 = vmatprep.subr.mxu0 0.0
    %5058 = vmatpush1.msra.mxu0 0.0
    %5059 = vmatprep.subr.mxu0 0.0
    %5060 = vmatpush1.msra.mxu0 0.0
    %5061 = vmatprep.subr.mxu0 0.0
    %5062 = vmatpush1.msra.mxu0 0.0
    %5063 = vmatprep.subr.mxu0 0.0
    %5064 = vmatpush1.msra.mxu0 0.0
    %5065 = vmatprep.subr.mxu0 0.0
    %5066 = vmatpush1.msra.mxu0 0.0
    %5067 = vmatprep.subr.mxu0 0.0
    %5068 = vmatpush1.msra.mxu0 0.0
    %5069 = vmatprep.subr.mxu0 0.0
    %5070 = vmatpush1.msra.mxu0 0.0
    %5071 = vmatprep.mubr.f32.mxu0 0.0
    %5072 = vmatmul.mubr.f32.gmra.mrb[0].mxu0 %v5005
    %v5073 = vpop.f32.mrb[0].mxu0
    %v5074 = vadd.f32 %v3509, %v5073
    %v5075 = vpop.f32.mrb[0].mxu0
    %v5076 = vadd.f32 %v3513, %v5075
    %5077 = vdwg.mxu0
    %5078 = vmatprep.subr.mxu0 0.0
    %5079 = vmatpush1.msra.mxu0 %v3186
    %5080 = vmatprep.subr.mxu0 0.0
    %5081 = vmatpush1.msra.mxu0 %v3189
    %5082 = vmatprep.subr.mxu0 0.0
    %5083 = vmatpush1.msra.mxu0 0.0
    %5084 = vmatprep.subr.mxu0 0.0
    %5085 = vmatpush1.msra.mxu0 0.0
    %5086 = vmatprep.subr.mxu0 0.0
    %5087 = vmatpush1.msra.mxu0 0.0
    %5088 = vmatprep.subr.mxu0 0.0
    %5089 = vmatpush1.msra.mxu0 0.0
    %5090 = vmatprep.subr.mxu0 0.0
    %5091 = vmatpush1.msra.mxu0 0.0
    %5092 = vmatprep.subr.mxu0 0.0
    %5093 = vmatpush1.msra.mxu0 0.0
    %5094 = vmatprep.subr.mxu0 0.0
    %5095 = vmatpush1.msra.mxu0 0.0
    %5096 = vmatprep.subr.mxu0 0.0
    %5097 = vmatpush1.msra.mxu0 0.0
    %5098 = vmatprep.subr.mxu0 0.0
    %5099 = vmatpush1.msra.mxu0 0.0
    %5100 = vmatprep.subr.mxu0 0.0
    %5101 = vmatpush1.msra.mxu0 0.0
    %5102 = vmatprep.subr.mxu0 0.0
    %5103 = vmatpush1.msra.mxu0 0.0
    %5104 = vmatprep.subr.mxu0 0.0
    %5105 = vmatpush1.msra.mxu0 0.0
    %5106 = vmatprep.subr.mxu0 0.0
    %5107 = vmatpush1.msra.mxu0 0.0
    %5108 = vmatprep.subr.mxu0 0.0
    %5109 = vmatpush1.msra.mxu0 0.0
    %5110 = vmatprep.subr.mxu0 0.0
    %5111 = vmatpush1.msra.mxu0 0.0
    %5112 = vmatprep.subr.mxu0 0.0
    %5113 = vmatpush1.msra.mxu0 0.0
    %5114 = vmatprep.subr.mxu0 0.0
    %5115 = vmatpush1.msra.mxu0 0.0
    %5116 = vmatprep.subr.mxu0 0.0
    %5117 = vmatpush1.msra.mxu0 0.0
    %5118 = vmatprep.subr.mxu0 0.0
    %5119 = vmatpush1.msra.mxu0 0.0
    %5120 = vmatprep.subr.mxu0 0.0
    %5121 = vmatpush1.msra.mxu0 0.0
    %5122 = vmatprep.subr.mxu0 0.0
    %5123 = vmatpush1.msra.mxu0 0.0
    %5124 = vmatprep.subr.mxu0 0.0
    %5125 = vmatpush1.msra.mxu0 0.0
    %5126 = vmatprep.subr.mxu0 0.0
    %5127 = vmatpush1.msra.mxu0 0.0
    %5128 = vmatprep.subr.mxu0 0.0
    %5129 = vmatpush1.msra.mxu0 0.0
    %5130 = vmatprep.subr.mxu0 0.0
    %5131 = vmatpush1.msra.mxu0 0.0
    %5132 = vmatprep.subr.mxu0 0.0
    %5133 = vmatpush1.msra.mxu0 0.0
    %5134 = vmatprep.subr.mxu0 0.0
    %5135 = vmatpush1.msra.mxu0 0.0
    %5136 = vmatprep.subr.mxu0 0.0
    %5137 = vmatpush1.msra.mxu0 0.0
    %5138 = vmatprep.subr.mxu0 0.0
    %5139 = vmatpush1.msra.mxu0 0.0
    %5140 = vmatprep.subr.mxu0 0.0
    %5141 = vmatpush1.msra.mxu0 0.0
    %5142 = vmatprep.mubr.f32.mxu0 0.0
    %5143 = vmatmul.mubr.f32.gmra.mrb[0].mxu0 %v5005
    %v5144 = vpop.f32.mrb[0].mxu0
    %v5145 = vadd.f32 %v3517, %v5144
    %v5146 = vpop.f32.mrb[0].mxu0
    %5147 = vdwg.mxu0
    %5148 = vmatprep.subr.mxu0 %v3191
    %5149 = vmatpush1.msra.mxu0 %v3190
    %5150 = vmatprep.subr.mxu0 %v3194
    %5151 = vmatpush1.msra.mxu0 %v3193
    %5152 = vmatprep.subr.mxu0 0.0
    %5153 = vmatpush1.msra.mxu0 0.0
    %5154 = vmatprep.subr.mxu0 0.0
    %5155 = vmatpush1.msra.mxu0 0.0
    %5156 = vmatprep.subr.mxu0 0.0
    %5157 = vmatpush1.msra.mxu0 0.0
    %5158 = vmatprep.subr.mxu0 0.0
    %5159 = vmatpush1.msra.mxu0 0.0
    %5160 = vmatprep.subr.mxu0 0.0
    %5161 = vmatpush1.msra.mxu0 0.0
    %5162 = vmatprep.subr.mxu0 0.0
    %5163 = vmatpush1.msra.mxu0 0.0
    %5164 = vmatprep.subr.mxu0 0.0
    %5165 = vmatpush1.msra.mxu0 0.0
    %5166 = vmatprep.subr.mxu0 0.0
    %5167 = vmatpush1.msra.mxu0 0.0
    %5168 = vmatprep.subr.mxu0 0.0
    %5169 = vmatpush1.msra.mxu0 0.0
    %5170 = vmatprep.subr.mxu0 0.0
    %5171 = vmatpush1.msra.mxu0 0.0
    %5172 = vmatprep.subr.mxu0 0.0
    %5173 = vmatpush1.msra.mxu0 0.0
    %5174 = vmatprep.subr.mxu0 0.0
    %5175 = vmatpush1.msra.mxu0 0.0
    %5176 = vmatprep.subr.mxu0 0.0
    %5177 = vmatpush1.msra.mxu0 0.0
    %5178 = vmatprep.subr.mxu0 0.0
    %5179 = vmatpush1.msra.mxu0 0.0
    %5180 = vmatprep.subr.mxu0 0.0
    %5181 = vmatpush1.msra.mxu0 0.0
    %5182 = vmatprep.subr.mxu0 0.0
    %5183 = vmatpush1.msra.mxu0 0.0
    %5184 = vmatprep.subr.mxu0 0.0
    %5185 = vmatpush1.msra.mxu0 0.0
    %5186 = vmatprep.subr.mxu0 0.0
    %5187 = vmatpush1.msra.mxu0 0.0
    %5188 = vmatprep.subr.mxu0 0.0
    %5189 = vmatpush1.msra.mxu0 0.0
    %5190 = vmatprep.subr.mxu0 0.0
    %5191 = vmatpush1.msra.mxu0 0.0
    %5192 = vmatprep.subr.mxu0 0.0
    %5193 = vmatpush1.msra.mxu0 0.0
    %5194 = vmatprep.subr.mxu0 0.0
    %5195 = vmatpush1.msra.mxu0 0.0
    %5196 = vmatprep.subr.mxu0 0.0
    %5197 = vmatpush1.msra.mxu0 0.0
    %5198 = vmatprep.subr.mxu0 0.0
    %5199 = vmatpush1.msra.mxu0 0.0
    %5200 = vmatprep.subr.mxu0 0.0
    %5201 = vmatpush1.msra.mxu0 0.0
    %5202 = vmatprep.subr.mxu0 0.0
    %5203 = vmatpush1.msra.mxu0 0.0
    %5204 = vmatprep.subr.mxu0 0.0
    %5205 = vmatpush1.msra.mxu0 0.0
    %5206 = vmatprep.subr.mxu0 0.0
    %5207 = vmatpush1.msra.mxu0 0.0
    %5208 = vmatprep.subr.mxu0 0.0
    %5209 = vmatpush1.msra.mxu0 0.0
    %5210 = vmatprep.subr.mxu0 0.0
    %5211 = vmatpush1.msra.mxu0 0.0
    %5212 = vmatprep.mubr.f32.mxu0 0.0
    %5213 = vmatmul.mubr.f32.gmra.mrb[0].mxu0 %v4823
    %v5214 = vpop.f32.mrb[0].mxu0
    %v5215 = vadd.f32 %v3669, %v5214
    %v5216 = vpop.f32.mrb[0].mxu0
    %v5217 = vadd.f32 %v3673, %v5216
    %5218 = vdwg.mxu0
    %5219 = vmatprep.subr.mxu0 0.0
    %5220 = vmatpush1.msra.mxu0 %v3192
    %5221 = vmatprep.subr.mxu0 0.0
    %5222 = vmatpush1.msra.mxu0 %v3195
    %5223 = vmatprep.subr.mxu0 0.0
    %5224 = vmatpush1.msra.mxu0 0.0
    %5225 = vmatprep.subr.mxu0 0.0
    %5226 = vmatpush1.msra.mxu0 0.0
    %5227 = vmatprep.subr.mxu0 0.0
    %5228 = vmatpush1.msra.mxu0 0.0
    %5229 = vmatprep.subr.mxu0 0.0
    %5230 = vmatpush1.msra.mxu0 0.0
    %5231 = vmatprep.subr.mxu0 0.0
    %5232 = vmatpush1.msra.mxu0 0.0
    %5233 = vmatprep.subr.mxu0 0.0
    %5234 = vmatpush1.msra.mxu0 0.0
    %5235 = vmatprep.subr.mxu0 0.0
    %5236 = vmatpush1.msra.mxu0 0.0
    %5237 = vmatprep.subr.mxu0 0.0
    %5238 = vmatpush1.msra.mxu0 0.0
    %5239 = vmatprep.subr.mxu0 0.0
    %5240 = vmatpush1.msra.mxu0 0.0
    %5241 = vmatprep.subr.mxu0 0.0
    %5242 = vmatpush1.msra.mxu0 0.0
    %5243 = vmatprep.subr.mxu0 0.0
    %5244 = vmatpush1.msra.mxu0 0.0
    %5245 = vmatprep.subr.mxu0 0.0
    %5246 = vmatpush1.msra.mxu0 0.0
    %5247 = vmatprep.subr.mxu0 0.0
    %5248 = vmatpush1.msra.mxu0 0.0
    %5249 = vmatprep.subr.mxu0 0.0
    %5250 = vmatpush1.msra.mxu0 0.0
    %5251 = vmatprep.subr.mxu0 0.0
    %5252 = vmatpush1.msra.mxu0 0.0
    %5253 = vmatprep.subr.mxu0 0.0
    %5254 = vmatpush1.msra.mxu0 0.0
    %5255 = vmatprep.subr.mxu0 0.0
    %5256 = vmatpush1.msra.mxu0 0.0
    %5257 = vmatprep.subr.mxu0 0.0
    %5258 = vmatpush1.msra.mxu0 0.0
    %5259 = vmatprep.subr.mxu0 0.0
    %5260 = vmatpush1.msra.mxu0 0.0
    %5261 = vmatprep.subr.mxu0 0.0
    %5262 = vmatpush1.msra.mxu0 0.0
    %5263 = vmatprep.subr.mxu0 0.0
    %5264 = vmatpush1.msra.mxu0 0.0
    %5265 = vmatprep.subr.mxu0 0.0
    %5266 = vmatpush1.msra.mxu0 0.0
    %5267 = vmatprep.subr.mxu0 0.0
    %5268 = vmatpush1.msra.mxu0 0.0
    %5269 = vmatprep.subr.mxu0 0.0
    %5270 = vmatpush1.msra.mxu0 0.0
    %5271 = vmatprep.subr.mxu0 0.0
    %5272 = vmatpush1.msra.mxu0 0.0
    %5273 = vmatprep.subr.mxu0 0.0
    %5274 = vmatpush1.msra.mxu0 0.0
    %5275 = vmatprep.subr.mxu0 0.0
    %5276 = vmatpush1.msra.mxu0 0.0
    %5277 = vmatprep.subr.mxu0 0.0
    %5278 = vmatpush1.msra.mxu0 0.0
    %5279 = vmatprep.subr.mxu0 0.0
    %5280 = vmatpush1.msra.mxu0 0.0
    %5281 = vmatprep.subr.mxu0 0.0
    %5282 = vmatpush1.msra.mxu0 0.0
    %5283 = vmatprep.mubr.f32.mxu0 0.0
    %5284 = vmatmul.mubr.f32.gmra.mrb[0].mxu0 %v4823
    %v5285 = vpop.f32.mrb[0].mxu0
    %v5286 = vadd.f32 %v3677, %v5285
    %v5287 = vpop.f32.mrb[0].mxu0
    %5288 = vdwg.mxu0
    %v5289 = vadd.f32 %v5074, %v5215
    %v5290 = vsub.f32 0.0, %v5289
    %v5291 = vmul.f32 %v5290, 1.442695
    %v5292 = vpow.pop %v5291
    %v5293 = vadd.f32 %v5292, 1.0
    %v5294 = vrcp.pop %v5293
    %v5295 = vmul.f32 1.0, %v5294
    %v5296 = vadd.f32 %v5076, %v5217
    %v5297 = vsub.f32 0.0, %v5296
    %v5298 = vmul.f32 %v5297, 1.442695
    %v5299 = vpow.pop %v5298
    %v5300 = vadd.f32 %v5299, 1.0
    %v5301 = vrcp.pop %v5300
    %v5302 = vmul.f32 1.0, %v5301
    %v5303 = vmul.f32 %v5295, %v5286
    %v5304 = vadd.f32 %v5145, %v5303
    %v5305 = vtanh.pop %v5304
    %v5306 = vsub.f32 1.0, %v5302
    %v5307 = vmul.f32 %v5306, %v5305
    %v5308 = vmul.f32 %v5302, %v4821
    %v5309 = vadd.f32 %v5307, %v5308
    %v5310 = vmax.f32 %v5309, 0.0
    %v5311 = vld [vmem:[%s69] sm:$0xff]
    %v5312 = vld [vmem:[%s69 + $0x8] sm:$0xff]
    %v5313 = vld [vmem:[#allocation2] sm:$0x1]
    %v5315 = vlaneseq
    %v5316 = vshrl.u32 %v5315, 7
    %v5317 = vsub.s32 0, %v5316
    %v5318 = vrot.slane %v5313, %v5317
    %v5321 = vsel %vm717, %v5310, 0
    %5323 = vmatprep.subr.mxu0 0.0
    %5324 = vmatpush1.msra.mxu0 %v5311
    %5325 = vmatprep.subr.mxu0 0.0
    %5326 = vmatpush1.msra.mxu0 %v5312
    %5327 = vmatprep.subr.mxu0 0.0
    %5328 = vmatpush1.msra.mxu0 0.0
    %5329 = vmatprep.subr.mxu0 0.0
    %5330 = vmatpush1.msra.mxu0 0.0
    %5331 = vmatprep.subr.mxu0 0.0
    %5332 = vmatpush1.msra.mxu0 0.0
    %5333 = vmatprep.subr.mxu0 0.0
    %5334 = vmatpush1.msra.mxu0 0.0
    %5335 = vmatprep.subr.mxu0 0.0
    %5336 = vmatpush1.msra.mxu0 0.0
    %5337 = vmatprep.subr.mxu0 0.0
    %5338 = vmatpush1.msra.mxu0 0.0
    %5339 = vmatprep.subr.mxu0 0.0
    %5340 = vmatpush1.msra.mxu0 0.0
    %5341 = vmatprep.subr.mxu0 0.0
    %5342 = vmatpush1.msra.mxu0 0.0
    %5343 = vmatprep.subr.mxu0 0.0
    %5344 = vmatpush1.msra.mxu0 0.0
    %5345 = vmatprep.subr.mxu0 0.0
    %5346 = vmatpush1.msra.mxu0 0.0
    %5347 = vmatprep.subr.mxu0 0.0
    %5348 = vmatpush1.msra.mxu0 0.0
    %5349 = vmatprep.subr.mxu0 0.0
    %5350 = vmatpush1.msra.mxu0 0.0
    %5351 = vmatprep.subr.mxu0 0.0
    %5352 = vmatpush1.msra.mxu0 0.0
    %5353 = vmatprep.subr.mxu0 0.0
    %5354 = vmatpush1.msra.mxu0 0.0
    %5355 = vmatprep.subr.mxu0 0.0
    %5356 = vmatpush1.msra.mxu0 0.0
    %5357 = vmatprep.subr.mxu0 0.0
    %5358 = vmatpush1.msra.mxu0 0.0
    %5359 = vmatprep.subr.mxu0 0.0
    %5360 = vmatpush1.msra.mxu0 0.0
    %5361 = vmatprep.subr.mxu0 0.0
    %5362 = vmatpush1.msra.mxu0 0.0
    %5363 = vmatprep.subr.mxu0 0.0
    %5364 = vmatpush1.msra.mxu0 0.0
    %5365 = vmatprep.subr.mxu0 0.0
    %5366 = vmatpush1.msra.mxu0 0.0
    %5367 = vmatprep.subr.mxu0 0.0
    %5368 = vmatpush1.msra.mxu0 0.0
    %5369 = vmatprep.subr.mxu0 0.0
    %5370 = vmatpush1.msra.mxu0 0.0
    %5371 = vmatprep.subr.mxu0 0.0
    %5372 = vmatpush1.msra.mxu0 0.0
    %5373 = vmatprep.subr.mxu0 0.0
    %5374 = vmatpush1.msra.mxu0 0.0
    %5375 = vmatprep.subr.mxu0 0.0
    %5376 = vmatpush1.msra.mxu0 0.0
    %5377 = vmatprep.subr.mxu0 0.0
    %5378 = vmatpush1.msra.mxu0 0.0
    %5379 = vmatprep.subr.mxu0 0.0
    %5380 = vmatpush1.msra.mxu0 0.0
    %5381 = vmatprep.subr.mxu0 0.0
    %5382 = vmatpush1.msra.mxu0 0.0
    %5383 = vmatprep.subr.mxu0 0.0
    %5384 = vmatpush1.msra.mxu0 0.0
    %5385 = vmatprep.subr.mxu0 0.0
    %5386 = vmatpush1.msra.mxu0 0.0
    %5387 = vmatprep.mubr.f32.mxu0 0.0
    %5388 = vmatmul.mubr.f32.gmra.mrb[0].mxu0 %v5321
    %v5389 = vpop.f32.mrb[0].mxu0
    %v5390 = vadd.f32 %v5318, %v5389
    %v5391 = vpop.f32.mrb[0].mxu0
    %5392 = vdwg.mxu0
    %vm5393 = vcmask 1024
    %5394 = vst.msk [vmem:[%s73] sm:$0x3] %vm5393, %v5390
    // Predicated region
    $region230: #{attentive_fp_forward.1} parent=1 // pred_check
      _
    $region231: #{attentive_fp_forward.1} parent=1 // pred_check_branch
      %5396 = sbr.rel (0) target = $region233
    $region232: #{attentive_fp_forward.1} parent=1 // pred_region
      _
    $region233: #{attentive_fp_forward.1} parent=1 // pred_fallthru
      _
    // Predicated region
    $region234: #{attentive_fp_forward.1} parent=1 // pred_check
      _
    $region235: #{attentive_fp_forward.1} parent=1 // pred_check_branch
      %5398 = sbr.rel (0) target = $region237
    $region236: #{attentive_fp_forward.1} parent=1 // pred_region
      _
    $region237: #{attentive_fp_forward.1} parent=1 // pred_fallthru
      _
    %5399 = vsyncpa [#allocation4], 1
    %5400 = vsyncpa [#allocation6], 1
    %5401 = vsyncpa [#allocation9], 1
    %5402 = vsyncpa [#allocation12], 1
    %5403 = vsyncpa [#allocation15], 1
    %5404 = vsyncpa [#allocation18], 1
    %5405 = vsyncpa [#allocation21], 1
    %5406 = vsyncpa [#allocation24], 1
    %5407 = vsyncpa [#allocation27], 1
    %5408 = vsyncpa [#allocation30], 1
    %5409 = vsyncpa [#allocation33], 1

</llo_original>
